<compile_context>
chip_gen: v7x
topology: tpu7x:2x2x1
jax: 0.10.0
libtpu: 0.0.40
codegen_flags: <defaults>
</compile_context>

<pallas_src>
import jax
import jax.numpy as jnp
from jax import lax
from jax.experimental import pallas as pl
from jax.experimental.pallas import tpu as pltpu


# ----------------------------- Pallas kernels ------------------------------ #

def _conv_fused_kernel(p1_ref, w1_ref, b1_ref, w2_ref, b2_ref, o_ref,
                       h1_s, h2_s):
    # ---- conv1: (676, 9) @ (9, 32) + bias, ReLU.  Flat row r = y*26 + x. ----
    h1 = jnp.dot(p1_ref[0], w1_ref[...], preferred_element_type=jnp.float32)
    h1_s[...] = jnp.maximum(h1 + b1_ref[...], 0.0)

    # ---- conv2 with fused im2col (flat row-shift trick) --------------------
    # Output position (y, x), y, x in [0, 24), is flat row r = y*26 + x and its
    # patch element (dy, dx) is h1 row r + dy*26 + dx.  Max valid r is
    # 23*26 + 23 = 621, so only 622 rows are computed (no garbage rows).
    acc = jnp.zeros((622, 64), jnp.float32)
    for t in range(9):                      # static 9-tap loop, static offsets
        off = (t // 3) * 26 + (t % 3)
        acc = acc + jnp.dot(h1_s[pl.ds(off, 622), :], w2_ref[t],
                            preferred_element_type=jnp.float32)
    h2_s[...] = acc + b2_ref[...]

    # ---- ReLU + 2x2 max-pool (ReLU commutes with max), NHWC output ---------
    for py in range(12):
        win = []
        for i in range(2):
            for j in range(2):
                start = (2 * py + i) * 26 + j       # rows (2py+i)*26 + 2px + j
                win.append(h2_s[pl.ds(start, 12, stride=2), :])
        pooled = jnp.maximum(jnp.maximum(win[0], win[1]),
                             jnp.maximum(win[2], win[3]))
        o_ref[0, py] = jnp.maximum(pooled, 0.0).astype(o_ref.dtype)


def _fc_fused_kernel(x_ref, w1_ref, b1_ref, w2_ref, b2_ref, o_ref, acc_ref):
    k = pl.program_id(0)

    @pl.when(k == 0)
    def _():
        acc_ref[...] = jnp.zeros_like(acc_ref)

    # fc1 partial product for this K-tile (bf16 operands, f32 accumulation).
    acc_ref[...] += jnp.dot(x_ref[...], w1_ref[...],
                            preferred_element_type=jnp.float32)

    @pl.when(k == pl.num_programs(0) - 1)
    def _():
        h = jnp.maximum(acc_ref[...] + b1_ref[...], 0.0)          # fc1 + ReLU
        z = jnp.dot(h, w2_ref[...], preferred_element_type=jnp.float32)
        z = z + b2_ref[...]                                       # fc2
        m = jnp.max(z, axis=-1, keepdims=True)                    # log_softmax
        s = z - m
        lse = jnp.log(jnp.sum(jnp.exp(s), axis=-1, keepdims=True))
        o_ref[...] = (s - lse).astype(o_ref.dtype)


# ------------------------------ Pallas wrappers ----------------------------- #

def conv_fused(p1, w1m, b1, w2m, b2):
    B = p1.shape[0]
    return pl.pallas_call(
        _conv_fused_kernel,
        out_shape=jax.ShapeDtypeStruct((B, 12, 12, 64), jnp.bfloat16),
        grid=(B,),
        in_specs=[
            pl.BlockSpec((1, 676, 9), lambda b: (b, 0, 0)),     # per-image patches
            pl.BlockSpec((9, 32), lambda b: (0, 0)),            # conv1 weights (resident)
            pl.BlockSpec((1, 32), lambda b: (0, 0)),
            pl.BlockSpec((9, 32, 64), lambda b: (0, 0, 0)),     # conv2 weights (resident)
            pl.BlockSpec((1, 64), lambda b: (0, 0)),
        ],
        out_specs=pl.BlockSpec((1, 12, 12, 64), lambda b: (b, 0, 0, 0)),
        scratch_shapes=[
            pltpu.VMEM((676, 32), jnp.float32),   # h1, flat rows y*26 + x
            pltpu.VMEM((622, 64), jnp.float32),   # h2 + bias, flat rows y*26 + x
        ],
        compiler_params=pltpu.CompilerParams(
            dimension_semantics=("parallel",)),
    )(p1, w1m, b1, w2m, b2)


def fc_fused(flat, wf1, bf1, wf2, bf2, *, tk=2304):
    B, K = flat.shape
    N1 = wf1.shape[1]   # 128
    N2 = wf2.shape[1]   # 10
    assert K % tk == 0
    return pl.pallas_call(
        _fc_fused_kernel,
        out_shape=jax.ShapeDtypeStruct((B, N2), jnp.float32),
        grid=(K // tk,),
        in_specs=[
            pl.BlockSpec((B, tk), lambda k: (0, k)),      # activations, K-tiled
            pl.BlockSpec((tk, N1), lambda k: (k, 0)),     # fc1 weight, streamed
            pl.BlockSpec((1, N1), lambda k: (0, 0)),
            pl.BlockSpec((N1, N2), lambda k: (0, 0)),     # fc2 weight, resident
            pl.BlockSpec((1, N2), lambda k: (0, 0)),
        ],
        out_specs=pl.BlockSpec((B, N2), lambda k: (0, 0)),
        scratch_shapes=[pltpu.VMEM((B, N1), jnp.float32)],
        compiler_params=pltpu.CompilerParams(
            dimension_semantics=("arbitrary",)),
    )(flat, wf1, bf1, wf2, bf2)


# --------------------------------- glue ------------------------------------ #

def im2col3x3(x_nhwc):
    # (B, H, W, C) -> (B, H-2, W-2, 9*C); patch order (dy, dx, cin).
    B, H, W, C = x_nhwc.shape
    Ho, Wo = H - 2, W - 2
    cols = [x_nhwc[:, dy:dy + Ho, dx:dx + Wo, :]
            for dy in range(3) for dx in range(3)]
    return jnp.concatenate(cols, axis=-1)


def init_torch_params(key):
    # PyTorch-shaped parameters (deterministic synthetic init).
    ks = jax.random.split(key, 8)

    def u(k, shape, fan_in):
        bound = 1.0 / jnp.sqrt(jnp.float32(fan_in))
        return jax.random.uniform(k, shape, jnp.float32, -bound, bound)

    return {
        "conv1_w": u(ks[0], (32, 1, 3, 3), 9),      "conv1_b": u(ks[1], (32,), 9),
        "conv2_w": u(ks[2], (64, 32, 3, 3), 288),   "conv2_b": u(ks[3], (64,), 288),
        "fc1_w":   u(ks[4], (128, 9216), 9216),     "fc1_b":   u(ks[5], (128,), 9216),
        "fc2_w":   u(ks[6], (10, 128), 128),        "fc2_b":   u(ks[7], (10,), 128),
    }


def convert_params(tp):
    # Kernel-friendly layouts.  fc1 rows are permuted to NHWC-flatten order
    # ((h*12 + w)*64 + c) so the wrapper never has to transpose activations.
    return {
        "w1m": tp["conv1_w"].transpose(2, 3, 1, 0).reshape(9, 32),          # (tap, cout)
        "b1":  tp["conv1_b"].reshape(1, 32),
        "w2m": tp["conv2_w"].transpose(2, 3, 1, 0).reshape(9, 32, 64),      # (tap, cin, cout)
        "b2":  tp["conv2_b"].reshape(1, 64),
        "wf1": tp["fc1_w"].reshape(128, 64, 12, 12).transpose(2, 3, 1, 0)
                          .reshape(9216, 128).astype(jnp.bfloat16),
        "bf1": tp["fc1_b"].reshape(1, 128),
        "wf2": tp["fc2_w"].T,                                               # (128, 10)
        "bf2": tp["fc2_b"].reshape(1, 10),
    }


@jax.jit
def net_forward(x_nchw, params):
    B = x_nchw.shape[0]
    x = jnp.transpose(x_nchw, (0, 2, 3, 1)).astype(jnp.float32)   # NCHW -> NHWC
    # conv1 patches are tiny (B*676*9 f32); conv2's 9x-larger im2col is fused
    # inside the kernel and never materialized.
    p1 = im2col3x3(x).reshape(B, 26 * 26, 9)
    pooled = conv_fused(p1, params["w1m"], params["b1"],
                        params["w2m"], params["b2"])              # (B,12,12,64) bf16
    # dropout1: identity (eval mode)
    flat = pooled.reshape(B, 12 * 12 * 64)    # NHWC flatten; wf1 rows pre-permuted
    # dropout2: identity (eval mode); fc1+relu+fc2+log_softmax fused.
    return fc_fused(flat, params["wf1"], params["bf1"],
                    params["wf2"], params["bf2"])


@jax.jit
def net_reference(x_nchw, tp):
    # Plain-JAX f32 reference mirroring the PyTorch module (eval mode).
    y = lax.conv_general_dilated(x_nchw, tp["conv1_w"], (1, 1), "VALID",
                                 dimension_numbers=("NCHW", "OIHW", "NCHW"))
    y = jax.nn.relu(y + tp["conv1_b"][None, :, None, None])
    y = lax.conv_general_dilated(y, tp["conv2_w"], (1, 1), "VALID",
                                 dimension_numbers=("NCHW", "OIHW", "NCHW"))
    y = jax.nn.relu(y + tp["conv2_b"][None, :, None, None])
    B, C, H, W = y.shape
    y = y.reshape(B, C, H // 2, 2, W // 2, 2).max(axis=(3, 5))    # max_pool2d(2)
    y = y.reshape(B, C * (H // 2) * (W // 2))                     # flatten(1), NCHW
    y = jax.nn.relu(y @ tp["fc1_w"].T + tp["fc1_b"])
    z = y @ tp["fc2_w"].T + tp["fc2_b"]
    return jax.nn.log_softmax(z, axis=-1)


# ---------------------------------- main ------------------------------------ #

if __name__ == "__main__":
    key = jax.random.PRNGKey(0)
    k_params, k_x = jax.random.split(key)

    torch_params = init_torch_params(k_params)
    params = convert_params(torch_params)
    # fc1 expects 9216 = 64 * 12 * 12 features => 28x28 single-channel input.
    x = jax.random.normal(k_x, (2, 1, 28, 28), jnp.float32)

    out = jax.block_until_ready(net_forward(x, params))
    ref = jax.block_until_ready(net_reference(x, torch_params))

    assert out.shape == (2, 10), out.shape
    assert bool(jnp.all(jnp.isfinite(out)))
    # log_softmax rows exponentiate-and-sum to ~1
    assert bool(jnp.allclose(jnp.sum(jnp.exp(out), axis=1), 1.0, atol=1e-4))
    # matches the plain-JAX (PyTorch-equivalent) reference up to bf16 rounding
    assert bool(jnp.allclose(out, ref, atol=5e-2)), (out, ref)

    print("KERNEL_OK")
</pallas_src>

<mosaic_0001>
module attributes {stable_mosaic.version = 11 : i64} {
  func.func @_conv_fused_kernel(%arg0: i32, %arg1: memref<1x676x9xf32, #tpu.memory_space<vmem>>, %arg2: memref<9x32xf32, #tpu.memory_space<vmem>>, %arg3: memref<1x32xf32, #tpu.memory_space<vmem>>, %arg4: memref<9x32x64xf32, #tpu.memory_space<vmem>>, %arg5: memref<1x64xf32, #tpu.memory_space<vmem>>, %arg6: memref<1x12x12x64xbf16, #tpu.memory_space<vmem>>, %arg7: memref<676x32xf32, #tpu.memory_space<vmem>>, %arg8: memref<622x64xf32, #tpu.memory_space<vmem>>) attributes {dimension_semantics = [#tpu.dimension_semantics<parallel>], iteration_bounds = array<i64: 2>, scalar_prefetch = 0 : i64, scratch_operands = 2 : i64, tpu.core_type = #tpu.core_type<tc>, window_params = [{transform_indices = @transform_0, window_bounds = array<i64: 1, 676, 9>}, {pipeline_mode = #tpu.pipeline_mode<synchronous>, transform_indices = @transform_1, window_bounds = array<i64: 9, 32>}, {pipeline_mode = #tpu.pipeline_mode<synchronous>, transform_indices = @transform_2, window_bounds = array<i64: 1, 32>}, {pipeline_mode = #tpu.pipeline_mode<synchronous>, transform_indices = @transform_3, window_bounds = array<i64: 9, 32, 64>}, {pipeline_mode = #tpu.pipeline_mode<synchronous>, transform_indices = @transform_4, window_bounds = array<i64: 1, 64>}, {transform_indices = @transform_5, window_bounds = array<i64: 1, 12, 12, 64>}]} {
    %c0 = arith.constant 0 : index
    %c0_0 = arith.constant 0 : index
    %c0_1 = arith.constant 0 : index
    %0 = vector.load %arg1[%c0, %c0_0, %c0_1] : memref<1x676x9xf32, #tpu.memory_space<vmem>>, vector<1x676x9xf32>
    %1 = vector.shape_cast %0 : vector<1x676x9xf32> to vector<676x9xf32>
    %c0_2 = arith.constant 0 : index
    %c0_3 = arith.constant 0 : index
    %2 = vector.load %arg2[%c0_2, %c0_3] : memref<9x32xf32, #tpu.memory_space<vmem>>, vector<9x32xf32>
    %cst = arith.constant dense<0.000000e+00> : vector<676x32xf32>
    %3 = tpu.matmul %1, %2, %cst {dimension_numbers = #tpu.dot_dimension_numbers<[1], [0], [0], [1], [0, 0, 1, 1], [], []>} : vector<676x9xf32>, vector<9x32xf32>, vector<676x32xf32> -> vector<676x32xf32>
    %c0_4 = arith.constant 0 : index
    %c0_5 = arith.constant 0 : index
    %4 = vector.load %arg3[%c0_4, %c0_5] : memref<1x32xf32, #tpu.memory_space<vmem>>, vector<1x32xf32>
    %5 = vector.broadcast %4 : vector<1x32xf32> to vector<676x32xf32>
    %6 = arith.addf %3, %5 : vector<676x32xf32>
    %cst_6 = arith.constant 0.000000e+00 : f32
    %7 = vector.broadcast %cst_6 : f32 to vector<676x32xf32>
    %8 = arith.maximumf %6, %7 : vector<676x32xf32>
    %c0_7 = arith.constant 0 : index
    %c0_8 = arith.constant 0 : index
    %9 = vector.load %arg7[%c0_7, %c0_8] : memref<676x32xf32, #tpu.memory_space<vmem>>, vector<676x32xf32>
    tpu.vector_store %arg7[%c0_7, %c0_8], %8 {strides = array<i32>} : memref<676x32xf32, #tpu.memory_space<vmem>>, vector<676x32xf32>,
    %cst_9 = arith.constant 0.000000e+00 : f32
    %10 = vector.broadcast %cst_9 : f32 to vector<622x64xf32>
    %c0_10 = arith.constant 0 : index
    %c0_11 = arith.constant 0 : index
    %11 = vector.load %arg7[%c0_10, %c0_11] : memref<676x32xf32, #tpu.memory_space<vmem>>, vector<622x32xf32>
    %c0_12 = arith.constant 0 : index
    %c0_13 = arith.constant 0 : index
    %c0_14 = arith.constant 0 : index
    %12 = vector.load %arg4[%c0_12, %c0_13, %c0_14] : memref<9x32x64xf32, #tpu.memory_space<vmem>>, vector<1x32x64xf32>
    %13 = vector.shape_cast %12 : vector<1x32x64xf32> to vector<32x64xf32>
    %cst_15 = arith.constant dense<0.000000e+00> : vector<622x64xf32>
    %14 = tpu.matmul %11, %13, %cst_15 {dimension_numbers = #tpu.dot_dimension_numbers<[1], [0], [0], [1], [0, 0, 1, 1], [], []>} : vector<622x32xf32>, vector<32x64xf32>, vector<622x64xf32> -> vector<622x64xf32>
    %15 = arith.addf %10, %14 : vector<622x64xf32>
    %c1 = arith.constant 1 : index
    %c0_16 = arith.constant 0 : index
    %16 = vector.load %arg7[%c1, %c0_16] : memref<676x32xf32, #tpu.memory_space<vmem>>, vector<622x32xf32>
    %c1_17 = arith.constant 1 : index
    %c0_18 = arith.constant 0 : index
    %c0_19 = arith.constant 0 : index
    %17 = vector.load %arg4[%c1_17, %c0_18, %c0_19] : memref<9x32x64xf32, #tpu.memory_space<vmem>>, vector<1x32x64xf32>
    %18 = vector.shape_cast %17 : vector<1x32x64xf32> to vector<32x64xf32>
    %cst_20 = arith.constant dense<0.000000e+00> : vector<622x64xf32>
    %19 = tpu.matmul %16, %18, %cst_20 {dimension_numbers = #tpu.dot_dimension_numbers<[1], [0], [0], [1], [0, 0, 1, 1], [], []>} : vector<622x32xf32>, vector<32x64xf32>, vector<622x64xf32> -> vector<622x64xf32>
    %20 = arith.addf %15, %19 : vector<622x64xf32>
    %c2 = arith.constant 2 : index
    %c0_21 = arith.constant 0 : index
    %21 = vector.load %arg7[%c2, %c0_21] : memref<676x32xf32, #tpu.memory_space<vmem>>, vector<622x32xf32>
    %c2_22 = arith.constant 2 : index
    %c0_23 = arith.constant 0 : index
    %c0_24 = arith.constant 0 : index
    %22 = vector.load %arg4[%c2_22, %c0_23, %c0_24] : memref<9x32x64xf32, #tpu.memory_space<vmem>>, vector<1x32x64xf32>
    %23 = vector.shape_cast %22 : vector<1x32x64xf32> to vector<32x64xf32>
    %cst_25 = arith.constant dense<0.000000e+00> : vector<622x64xf32>
    %24 = tpu.matmul %21, %23, %cst_25 {dimension_numbers = #tpu.dot_dimension_numbers<[1], [0], [0], [1], [0, 0, 1, 1], [], []>} : vector<622x32xf32>, vector<32x64xf32>, vector<622x64xf32> -> vector<622x64xf32>
    %25 = arith.addf %20, %24 : vector<622x64xf32>
    %c26 = arith.constant 26 : index
    %c0_26 = arith.constant 0 : index
    %26 = vector.load %arg7[%c26, %c0_26] : memref<676x32xf32, #tpu.memory_space<vmem>>, vector<622x32xf32>
    %c3 = arith.constant 3 : index
    %c0_27 = arith.constant 0 : index
    %c0_28 = arith.constant 0 : index
    %27 = vector.load %arg4[%c3, %c0_27, %c0_28] : memref<9x32x64xf32, #tpu.memory_space<vmem>>, vector<1x32x64xf32>
    %28 = vector.shape_cast %27 : vector<1x32x64xf32> to vector<32x64xf32>
    %cst_29 = arith.constant dense<0.000000e+00> : vector<622x64xf32>
    %29 = tpu.matmul %26, %28, %cst_29 {dimension_numbers = #tpu.dot_dimension_numbers<[1], [0], [0], [1], [0, 0, 1, 1], [], []>} : vector<622x32xf32>, vector<32x64xf32>, vector<622x64xf32> -> vector<622x64xf32>
    %30 = arith.addf %25, %29 : vector<622x64xf32>
    %c27 = arith.constant 27 : index
    %c0_30 = arith.constant 0 : index
    %31 = vector.load %arg7[%c27, %c0_30] : memref<676x32xf32, #tpu.memory_space<vmem>>, vector<622x32xf32>
    %c4 = arith.constant 4 : index
    %c0_31 = arith.constant 0 : index
    %c0_32 = arith.constant 0 : index
    %32 = vector.load %arg4[%c4, %c0_31, %c0_32] : memref<9x32x64xf32, #tpu.memory_space<vmem>>, vector<1x32x64xf32>
    %33 = vector.shape_cast %32 : vector<1x32x64xf32> to vector<32x64xf32>
    %cst_33 = arith.constant dense<0.000000e+00> : vector<622x64xf32>
    %34 = tpu.matmul %31, %33, %cst_33 {dimension_numbers = #tpu.dot_dimension_numbers<[1], [0], [0], [1], [0, 0, 1, 1], [], []>} : vector<622x32xf32>, vector<32x64xf32>, vector<622x64xf32> -> vector<622x64xf32>
    %35 = arith.addf %30, %34 : vector<622x64xf32>
    %c28 = arith.constant 28 : index
    %c0_34 = arith.constant 0 : index
    %36 = vector.load %arg7[%c28, %c0_34] : memref<676x32xf32, #tpu.memory_space<vmem>>, vector<622x32xf32>
    %c5 = arith.constant 5 : index
    %c0_35 = arith.constant 0 : index
    %c0_36 = arith.constant 0 : index
    %37 = vector.load %arg4[%c5, %c0_35, %c0_36] : memref<9x32x64xf32, #tpu.memory_space<vmem>>, vector<1x32x64xf32>
    %38 = vector.shape_cast %37 : vector<1x32x64xf32> to vector<32x64xf32>
    %cst_37 = arith.constant dense<0.000000e+00> : vector<622x64xf32>
    %39 = tpu.matmul %36, %38, %cst_37 {dimension_numbers = #tpu.dot_dimension_numbers<[1], [0], [0], [1], [0, 0, 1, 1], [], []>} : vector<622x32xf32>, vector<32x64xf32>, vector<622x64xf32> -> vector<622x64xf32>
    %40 = arith.addf %35, %39 : vector<622x64xf32>
    %c52 = arith.constant 52 : index
    %c0_38 = arith.constant 0 : index
    %41 = vector.load %arg7[%c52, %c0_38] : memref<676x32xf32, #tpu.memory_space<vmem>>, vector<622x32xf32>
    %c6 = arith.constant 6 : index
    %c0_39 = arith.constant 0 : index
    %c0_40 = arith.constant 0 : index
    %42 = vector.load %arg4[%c6, %c0_39, %c0_40] : memref<9x32x64xf32, #tpu.memory_space<vmem>>, vector<1x32x64xf32>
    %43 = vector.shape_cast %42 : vector<1x32x64xf32> to vector<32x64xf32>
    %cst_41 = arith.constant dense<0.000000e+00> : vector<622x64xf32>
    %44 = tpu.matmul %41, %43, %cst_41 {dimension_numbers = #tpu.dot_dimension_numbers<[1], [0], [0], [1], [0, 0, 1, 1], [], []>} : vector<622x32xf32>, vector<32x64xf32>, vector<622x64xf32> -> vector<622x64xf32>
    %45 = arith.addf %40, %44 : vector<622x64xf32>
    %c53 = arith.constant 53 : index
    %c0_42 = arith.constant 0 : index
    %46 = vector.load %arg7[%c53, %c0_42] : memref<676x32xf32, #tpu.memory_space<vmem>>, vector<622x32xf32>
    %c7 = arith.constant 7 : index
    %c0_43 = arith.constant 0 : index
    %c0_44 = arith.constant 0 : index
    %47 = vector.load %arg4[%c7, %c0_43, %c0_44] : memref<9x32x64xf32, #tpu.memory_space<vmem>>, vector<1x32x64xf32>
    %48 = vector.shape_cast %47 : vector<1x32x64xf32> to vector<32x64xf32>
    %cst_45 = arith.constant dense<0.000000e+00> : vector<622x64xf32>
    %49 = tpu.matmul %46, %48, %cst_45 {dimension_numbers = #tpu.dot_dimension_numbers<[1], [0], [0], [1], [0, 0, 1, 1], [], []>} : vector<622x32xf32>, vector<32x64xf32>, vector<622x64xf32> -> vector<622x64xf32>
    %50 = arith.addf %45, %49 : vector<622x64xf32>
    %c54 = arith.constant 54 : index
    %c0_46 = arith.constant 0 : index
    %51 = vector.load %arg7[%c54, %c0_46] : memref<676x32xf32, #tpu.memory_space<vmem>>, vector<622x32xf32>
    %c8 = arith.constant 8 : index
    %c0_47 = arith.constant 0 : index
    %c0_48 = arith.constant 0 : index
    %52 = vector.load %arg4[%c8, %c0_47, %c0_48] : memref<9x32x64xf32, #tpu.memory_space<vmem>>, vector<1x32x64xf32>
    %53 = vector.shape_cast %52 : vector<1x32x64xf32> to vector<32x64xf32>
    %cst_49 = arith.constant dense<0.000000e+00> : vector<622x64xf32>
    %54 = tpu.matmul %51, %53, %cst_49 {dimension_numbers = #tpu.dot_dimension_numbers<[1], [0], [0], [1], [0, 0, 1, 1], [], []>} : vector<622x32xf32>, vector<32x64xf32>, vector<622x64xf32> -> vector<622x64xf32>
    %55 = arith.addf %50, %54 : vector<622x64xf32>
    %c0_50 = arith.constant 0 : index
    %c0_51 = arith.constant 0 : index
    %56 = vector.load %arg5[%c0_50, %c0_51] : memref<1x64xf32, #tpu.memory_space<vmem>>, vector<1x64xf32>
    %57 = vector.broadcast %56 : vector<1x64xf32> to vector<622x64xf32>
    %58 = arith.addf %55, %57 : vector<622x64xf32>
    %c0_52 = arith.constant 0 : index
    %c0_53 = arith.constant 0 : index
    %59 = vector.load %arg8[%c0_52, %c0_53] : memref<622x64xf32, #tpu.memory_space<vmem>>, vector<622x64xf32>
    tpu.vector_store %arg8[%c0_52, %c0_53], %58 {strides = array<i32>} : memref<622x64xf32, #tpu.memory_space<vmem>>, vector<622x64xf32>,
    %c0_54 = arith.constant 0 : index
    %c0_55 = arith.constant 0 : index
    %60 = tpu.strided_load %arg8[%c0_54, %c0_55] {strides = array<i32: 2, 1>} : memref<622x64xf32, #tpu.memory_space<vmem>>, vector<12x64xf32>
    %c1_56 = arith.constant 1 : index
    %c0_57 = arith.constant 0 : index
    %61 = tpu.strided_load %arg8[%c1_56, %c0_57] {strides = array<i32: 2, 1>} : memref<622x64xf32, #tpu.memory_space<vmem>>, vector<12x64xf32>
    %c26_58 = arith.constant 26 : index
    %c0_59 = arith.constant 0 : index
    %62 = tpu.strided_load %arg8[%c26_58, %c0_59] {strides = array<i32: 2, 1>} : memref<622x64xf32, #tpu.memory_space<vmem>>, vector<12x64xf32>
    %c27_60 = arith.constant 27 : index
    %c0_61 = arith.constant 0 : index
    %63 = tpu.strided_load %arg8[%c27_60, %c0_61] {strides = array<i32: 2, 1>} : memref<622x64xf32, #tpu.memory_space<vmem>>, vector<12x64xf32>
    %64 = arith.maximumf %60, %61 : vector<12x64xf32>
    %65 = arith.maximumf %62, %63 : vector<12x64xf32>
    %66 = arith.maximumf %64, %65 : vector<12x64xf32>
    %cst_62 = arith.constant 0.000000e+00 : f32
    %67 = vector.broadcast %cst_62 : f32 to vector<12x64xf32>
    %68 = arith.maximumf %66, %67 : vector<12x64xf32>
    %69 = arith.truncf %68 : vector<12x64xf32> to vector<12x64xbf16>
    %c0_63 = arith.constant 0 : index
    %c0_64 = arith.constant 0 : index
    %c0_65 = arith.constant 0 : index
    %c0_66 = arith.constant 0 : index
    %70 = vector.load %arg6[%c0_63, %c0_64, %c0_65, %c0_66] : memref<1x12x12x64xbf16, #tpu.memory_space<vmem>>, vector<1x1x12x64xbf16>
    %71 = vector.shape_cast %70 : vector<1x1x12x64xbf16> to vector<12x64xbf16>
    %72 = vector.shape_cast %69 : vector<12x64xbf16> to vector<1x1x12x64xbf16>
    tpu.vector_store %arg6[%c0_63, %c0_64, %c0_65, %c0_66], %72 {strides = array<i32>} : memref<1x12x12x64xbf16, #tpu.memory_space<vmem>>, vector<1x1x12x64xbf16>,
    %c52_67 = arith.constant 52 : index
    %c0_68 = arith.constant 0 : index
    %73 = tpu.strided_load %arg8[%c52_67, %c0_68] {strides = array<i32: 2, 1>} : memref<622x64xf32, #tpu.memory_space<vmem>>, vector<12x64xf32>
    %c53_69 = arith.constant 53 : index
    %c0_70 = arith.constant 0 : index
    %74 = tpu.strided_load %arg8[%c53_69, %c0_70] {strides = array<i32: 2, 1>} : memref<622x64xf32, #tpu.memory_space<vmem>>, vector<12x64xf32>
    %c78 = arith.constant 78 : index
    %c0_71 = arith.constant 0 : index
    %75 = tpu.strided_load %arg8[%c78, %c0_71] {strides = array<i32: 2, 1>} : memref<622x64xf32, #tpu.memory_space<vmem>>, vector<12x64xf32>
    %c79 = arith.constant 79 : index
    %c0_72 = arith.constant 0 : index
    %76 = tpu.strided_load %arg8[%c79, %c0_72] {strides = array<i32: 2, 1>} : memref<622x64xf32, #tpu.memory_space<vmem>>, vector<12x64xf32>
    %77 = arith.maximumf %73, %74 : vector<12x64xf32>
    %78 = arith.maximumf %75, %76 : vector<12x64xf32>
    %79 = arith.maximumf %77, %78 : vector<12x64xf32>
    %cst_73 = arith.constant 0.000000e+00 : f32
    %80 = vector.broadcast %cst_73 : f32 to vector<12x64xf32>
    %81 = arith.maximumf %79, %80 : vector<12x64xf32>
    %82 = arith.truncf %81 : vector<12x64xf32> to vector<12x64xbf16>
    %c0_74 = arith.constant 0 : index
    %c1_75 = arith.constant 1 : index
    %c0_76 = arith.constant 0 : index
    %c0_77 = arith.constant 0 : index
    %83 = vector.load %arg6[%c0_74, %c1_75, %c0_76, %c0_77] : memref<1x12x12x64xbf16, #tpu.memory_space<vmem>>, vector<1x1x12x64xbf16>
    %84 = vector.shape_cast %83 : vector<1x1x12x64xbf16> to vector<12x64xbf16>
    %85 = vector.shape_cast %82 : vector<12x64xbf16> to vector<1x1x12x64xbf16>
    tpu.vector_store %arg6[%c0_74, %c1_75, %c0_76, %c0_77], %85 {strides = array<i32>} : memref<1x12x12x64xbf16, #tpu.memory_space<vmem>>, vector<1x1x12x64xbf16>,
    %c104 = arith.constant 104 : index
    %c0_78 = arith.constant 0 : index
    %86 = tpu.strided_load %arg8[%c104, %c0_78] {strides = array<i32: 2, 1>} : memref<622x64xf32, #tpu.memory_space<vmem>>, vector<12x64xf32>
    %c105 = arith.constant 105 : index
    %c0_79 = arith.constant 0 : index
    %87 = tpu.strided_load %arg8[%c105, %c0_79] {strides = array<i32: 2, 1>} : memref<622x64xf32, #tpu.memory_space<vmem>>, vector<12x64xf32>
    %c130 = arith.constant 130 : index
    %c0_80 = arith.constant 0 : index
    %88 = tpu.strided_load %arg8[%c130, %c0_80] {strides = array<i32: 2, 1>} : memref<622x64xf32, #tpu.memory_space<vmem>>, vector<12x64xf32>
    %c131 = arith.constant 131 : index
    %c0_81 = arith.constant 0 : index
    %89 = tpu.strided_load %arg8[%c131, %c0_81] {strides = array<i32: 2, 1>} : memref<622x64xf32, #tpu.memory_space<vmem>>, vector<12x64xf32>
    %90 = arith.maximumf %86, %87 : vector<12x64xf32>
    %91 = arith.maximumf %88, %89 : vector<12x64xf32>
    %92 = arith.maximumf %90, %91 : vector<12x64xf32>
    %cst_82 = arith.constant 0.000000e+00 : f32
    %93 = vector.broadcast %cst_82 : f32 to vector<12x64xf32>
    %94 = arith.maximumf %92, %93 : vector<12x64xf32>
    %95 = arith.truncf %94 : vector<12x64xf32> to vector<12x64xbf16>
    %c0_83 = arith.constant 0 : index
    %c2_84 = arith.constant 2 : index
    %c0_85 = arith.constant 0 : index
    %c0_86 = arith.constant 0 : index
    %96 = vector.load %arg6[%c0_83, %c2_84, %c0_85, %c0_86] : memref<1x12x12x64xbf16, #tpu.memory_space<vmem>>, vector<1x1x12x64xbf16>
    %97 = vector.shape_cast %96 : vector<1x1x12x64xbf16> to vector<12x64xbf16>
    %98 = vector.shape_cast %95 : vector<12x64xbf16> to vector<1x1x12x64xbf16>
    tpu.vector_store %arg6[%c0_83, %c2_84, %c0_85, %c0_86], %98 {strides = array<i32>} : memref<1x12x12x64xbf16, #tpu.memory_space<vmem>>, vector<1x1x12x64xbf16>,
    %c156 = arith.constant 156 : index
    %c0_87 = arith.constant 0 : index
    %99 = tpu.strided_load %arg8[%c156, %c0_87] {strides = array<i32: 2, 1>} : memref<622x64xf32, #tpu.memory_space<vmem>>, vector<12x64xf32>
    %c157 = arith.constant 157 : index
    %c0_88 = arith.constant 0 : index
    %100 = tpu.strided_load %arg8[%c157, %c0_88] {strides = array<i32: 2, 1>} : memref<622x64xf32, #tpu.memory_space<vmem>>, vector<12x64xf32>
    %c182 = arith.constant 182 : index
    %c0_89 = arith.constant 0 : index
    %101 = tpu.strided_load %arg8[%c182, %c0_89] {strides = array<i32: 2, 1>} : memref<622x64xf32, #tpu.memory_space<vmem>>, vector<12x64xf32>
    %c183 = arith.constant 183 : index
    %c0_90 = arith.constant 0 : index
    %102 = tpu.strided_load %arg8[%c183, %c0_90] {strides = array<i32: 2, 1>} : memref<622x64xf32, #tpu.memory_space<vmem>>, vector<12x64xf32>
    %103 = arith.maximumf %99, %100 : vector<12x64xf32>
    %104 = arith.maximumf %101, %102 : vector<12x64xf32>
    %105 = arith.maximumf %103, %104 : vector<12x64xf32>
    %cst_91 = arith.constant 0.000000e+00 : f32
    %106 = vector.broadcast %cst_91 : f32 to vector<12x64xf32>
    %107 = arith.maximumf %105, %106 : vector<12x64xf32>
    %108 = arith.truncf %107 : vector<12x64xf32> to vector<12x64xbf16>
    %c0_92 = arith.constant 0 : index
    %c3_93 = arith.constant 3 : index
    %c0_94 = arith.constant 0 : index
    %c0_95 = arith.constant 0 : index
    %109 = vector.load %arg6[%c0_92, %c3_93, %c0_94, %c0_95] : memref<1x12x12x64xbf16, #tpu.memory_space<vmem>>, vector<1x1x12x64xbf16>
    %110 = vector.shape_cast %109 : vector<1x1x12x64xbf16> to vector<12x64xbf16>
    %111 = vector.shape_cast %108 : vector<12x64xbf16> to vector<1x1x12x64xbf16>
    tpu.vector_store %arg6[%c0_92, %c3_93, %c0_94, %c0_95], %111 {strides = array<i32>} : memref<1x12x12x64xbf16, #tpu.memory_space<vmem>>, vector<1x1x12x64xbf16>,
    %c208 = arith.constant 208 : index
    %c0_96 = arith.constant 0 : index
    %112 = tpu.strided_load %arg8[%c208, %c0_96] {strides = array<i32: 2, 1>} : memref<622x64xf32, #tpu.memory_space<vmem>>, vector<12x64xf32>
    %c209 = arith.constant 209 : index
    %c0_97 = arith.constant 0 : index
    %113 = tpu.strided_load %arg8[%c209, %c0_97] {strides = array<i32: 2, 1>} : memref<622x64xf32, #tpu.memory_space<vmem>>, vector<12x64xf32>
    %c234 = arith.constant 234 : index
    %c0_98 = arith.constant 0 : index
    %114 = tpu.strided_load %arg8[%c234, %c0_98] {strides = array<i32: 2, 1>} : memref<622x64xf32, #tpu.memory_space<vmem>>, vector<12x64xf32>
    %c235 = arith.constant 235 : index
    %c0_99 = arith.constant 0 : index
    %115 = tpu.strided_load %arg8[%c235, %c0_99] {strides = array<i32: 2, 1>} : memref<622x64xf32, #tpu.memory_space<vmem>>, vector<12x64xf32>
    %116 = arith.maximumf %112, %113 : vector<12x64xf32>
    %117 = arith.maximumf %114, %115 : vector<12x64xf32>
    %118 = arith.maximumf %116, %117 : vector<12x64xf32>
    %cst_100 = arith.constant 0.000000e+00 : f32
    %119 = vector.broadcast %cst_100 : f32 to vector<12x64xf32>
    %120 = arith.maximumf %118, %119 : vector<12x64xf32>
    %121 = arith.truncf %120 : vector<12x64xf32> to vector<12x64xbf16>
    %c0_101 = arith.constant 0 : index
    %c4_102 = arith.constant 4 : index
    %c0_103 = arith.constant 0 : index
    %c0_104 = arith.constant 0 : index
    %122 = vector.load %arg6[%c0_101, %c4_102, %c0_103, %c0_104] : memref<1x12x12x64xbf16, #tpu.memory_space<vmem>>, vector<1x1x12x64xbf16>
    %123 = vector.shape_cast %122 : vector<1x1x12x64xbf16> to vector<12x64xbf16>
    %124 = vector.shape_cast %121 : vector<12x64xbf16> to vector<1x1x12x64xbf16>
    tpu.vector_store %arg6[%c0_101, %c4_102, %c0_103, %c0_104], %124 {strides = array<i32>} : memref<1x12x12x64xbf16, #tpu.memory_space<vmem>>, vector<1x1x12x64xbf16>,
    %c260 = arith.constant 260 : index
    %c0_105 = arith.constant 0 : index
    %125 = tpu.strided_load %arg8[%c260, %c0_105] {strides = array<i32: 2, 1>} : memref<622x64xf32, #tpu.memory_space<vmem>>, vector<12x64xf32>
    %c261 = arith.constant 261 : index
    %c0_106 = arith.constant 0 : index
    %126 = tpu.strided_load %arg8[%c261, %c0_106] {strides = array<i32: 2, 1>} : memref<622x64xf32, #tpu.memory_space<vmem>>, vector<12x64xf32>
    %c286 = arith.constant 286 : index
    %c0_107 = arith.constant 0 : index
    %127 = tpu.strided_load %arg8[%c286, %c0_107] {strides = array<i32: 2, 1>} : memref<622x64xf32, #tpu.memory_space<vmem>>, vector<12x64xf32>
    %c287 = arith.constant 287 : index
    %c0_108 = arith.constant 0 : index
    %128 = tpu.strided_load %arg8[%c287, %c0_108] {strides = array<i32: 2, 1>} : memref<622x64xf32, #tpu.memory_space<vmem>>, vector<12x64xf32>
    %129 = arith.maximumf %125, %126 : vector<12x64xf32>
    %130 = arith.maximumf %127, %128 : vector<12x64xf32>
    %131 = arith.maximumf %129, %130 : vector<12x64xf32>
    %cst_109 = arith.constant 0.000000e+00 : f32
    %132 = vector.broadcast %cst_109 : f32 to vector<12x64xf32>
    %133 = arith.maximumf %131, %132 : vector<12x64xf32>
    %134 = arith.truncf %133 : vector<12x64xf32> to vector<12x64xbf16>
    %c0_110 = arith.constant 0 : index
    %c5_111 = arith.constant 5 : index
    %c0_112 = arith.constant 0 : index
    %c0_113 = arith.constant 0 : index
    %135 = vector.load %arg6[%c0_110, %c5_111, %c0_112, %c0_113] : memref<1x12x12x64xbf16, #tpu.memory_space<vmem>>, vector<1x1x12x64xbf16>
    %136 = vector.shape_cast %135 : vector<1x1x12x64xbf16> to vector<12x64xbf16>
    %137 = vector.shape_cast %134 : vector<12x64xbf16> to vector<1x1x12x64xbf16>
    tpu.vector_store %arg6[%c0_110, %c5_111, %c0_112, %c0_113], %137 {strides = array<i32>} : memref<1x12x12x64xbf16, #tpu.memory_space<vmem>>, vector<1x1x12x64xbf16>,
    %c312 = arith.constant 312 : index
    %c0_114 = arith.constant 0 : index
    %138 = tpu.strided_load %arg8[%c312, %c0_114] {strides = array<i32: 2, 1>} : memref<622x64xf32, #tpu.memory_space<vmem>>, vector<12x64xf32>
    %c313 = arith.constant 313 : index
    %c0_115 = arith.constant 0 : index
    %139 = tpu.strided_load %arg8[%c313, %c0_115] {strides = array<i32: 2, 1>} : memref<622x64xf32, #tpu.memory_space<vmem>>, vector<12x64xf32>
    %c338 = arith.constant 338 : index
    %c0_116 = arith.constant 0 : index
    %140 = tpu.strided_load %arg8[%c338, %c0_116] {strides = array<i32: 2, 1>} : memref<622x64xf32, #tpu.memory_space<vmem>>, vector<12x64xf32>
    %c339 = arith.constant 339 : index
    %c0_117 = arith.constant 0 : index
    %141 = tpu.strided_load %arg8[%c339, %c0_117] {strides = array<i32: 2, 1>} : memref<622x64xf32, #tpu.memory_space<vmem>>, vector<12x64xf32>
    %142 = arith.maximumf %138, %139 : vector<12x64xf32>
    %143 = arith.maximumf %140, %141 : vector<12x64xf32>
    %144 = arith.maximumf %142, %143 : vector<12x64xf32>
    %cst_118 = arith.constant 0.000000e+00 : f32
    %145 = vector.broadcast %cst_118 : f32 to vector<12x64xf32>
    %146 = arith.maximumf %144, %145 : vector<12x64xf32>
    %147 = arith.truncf %146 : vector<12x64xf32> to vector<12x64xbf16>
    %c0_119 = arith.constant 0 : index
    %c6_120 = arith.constant 6 : index
    %c0_121 = arith.constant 0 : index
    %c0_122 = arith.constant 0 : index
    %148 = vector.load %arg6[%c0_119, %c6_120, %c0_121, %c0_122] : memref<1x12x12x64xbf16, #tpu.memory_space<vmem>>, vector<1x1x12x64xbf16>
    %149 = vector.shape_cast %148 : vector<1x1x12x64xbf16> to vector<12x64xbf16>
    %150 = vector.shape_cast %147 : vector<12x64xbf16> to vector<1x1x12x64xbf16>
    tpu.vector_store %arg6[%c0_119, %c6_120, %c0_121, %c0_122], %150 {strides = array<i32>} : memref<1x12x12x64xbf16, #tpu.memory_space<vmem>>, vector<1x1x12x64xbf16>,
    %c364 = arith.constant 364 : index
    %c0_123 = arith.constant 0 : index
    %151 = tpu.strided_load %arg8[%c364, %c0_123] {strides = array<i32: 2, 1>} : memref<622x64xf32, #tpu.memory_space<vmem>>, vector<12x64xf32>
    %c365 = arith.constant 365 : index
    %c0_124 = arith.constant 0 : index
    %152 = tpu.strided_load %arg8[%c365, %c0_124] {strides = array<i32: 2, 1>} : memref<622x64xf32, #tpu.memory_space<vmem>>, vector<12x64xf32>
    %c390 = arith.constant 390 : index
    %c0_125 = arith.constant 0 : index
    %153 = tpu.strided_load %arg8[%c390, %c0_125] {strides = array<i32: 2, 1>} : memref<622x64xf32, #tpu.memory_space<vmem>>, vector<12x64xf32>
    %c391 = arith.constant 391 : index
    %c0_126 = arith.constant 0 : index
    %154 = tpu.strided_load %arg8[%c391, %c0_126] {strides = array<i32: 2, 1>} : memref<622x64xf32, #tpu.memory_space<vmem>>, vector<12x64xf32>
    %155 = arith.maximumf %151, %152 : vector<12x64xf32>
    %156 = arith.maximumf %153, %154 : vector<12x64xf32>
    %157 = arith.maximumf %155, %156 : vector<12x64xf32>
    %cst_127 = arith.constant 0.000000e+00 : f32
    %158 = vector.broadcast %cst_127 : f32 to vector<12x64xf32>
    %159 = arith.maximumf %157, %158 : vector<12x64xf32>
    %160 = arith.truncf %159 : vector<12x64xf32> to vector<12x64xbf16>
    %c0_128 = arith.constant 0 : index
    %c7_129 = arith.constant 7 : index
    %c0_130 = arith.constant 0 : index
    %c0_131 = arith.constant 0 : index
    %161 = vector.load %arg6[%c0_128, %c7_129, %c0_130, %c0_131] : memref<1x12x12x64xbf16, #tpu.memory_space<vmem>>, vector<1x1x12x64xbf16>
    %162 = vector.shape_cast %161 : vector<1x1x12x64xbf16> to vector<12x64xbf16>
    %163 = vector.shape_cast %160 : vector<12x64xbf16> to vector<1x1x12x64xbf16>
    tpu.vector_store %arg6[%c0_128, %c7_129, %c0_130, %c0_131], %163 {strides = array<i32>} : memref<1x12x12x64xbf16, #tpu.memory_space<vmem>>, vector<1x1x12x64xbf16>,
    %c416 = arith.constant 416 : index
    %c0_132 = arith.constant 0 : index
    %164 = tpu.strided_load %arg8[%c416, %c0_132] {strides = array<i32: 2, 1>} : memref<622x64xf32, #tpu.memory_space<vmem>>, vector<12x64xf32>
    %c417 = arith.constant 417 : index
    %c0_133 = arith.constant 0 : index
    %165 = tpu.strided_load %arg8[%c417, %c0_133] {strides = array<i32: 2, 1>} : memref<622x64xf32, #tpu.memory_space<vmem>>, vector<12x64xf32>
    %c442 = arith.constant 442 : index
    %c0_134 = arith.constant 0 : index
    %166 = tpu.strided_load %arg8[%c442, %c0_134] {strides = array<i32: 2, 1>} : memref<622x64xf32, #tpu.memory_space<vmem>>, vector<12x64xf32>
    %c443 = arith.constant 443 : index
    %c0_135 = arith.constant 0 : index
    %167 = tpu.strided_load %arg8[%c443, %c0_135] {strides = array<i32: 2, 1>} : memref<622x64xf32, #tpu.memory_space<vmem>>, vector<12x64xf32>
    %168 = arith.maximumf %164, %165 : vector<12x64xf32>
    %169 = arith.maximumf %166, %167 : vector<12x64xf32>
    %170 = arith.maximumf %168, %169 : vector<12x64xf32>
    %cst_136 = arith.constant 0.000000e+00 : f32
    %171 = vector.broadcast %cst_136 : f32 to vector<12x64xf32>
    %172 = arith.maximumf %170, %171 : vector<12x64xf32>
    %173 = arith.truncf %172 : vector<12x64xf32> to vector<12x64xbf16>
    %c0_137 = arith.constant 0 : index
    %c8_138 = arith.constant 8 : index
    %c0_139 = arith.constant 0 : index
    %c0_140 = arith.constant 0 : index
    %174 = vector.load %arg6[%c0_137, %c8_138, %c0_139, %c0_140] : memref<1x12x12x64xbf16, #tpu.memory_space<vmem>>, vector<1x1x12x64xbf16>
    %175 = vector.shape_cast %174 : vector<1x1x12x64xbf16> to vector<12x64xbf16>
    %176 = vector.shape_cast %173 : vector<12x64xbf16> to vector<1x1x12x64xbf16>
    tpu.vector_store %arg6[%c0_137, %c8_138, %c0_139, %c0_140], %176 {strides = array<i32>} : memref<1x12x12x64xbf16, #tpu.memory_space<vmem>>, vector<1x1x12x64xbf16>,
    %c468 = arith.constant 468 : index
    %c0_141 = arith.constant 0 : index
    %177 = tpu.strided_load %arg8[%c468, %c0_141] {strides = array<i32: 2, 1>} : memref<622x64xf32, #tpu.memory_space<vmem>>, vector<12x64xf32>
    %c469 = arith.constant 469 : index
    %c0_142 = arith.constant 0 : index
    %178 = tpu.strided_load %arg8[%c469, %c0_142] {strides = array<i32: 2, 1>} : memref<622x64xf32, #tpu.memory_space<vmem>>, vector<12x64xf32>
    %c494 = arith.constant 494 : index
    %c0_143 = arith.constant 0 : index
    %179 = tpu.strided_load %arg8[%c494, %c0_143] {strides = array<i32: 2, 1>} : memref<622x64xf32, #tpu.memory_space<vmem>>, vector<12x64xf32>
    %c495 = arith.constant 495 : index
    %c0_144 = arith.constant 0 : index
    %180 = tpu.strided_load %arg8[%c495, %c0_144] {strides = array<i32: 2, 1>} : memref<622x64xf32, #tpu.memory_space<vmem>>, vector<12x64xf32>
    %181 = arith.maximumf %177, %178 : vector<12x64xf32>
    %182 = arith.maximumf %179, %180 : vector<12x64xf32>
    %183 = arith.maximumf %181, %182 : vector<12x64xf32>
    %cst_145 = arith.constant 0.000000e+00 : f32
    %184 = vector.broadcast %cst_145 : f32 to vector<12x64xf32>
    %185 = arith.maximumf %183, %184 : vector<12x64xf32>
    %186 = arith.truncf %185 : vector<12x64xf32> to vector<12x64xbf16>
    %c0_146 = arith.constant 0 : index
    %c9 = arith.constant 9 : index
    %c0_147 = arith.constant 0 : index
    %c0_148 = arith.constant 0 : index
    %187 = vector.load %arg6[%c0_146, %c9, %c0_147, %c0_148] : memref<1x12x12x64xbf16, #tpu.memory_space<vmem>>, vector<1x1x12x64xbf16>
    %188 = vector.shape_cast %187 : vector<1x1x12x64xbf16> to vector<12x64xbf16>
    %189 = vector.shape_cast %186 : vector<12x64xbf16> to vector<1x1x12x64xbf16>
    tpu.vector_store %arg6[%c0_146, %c9, %c0_147, %c0_148], %189 {strides = array<i32>} : memref<1x12x12x64xbf16, #tpu.memory_space<vmem>>, vector<1x1x12x64xbf16>,
    %c520 = arith.constant 520 : index
    %c0_149 = arith.constant 0 : index
    %190 = tpu.strided_load %arg8[%c520, %c0_149] {strides = array<i32: 2, 1>} : memref<622x64xf32, #tpu.memory_space<vmem>>, vector<12x64xf32>
    %c521 = arith.constant 521 : index
    %c0_150 = arith.constant 0 : index
    %191 = tpu.strided_load %arg8[%c521, %c0_150] {strides = array<i32: 2, 1>} : memref<622x64xf32, #tpu.memory_space<vmem>>, vector<12x64xf32>
    %c546 = arith.constant 546 : index
    %c0_151 = arith.constant 0 : index
    %192 = tpu.strided_load %arg8[%c546, %c0_151] {strides = array<i32: 2, 1>} : memref<622x64xf32, #tpu.memory_space<vmem>>, vector<12x64xf32>
    %c547 = arith.constant 547 : index
    %c0_152 = arith.constant 0 : index
    %193 = tpu.strided_load %arg8[%c547, %c0_152] {strides = array<i32: 2, 1>} : memref<622x64xf32, #tpu.memory_space<vmem>>, vector<12x64xf32>
    %194 = arith.maximumf %190, %191 : vector<12x64xf32>
    %195 = arith.maximumf %192, %193 : vector<12x64xf32>
    %196 = arith.maximumf %194, %195 : vector<12x64xf32>
    %cst_153 = arith.constant 0.000000e+00 : f32
    %197 = vector.broadcast %cst_153 : f32 to vector<12x64xf32>
    %198 = arith.maximumf %196, %197 : vector<12x64xf32>
    %199 = arith.truncf %198 : vector<12x64xf32> to vector<12x64xbf16>
    %c0_154 = arith.constant 0 : index
    %c10 = arith.constant 10 : index
    %c0_155 = arith.constant 0 : index
    %c0_156 = arith.constant 0 : index
    %200 = vector.load %arg6[%c0_154, %c10, %c0_155, %c0_156] : memref<1x12x12x64xbf16, #tpu.memory_space<vmem>>, vector<1x1x12x64xbf16>
    %201 = vector.shape_cast %200 : vector<1x1x12x64xbf16> to vector<12x64xbf16>
    %202 = vector.shape_cast %199 : vector<12x64xbf16> to vector<1x1x12x64xbf16>
    tpu.vector_store %arg6[%c0_154, %c10, %c0_155, %c0_156], %202 {strides = array<i32>} : memref<1x12x12x64xbf16, #tpu.memory_space<vmem>>, vector<1x1x12x64xbf16>,
    %c572 = arith.constant 572 : index
    %c0_157 = arith.constant 0 : index
    %203 = tpu.strided_load %arg8[%c572, %c0_157] {strides = array<i32: 2, 1>} : memref<622x64xf32, #tpu.memory_space<vmem>>, vector<12x64xf32>
    %c573 = arith.constant 573 : index
    %c0_158 = arith.constant 0 : index
    %204 = tpu.strided_load %arg8[%c573, %c0_158] {strides = array<i32: 2, 1>} : memref<622x64xf32, #tpu.memory_space<vmem>>, vector<12x64xf32>
    %c598 = arith.constant 598 : index
    %c0_159 = arith.constant 0 : index
    %205 = tpu.strided_load %arg8[%c598, %c0_159] {strides = array<i32: 2, 1>} : memref<622x64xf32, #tpu.memory_space<vmem>>, vector<12x64xf32>
    %c599 = arith.constant 599 : index
    %c0_160 = arith.constant 0 : index
    %206 = tpu.strided_load %arg8[%c599, %c0_160] {strides = array<i32: 2, 1>} : memref<622x64xf32, #tpu.memory_space<vmem>>, vector<12x64xf32>
    %207 = arith.maximumf %203, %204 : vector<12x64xf32>
    %208 = arith.maximumf %205, %206 : vector<12x64xf32>
    %209 = arith.maximumf %207, %208 : vector<12x64xf32>
    %cst_161 = arith.constant 0.000000e+00 : f32
    %210 = vector.broadcast %cst_161 : f32 to vector<12x64xf32>
    %211 = arith.maximumf %209, %210 : vector<12x64xf32>
    %212 = arith.truncf %211 : vector<12x64xf32> to vector<12x64xbf16>
    %c0_162 = arith.constant 0 : index
    %c11 = arith.constant 11 : index
    %c0_163 = arith.constant 0 : index
    %c0_164 = arith.constant 0 : index
    %213 = vector.load %arg6[%c0_162, %c11, %c0_163, %c0_164] : memref<1x12x12x64xbf16, #tpu.memory_space<vmem>>, vector<1x1x12x64xbf16>
    %214 = vector.shape_cast %213 : vector<1x1x12x64xbf16> to vector<12x64xbf16>
    %215 = vector.shape_cast %212 : vector<12x64xbf16> to vector<1x1x12x64xbf16>
    tpu.vector_store %arg6[%c0_162, %c11, %c0_163, %c0_164], %215 {strides = array<i32>} : memref<1x12x12x64xbf16, #tpu.memory_space<vmem>>, vector<1x1x12x64xbf16>,
    return
  }
  func.func @transform_0(%arg0: i32) -> (i32, i32, i32) {
    %c0_i32 = arith.constant 0 : i32
    %c0_i32_0 = arith.constant 0 : i32
    %c0_i32_1 = arith.constant 0 : i32
    return %arg0, %c0_i32, %c0_i32_0 : i32, i32, i32
  }
  func.func @transform_1(%arg0: i32) -> (i32, i32) {
    %c0_i32 = arith.constant 0 : i32
    %c0_i32_0 = arith.constant 0 : i32
    %c0_i32_1 = arith.constant 0 : i32
    return %c0_i32, %c0_i32_0 : i32, i32
  }
  func.func @transform_2(%arg0: i32) -> (i32, i32) {
    %c0_i32 = arith.constant 0 : i32
    %c0_i32_0 = arith.constant 0 : i32
    %c0_i32_1 = arith.constant 0 : i32
    return %c0_i32, %c0_i32_0 : i32, i32
  }
  func.func @transform_3(%arg0: i32) -> (i32, i32, i32) {
    %c0_i32 = arith.constant 0 : i32
    %c0_i32_0 = arith.constant 0 : i32
    %c0_i32_1 = arith.constant 0 : i32
    %c0_i32_2 = arith.constant 0 : i32
    return %c0_i32, %c0_i32_0, %c0_i32_1 : i32, i32, i32
  }
  func.func @transform_4(%arg0: i32) -> (i32, i32) {
    %c0_i32 = arith.constant 0 : i32
    %c0_i32_0 = arith.constant 0 : i32
    %c0_i32_1 = arith.constant 0 : i32
    return %c0_i32, %c0_i32_0 : i32, i32
  }
  func.func @transform_5(%arg0: i32) -> (i32, i32, i32, i32) {
    %c0_i32 = arith.constant 0 : i32
    %c0_i32_0 = arith.constant 0 : i32
    %c0_i32_1 = arith.constant 0 : i32
    %c0_i32_2 = arith.constant 0 : i32
    return %arg0, %c0_i32, %c0_i32_0, %c0_i32_1 : i32, i32, i32, i32
  }
}

module attributes {stable_mosaic.version = 11 : i64} {
  func.func @_fc_fused_kernel(%arg0: i32, %arg1: memref<2x2304xbf16, #tpu.memory_space<vmem>>, %arg2: memref<2304x128xbf16, #tpu.memory_space<vmem>>, %arg3: memref<1x128xf32, #tpu.memory_space<vmem>>, %arg4: memref<128x10xf32, #tpu.memory_space<vmem>>, %arg5: memref<1x10xf32, #tpu.memory_space<vmem>>, %arg6: memref<2x10xf32, #tpu.memory_space<vmem>>, %arg7: memref<2x128xf32, #tpu.memory_space<vmem>>) attributes {dimension_semantics = [#tpu.dimension_semantics<arbitrary>], iteration_bounds = array<i64: 4>, scalar_prefetch = 0 : i64, scratch_operands = 1 : i64, tpu.core_type = #tpu.core_type<tc>, window_params = [{transform_indices = @transform_0, window_bounds = array<i64: 2, 2304>}, {transform_indices = @transform_1, window_bounds = array<i64: 2304, 128>}, {pipeline_mode = #tpu.pipeline_mode<synchronous>, transform_indices = @transform_2, window_bounds = array<i64: 1, 128>}, {pipeline_mode = #tpu.pipeline_mode<synchronous>, transform_indices = @transform_3, window_bounds = array<i64: 128, 10>}, {pipeline_mode = #tpu.pipeline_mode<synchronous>, transform_indices = @transform_4, window_bounds = array<i64: 1, 10>}, {pipeline_mode = #tpu.pipeline_mode<synchronous>, transform_indices = @transform_5, window_bounds = array<i64: 2, 10>}]} {
    %c0_i32 = arith.constant 0 : i32
    %0 = arith.cmpi eq, %arg0, %c0_i32 : i32
    %1 = arith.extui %0 : i1 to i32
    %c0_i32_0 = arith.constant 0 : i32
    %2 = arith.cmpi ne, %1, %c0_i32_0 : i32
    scf.if %2 {
      %cst_9 = arith.constant 0.000000e+00 : f32
      %12 = vector.broadcast %cst_9 : f32 to vector<2x128xf32>
      %c0_10 = arith.constant 0 : index
      %c0_11 = arith.constant 0 : index
      %13 = vector.load %arg7[%c0_10, %c0_11] : memref<2x128xf32, #tpu.memory_space<vmem>>, vector<2x128xf32>
      tpu.vector_store %arg7[%c0_10, %c0_11], %12 {strides = array<i32>} : memref<2x128xf32, #tpu.memory_space<vmem>>, vector<2x128xf32>,
    } else {
    }
    %c0 = arith.constant 0 : index
    %c0_1 = arith.constant 0 : index
    %3 = vector.load %arg7[%c0, %c0_1] : memref<2x128xf32, #tpu.memory_space<vmem>>, vector<2x128xf32>
    %c0_2 = arith.constant 0 : index
    %c0_3 = arith.constant 0 : index
    %4 = vector.load %arg1[%c0_2, %c0_3] : memref<2x2304xbf16, #tpu.memory_space<vmem>>, vector<2x2304xbf16>
    %c0_4 = arith.constant 0 : index
    %c0_5 = arith.constant 0 : index
    %5 = vector.load %arg2[%c0_4, %c0_5] : memref<2304x128xbf16, #tpu.memory_space<vmem>>, vector<2304x128xbf16>
    %cst = arith.constant dense<0.000000e+00> : vector<2x128xf32>
    %6 = tpu.matmul %4, %5, %cst {dimension_numbers = #tpu.dot_dimension_numbers<[1], [0], [0], [1], [0, 0, 1, 1], [], []>} : vector<2x2304xbf16>, vector<2304x128xbf16>, vector<2x128xf32> -> vector<2x128xf32>
    %7 = arith.addf %3, %6 : vector<2x128xf32>
    %c0_6 = arith.constant 0 : index
    %c0_7 = arith.constant 0 : index
    %8 = vector.load %arg7[%c0_6, %c0_7] : memref<2x128xf32, #tpu.memory_space<vmem>>, vector<2x128xf32>
    tpu.vector_store %arg7[%c0_6, %c0_7], %7 {strides = array<i32>} : memref<2x128xf32, #tpu.memory_space<vmem>>, vector<2x128xf32>,
    %c3_i32 = arith.constant 3 : i32
    %9 = arith.cmpi eq, %arg0, %c3_i32 : i32
    %10 = arith.extui %9 : i1 to i32
    %c0_i32_8 = arith.constant 0 : i32
    %11 = arith.cmpi ne, %10, %c0_i32_8 : i32
    scf.if %11 {
      %c0_9 = arith.constant 0 : index
      %c0_10 = arith.constant 0 : index
      %12 = vector.load %arg7[%c0_9, %c0_10] : memref<2x128xf32, #tpu.memory_space<vmem>>, vector<2x128xf32>
      %c0_11 = arith.constant 0 : index
      %c0_12 = arith.constant 0 : index
      %13 = vector.load %arg3[%c0_11, %c0_12] : memref<1x128xf32, #tpu.memory_space<vmem>>, vector<1x128xf32>
      %14 = vector.broadcast %13 : vector<1x128xf32> to vector<2x128xf32>
      %15 = arith.addf %12, %14 : vector<2x128xf32>
      %cst_13 = arith.constant 0.000000e+00 : f32
      %16 = vector.broadcast %cst_13 : f32 to vector<2x128xf32>
      %17 = arith.maximumf %15, %16 : vector<2x128xf32>
      %c0_14 = arith.constant 0 : index
      %c0_15 = arith.constant 0 : index
      %18 = vector.load %arg4[%c0_14, %c0_15] : memref<128x10xf32, #tpu.memory_space<vmem>>, vector<128x10xf32>
      %cst_16 = arith.constant dense<0.000000e+00> : vector<2x10xf32>
      %19 = tpu.matmul %17, %18, %cst_16 {dimension_numbers = #tpu.dot_dimension_numbers<[1], [0], [0], [1], [0, 0, 1, 1], [], []>} : vector<2x128xf32>, vector<128x10xf32>, vector<2x10xf32> -> vector<2x10xf32>
      %c0_17 = arith.constant 0 : index
      %c0_18 = arith.constant 0 : index
      %20 = vector.load %arg5[%c0_17, %c0_18] : memref<1x10xf32, #tpu.memory_space<vmem>>, vector<1x10xf32>
      %21 = vector.broadcast %20 : vector<1x10xf32> to vector<2x10xf32>
      %22 = arith.addf %19, %21 : vector<2x10xf32>
      %cst_19 = arith.constant dense<0xFF800000> : vector<2xf32>
      %23 = vector.multi_reduction <maximumf>, %22, %cst_19 [1] : vector<2x10xf32> to vector<2xf32>
      %24 = vector.shape_cast %23 : vector<2xf32> to vector<2x1xf32>
      %25 = vector.broadcast %24 : vector<2x1xf32> to vector<2x10xf32>
      %26 = arith.subf %22, %25 : vector<2x10xf32>
      %27 = math.exp %26 : vector<2x10xf32>
      %cst_20 = arith.constant dense<0.000000e+00> : vector<2xf32>
      %28 = vector.multi_reduction <add>, %27, %cst_20 [1] : vector<2x10xf32> to vector<2xf32>
      %29 = vector.shape_cast %28 : vector<2xf32> to vector<2x1xf32>
      %30 = math.log %29 : vector<2x1xf32>
      %31 = vector.broadcast %30 : vector<2x1xf32> to vector<2x10xf32>
      %32 = arith.subf %26, %31 : vector<2x10xf32>
      %c0_21 = arith.constant 0 : index
      %c0_22 = arith.constant 0 : index
      %33 = vector.load %arg6[%c0_21, %c0_22] : memref<2x10xf32, #tpu.memory_space<vmem>>, vector<2x10xf32>
      tpu.vector_store %arg6[%c0_21, %c0_22], %32 {strides = array<i32>} : memref<2x10xf32, #tpu.memory_space<vmem>>, vector<2x10xf32>,
    } else {
    }
    return
  }
  func.func @transform_0(%arg0: i32) -> (i32, i32) {
    %c0_i32 = arith.constant 0 : i32
    %c0_i32_0 = arith.constant 0 : i32
    return %c0_i32, %arg0 : i32, i32
  }
  func.func @transform_1(%arg0: i32) -> (i32, i32) {
    %c0_i32 = arith.constant 0 : i32
    %c0_i32_0 = arith.constant 0 : i32
    return %arg0, %c0_i32 : i32, i32
  }
  func.func @transform_2(%arg0: i32) -> (i32, i32) {
    %c0_i32 = arith.constant 0 : i32
    %c0_i32_0 = arith.constant 0 : i32
    %c0_i32_1 = arith.constant 0 : i32
    return %c0_i32, %c0_i32_0 : i32, i32
  }
  func.func @transform_3(%arg0: i32) -> (i32, i32) {
    %c0_i32 = arith.constant 0 : i32
    %c0_i32_0 = arith.constant 0 : i32
    %c0_i32_1 = arith.constant 0 : i32
    return %c0_i32, %c0_i32_0 : i32, i32
  }
  func.func @transform_4(%arg0: i32) -> (i32, i32) {
    %c0_i32 = arith.constant 0 : i32
    %c0_i32_0 = arith.constant 0 : i32
    %c0_i32_1 = arith.constant 0 : i32
    return %c0_i32, %c0_i32_0 : i32, i32
  }
  func.func @transform_5(%arg0: i32) -> (i32, i32) {
    %c0_i32 = arith.constant 0 : i32
    %c0_i32_0 = arith.constant 0 : i32
    %c0_i32_1 = arith.constant 0 : i32
    return %c0_i32, %c0_i32_0 : i32, i32
  }
}

</mosaic_0001>

<llo_original>
// kernel: net_forward.3
$region0: #{net_forward.3}
  #allocation0 [shape = 'u32[]', space=smem, size = 0x4, offset = 0x4, fixed_abs, tag = 'smem constant byte address 0x4 - core index']
  #allocation1 [shape = 'u32[144,128]{1,0:T(1,128)}', space=vmem, size = 0x12000, scoped, tag = 'internal scratch']
  #allocation2 [shape = 'f32[2,128]{1,0:T(2,128)}', space=vmem, size = 0x400, scoped, tag = 'scratch operand']
  %s0 = inlined_call_operand.vmem [shape: bf16[2,9216], index: 0, kind: input, shape index: {}]
  %s1 = inlined_call_operand.vmem [shape: bf16[9216,128], index: 1, kind: input, shape index: {}]
  %s2 = inlined_call_operand.vmem [shape: f32[1,128], index: 2, kind: input, shape index: {}]
  %s3 = inlined_call_operand.vmem [shape: f32[128,10], index: 3, kind: input, shape index: {}]
  %s4 = inlined_call_operand.vmem [shape: f32[1,10], index: 4, kind: input, shape index: {}]
  %s5 = inlined_call_operand.hbm [shape: f32[2,10], index: 5, kind: output, shape index: {}]
  %s6 = sld [smem:[#allocation0]]
  $region61: #{net_forward.3} parent=0
    _
  %s8 = ssub.s32 1, %s6
  %s9 = scalar_select 0, %s8, %s6
  $region1: #{net_forward.3} parent=0
    #allocation3 [shape = 'u8[1024]{0}', space=vmem, size = 0x400, scoped, tag = 'output window, operand 0, single buffered']
    #allocation4 [shape = 's32[2]{0}', space=sflag, size = 0x8, scoped, tag = 'scoped memory for net_forward.3']
    %10 = vsyncpa [#allocation4], 0
    loop: start=0, step=1, limit=6
    $region2: #{net_forward.3} parent=1 // loop_pre_header
      _
    $region3: #{net_forward.3} parent=1 // loop_header
      %s12 = sphi 0, %s16
      %p13 = scmp.ge.s32.totalorder %s12, 6
      %s22 = sphi 0, %s24
      %s25 = sphi 0, %s22
      %s26 = sphi 0, %s25
      %s42 = sphi 0, %s26
      %s48 = sphi 0, %s50
      %s51 = sphi 0, %s48
      %s52 = sphi 0, %s51
      %s68 = sphi 0, %s52
      %s72 = sphi 0, %s72
      %s74 = sphi 0, %s72
      %s75 = sphi 0, %s74
      %s89 = sphi 0, %s75
      %s93 = sphi 0, %s93
      %s95 = sphi 0, %s93
      %s96 = sphi 0, %s95
      %s110 = sphi 0, %s96
      %s114 = sphi 0, %s114
      %s116 = sphi 0, %s114
      %s117 = sphi 0, %s116
      %s131 = sphi 0, %s117
      %s135 = sphi 0, %s135
      %s137 = sphi 0, %s135
      %s138 = sphi 0, %s137
      %s152 = sphi 0, %s138
    $region4: #{net_forward.3} parent=1 // loop_header_branch
      %15 = sbr.rel (%p13) target = $region8
    $region5: #{net_forward.3} parent=1 // loop_body
      %s17 = ssub.s32 %s12, 1
      %s18 = ssub.s32 %s12, 2
      %s19 = sadd.s32 %s12, 1
      %s20 = ssub.s32 %s12, %s19
      %p21 = scmp.eq.s32.totalorder %s20, 0
      %s23 = sadd.s32 %s22, 1
      %s24 = scalar_select %p21, %s22, %s23
      %p27 = pneg %p21
      %p28 = scmp.eq.s32.totalorder %s12, 3
      %p29 = por %p27, %p28
      %p30 = scmp.ne.s32.totalorder %s22, %s25
      %p31 = scmp.eq.s32.totalorder %s12, 0
      %p32 = por %p30, %p31
      %p33 = scmp.ne.s32.totalorder %s22, %s25
      %p34 = scmp.eq.s32.totalorder %s17, 3
      %p35 = por %p33, %p34
      %p36 = scmp.ne.s32.totalorder %s25, %s26
      %p37 = scmp.eq.s32.totalorder %s17, 0
      %p38 = por %p36, %p37
      %p39 = scmp.ne.s32.totalorder %s25, %s26
      %p40 = scmp.eq.s32.totalorder %s18, 3
      %p41 = por %p39, %p40
      %p43 = scmp.ne.s32.totalorder %s26, %s42
      %p44 = scmp.eq.s32.totalorder %s18, 0
      %p45 = por %p43, %p44
      %s46 = ssub.s32 %s12, %s19
      %p47 = scmp.eq.s32.totalorder %s46, 0
      %s49 = sadd.s32 %s48, 1
      %s50 = scalar_select %p47, %s48, %s49
      %p53 = pneg %p47
      %p54 = scmp.eq.s32.totalorder %s12, 3
      %p55 = por %p53, %p54
      %p56 = scmp.ne.s32.totalorder %s48, %s51
      %p57 = scmp.eq.s32.totalorder %s12, 0
      %p58 = por %p56, %p57
      %p59 = scmp.ne.s32.totalorder %s48, %s51
      %p60 = scmp.eq.s32.totalorder %s17, 3
      %p61 = por %p59, %p60
      %p62 = scmp.ne.s32.totalorder %s51, %s52
      %p63 = scmp.eq.s32.totalorder %s17, 0
      %p64 = por %p62, %p63
      %p65 = scmp.ne.s32.totalorder %s51, %s52
      %p66 = scmp.eq.s32.totalorder %s18, 3
      %p67 = por %p65, %p66
      %p69 = scmp.ne.s32.totalorder %s52, %s68
      %p70 = scmp.eq.s32.totalorder %s18, 0
      %p71 = por %p69, %p70
      %s73 = sadd.s32 %s72, 1
      %p76 = scmp.eq.s32.totalorder %s12, 3
      %p77 = scmp.ne.s32.totalorder %s72, %s74
      %p78 = scmp.eq.s32.totalorder %s12, 0
      %p79 = por %p77, %p78
      %p80 = scmp.ne.s32.totalorder %s72, %s74
      %p81 = scmp.eq.s32.totalorder %s17, 3
      %p82 = por %p80, %p81
      %p83 = scmp.ne.s32.totalorder %s74, %s75
      %p84 = scmp.eq.s32.totalorder %s17, 0
      %p85 = por %p83, %p84
      %p86 = scmp.ne.s32.totalorder %s74, %s75
      %p87 = scmp.eq.s32.totalorder %s18, 3
      %p88 = por %p86, %p87
      %p90 = scmp.ne.s32.totalorder %s75, %s89
      %p91 = scmp.eq.s32.totalorder %s18, 0
      %p92 = por %p90, %p91
      %s94 = sadd.s32 %s93, 1
      %p97 = scmp.eq.s32.totalorder %s12, 3
      %p98 = scmp.ne.s32.totalorder %s93, %s95
      %p99 = scmp.eq.s32.totalorder %s12, 0
      %p100 = por %p98, %p99
      %p101 = scmp.ne.s32.totalorder %s93, %s95
      %p102 = scmp.eq.s32.totalorder %s17, 3
      %p103 = por %p101, %p102
      %p104 = scmp.ne.s32.totalorder %s95, %s96
      %p105 = scmp.eq.s32.totalorder %s17, 0
      %p106 = por %p104, %p105
      %p107 = scmp.ne.s32.totalorder %s95, %s96
      %p108 = scmp.eq.s32.totalorder %s18, 3
      %p109 = por %p107, %p108
      %p111 = scmp.ne.s32.totalorder %s96, %s110
      %p112 = scmp.eq.s32.totalorder %s18, 0
      %p113 = por %p111, %p112
      %s115 = sadd.s32 %s114, 1
      %p118 = scmp.eq.s32.totalorder %s12, 3
      %p119 = scmp.ne.s32.totalorder %s114, %s116
      %p120 = scmp.eq.s32.totalorder %s12, 0
      %p121 = por %p119, %p120
      %p122 = scmp.ne.s32.totalorder %s114, %s116
      %p123 = scmp.eq.s32.totalorder %s17, 3
      %p124 = por %p122, %p123
      %p125 = scmp.ne.s32.totalorder %s116, %s117
      %p126 = scmp.eq.s32.totalorder %s17, 0
      %p127 = por %p125, %p126
      %p128 = scmp.ne.s32.totalorder %s116, %s117
      %p129 = scmp.eq.s32.totalorder %s18, 3
      %p130 = por %p128, %p129
      %p132 = scmp.ne.s32.totalorder %s117, %s131
      %p133 = scmp.eq.s32.totalorder %s18, 0
      %p134 = por %p132, %p133
      %s136 = sadd.s32 %s135, 1
      %p139 = scmp.eq.s32.totalorder %s12, 3
      %p140 = scmp.ne.s32.totalorder %s135, %s137
      %p141 = scmp.eq.s32.totalorder %s12, 0
      %p142 = por %p140, %p141
      %p143 = scmp.ne.s32.totalorder %s135, %s137
      %p144 = scmp.eq.s32.totalorder %s17, 3
      %p145 = por %p143, %p144
      %p146 = scmp.ne.s32.totalorder %s137, %s138
      %p147 = scmp.eq.s32.totalorder %s17, 0
      %p148 = por %p146, %p147
      %p149 = scmp.ne.s32.totalorder %s137, %s138
      %p150 = scmp.eq.s32.totalorder %s18, 3
      %p151 = por %p149, %p150
      %p153 = scmp.ne.s32.totalorder %s138, %s152
      %p154 = scmp.eq.s32.totalorder %s18, 0
      %p155 = por %p153, %p154
      %p156 = scmp.le.s32.totalorder 1, %s12
      %p157 = scmp.lt.s32.totalorder %s12, 5
      %p158 = pnand %p156, %p157
      %p159 = pneg %p158
      // Predicated region
      $region9: #{net_forward.3} parent=5 // pred_check
        _
      $region10: #{net_forward.3} parent=5 // pred_check_branch
        %161 = sbr.rel (%p158) target = $region12
      $region11: #{net_forward.3} parent=5 // pred_region
        %s162 = ssub.s32 %s12, 1
        // Predicated region
        $region13: #{net_forward.3} parent=11 // pred_check
          %p163 = pneg %p85
        $region14: #{net_forward.3} parent=11 // pred_check_branch
          %165 = sbr.rel (%p163) target = $region16
        $region15: #{net_forward.3} parent=11 // pred_region
          _
        $region16: #{net_forward.3} parent=11 // pred_fallthru
          _
        // Predicated region
        $region17: #{net_forward.3} parent=11 // pred_check
          %p166 = pneg %p106
        $region18: #{net_forward.3} parent=11 // pred_check_branch
          %168 = sbr.rel (%p166) target = $region20
        $region19: #{net_forward.3} parent=11 // pred_region
          _
        $region20: #{net_forward.3} parent=11 // pred_fallthru
          _
        // Predicated region
        $region21: #{net_forward.3} parent=11 // pred_check
          %p169 = pneg %p127
        $region22: #{net_forward.3} parent=11 // pred_check_branch
          %171 = sbr.rel (%p169) target = $region24
        $region23: #{net_forward.3} parent=11 // pred_region
          _
        $region24: #{net_forward.3} parent=11 // pred_fallthru
          _
      $region12: #{net_forward.3} parent=5 // pred_fallthru
        _
      %p172 = scmp.lt.s32.totalorder %s12, 4
      // Predicated region
      $region25: #{net_forward.3} parent=5 // pred_check
        %p173 = pneg %p172
      $region26: #{net_forward.3} parent=5 // pred_check_branch
        %175 = sbr.rel (%p173) target = $region28
      $region27: #{net_forward.3} parent=5 // pred_region
        // Predicated region
        $region29: #{net_forward.3} parent=27 // pred_check
          %p176 = pneg %p32
        $region30: #{net_forward.3} parent=27 // pred_check_branch
          %178 = sbr.rel (%p176) target = $region32
        $region31: #{net_forward.3} parent=27 // pred_region
          %s179 = smul.u32 18, %s12
          %p180 = scmp.lt.s32.totalorder %s179, 71
          %s181 = scalar_select %p180, %s179, 71
          %s182 = scalar_lea.vmem %s0, %s181
          %s183 = smul.u32 18, %s12
        $region32: #{net_forward.3} parent=27 // pred_fallthru
          _
        // Predicated region
        $region33: #{net_forward.3} parent=27 // pred_check
          %p184 = pneg %p58
        $region34: #{net_forward.3} parent=27 // pred_check_branch
          %186 = sbr.rel (%p184) target = $region36
        $region35: #{net_forward.3} parent=27 // pred_region
          %s187 = smul.u32 288, %s12
          %p188 = scmp.lt.s32.totalorder %s187, 1151
          %s189 = scalar_select %p188, %s187, 1151
          %s190 = smul.addr %s189, 4
          %s191 = scalar_lea.vmem %s1, %s190
          %s192 = smul.u32 288, %s12
        $region36: #{net_forward.3} parent=27 // pred_fallthru
          _
      $region28: #{net_forward.3} parent=5 // pred_fallthru
        _
      %p193 = scmp.le.s32.totalorder 1, %s12
      %p194 = scmp.lt.s32.totalorder %s12, 5
      %p195 = pnand %p193, %p194
      %p196 = pneg %p195
      // Predicated region
      $region37: #{net_forward.3} parent=5 // pred_check
        _
      $region38: #{net_forward.3} parent=5 // pred_check_branch
        %198 = sbr.rel (%p195) target = $region40
      $region39: #{net_forward.3} parent=5 // pred_region
        %s199 = ssub.s32 %s12, 1
        %s200 = smul.u32 18, %s17
        %p201 = scmp.lt.s32.totalorder %s200, 71
        %s202 = scalar_select %p201, %s200, 71
        %s203 = scalar_lea.vmem %s0, %s202
        %p204 = pneg %p38
        %p205 = pneg %p35
        %s206 = smul.u32 288, %s17
        %p207 = scmp.lt.s32.totalorder %s206, 1151
        %s208 = scalar_select %p207, %s206, 1151
        %s209 = smul.addr %s208, 4
        %s210 = scalar_lea.vmem %s1, %s209
        %p211 = pneg %p64
        %p212 = pneg %p61
        %p213 = pneg %p85
        %p214 = pneg %p82
        %p215 = pneg %p106
        %p216 = pneg %p103
        %p217 = pneg %p127
        %p218 = pneg %p124
        %p219 = pneg %p148
        %p220 = pneg %p145
        %s221 = smul.u32 18, %s17
        %p222 = scmp.lt.s32.totalorder %s221, 71
        %s223 = scalar_select %p222, %s221, 71
        %s224 = scalar_lea.vmem %s0, %s223
        %s225 = smul.u32 18, %s17
        %s226 = smul.u32 288, %s17
        %p227 = scmp.lt.s32.totalorder %s226, 1151
        %s228 = scalar_select %p227, %s226, 1151
        %s229 = smul.addr %s228, 4
        %s230 = scalar_lea.vmem %s1, %s229
        %s231 = smul.u32 288, %s17
        %p233 = scmp.eq.s32.totalorder %s17, 0
        // Predicated region
        $region41: #{net_forward.3} parent=39 // pred_check
          %p234 = pneg %p233
        $region42: #{net_forward.3} parent=39 // pred_check_branch
          %236 = sbr.rel (%p234) target = $region44
        $region43: #{net_forward.3} parent=39 // pred_region
          %237 = vst [vmem:[#allocation2] sm:$0x3] 0.0
        $region44: #{net_forward.3} parent=39 // pred_fallthru
          _
        %v238 = vld [vmem:[#allocation2] sm:$0x3]
        %v239 = vld [vmem:[%s224] sm:$0xff]
        %v240 = vld [vmem:[%s224 + $0x8] sm:$0xff]
        %v241 = vld [vmem:[%s224 + $0x10] sm:$0x3]
        %v242 = vld [vmem:[%s230] sm:$0xf]
        %v243 = vld [vmem:[%s230 + $0x4] sm:$0xf]
        %v244 = vld [vmem:[%s230 + $0x8] sm:$0xf]
        %v245 = vld [vmem:[%s230 + $0xc] sm:$0xf]
        %v246 = vld [vmem:[%s230 + $0x10] sm:$0xf]
        %v247 = vld [vmem:[%s230 + $0x14] sm:$0xf]
        %v248 = vld [vmem:[%s230 + $0x18] sm:$0xf]
        %v249 = vld [vmem:[%s230 + $0x1c] sm:$0xf]
        %v250 = vld [vmem:[%s230 + $0x20] sm:$0xf]
        %v251 = vld [vmem:[%s230 + $0x24] sm:$0xf]
        %v252 = vld [vmem:[%s230 + $0x28] sm:$0xf]
        %v253 = vld [vmem:[%s230 + $0x2c] sm:$0xf]
        %v254 = vld [vmem:[%s230 + $0x30] sm:$0xf]
        %v255 = vld [vmem:[%s230 + $0x34] sm:$0xf]
        %v256 = vld [vmem:[%s230 + $0x38] sm:$0xf]
        %v257 = vld [vmem:[%s230 + $0x3c] sm:$0xf]
        %v258 = vld [vmem:[%s230 + $0x40] sm:$0xf]
        %v259 = vld [vmem:[%s230 + $0x44] sm:$0xf]
        %v260 = vld [vmem:[%s230 + $0x48] sm:$0xf]
        %v261 = vld [vmem:[%s230 + $0x4c] sm:$0xf]
        %v262 = vld [vmem:[%s230 + $0x50] sm:$0xf]
        %v263 = vld [vmem:[%s230 + $0x54] sm:$0xf]
        %v264 = vld [vmem:[%s230 + $0x58] sm:$0xf]
        %v265 = vld [vmem:[%s230 + $0x5c] sm:$0xf]
        %v266 = vld [vmem:[%s230 + $0x60] sm:$0xf]
        %v267 = vld [vmem:[%s230 + $0x64] sm:$0xf]
        %v268 = vld [vmem:[%s230 + $0x68] sm:$0xf]
        %v269 = vld [vmem:[%s230 + $0x6c] sm:$0xf]
        %v270 = vld [vmem:[%s230 + $0x70] sm:$0xf]
        %v271 = vld [vmem:[%s230 + $0x74] sm:$0xf]
        %v272 = vld [vmem:[%s230 + $0x78] sm:$0xf]
        %v273 = vld [vmem:[%s230 + $0x7c] sm:$0xf]
        %v274 = vld [vmem:[%s230 + $0x80] sm:$0xf]
        %v275 = vld [vmem:[%s230 + $0x84] sm:$0xf]
        %v276 = vld [vmem:[%s230 + $0x88] sm:$0xf]
        %v277 = vld [vmem:[%s230 + $0x8c] sm:$0xf]
        %v278 = vld [vmem:[%s230 + $0x90] sm:$0xf]
        %v279 = vld [vmem:[%s230 + $0x94] sm:$0xf]
        %v280 = vld [vmem:[%s230 + $0x98] sm:$0xf]
        %v281 = vld [vmem:[%s230 + $0x9c] sm:$0xf]
        %v282 = vld [vmem:[%s230 + $0xa0] sm:$0xf]
        %v283 = vld [vmem:[%s230 + $0xa4] sm:$0xf]
        %v284 = vld [vmem:[%s230 + $0xa8] sm:$0xf]
        %v285 = vld [vmem:[%s230 + $0xac] sm:$0xf]
        %v286 = vld [vmem:[%s230 + $0xb0] sm:$0xf]
        %v287 = vld [vmem:[%s230 + $0xb4] sm:$0xf]
        %v288 = vld [vmem:[%s230 + $0xb8] sm:$0xf]
        %v289 = vld [vmem:[%s230 + $0xbc] sm:$0xf]
        %v290 = vld [vmem:[%s230 + $0xc0] sm:$0xf]
        %v291 = vld [vmem:[%s230 + $0xc4] sm:$0xf]
        %v292 = vld [vmem:[%s230 + $0xc8] sm:$0xf]
        %v293 = vld [vmem:[%s230 + $0xcc] sm:$0xf]
        %v294 = vld [vmem:[%s230 + $0xd0] sm:$0xf]
        %v295 = vld [vmem:[%s230 + $0xd4] sm:$0xf]
        %v296 = vld [vmem:[%s230 + $0xd8] sm:$0xf]
        %v297 = vld [vmem:[%s230 + $0xdc] sm:$0xf]
        %v298 = vld [vmem:[%s230 + $0xe0] sm:$0xf]
        %v299 = vld [vmem:[%s230 + $0xe4] sm:$0xf]
        %v300 = vld [vmem:[%s230 + $0xe8] sm:$0xf]
        %v301 = vld [vmem:[%s230 + $0xec] sm:$0xf]
        %v302 = vld [vmem:[%s230 + $0xf0] sm:$0xf]
        %v303 = vld [vmem:[%s230 + $0xf4] sm:$0xf]
        %v304 = vld [vmem:[%s230 + $0xf8] sm:$0xf]
        %v305 = vld [vmem:[%s230 + $0xfc] sm:$0xf]
        %v306 = vld [vmem:[%s230 + $0x100] sm:$0xf]
        %v307 = vld [vmem:[%s230 + $0x104] sm:$0xf]
        %v308 = vld [vmem:[%s230 + $0x108] sm:$0xf]
        %v309 = vld [vmem:[%s230 + $0x10c] sm:$0xf]
        %v310 = vld [vmem:[%s230 + $0x110] sm:$0xf]
        %v311 = vld [vmem:[%s230 + $0x114] sm:$0xf]
        %v312 = vld [vmem:[%s230 + $0x118] sm:$0xf]
        %v313 = vld [vmem:[%s230 + $0x11c] sm:$0xf]
        %v314 = vld [vmem:[%s230 + $0x120] sm:$0xf]
        %v315 = vld [vmem:[%s230 + $0x124] sm:$0xf]
        %v316 = vld [vmem:[%s230 + $0x128] sm:$0xf]
        %v317 = vld [vmem:[%s230 + $0x12c] sm:$0xf]
        %v318 = vld [vmem:[%s230 + $0x130] sm:$0xf]
        %v319 = vld [vmem:[%s230 + $0x134] sm:$0xf]
        %v320 = vld [vmem:[%s230 + $0x138] sm:$0xf]
        %v321 = vld [vmem:[%s230 + $0x13c] sm:$0xf]
        %v322 = vld [vmem:[%s230 + $0x140] sm:$0xf]
        %v323 = vld [vmem:[%s230 + $0x144] sm:$0xf]
        %v324 = vld [vmem:[%s230 + $0x148] sm:$0xf]
        %v325 = vld [vmem:[%s230 + $0x14c] sm:$0xf]
        %v326 = vld [vmem:[%s230 + $0x150] sm:$0xf]
        %v327 = vld [vmem:[%s230 + $0x154] sm:$0xf]
        %v328 = vld [vmem:[%s230 + $0x158] sm:$0xf]
        %v329 = vld [vmem:[%s230 + $0x15c] sm:$0xf]
        %v330 = vld [vmem:[%s230 + $0x160] sm:$0xf]
        %v331 = vld [vmem:[%s230 + $0x164] sm:$0xf]
        %v332 = vld [vmem:[%s230 + $0x168] sm:$0xf]
        %v333 = vld [vmem:[%s230 + $0x16c] sm:$0xf]
        %v334 = vld [vmem:[%s230 + $0x170] sm:$0xf]
        %v335 = vld [vmem:[%s230 + $0x174] sm:$0xf]
        %v336 = vld [vmem:[%s230 + $0x178] sm:$0xf]
        %v337 = vld [vmem:[%s230 + $0x17c] sm:$0xf]
        %v338 = vld [vmem:[%s230 + $0x180] sm:$0xf]
        %v339 = vld [vmem:[%s230 + $0x184] sm:$0xf]
        %v340 = vld [vmem:[%s230 + $0x188] sm:$0xf]
        %v341 = vld [vmem:[%s230 + $0x18c] sm:$0xf]
        %v342 = vld [vmem:[%s230 + $0x190] sm:$0xf]
        %v343 = vld [vmem:[%s230 + $0x194] sm:$0xf]
        %v344 = vld [vmem:[%s230 + $0x198] sm:$0xf]
        %v345 = vld [vmem:[%s230 + $0x19c] sm:$0xf]
        %v346 = vld [vmem:[%s230 + $0x1a0] sm:$0xf]
        %v347 = vld [vmem:[%s230 + $0x1a4] sm:$0xf]
        %v348 = vld [vmem:[%s230 + $0x1a8] sm:$0xf]
        %v349 = vld [vmem:[%s230 + $0x1ac] sm:$0xf]
        %v350 = vld [vmem:[%s230 + $0x1b0] sm:$0xf]
        %v351 = vld [vmem:[%s230 + $0x1b4] sm:$0xf]
        %v352 = vld [vmem:[%s230 + $0x1b8] sm:$0xf]
        %v353 = vld [vmem:[%s230 + $0x1bc] sm:$0xf]
        %v354 = vld [vmem:[%s230 + $0x1c0] sm:$0xf]
        %v355 = vld [vmem:[%s230 + $0x1c4] sm:$0xf]
        %v356 = vld [vmem:[%s230 + $0x1c8] sm:$0xf]
        %v357 = vld [vmem:[%s230 + $0x1cc] sm:$0xf]
        %v358 = vld [vmem:[%s230 + $0x1d0] sm:$0xf]
        %v359 = vld [vmem:[%s230 + $0x1d4] sm:$0xf]
        %v360 = vld [vmem:[%s230 + $0x1d8] sm:$0xf]
        %v361 = vld [vmem:[%s230 + $0x1dc] sm:$0xf]
        %v362 = vld [vmem:[%s230 + $0x1e0] sm:$0xf]
        %v363 = vld [vmem:[%s230 + $0x1e4] sm:$0xf]
        %v364 = vld [vmem:[%s230 + $0x1e8] sm:$0xf]
        %v365 = vld [vmem:[%s230 + $0x1ec] sm:$0xf]
        %v366 = vld [vmem:[%s230 + $0x1f0] sm:$0xf]
        %v367 = vld [vmem:[%s230 + $0x1f4] sm:$0xf]
        %v368 = vld [vmem:[%s230 + $0x1f8] sm:$0xf]
        %v369 = vld [vmem:[%s230 + $0x1fc] sm:$0xf]
        %v370 = vld [vmem:[%s230 + $0x200] sm:$0xf]
        %v371 = vld [vmem:[%s230 + $0x204] sm:$0xf]
        %v372 = vld [vmem:[%s230 + $0x208] sm:$0xf]
        %v373 = vld [vmem:[%s230 + $0x20c] sm:$0xf]
        %v374 = vld [vmem:[%s230 + $0x210] sm:$0xf]
        %v375 = vld [vmem:[%s230 + $0x214] sm:$0xf]
        %v376 = vld [vmem:[%s230 + $0x218] sm:$0xf]
        %v377 = vld [vmem:[%s230 + $0x21c] sm:$0xf]
        %v378 = vld [vmem:[%s230 + $0x220] sm:$0xf]
        %v379 = vld [vmem:[%s230 + $0x224] sm:$0xf]
        %v380 = vld [vmem:[%s230 + $0x228] sm:$0xf]
        %v381 = vld [vmem:[%s230 + $0x22c] sm:$0xf]
        %v382 = vld [vmem:[%s230 + $0x230] sm:$0xf]
        %v383 = vld [vmem:[%s230 + $0x234] sm:$0xf]
        %v384 = vld [vmem:[%s230 + $0x238] sm:$0xf]
        %v385 = vld [vmem:[%s230 + $0x23c] sm:$0xf]
        %v386 = vld [vmem:[%s230 + $0x240] sm:$0xf]
        %v387 = vld [vmem:[%s230 + $0x244] sm:$0xf]
        %v388 = vld [vmem:[%s230 + $0x248] sm:$0xf]
        %v389 = vld [vmem:[%s230 + $0x24c] sm:$0xf]
        %v390 = vld [vmem:[%s230 + $0x250] sm:$0xf]
        %v391 = vld [vmem:[%s230 + $0x254] sm:$0xf]
        %v392 = vld [vmem:[%s230 + $0x258] sm:$0xf]
        %v393 = vld [vmem:[%s230 + $0x25c] sm:$0xf]
        %v394 = vld [vmem:[%s230 + $0x260] sm:$0xf]
        %v395 = vld [vmem:[%s230 + $0x264] sm:$0xf]
        %v396 = vld [vmem:[%s230 + $0x268] sm:$0xf]
        %v397 = vld [vmem:[%s230 + $0x26c] sm:$0xf]
        %v398 = vld [vmem:[%s230 + $0x270] sm:$0xf]
        %v399 = vld [vmem:[%s230 + $0x274] sm:$0xf]
        %v400 = vld [vmem:[%s230 + $0x278] sm:$0xf]
        %v401 = vld [vmem:[%s230 + $0x27c] sm:$0xf]
        %v402 = vld [vmem:[%s230 + $0x280] sm:$0xf]
        %v403 = vld [vmem:[%s230 + $0x284] sm:$0xf]
        %v404 = vld [vmem:[%s230 + $0x288] sm:$0xf]
        %v405 = vld [vmem:[%s230 + $0x28c] sm:$0xf]
        %v406 = vld [vmem:[%s230 + $0x290] sm:$0xf]
        %v407 = vld [vmem:[%s230 + $0x294] sm:$0xf]
        %v408 = vld [vmem:[%s230 + $0x298] sm:$0xf]
        %v409 = vld [vmem:[%s230 + $0x29c] sm:$0xf]
        %v410 = vld [vmem:[%s230 + $0x2a0] sm:$0xf]
        %v411 = vld [vmem:[%s230 + $0x2a4] sm:$0xf]
        %v412 = vld [vmem:[%s230 + $0x2a8] sm:$0xf]
        %v413 = vld [vmem:[%s230 + $0x2ac] sm:$0xf]
        %v414 = vld [vmem:[%s230 + $0x2b0] sm:$0xf]
        %v415 = vld [vmem:[%s230 + $0x2b4] sm:$0xf]
        %v416 = vld [vmem:[%s230 + $0x2b8] sm:$0xf]
        %v417 = vld [vmem:[%s230 + $0x2bc] sm:$0xf]
        %v418 = vld [vmem:[%s230 + $0x2c0] sm:$0xf]
        %v419 = vld [vmem:[%s230 + $0x2c4] sm:$0xf]
        %v420 = vld [vmem:[%s230 + $0x2c8] sm:$0xf]
        %v421 = vld [vmem:[%s230 + $0x2cc] sm:$0xf]
        %v422 = vld [vmem:[%s230 + $0x2d0] sm:$0xf]
        %v423 = vld [vmem:[%s230 + $0x2d4] sm:$0xf]
        %v424 = vld [vmem:[%s230 + $0x2d8] sm:$0xf]
        %v425 = vld [vmem:[%s230 + $0x2dc] sm:$0xf]
        %v426 = vld [vmem:[%s230 + $0x2e0] sm:$0xf]
        %v427 = vld [vmem:[%s230 + $0x2e4] sm:$0xf]
        %v428 = vld [vmem:[%s230 + $0x2e8] sm:$0xf]
        %v429 = vld [vmem:[%s230 + $0x2ec] sm:$0xf]
        %v430 = vld [vmem:[%s230 + $0x2f0] sm:$0xf]
        %v431 = vld [vmem:[%s230 + $0x2f4] sm:$0xf]
        %v432 = vld [vmem:[%s230 + $0x2f8] sm:$0xf]
        %v433 = vld [vmem:[%s230 + $0x2fc] sm:$0xf]
        %v434 = vld [vmem:[%s230 + $0x300] sm:$0xf]
        %v435 = vld [vmem:[%s230 + $0x304] sm:$0xf]
        %v436 = vld [vmem:[%s230 + $0x308] sm:$0xf]
        %v437 = vld [vmem:[%s230 + $0x30c] sm:$0xf]
        %v438 = vld [vmem:[%s230 + $0x310] sm:$0xf]
        %v439 = vld [vmem:[%s230 + $0x314] sm:$0xf]
        %v440 = vld [vmem:[%s230 + $0x318] sm:$0xf]
        %v441 = vld [vmem:[%s230 + $0x31c] sm:$0xf]
        %v442 = vld [vmem:[%s230 + $0x320] sm:$0xf]
        %v443 = vld [vmem:[%s230 + $0x324] sm:$0xf]
        %v444 = vld [vmem:[%s230 + $0x328] sm:$0xf]
        %v445 = vld [vmem:[%s230 + $0x32c] sm:$0xf]
        %v446 = vld [vmem:[%s230 + $0x330] sm:$0xf]
        %v447 = vld [vmem:[%s230 + $0x334] sm:$0xf]
        %v448 = vld [vmem:[%s230 + $0x338] sm:$0xf]
        %v449 = vld [vmem:[%s230 + $0x33c] sm:$0xf]
        %v450 = vld [vmem:[%s230 + $0x340] sm:$0xf]
        %v451 = vld [vmem:[%s230 + $0x344] sm:$0xf]
        %v452 = vld [vmem:[%s230 + $0x348] sm:$0xf]
        %v453 = vld [vmem:[%s230 + $0x34c] sm:$0xf]
        %v454 = vld [vmem:[%s230 + $0x350] sm:$0xf]
        %v455 = vld [vmem:[%s230 + $0x354] sm:$0xf]
        %v456 = vld [vmem:[%s230 + $0x358] sm:$0xf]
        %v457 = vld [vmem:[%s230 + $0x35c] sm:$0xf]
        %v458 = vld [vmem:[%s230 + $0x360] sm:$0xf]
        %v459 = vld [vmem:[%s230 + $0x364] sm:$0xf]
        %v460 = vld [vmem:[%s230 + $0x368] sm:$0xf]
        %v461 = vld [vmem:[%s230 + $0x36c] sm:$0xf]
        %v462 = vld [vmem:[%s230 + $0x370] sm:$0xf]
        %v463 = vld [vmem:[%s230 + $0x374] sm:$0xf]
        %v464 = vld [vmem:[%s230 + $0x378] sm:$0xf]
        %v465 = vld [vmem:[%s230 + $0x37c] sm:$0xf]
        %v466 = vld [vmem:[%s230 + $0x380] sm:$0xf]
        %v467 = vld [vmem:[%s230 + $0x384] sm:$0xf]
        %v468 = vld [vmem:[%s230 + $0x388] sm:$0xf]
        %v469 = vld [vmem:[%s230 + $0x38c] sm:$0xf]
        %v470 = vld [vmem:[%s230 + $0x390] sm:$0xf]
        %v471 = vld [vmem:[%s230 + $0x394] sm:$0xf]
        %v472 = vld [vmem:[%s230 + $0x398] sm:$0xf]
        %v473 = vld [vmem:[%s230 + $0x39c] sm:$0xf]
        %v474 = vld [vmem:[%s230 + $0x3a0] sm:$0xf]
        %v475 = vld [vmem:[%s230 + $0x3a4] sm:$0xf]
        %v476 = vld [vmem:[%s230 + $0x3a8] sm:$0xf]
        %v477 = vld [vmem:[%s230 + $0x3ac] sm:$0xf]
        %v478 = vld [vmem:[%s230 + $0x3b0] sm:$0xf]
        %v479 = vld [vmem:[%s230 + $0x3b4] sm:$0xf]
        %v480 = vld [vmem:[%s230 + $0x3b8] sm:$0xf]
        %v481 = vld [vmem:[%s230 + $0x3bc] sm:$0xf]
        %v482 = vld [vmem:[%s230 + $0x3c0] sm:$0xf]
        %v483 = vld [vmem:[%s230 + $0x3c4] sm:$0xf]
        %v484 = vld [vmem:[%s230 + $0x3c8] sm:$0xf]
        %v485 = vld [vmem:[%s230 + $0x3cc] sm:$0xf]
        %v486 = vld [vmem:[%s230 + $0x3d0] sm:$0xf]
        %v487 = vld [vmem:[%s230 + $0x3d4] sm:$0xf]
        %v488 = vld [vmem:[%s230 + $0x3d8] sm:$0xf]
        %v489 = vld [vmem:[%s230 + $0x3dc] sm:$0xf]
        %v490 = vld [vmem:[%s230 + $0x3e0] sm:$0xf]
        %v491 = vld [vmem:[%s230 + $0x3e4] sm:$0xf]
        %v492 = vld [vmem:[%s230 + $0x3e8] sm:$0xf]
        %v493 = vld [vmem:[%s230 + $0x3ec] sm:$0xf]
        %v494 = vld [vmem:[%s230 + $0x3f0] sm:$0xf]
        %v495 = vld [vmem:[%s230 + $0x3f4] sm:$0xf]
        %v496 = vld [vmem:[%s230 + $0x3f8] sm:$0xf]
        %v497 = vld [vmem:[%s230 + $0x3fc] sm:$0xf]
        %v498 = vld [vmem:[%s230 + $0x400] sm:$0xf]
        %v499 = vld [vmem:[%s230 + $0x404] sm:$0xf]
        %v500 = vld [vmem:[%s230 + $0x408] sm:$0xf]
        %v501 = vld [vmem:[%s230 + $0x40c] sm:$0xf]
        %v502 = vld [vmem:[%s230 + $0x410] sm:$0xf]
        %v503 = vld [vmem:[%s230 + $0x414] sm:$0xf]
        %v504 = vld [vmem:[%s230 + $0x418] sm:$0xf]
        %v505 = vld [vmem:[%s230 + $0x41c] sm:$0xf]
        %v506 = vld [vmem:[%s230 + $0x420] sm:$0xf]
        %v507 = vld [vmem:[%s230 + $0x424] sm:$0xf]
        %v508 = vld [vmem:[%s230 + $0x428] sm:$0xf]
        %v509 = vld [vmem:[%s230 + $0x42c] sm:$0xf]
        %v510 = vld [vmem:[%s230 + $0x430] sm:$0xf]
        %v511 = vld [vmem:[%s230 + $0x434] sm:$0xf]
        %v512 = vld [vmem:[%s230 + $0x438] sm:$0xf]
        %v513 = vld [vmem:[%s230 + $0x43c] sm:$0xf]
        %v514 = vld [vmem:[%s230 + $0x440] sm:$0xf]
        %v515 = vld [vmem:[%s230 + $0x444] sm:$0xf]
        %v516 = vld [vmem:[%s230 + $0x448] sm:$0xf]
        %v517 = vld [vmem:[%s230 + $0x44c] sm:$0xf]
        %v518 = vld [vmem:[%s230 + $0x450] sm:$0xf]
        %v519 = vld [vmem:[%s230 + $0x454] sm:$0xf]
        %v520 = vld [vmem:[%s230 + $0x458] sm:$0xf]
        %v521 = vld [vmem:[%s230 + $0x45c] sm:$0xf]
        %v522 = vld [vmem:[%s230 + $0x460] sm:$0xf]
        %v523 = vld [vmem:[%s230 + $0x464] sm:$0xf]
        %v524 = vld [vmem:[%s230 + $0x468] sm:$0xf]
        %v525 = vld [vmem:[%s230 + $0x46c] sm:$0xf]
        %v526 = vld [vmem:[%s230 + $0x470] sm:$0xf]
        %v527 = vld [vmem:[%s230 + $0x474] sm:$0xf]
        %v528 = vld [vmem:[%s230 + $0x478] sm:$0xf]
        %v529 = vld [vmem:[%s230 + $0x47c] sm:$0xf]
        %v533 = vcombine.high %v239, %v239
        %v535 = vunpack.c.l.s4 1966171168
        %v536 = vunpack.c.0.s8 %v535
        %v537 = vlaneseq
        %v538 = vshrl.u32 %v537, 7
        %v539 = vsub.s32 %v536, %v538
        %v540 = vrot.slane %v239, %v539
        %v542 = vunpack.c.l.s4 1966171168
        %v543 = vunpack.c.0.s8 %v542
        %v544 = vlaneseq
        %v545 = vshrl.u32 %v544, 7
        %v546 = vsub.s32 %v543, %v545
        %v547 = vrot.slane %v533, %v546
        %v548 = vcombine.high %v540, %v540
        %v549 = vcombine.high %v547, %v547
        %v551 = vunpack.c.l.s4 1966171168
        %v552 = vunpack.c.0.s8 %v551
        %v553 = vlaneseq
        %v554 = vshrl.u32 %v553, 7
        %v555 = vsub.s32 %v552, %v554
        %v556 = vrot.slane %v540, %v555
        %v558 = vunpack.c.l.s4 1966171168
        %v559 = vunpack.c.0.s8 %v558
        %v560 = vlaneseq
        %v561 = vshrl.u32 %v560, 7
        %v562 = vsub.s32 %v559, %v561
        %v563 = vrot.slane %v547, %v562
        %v565 = vunpack.c.l.s4 1966171168
        %v566 = vunpack.c.0.s8 %v565
        %v567 = vlaneseq
        %v568 = vshrl.u32 %v567, 7
        %v569 = vsub.s32 %v566, %v568
        %v570 = vrot.slane %v548, %v569
        %v572 = vunpack.c.l.s4 1966171168
        %v573 = vunpack.c.0.s8 %v572
        %v574 = vlaneseq
        %v575 = vshrl.u32 %v574, 7
        %v576 = vsub.s32 %v573, %v575
        %v577 = vrot.slane %v549, %v576
        %v578 = vcombine.high %v556, %v556
        %v579 = vcombine.high %v563, %v563
        %v580 = vcombine.high %v570, %v570
        %v581 = vcombine.high %v577, %v577
        %v582 = vcombine.high %v240, %v240
        %v584 = vunpack.c.l.s4 1966171168
        %v585 = vunpack.c.0.s8 %v584
        %v586 = vlaneseq
        %v587 = vshrl.u32 %v586, 7
        %v588 = vsub.s32 %v585, %v587
        %v589 = vrot.slane %v240, %v588
        %v591 = vunpack.c.l.s4 1966171168
        %v592 = vunpack.c.0.s8 %v591
        %v593 = vlaneseq
        %v594 = vshrl.u32 %v593, 7
        %v595 = vsub.s32 %v592, %v594
        %v596 = vrot.slane %v582, %v595
        %v597 = vcombine.high %v589, %v589
        %v598 = vcombine.high %v596, %v596
        %v600 = vunpack.c.l.s4 1966171168
        %v601 = vunpack.c.0.s8 %v600
        %v602 = vlaneseq
        %v603 = vshrl.u32 %v602, 7
        %v604 = vsub.s32 %v601, %v603
        %v605 = vrot.slane %v589, %v604
        %v607 = vunpack.c.l.s4 1966171168
        %v608 = vunpack.c.0.s8 %v607
        %v609 = vlaneseq
        %v610 = vshrl.u32 %v609, 7
        %v611 = vsub.s32 %v608, %v610
        %v612 = vrot.slane %v596, %v611
        %v614 = vunpack.c.l.s4 1966171168
        %v615 = vunpack.c.0.s8 %v614
        %v616 = vlaneseq
        %v617 = vshrl.u32 %v616, 7
        %v618 = vsub.s32 %v615, %v617
        %v619 = vrot.slane %v597, %v618
        %v621 = vunpack.c.l.s4 1966171168
        %v622 = vunpack.c.0.s8 %v621
        %v623 = vlaneseq
        %v624 = vshrl.u32 %v623, 7
        %v625 = vsub.s32 %v622, %v624
        %v626 = vrot.slane %v598, %v625
        %v627 = vcombine.high %v605, %v605
        %v628 = vcombine.high %v612, %v612
        %v629 = vcombine.high %v619, %v619
        %v630 = vcombine.high %v626, %v626
        %v632 = vunpack.c.l.s4 1966171168
        %v633 = vunpack.c.0.s8 %v632
        %v634 = vlaneseq
        %v635 = vshrl.u32 %v634, 7
        %v636 = vsub.s32 %v633, %v635
        %v637 = vrot.slane %v241, %v636
        %v638 = vcombine.high %v637, %v637
        %v640 = vunpack.c.l.s4 1966171168
        %v641 = vunpack.c.0.s8 %v640
        %v642 = vlaneseq
        %v643 = vshrl.u32 %v642, 7
        %v644 = vsub.s32 %v641, %v643
        %v645 = vrot.slane %v637, %v644
        %v647 = vunpack.c.l.s4 1966171168
        %v648 = vunpack.c.0.s8 %v647
        %v649 = vlaneseq
        %v650 = vshrl.u32 %v649, 7
        %v651 = vsub.s32 %v648, %v650
        %v652 = vrot.slane %v638, %v651
        %v959 = vunpack.c.l.b16 %v242
        %v960 = vunpack.c.l.b16 %v243
        %v961 = vunpack.c.l.b16 %v244
        %v962 = vunpack.c.l.b16 %v245
        %v963 = vunpack.c.l.b16 %v246
        %v964 = vunpack.c.l.b16 %v247
        %v965 = vunpack.c.l.b16 %v248
        %v966 = vunpack.c.l.b16 %v249
        %v967 = vunpack.c.l.b16 %v250
        %v968 = vunpack.c.l.b16 %v251
        %v969 = vunpack.c.l.b16 %v252
        %v970 = vunpack.c.l.b16 %v253
        %v971 = vunpack.c.l.b16 %v254
        %v972 = vunpack.c.l.b16 %v255
        %v973 = vunpack.c.l.b16 %v256
        %v974 = vunpack.c.l.b16 %v257
        %v975 = vunpack.c.l.b16 %v258
        %v976 = vunpack.c.l.b16 %v259
        %v977 = vunpack.c.l.b16 %v260
        %v978 = vunpack.c.l.b16 %v261
        %v979 = vunpack.c.l.b16 %v262
        %v980 = vunpack.c.l.b16 %v263
        %v981 = vunpack.c.l.b16 %v264
        %v982 = vunpack.c.l.b16 %v265
        %v983 = vunpack.c.l.b16 %v266
        %v984 = vunpack.c.l.b16 %v267
        %v985 = vunpack.c.l.b16 %v268
        %v986 = vunpack.c.l.b16 %v269
        %v987 = vunpack.c.l.b16 %v270
        %v988 = vunpack.c.l.b16 %v271
        %v989 = vunpack.c.l.b16 %v272
        %v990 = vunpack.c.l.b16 %v273
        %v991 = vunpack.c.l.b16 %v274
        %v992 = vunpack.c.l.b16 %v275
        %v993 = vunpack.c.l.b16 %v276
        %v994 = vunpack.c.l.b16 %v277
        %v995 = vunpack.c.l.b16 %v278
        %v996 = vunpack.c.l.b16 %v279
        %v997 = vunpack.c.l.b16 %v280
        %v998 = vunpack.c.l.b16 %v281
        %v999 = vunpack.c.l.b16 %v282
        %v1000 = vunpack.c.l.b16 %v283
        %v1001 = vunpack.c.l.b16 %v284
        %v1002 = vunpack.c.l.b16 %v285
        %v1003 = vunpack.c.l.b16 %v286
        %v1004 = vunpack.c.l.b16 %v287
        %v1005 = vunpack.c.l.b16 %v288
        %v1006 = vunpack.c.l.b16 %v289
        %v1007 = vunpack.c.l.b16 %v290
        %v1008 = vunpack.c.l.b16 %v291
        %v1009 = vunpack.c.l.b16 %v292
        %v1010 = vunpack.c.l.b16 %v293
        %v1011 = vunpack.c.l.b16 %v294
        %v1012 = vunpack.c.l.b16 %v295
        %v1013 = vunpack.c.l.b16 %v296
        %v1014 = vunpack.c.l.b16 %v297
        %v1015 = vunpack.c.l.b16 %v298
        %v1016 = vunpack.c.l.b16 %v299
        %v1017 = vunpack.c.l.b16 %v300
        %v1018 = vunpack.c.l.b16 %v301
        %v1019 = vunpack.c.l.b16 %v302
        %v1020 = vunpack.c.l.b16 %v303
        %v1021 = vunpack.c.l.b16 %v304
        %v1022 = vunpack.c.l.b16 %v305
        %v1023 = vunpack.c.l.b16 %v306
        %v1024 = vunpack.c.l.b16 %v307
        %v1025 = vunpack.c.l.b16 %v308
        %v1026 = vunpack.c.l.b16 %v309
        %v1027 = vunpack.c.l.b16 %v310
        %v1028 = vunpack.c.l.b16 %v311
        %v1029 = vunpack.c.l.b16 %v312
        %v1030 = vunpack.c.l.b16 %v313
        %v1031 = vunpack.c.l.b16 %v314
        %v1032 = vunpack.c.l.b16 %v315
        %v1033 = vunpack.c.l.b16 %v316
        %v1034 = vunpack.c.l.b16 %v317
        %v1035 = vunpack.c.l.b16 %v318
        %v1036 = vunpack.c.l.b16 %v319
        %v1037 = vunpack.c.l.b16 %v320
        %v1038 = vunpack.c.l.b16 %v321
        %v1039 = vunpack.c.l.b16 %v322
        %v1040 = vunpack.c.l.b16 %v323
        %v1041 = vunpack.c.l.b16 %v324
        %v1042 = vunpack.c.l.b16 %v325
        %v1043 = vunpack.c.l.b16 %v326
        %v1044 = vunpack.c.l.b16 %v327
        %v1045 = vunpack.c.l.b16 %v328
        %v1046 = vunpack.c.l.b16 %v329
        %v1047 = vunpack.c.l.b16 %v330
        %v1048 = vunpack.c.l.b16 %v331
        %v1049 = vunpack.c.l.b16 %v332
        %v1050 = vunpack.c.l.b16 %v333
        %v1051 = vunpack.c.l.b16 %v334
        %v1052 = vunpack.c.l.b16 %v335
        %v1053 = vunpack.c.l.b16 %v336
        %v1054 = vunpack.c.l.b16 %v337
        %v1055 = vunpack.c.l.b16 %v338
        %v1056 = vunpack.c.l.b16 %v339
        %v1057 = vunpack.c.l.b16 %v340
        %v1058 = vunpack.c.l.b16 %v341
        %v1059 = vunpack.c.l.b16 %v342
        %v1060 = vunpack.c.l.b16 %v343
        %v1061 = vunpack.c.l.b16 %v344
        %v1062 = vunpack.c.l.b16 %v345
        %v1063 = vunpack.c.l.b16 %v346
        %v1064 = vunpack.c.l.b16 %v347
        %v1065 = vunpack.c.l.b16 %v348
        %v1066 = vunpack.c.l.b16 %v349
        %v1067 = vunpack.c.l.b16 %v350
        %v1068 = vunpack.c.l.b16 %v351
        %v1069 = vunpack.c.l.b16 %v352
        %v1070 = vunpack.c.l.b16 %v353
        %v1071 = vunpack.c.l.b16 %v354
        %v1072 = vunpack.c.l.b16 %v355
        %v1073 = vunpack.c.l.b16 %v356
        %v1074 = vunpack.c.l.b16 %v357
        %v1075 = vunpack.c.l.b16 %v358
        %v1076 = vunpack.c.l.b16 %v359
        %v1077 = vunpack.c.l.b16 %v360
        %v1078 = vunpack.c.l.b16 %v361
        %v1079 = vunpack.c.l.b16 %v362
        %v1080 = vunpack.c.l.b16 %v363
        %v1081 = vunpack.c.l.b16 %v364
        %v1082 = vunpack.c.l.b16 %v365
        %v1083 = vunpack.c.l.b16 %v366
        %v1084 = vunpack.c.l.b16 %v367
        %v1085 = vunpack.c.l.b16 %v368
        %v1086 = vunpack.c.l.b16 %v369
        %v1087 = vunpack.c.l.b16 %v370
        %v1088 = vunpack.c.l.b16 %v371
        %v1089 = vunpack.c.l.b16 %v372
        %v1090 = vunpack.c.l.b16 %v373
        %v1091 = vunpack.c.l.b16 %v374
        %v1092 = vunpack.c.l.b16 %v375
        %v1093 = vunpack.c.l.b16 %v376
        %v1094 = vunpack.c.l.b16 %v377
        %v1095 = vunpack.c.l.b16 %v378
        %v1096 = vunpack.c.l.b16 %v379
        %v1097 = vunpack.c.l.b16 %v380
        %v1098 = vunpack.c.l.b16 %v381
        %v1099 = vunpack.c.l.b16 %v382
        %v1100 = vunpack.c.l.b16 %v383
        %v1101 = vunpack.c.l.b16 %v384
        %v1102 = vunpack.c.l.b16 %v385
        %v1103 = vunpack.c.l.b16 %v386
        %v1104 = vunpack.c.l.b16 %v387
        %v1105 = vunpack.c.l.b16 %v388
        %v1106 = vunpack.c.l.b16 %v389
        %v1107 = vunpack.c.l.b16 %v390
        %v1108 = vunpack.c.l.b16 %v391
        %v1109 = vunpack.c.l.b16 %v392
        %v1110 = vunpack.c.l.b16 %v393
        %v1111 = vunpack.c.l.b16 %v394
        %v1112 = vunpack.c.l.b16 %v395
        %v1113 = vunpack.c.l.b16 %v396
        %v1114 = vunpack.c.l.b16 %v397
        %v1115 = vunpack.c.l.b16 %v398
        %v1116 = vunpack.c.l.b16 %v399
        %v1117 = vunpack.c.l.b16 %v400
        %v1118 = vunpack.c.l.b16 %v401
        %v1119 = vunpack.c.l.b16 %v402
        %v1120 = vunpack.c.l.b16 %v403
        %v1121 = vunpack.c.l.b16 %v404
        %v1122 = vunpack.c.l.b16 %v405
        %v1123 = vunpack.c.l.b16 %v406
        %v1124 = vunpack.c.l.b16 %v407
        %v1125 = vunpack.c.l.b16 %v408
        %v1126 = vunpack.c.l.b16 %v409
        %v1127 = vunpack.c.l.b16 %v410
        %v1128 = vunpack.c.l.b16 %v411
        %v1129 = vunpack.c.l.b16 %v412
        %v1130 = vunpack.c.l.b16 %v413
        %v1131 = vunpack.c.l.b16 %v414
        %v1132 = vunpack.c.l.b16 %v415
        %v1133 = vunpack.c.l.b16 %v416
        %v1134 = vunpack.c.l.b16 %v417
        %v1135 = vunpack.c.l.b16 %v418
        %v1136 = vunpack.c.l.b16 %v419
        %v1137 = vunpack.c.l.b16 %v420
        %v1138 = vunpack.c.l.b16 %v421
        %v1139 = vunpack.c.l.b16 %v422
        %v1140 = vunpack.c.l.b16 %v423
        %v1141 = vunpack.c.l.b16 %v424
        %v1142 = vunpack.c.l.b16 %v425
        %v1143 = vunpack.c.l.b16 %v426
        %v1144 = vunpack.c.l.b16 %v427
        %v1145 = vunpack.c.l.b16 %v428
        %v1146 = vunpack.c.l.b16 %v429
        %v1147 = vunpack.c.l.b16 %v430
        %v1148 = vunpack.c.l.b16 %v431
        %v1149 = vunpack.c.l.b16 %v432
        %v1150 = vunpack.c.l.b16 %v433
        %v1151 = vunpack.c.l.b16 %v434
        %v1152 = vunpack.c.l.b16 %v435
        %v1153 = vunpack.c.l.b16 %v436
        %v1154 = vunpack.c.l.b16 %v437
        %v1155 = vunpack.c.l.b16 %v438
        %v1156 = vunpack.c.l.b16 %v439
        %v1157 = vunpack.c.l.b16 %v440
        %v1158 = vunpack.c.l.b16 %v441
        %v1159 = vunpack.c.l.b16 %v442
        %v1160 = vunpack.c.l.b16 %v443
        %v1161 = vunpack.c.l.b16 %v444
        %v1162 = vunpack.c.l.b16 %v445
        %v1163 = vunpack.c.l.b16 %v446
        %v1164 = vunpack.c.l.b16 %v447
        %v1165 = vunpack.c.l.b16 %v448
        %v1166 = vunpack.c.l.b16 %v449
        %v1167 = vunpack.c.l.b16 %v450
        %v1168 = vunpack.c.l.b16 %v451
        %v1169 = vunpack.c.l.b16 %v452
        %v1170 = vunpack.c.l.b16 %v453
        %v1171 = vunpack.c.l.b16 %v454
        %v1172 = vunpack.c.l.b16 %v455
        %v1173 = vunpack.c.l.b16 %v456
        %v1174 = vunpack.c.l.b16 %v457
        %v1175 = vunpack.c.l.b16 %v458
        %v1176 = vunpack.c.l.b16 %v459
        %v1177 = vunpack.c.l.b16 %v460
        %v1178 = vunpack.c.l.b16 %v461
        %v1179 = vunpack.c.l.b16 %v462
        %v1180 = vunpack.c.l.b16 %v463
        %v1181 = vunpack.c.l.b16 %v464
        %v1182 = vunpack.c.l.b16 %v465
        %v1183 = vunpack.c.l.b16 %v466
        %v1184 = vunpack.c.l.b16 %v467
        %v1185 = vunpack.c.l.b16 %v468
        %v1186 = vunpack.c.l.b16 %v469
        %v1187 = vunpack.c.l.b16 %v470
        %v1188 = vunpack.c.l.b16 %v471
        %v1189 = vunpack.c.l.b16 %v472
        %v1190 = vunpack.c.l.b16 %v473
        %v1191 = vunpack.c.l.b16 %v474
        %v1192 = vunpack.c.l.b16 %v475
        %v1193 = vunpack.c.l.b16 %v476
        %v1194 = vunpack.c.l.b16 %v477
        %v1195 = vunpack.c.l.b16 %v478
        %v1196 = vunpack.c.l.b16 %v479
        %v1197 = vunpack.c.l.b16 %v480
        %v1198 = vunpack.c.l.b16 %v481
        %v1199 = vunpack.c.l.b16 %v482
        %v1200 = vunpack.c.l.b16 %v483
        %v1201 = vunpack.c.l.b16 %v484
        %v1202 = vunpack.c.l.b16 %v485
        %v1203 = vunpack.c.l.b16 %v486
        %v1204 = vunpack.c.l.b16 %v487
        %v1205 = vunpack.c.l.b16 %v488
        %v1206 = vunpack.c.l.b16 %v489
        %v1207 = vunpack.c.l.b16 %v490
        %v1208 = vunpack.c.l.b16 %v491
        %v1209 = vunpack.c.l.b16 %v492
        %v1210 = vunpack.c.l.b16 %v493
        %v1211 = vunpack.c.l.b16 %v494
        %v1212 = vunpack.c.l.b16 %v495
        %v1213 = vunpack.c.l.b16 %v496
        %v1214 = vunpack.c.l.b16 %v497
        %v1215 = vunpack.c.l.b16 %v498
        %v1216 = vunpack.c.l.b16 %v499
        %v1217 = vunpack.c.l.b16 %v500
        %v1218 = vunpack.c.l.b16 %v501
        %v1219 = vunpack.c.l.b16 %v502
        %v1220 = vunpack.c.l.b16 %v503
        %v1221 = vunpack.c.l.b16 %v504
        %v1222 = vunpack.c.l.b16 %v505
        %v1223 = vunpack.c.l.b16 %v506
        %v1224 = vunpack.c.l.b16 %v507
        %v1225 = vunpack.c.l.b16 %v508
        %v1226 = vunpack.c.l.b16 %v509
        %v1227 = vunpack.c.l.b16 %v510
        %v1228 = vunpack.c.l.b16 %v511
        %v1229 = vunpack.c.l.b16 %v512
        %v1230 = vunpack.c.l.b16 %v513
        %v1231 = vunpack.c.l.b16 %v514
        %v1232 = vunpack.c.l.b16 %v515
        %v1233 = vunpack.c.l.b16 %v516
        %v1234 = vunpack.c.l.b16 %v517
        %v1235 = vunpack.c.l.b16 %v518
        %v1236 = vunpack.c.l.b16 %v519
        %v1237 = vunpack.c.l.b16 %v520
        %v1238 = vunpack.c.l.b16 %v521
        %v1239 = vunpack.c.l.b16 %v522
        %v1240 = vunpack.c.l.b16 %v523
        %v1241 = vunpack.c.l.b16 %v524
        %v1242 = vunpack.c.l.b16 %v525
        %v1243 = vunpack.c.l.b16 %v526
        %v1244 = vunpack.c.l.b16 %v527
        %v1245 = vunpack.c.l.b16 %v528
        %v1246 = vunpack.c.l.b16 %v529
        %v1247 = vpack.c.b16 %v960, %v959
        %v1248 = vpack.c.b16 %v962, %v961
        %v1249 = vpack.c.b16 %v964, %v963
        %v1250 = vpack.c.b16 %v966, %v965
        %v1251 = vpack.c.b16 %v968, %v967
        %v1252 = vpack.c.b16 %v970, %v969
        %v1253 = vpack.c.b16 %v972, %v971
        %v1254 = vpack.c.b16 %v974, %v973
        %v1255 = vpack.c.b16 %v976, %v975
        %v1256 = vpack.c.b16 %v978, %v977
        %v1257 = vpack.c.b16 %v980, %v979
        %v1258 = vpack.c.b16 %v982, %v981
        %v1259 = vpack.c.b16 %v984, %v983
        %v1260 = vpack.c.b16 %v986, %v985
        %v1261 = vpack.c.b16 %v988, %v987
        %v1262 = vpack.c.b16 %v990, %v989
        %v1263 = vpack.c.b16 %v992, %v991
        %v1264 = vpack.c.b16 %v994, %v993
        %v1265 = vpack.c.b16 %v996, %v995
        %v1266 = vpack.c.b16 %v998, %v997
        %v1267 = vpack.c.b16 %v1000, %v999
        %v1268 = vpack.c.b16 %v1002, %v1001
        %v1269 = vpack.c.b16 %v1004, %v1003
        %v1270 = vpack.c.b16 %v1006, %v1005
        %v1271 = vpack.c.b16 %v1008, %v1007
        %v1272 = vpack.c.b16 %v1010, %v1009
        %v1273 = vpack.c.b16 %v1012, %v1011
        %v1274 = vpack.c.b16 %v1014, %v1013
        %v1275 = vpack.c.b16 %v1016, %v1015
        %v1276 = vpack.c.b16 %v1018, %v1017
        %v1277 = vpack.c.b16 %v1020, %v1019
        %v1278 = vpack.c.b16 %v1022, %v1021
        %v1279 = vpack.c.b16 %v1024, %v1023
        %v1280 = vpack.c.b16 %v1026, %v1025
        %v1281 = vpack.c.b16 %v1028, %v1027
        %v1282 = vpack.c.b16 %v1030, %v1029
        %v1283 = vpack.c.b16 %v1032, %v1031
        %v1284 = vpack.c.b16 %v1034, %v1033
        %v1285 = vpack.c.b16 %v1036, %v1035
        %v1286 = vpack.c.b16 %v1038, %v1037
        %v1287 = vpack.c.b16 %v1040, %v1039
        %v1288 = vpack.c.b16 %v1042, %v1041
        %v1289 = vpack.c.b16 %v1044, %v1043
        %v1290 = vpack.c.b16 %v1046, %v1045
        %v1291 = vpack.c.b16 %v1048, %v1047
        %v1292 = vpack.c.b16 %v1050, %v1049
        %v1293 = vpack.c.b16 %v1052, %v1051
        %v1294 = vpack.c.b16 %v1054, %v1053
        %v1295 = vpack.c.b16 %v1056, %v1055
        %v1296 = vpack.c.b16 %v1058, %v1057
        %v1297 = vpack.c.b16 %v1060, %v1059
        %v1298 = vpack.c.b16 %v1062, %v1061
        %v1299 = vpack.c.b16 %v1064, %v1063
        %v1300 = vpack.c.b16 %v1066, %v1065
        %v1301 = vpack.c.b16 %v1068, %v1067
        %v1302 = vpack.c.b16 %v1070, %v1069
        %v1303 = vpack.c.b16 %v1072, %v1071
        %v1304 = vpack.c.b16 %v1074, %v1073
        %v1305 = vpack.c.b16 %v1076, %v1075
        %v1306 = vpack.c.b16 %v1078, %v1077
        %v1307 = vpack.c.b16 %v1080, %v1079
        %v1308 = vpack.c.b16 %v1082, %v1081
        %v1309 = vpack.c.b16 %v1084, %v1083
        %v1310 = vpack.c.b16 %v1086, %v1085
        %v1311 = vpack.c.b16 %v1088, %v1087
        %v1312 = vpack.c.b16 %v1090, %v1089
        %v1313 = vpack.c.b16 %v1092, %v1091
        %v1314 = vpack.c.b16 %v1094, %v1093
        %v1315 = vpack.c.b16 %v1096, %v1095
        %v1316 = vpack.c.b16 %v1098, %v1097
        %v1317 = vpack.c.b16 %v1100, %v1099
        %v1318 = vpack.c.b16 %v1102, %v1101
        %v1319 = vpack.c.b16 %v1104, %v1103
        %v1320 = vpack.c.b16 %v1106, %v1105
        %v1321 = vpack.c.b16 %v1108, %v1107
        %v1322 = vpack.c.b16 %v1110, %v1109
        %v1323 = vpack.c.b16 %v1112, %v1111
        %v1324 = vpack.c.b16 %v1114, %v1113
        %v1325 = vpack.c.b16 %v1116, %v1115
        %v1326 = vpack.c.b16 %v1118, %v1117
        %v1327 = vpack.c.b16 %v1120, %v1119
        %v1328 = vpack.c.b16 %v1122, %v1121
        %v1329 = vpack.c.b16 %v1124, %v1123
        %v1330 = vpack.c.b16 %v1126, %v1125
        %v1331 = vpack.c.b16 %v1128, %v1127
        %v1332 = vpack.c.b16 %v1130, %v1129
        %v1333 = vpack.c.b16 %v1132, %v1131
        %v1334 = vpack.c.b16 %v1134, %v1133
        %v1335 = vpack.c.b16 %v1136, %v1135
        %v1336 = vpack.c.b16 %v1138, %v1137
        %v1337 = vpack.c.b16 %v1140, %v1139
        %v1338 = vpack.c.b16 %v1142, %v1141
        %v1339 = vpack.c.b16 %v1144, %v1143
        %v1340 = vpack.c.b16 %v1146, %v1145
        %v1341 = vpack.c.b16 %v1148, %v1147
        %v1342 = vpack.c.b16 %v1150, %v1149
        %v1343 = vpack.c.b16 %v1152, %v1151
        %v1344 = vpack.c.b16 %v1154, %v1153
        %v1345 = vpack.c.b16 %v1156, %v1155
        %v1346 = vpack.c.b16 %v1158, %v1157
        %v1347 = vpack.c.b16 %v1160, %v1159
        %v1348 = vpack.c.b16 %v1162, %v1161
        %v1349 = vpack.c.b16 %v1164, %v1163
        %v1350 = vpack.c.b16 %v1166, %v1165
        %v1351 = vpack.c.b16 %v1168, %v1167
        %v1352 = vpack.c.b16 %v1170, %v1169
        %v1353 = vpack.c.b16 %v1172, %v1171
        %v1354 = vpack.c.b16 %v1174, %v1173
        %v1355 = vpack.c.b16 %v1176, %v1175
        %v1356 = vpack.c.b16 %v1178, %v1177
        %v1357 = vpack.c.b16 %v1180, %v1179
        %v1358 = vpack.c.b16 %v1182, %v1181
        %v1359 = vpack.c.b16 %v1184, %v1183
        %v1360 = vpack.c.b16 %v1186, %v1185
        %v1361 = vpack.c.b16 %v1188, %v1187
        %v1362 = vpack.c.b16 %v1190, %v1189
        %v1363 = vpack.c.b16 %v1192, %v1191
        %v1364 = vpack.c.b16 %v1194, %v1193
        %v1365 = vpack.c.b16 %v1196, %v1195
        %v1366 = vpack.c.b16 %v1198, %v1197
        %v1367 = vpack.c.b16 %v1200, %v1199
        %v1368 = vpack.c.b16 %v1202, %v1201
        %v1369 = vpack.c.b16 %v1204, %v1203
        %v1370 = vpack.c.b16 %v1206, %v1205
        %v1371 = vpack.c.b16 %v1208, %v1207
        %v1372 = vpack.c.b16 %v1210, %v1209
        %v1373 = vpack.c.b16 %v1212, %v1211
        %v1374 = vpack.c.b16 %v1214, %v1213
        %v1375 = vpack.c.b16 %v1216, %v1215
        %v1376 = vpack.c.b16 %v1218, %v1217
        %v1377 = vpack.c.b16 %v1220, %v1219
        %v1378 = vpack.c.b16 %v1222, %v1221
        %v1379 = vpack.c.b16 %v1224, %v1223
        %v1380 = vpack.c.b16 %v1226, %v1225
        %v1381 = vpack.c.b16 %v1228, %v1227
        %v1382 = vpack.c.b16 %v1230, %v1229
        %v1383 = vpack.c.b16 %v1232, %v1231
        %v1384 = vpack.c.b16 %v1234, %v1233
        %v1385 = vpack.c.b16 %v1236, %v1235
        %v1386 = vpack.c.b16 %v1238, %v1237
        %v1387 = vpack.c.b16 %v1240, %v1239
        %v1388 = vpack.c.b16 %v1242, %v1241
        %v1389 = vpack.c.b16 %v1244, %v1243
        %v1390 = vpack.c.b16 %v1246, %v1245
        %1535 = vmatprep.subr.bf16.mxu0 0
        %1536 = vmatpush1.bf16.msra.mxu0 %v1247
        %1537 = vmatprep.subr.bf16.mxu0 0
        %1538 = vmatpush1.bf16.msra.mxu0 %v1248
        %1539 = vmatprep.subr.bf16.mxu0 0
        %1540 = vmatpush1.bf16.msra.mxu0 %v1249
        %1541 = vmatprep.subr.bf16.mxu0 0
        %1542 = vmatpush1.bf16.msra.mxu0 %v1250
        %1543 = vmatprep.subr.bf16.mxu0 0
        %1544 = vmatpush1.bf16.msra.mxu0 %v1251
        %1545 = vmatprep.subr.bf16.mxu0 0
        %1546 = vmatpush1.bf16.msra.mxu0 %v1252
        %1547 = vmatprep.subr.bf16.mxu0 0
        %1548 = vmatpush1.bf16.msra.mxu0 %v1253
        %1549 = vmatprep.subr.bf16.mxu0 0
        %1550 = vmatpush1.bf16.msra.mxu0 %v1254
        %1551 = vmatprep.subr.bf16.mxu0 0
        %1552 = vmatpush1.bf16.msra.mxu0 %v1255
        %1553 = vmatprep.subr.bf16.mxu0 0
        %1554 = vmatpush1.bf16.msra.mxu0 %v1256
        %1555 = vmatprep.subr.bf16.mxu0 0
        %1556 = vmatpush1.bf16.msra.mxu0 %v1257
        %1557 = vmatprep.subr.bf16.mxu0 0
        %1558 = vmatpush1.bf16.msra.mxu0 %v1258
        %1559 = vmatprep.subr.bf16.mxu0 0
        %1560 = vmatpush1.bf16.msra.mxu0 %v1259
        %1561 = vmatprep.subr.bf16.mxu0 0
        %1562 = vmatpush1.bf16.msra.mxu0 %v1260
        %1563 = vmatprep.subr.bf16.mxu0 0
        %1564 = vmatpush1.bf16.msra.mxu0 %v1261
        %1565 = vmatprep.subr.bf16.mxu0 0
        %1566 = vmatpush1.bf16.msra.mxu0 %v1262
        %1567 = vmatprep.mubr.bf16.mxu0 %v570
        %1568 = vmatmul.mubr.bf16.gmra.mrb[0].mxu0 %v556
        %v1569 = vpop.f32.mrb[0].mxu0
        %v1570 = vadd.f32 0.0, %v1569
        %v1571 = vpop.f32.mrb[0].mxu0
        %v1572 = vpop.f32.mrb[0].mxu0
        %v1573 = vpop.f32.mrb[0].mxu0
        %1574 = vdwg.mxu0
        %1575 = vmatprep.subr.bf16.mxu0 0
        %1576 = vmatpush1.bf16.msra.mxu0 %v1263
        %1577 = vmatprep.subr.bf16.mxu0 0
        %1578 = vmatpush1.bf16.msra.mxu0 %v1264
        %1579 = vmatprep.subr.bf16.mxu0 0
        %1580 = vmatpush1.bf16.msra.mxu0 %v1265
        %1581 = vmatprep.subr.bf16.mxu0 0
        %1582 = vmatpush1.bf16.msra.mxu0 %v1266
        %1583 = vmatprep.subr.bf16.mxu0 0
        %1584 = vmatpush1.bf16.msra.mxu0 %v1267
        %1585 = vmatprep.subr.bf16.mxu0 0
        %1586 = vmatpush1.bf16.msra.mxu0 %v1268
        %1587 = vmatprep.subr.bf16.mxu0 0
        %1588 = vmatpush1.bf16.msra.mxu0 %v1269
        %1589 = vmatprep.subr.bf16.mxu0 0
        %1590 = vmatpush1.bf16.msra.mxu0 %v1270
        %1591 = vmatprep.subr.bf16.mxu0 0
        %1592 = vmatpush1.bf16.msra.mxu0 %v1271
        %1593 = vmatprep.subr.bf16.mxu0 0
        %1594 = vmatpush1.bf16.msra.mxu0 %v1272
        %1595 = vmatprep.subr.bf16.mxu0 0
        %1596 = vmatpush1.bf16.msra.mxu0 %v1273
        %1597 = vmatprep.subr.bf16.mxu0 0
        %1598 = vmatpush1.bf16.msra.mxu0 %v1274
        %1599 = vmatprep.subr.bf16.mxu0 0
        %1600 = vmatpush1.bf16.msra.mxu0 %v1275
        %1601 = vmatprep.subr.bf16.mxu0 0
        %1602 = vmatpush1.bf16.msra.mxu0 %v1276
        %1603 = vmatprep.subr.bf16.mxu0 0
        %1604 = vmatpush1.bf16.msra.mxu0 %v1277
        %1605 = vmatprep.subr.bf16.mxu0 0
        %1606 = vmatpush1.bf16.msra.mxu0 %v1278
        %1607 = vmatprep.mubr.bf16.mxu0 %v580
        %1608 = vmatmul.mubr.bf16.gmra.mrb[0].mxu0 %v578
        %v1609 = vpop.f32.mrb[0].mxu0
        %v1610 = vadd.f32 %v1570, %v1609
        %v1611 = vpop.f32.mrb[0].mxu0
        %v1612 = vpop.f32.mrb[0].mxu0
        %v1613 = vpop.f32.mrb[0].mxu0
        %1614 = vdwg.mxu0
        %1615 = vmatprep.subr.bf16.mxu0 0
        %1616 = vmatpush1.bf16.msra.mxu0 %v1279
        %1617 = vmatprep.subr.bf16.mxu0 0
        %1618 = vmatpush1.bf16.msra.mxu0 %v1280
        %1619 = vmatprep.subr.bf16.mxu0 0
        %1620 = vmatpush1.bf16.msra.mxu0 %v1281
        %1621 = vmatprep.subr.bf16.mxu0 0
        %1622 = vmatpush1.bf16.msra.mxu0 %v1282
        %1623 = vmatprep.subr.bf16.mxu0 0
        %1624 = vmatpush1.bf16.msra.mxu0 %v1283
        %1625 = vmatprep.subr.bf16.mxu0 0
        %1626 = vmatpush1.bf16.msra.mxu0 %v1284
        %1627 = vmatprep.subr.bf16.mxu0 0
        %1628 = vmatpush1.bf16.msra.mxu0 %v1285
        %1629 = vmatprep.subr.bf16.mxu0 0
        %1630 = vmatpush1.bf16.msra.mxu0 %v1286
        %1631 = vmatprep.subr.bf16.mxu0 0
        %1632 = vmatpush1.bf16.msra.mxu0 %v1287
        %1633 = vmatprep.subr.bf16.mxu0 0
        %1634 = vmatpush1.bf16.msra.mxu0 %v1288
        %1635 = vmatprep.subr.bf16.mxu0 0
        %1636 = vmatpush1.bf16.msra.mxu0 %v1289
        %1637 = vmatprep.subr.bf16.mxu0 0
        %1638 = vmatpush1.bf16.msra.mxu0 %v1290
        %1639 = vmatprep.subr.bf16.mxu0 0
        %1640 = vmatpush1.bf16.msra.mxu0 %v1291
        %1641 = vmatprep.subr.bf16.mxu0 0
        %1642 = vmatpush1.bf16.msra.mxu0 %v1292
        %1643 = vmatprep.subr.bf16.mxu0 0
        %1644 = vmatpush1.bf16.msra.mxu0 %v1293
        %1645 = vmatprep.subr.bf16.mxu0 0
        %1646 = vmatpush1.bf16.msra.mxu0 %v1294
        %1647 = vmatprep.mubr.bf16.mxu0 %v577
        %1648 = vmatmul.mubr.bf16.gmra.mrb[0].mxu0 %v563
        %v1649 = vpop.f32.mrb[0].mxu0
        %v1650 = vadd.f32 %v1610, %v1649
        %v1651 = vpop.f32.mrb[0].mxu0
        %v1652 = vpop.f32.mrb[0].mxu0
        %v1653 = vpop.f32.mrb[0].mxu0
        %1654 = vdwg.mxu0
        %1655 = vmatprep.subr.bf16.mxu0 0
        %1656 = vmatpush1.bf16.msra.mxu0 %v1295
        %1657 = vmatprep.subr.bf16.mxu0 0
        %1658 = vmatpush1.bf16.msra.mxu0 %v1296
        %1659 = vmatprep.subr.bf16.mxu0 0
        %1660 = vmatpush1.bf16.msra.mxu0 %v1297
        %1661 = vmatprep.subr.bf16.mxu0 0
        %1662 = vmatpush1.bf16.msra.mxu0 %v1298
        %1663 = vmatprep.subr.bf16.mxu0 0
        %1664 = vmatpush1.bf16.msra.mxu0 %v1299
        %1665 = vmatprep.subr.bf16.mxu0 0
        %1666 = vmatpush1.bf16.msra.mxu0 %v1300
        %1667 = vmatprep.subr.bf16.mxu0 0
        %1668 = vmatpush1.bf16.msra.mxu0 %v1301
        %1669 = vmatprep.subr.bf16.mxu0 0
        %1670 = vmatpush1.bf16.msra.mxu0 %v1302
        %1671 = vmatprep.subr.bf16.mxu0 0
        %1672 = vmatpush1.bf16.msra.mxu0 %v1303
        %1673 = vmatprep.subr.bf16.mxu0 0
        %1674 = vmatpush1.bf16.msra.mxu0 %v1304
        %1675 = vmatprep.subr.bf16.mxu0 0
        %1676 = vmatpush1.bf16.msra.mxu0 %v1305
        %1677 = vmatprep.subr.bf16.mxu0 0
        %1678 = vmatpush1.bf16.msra.mxu0 %v1306
        %1679 = vmatprep.subr.bf16.mxu0 0
        %1680 = vmatpush1.bf16.msra.mxu0 %v1307
        %1681 = vmatprep.subr.bf16.mxu0 0
        %1682 = vmatpush1.bf16.msra.mxu0 %v1308
        %1683 = vmatprep.subr.bf16.mxu0 0
        %1684 = vmatpush1.bf16.msra.mxu0 %v1309
        %1685 = vmatprep.subr.bf16.mxu0 0
        %1686 = vmatpush1.bf16.msra.mxu0 %v1310
        %1687 = vmatprep.mubr.bf16.mxu0 %v581
        %1688 = vmatmul.mubr.bf16.gmra.mrb[0].mxu0 %v579
        %v1689 = vpop.f32.mrb[0].mxu0
        %v1690 = vadd.f32 %v1650, %v1689
        %v1691 = vpop.f32.mrb[0].mxu0
        %v1692 = vpop.f32.mrb[0].mxu0
        %v1693 = vpop.f32.mrb[0].mxu0
        %1694 = vdwg.mxu0
        %1695 = vmatprep.subr.bf16.mxu0 0
        %1696 = vmatpush1.bf16.msra.mxu0 %v1311
        %1697 = vmatprep.subr.bf16.mxu0 0
        %1698 = vmatpush1.bf16.msra.mxu0 %v1312
        %1699 = vmatprep.subr.bf16.mxu0 0
        %1700 = vmatpush1.bf16.msra.mxu0 %v1313
        %1701 = vmatprep.subr.bf16.mxu0 0
        %1702 = vmatpush1.bf16.msra.mxu0 %v1314
        %1703 = vmatprep.subr.bf16.mxu0 0
        %1704 = vmatpush1.bf16.msra.mxu0 %v1315
        %1705 = vmatprep.subr.bf16.mxu0 0
        %1706 = vmatpush1.bf16.msra.mxu0 %v1316
        %1707 = vmatprep.subr.bf16.mxu0 0
        %1708 = vmatpush1.bf16.msra.mxu0 %v1317
        %1709 = vmatprep.subr.bf16.mxu0 0
        %1710 = vmatpush1.bf16.msra.mxu0 %v1318
        %1711 = vmatprep.subr.bf16.mxu0 0
        %1712 = vmatpush1.bf16.msra.mxu0 %v1319
        %1713 = vmatprep.subr.bf16.mxu0 0
        %1714 = vmatpush1.bf16.msra.mxu0 %v1320
        %1715 = vmatprep.subr.bf16.mxu0 0
        %1716 = vmatpush1.bf16.msra.mxu0 %v1321
        %1717 = vmatprep.subr.bf16.mxu0 0
        %1718 = vmatpush1.bf16.msra.mxu0 %v1322
        %1719 = vmatprep.subr.bf16.mxu0 0
        %1720 = vmatpush1.bf16.msra.mxu0 %v1323
        %1721 = vmatprep.subr.bf16.mxu0 0
        %1722 = vmatpush1.bf16.msra.mxu0 %v1324
        %1723 = vmatprep.subr.bf16.mxu0 0
        %1724 = vmatpush1.bf16.msra.mxu0 %v1325
        %1725 = vmatprep.subr.bf16.mxu0 0
        %1726 = vmatpush1.bf16.msra.mxu0 %v1326
        %1727 = vmatprep.mubr.bf16.mxu0 %v619
        %1728 = vmatmul.mubr.bf16.gmra.mrb[0].mxu0 %v605
        %v1729 = vpop.f32.mrb[0].mxu0
        %v1730 = vadd.f32 %v1690, %v1729
        %v1731 = vpop.f32.mrb[0].mxu0
        %v1732 = vpop.f32.mrb[0].mxu0
        %v1733 = vpop.f32.mrb[0].mxu0
        %1734 = vdwg.mxu0
        %1735 = vmatprep.subr.bf16.mxu0 0
        %1736 = vmatpush1.bf16.msra.mxu0 %v1327
        %1737 = vmatprep.subr.bf16.mxu0 0
        %1738 = vmatpush1.bf16.msra.mxu0 %v1328
        %1739 = vmatprep.subr.bf16.mxu0 0
        %1740 = vmatpush1.bf16.msra.mxu0 %v1329
        %1741 = vmatprep.subr.bf16.mxu0 0
        %1742 = vmatpush1.bf16.msra.mxu0 %v1330
        %1743 = vmatprep.subr.bf16.mxu0 0
        %1744 = vmatpush1.bf16.msra.mxu0 %v1331
        %1745 = vmatprep.subr.bf16.mxu0 0
        %1746 = vmatpush1.bf16.msra.mxu0 %v1332
        %1747 = vmatprep.subr.bf16.mxu0 0
        %1748 = vmatpush1.bf16.msra.mxu0 %v1333
        %1749 = vmatprep.subr.bf16.mxu0 0
        %1750 = vmatpush1.bf16.msra.mxu0 %v1334
        %1751 = vmatprep.subr.bf16.mxu0 0
        %1752 = vmatpush1.bf16.msra.mxu0 %v1335
        %1753 = vmatprep.subr.bf16.mxu0 0
        %1754 = vmatpush1.bf16.msra.mxu0 %v1336
        %1755 = vmatprep.subr.bf16.mxu0 0
        %1756 = vmatpush1.bf16.msra.mxu0 %v1337
        %1757 = vmatprep.subr.bf16.mxu0 0
        %1758 = vmatpush1.bf16.msra.mxu0 %v1338
        %1759 = vmatprep.subr.bf16.mxu0 0
        %1760 = vmatpush1.bf16.msra.mxu0 %v1339
        %1761 = vmatprep.subr.bf16.mxu0 0
        %1762 = vmatpush1.bf16.msra.mxu0 %v1340
        %1763 = vmatprep.subr.bf16.mxu0 0
        %1764 = vmatpush1.bf16.msra.mxu0 %v1341
        %1765 = vmatprep.subr.bf16.mxu0 0
        %1766 = vmatpush1.bf16.msra.mxu0 %v1342
        %1767 = vmatprep.mubr.bf16.mxu0 %v629
        %1768 = vmatmul.mubr.bf16.gmra.mrb[0].mxu0 %v627
        %v1769 = vpop.f32.mrb[0].mxu0
        %v1770 = vadd.f32 %v1730, %v1769
        %v1771 = vpop.f32.mrb[0].mxu0
        %v1772 = vpop.f32.mrb[0].mxu0
        %v1773 = vpop.f32.mrb[0].mxu0
        %1774 = vdwg.mxu0
        %1775 = vmatprep.subr.bf16.mxu0 0
        %1776 = vmatpush1.bf16.msra.mxu0 %v1343
        %1777 = vmatprep.subr.bf16.mxu0 0
        %1778 = vmatpush1.bf16.msra.mxu0 %v1344
        %1779 = vmatprep.subr.bf16.mxu0 0
        %1780 = vmatpush1.bf16.msra.mxu0 %v1345
        %1781 = vmatprep.subr.bf16.mxu0 0
        %1782 = vmatpush1.bf16.msra.mxu0 %v1346
        %1783 = vmatprep.subr.bf16.mxu0 0
        %1784 = vmatpush1.bf16.msra.mxu0 %v1347
        %1785 = vmatprep.subr.bf16.mxu0 0
        %1786 = vmatpush1.bf16.msra.mxu0 %v1348
        %1787 = vmatprep.subr.bf16.mxu0 0
        %1788 = vmatpush1.bf16.msra.mxu0 %v1349
        %1789 = vmatprep.subr.bf16.mxu0 0
        %1790 = vmatpush1.bf16.msra.mxu0 %v1350
        %1791 = vmatprep.subr.bf16.mxu0 0
        %1792 = vmatpush1.bf16.msra.mxu0 %v1351
        %1793 = vmatprep.subr.bf16.mxu0 0
        %1794 = vmatpush1.bf16.msra.mxu0 %v1352
        %1795 = vmatprep.subr.bf16.mxu0 0
        %1796 = vmatpush1.bf16.msra.mxu0 %v1353
        %1797 = vmatprep.subr.bf16.mxu0 0
        %1798 = vmatpush1.bf16.msra.mxu0 %v1354
        %1799 = vmatprep.subr.bf16.mxu0 0
        %1800 = vmatpush1.bf16.msra.mxu0 %v1355
        %1801 = vmatprep.subr.bf16.mxu0 0
        %1802 = vmatpush1.bf16.msra.mxu0 %v1356
        %1803 = vmatprep.subr.bf16.mxu0 0
        %1804 = vmatpush1.bf16.msra.mxu0 %v1357
        %1805 = vmatprep.subr.bf16.mxu0 0
        %1806 = vmatpush1.bf16.msra.mxu0 %v1358
        %1807 = vmatprep.mubr.bf16.mxu0 %v626
        %1808 = vmatmul.mubr.bf16.gmra.mrb[0].mxu0 %v612
        %v1809 = vpop.f32.mrb[0].mxu0
        %v1810 = vadd.f32 %v1770, %v1809
        %v1811 = vpop.f32.mrb[0].mxu0
        %v1812 = vpop.f32.mrb[0].mxu0
        %v1813 = vpop.f32.mrb[0].mxu0
        %1814 = vdwg.mxu0
        %1815 = vmatprep.subr.bf16.mxu0 0
        %1816 = vmatpush1.bf16.msra.mxu0 %v1359
        %1817 = vmatprep.subr.bf16.mxu0 0
        %1818 = vmatpush1.bf16.msra.mxu0 %v1360
        %1819 = vmatprep.subr.bf16.mxu0 0
        %1820 = vmatpush1.bf16.msra.mxu0 %v1361
        %1821 = vmatprep.subr.bf16.mxu0 0
        %1822 = vmatpush1.bf16.msra.mxu0 %v1362
        %1823 = vmatprep.subr.bf16.mxu0 0
        %1824 = vmatpush1.bf16.msra.mxu0 %v1363
        %1825 = vmatprep.subr.bf16.mxu0 0
        %1826 = vmatpush1.bf16.msra.mxu0 %v1364
        %1827 = vmatprep.subr.bf16.mxu0 0
        %1828 = vmatpush1.bf16.msra.mxu0 %v1365
        %1829 = vmatprep.subr.bf16.mxu0 0
        %1830 = vmatpush1.bf16.msra.mxu0 %v1366
        %1831 = vmatprep.subr.bf16.mxu0 0
        %1832 = vmatpush1.bf16.msra.mxu0 %v1367
        %1833 = vmatprep.subr.bf16.mxu0 0
        %1834 = vmatpush1.bf16.msra.mxu0 %v1368
        %1835 = vmatprep.subr.bf16.mxu0 0
        %1836 = vmatpush1.bf16.msra.mxu0 %v1369
        %1837 = vmatprep.subr.bf16.mxu0 0
        %1838 = vmatpush1.bf16.msra.mxu0 %v1370
        %1839 = vmatprep.subr.bf16.mxu0 0
        %1840 = vmatpush1.bf16.msra.mxu0 %v1371
        %1841 = vmatprep.subr.bf16.mxu0 0
        %1842 = vmatpush1.bf16.msra.mxu0 %v1372
        %1843 = vmatprep.subr.bf16.mxu0 0
        %1844 = vmatpush1.bf16.msra.mxu0 %v1373
        %1845 = vmatprep.subr.bf16.mxu0 0
        %1846 = vmatpush1.bf16.msra.mxu0 %v1374
        %1847 = vmatprep.mubr.bf16.mxu0 %v630
        %1848 = vmatmul.mubr.bf16.gmra.mrb[0].mxu0 %v628
        %v1849 = vpop.f32.mrb[0].mxu0
        %v1850 = vadd.f32 %v1810, %v1849
        %v1851 = vpop.f32.mrb[0].mxu0
        %v1852 = vpop.f32.mrb[0].mxu0
        %v1853 = vpop.f32.mrb[0].mxu0
        %1854 = vdwg.mxu0
        %1855 = vmatprep.subr.bf16.mxu0 0
        %1856 = vmatpush1.bf16.msra.mxu0 %v1375
        %1857 = vmatprep.subr.bf16.mxu0 0
        %1858 = vmatpush1.bf16.msra.mxu0 %v1376
        %1859 = vmatprep.subr.bf16.mxu0 0
        %1860 = vmatpush1.bf16.msra.mxu0 %v1377
        %1861 = vmatprep.subr.bf16.mxu0 0
        %1862 = vmatpush1.bf16.msra.mxu0 %v1378
        %1863 = vmatprep.subr.bf16.mxu0 0
        %1864 = vmatpush1.bf16.msra.mxu0 %v1379
        %1865 = vmatprep.subr.bf16.mxu0 0
        %1866 = vmatpush1.bf16.msra.mxu0 %v1380
        %1867 = vmatprep.subr.bf16.mxu0 0
        %1868 = vmatpush1.bf16.msra.mxu0 %v1381
        %1869 = vmatprep.subr.bf16.mxu0 0
        %1870 = vmatpush1.bf16.msra.mxu0 %v1382
        %1871 = vmatprep.subr.bf16.mxu0 0
        %1872 = vmatpush1.bf16.msra.mxu0 %v1383
        %1873 = vmatprep.subr.bf16.mxu0 0
        %1874 = vmatpush1.bf16.msra.mxu0 %v1384
        %1875 = vmatprep.subr.bf16.mxu0 0
        %1876 = vmatpush1.bf16.msra.mxu0 %v1385
        %1877 = vmatprep.subr.bf16.mxu0 0
        %1878 = vmatpush1.bf16.msra.mxu0 %v1386
        %1879 = vmatprep.subr.bf16.mxu0 0
        %1880 = vmatpush1.bf16.msra.mxu0 %v1387
        %1881 = vmatprep.subr.bf16.mxu0 0
        %1882 = vmatpush1.bf16.msra.mxu0 %v1388
        %1883 = vmatprep.subr.bf16.mxu0 0
        %1884 = vmatpush1.bf16.msra.mxu0 %v1389
        %1885 = vmatprep.subr.bf16.mxu0 0
        %1886 = vmatpush1.bf16.msra.mxu0 %v1390
        %1887 = vmatprep.mubr.bf16.mxu0 %v652
        %1888 = vmatmul.mubr.bf16.gmra.mrb[0].mxu0 %v645
        %v1889 = vpop.f32.mrb[0].mxu0
        %v1890 = vadd.f32 %v1850, %v1889
        %v1891 = vpop.f32.mrb[0].mxu0
        %v1892 = vpop.f32.mrb[0].mxu0
        %v1893 = vpop.f32.mrb[0].mxu0
        %1894 = vdwg.mxu0
        %v1895 = vadd.f32 %v238, %v1890
        %1896 = vst [vmem:[#allocation2] sm:$0x3] %v1895
        %p1897 = scmp.eq.s32.totalorder %s17, 3
        // Predicated region
        $region45: #{net_forward.3} parent=39 // pred_check
          %p1898 = pneg %p1897
        $region46: #{net_forward.3} parent=39 // pred_check_branch
          %1900 = sbr.rel (%p1898) target = $region48
        $region47: #{net_forward.3} parent=39 // pred_region
          %v1901 = vld [vmem:[#allocation2] sm:$0x3]
          %v1902 = vld [vmem:[%s2] sm:$0x1]
          %v1904 = vlaneseq
          %v1905 = vshrl.u32 %v1904, 7
          %v1906 = vsub.s32 0, %v1905
          %v1907 = vrot.slane %v1902, %v1906
          %v1909 = vadd.f32 %v1901, %v1907
          %v1910 = vmax.f32 %v1909, 0.0
          %v1911 = vld [vmem:[%s3] sm:$0xff]
          %v1912 = vld [vmem:[%s3 + $0x8] sm:$0xff]
          %v1913 = vld [vmem:[%s3 + $0x10] sm:$0xff]
          %v1914 = vld [vmem:[%s3 + $0x18] sm:$0xff]
          %v1915 = vld [vmem:[%s3 + $0x20] sm:$0xff]
          %v1916 = vld [vmem:[%s3 + $0x28] sm:$0xff]
          %v1917 = vld [vmem:[%s3 + $0x30] sm:$0xff]
          %v1918 = vld [vmem:[%s3 + $0x38] sm:$0xff]
          %v1919 = vld [vmem:[%s3 + $0x40] sm:$0xff]
          %v1920 = vld [vmem:[%s3 + $0x48] sm:$0xff]
          %v1921 = vld [vmem:[%s3 + $0x50] sm:$0xff]
          %v1922 = vld [vmem:[%s3 + $0x58] sm:$0xff]
          %v1923 = vld [vmem:[%s3 + $0x60] sm:$0xff]
          %v1924 = vld [vmem:[%s3 + $0x68] sm:$0xff]
          %v1925 = vld [vmem:[%s3 + $0x70] sm:$0xff]
          %v1926 = vld [vmem:[%s3 + $0x78] sm:$0xff]
          %v1927 = vld [vmem:[%s4] sm:$0x1]
          %v1929 = vlaneseq
          %v1930 = vshrl.u32 %v1929, 7
          %v1931 = vsub.s32 0, %v1930
          %v1932 = vrot.slane %v1927, %v1931
          %1934 = vmatprep.subr.mxu0 0.0
          %1935 = vmatpush1.msra.mxu0 %v1911
          %1936 = vmatprep.subr.mxu0 0.0
          %1937 = vmatpush1.msra.mxu0 %v1912
          %1938 = vmatprep.subr.mxu0 0.0
          %1939 = vmatpush1.msra.mxu0 %v1913
          %1940 = vmatprep.subr.mxu0 0.0
          %1941 = vmatpush1.msra.mxu0 %v1914
          %1942 = vmatprep.subr.mxu0 0.0
          %1943 = vmatpush1.msra.mxu0 %v1915
          %1944 = vmatprep.subr.mxu0 0.0
          %1945 = vmatpush1.msra.mxu0 %v1916
          %1946 = vmatprep.subr.mxu0 0.0
          %1947 = vmatpush1.msra.mxu0 %v1917
          %1948 = vmatprep.subr.mxu0 0.0
          %1949 = vmatpush1.msra.mxu0 %v1918
          %1950 = vmatprep.subr.mxu0 0.0
          %1951 = vmatpush1.msra.mxu0 %v1919
          %1952 = vmatprep.subr.mxu0 0.0
          %1953 = vmatpush1.msra.mxu0 %v1920
          %1954 = vmatprep.subr.mxu0 0.0
          %1955 = vmatpush1.msra.mxu0 %v1921
          %1956 = vmatprep.subr.mxu0 0.0
          %1957 = vmatpush1.msra.mxu0 %v1922
          %1958 = vmatprep.subr.mxu0 0.0
          %1959 = vmatpush1.msra.mxu0 %v1923
          %1960 = vmatprep.subr.mxu0 0.0
          %1961 = vmatpush1.msra.mxu0 %v1924
          %1962 = vmatprep.subr.mxu0 0.0
          %1963 = vmatpush1.msra.mxu0 %v1925
          %1964 = vmatprep.subr.mxu0 0.0
          %1965 = vmatpush1.msra.mxu0 %v1926
          %1966 = vmatprep.subr.mxu0 0.0
          %1967 = vmatpush1.msra.mxu0 0.0
          %1968 = vmatprep.subr.mxu0 0.0
          %1969 = vmatpush1.msra.mxu0 0.0
          %1970 = vmatprep.subr.mxu0 0.0
          %1971 = vmatpush1.msra.mxu0 0.0
          %1972 = vmatprep.subr.mxu0 0.0
          %1973 = vmatpush1.msra.mxu0 0.0
          %1974 = vmatprep.subr.mxu0 0.0
          %1975 = vmatpush1.msra.mxu0 0.0
          %1976 = vmatprep.subr.mxu0 0.0
          %1977 = vmatpush1.msra.mxu0 0.0
          %1978 = vmatprep.subr.mxu0 0.0
          %1979 = vmatpush1.msra.mxu0 0.0
          %1980 = vmatprep.subr.mxu0 0.0
          %1981 = vmatpush1.msra.mxu0 0.0
          %1982 = vmatprep.subr.mxu0 0.0
          %1983 = vmatpush1.msra.mxu0 0.0
          %1984 = vmatprep.subr.mxu0 0.0
          %1985 = vmatpush1.msra.mxu0 0.0
          %1986 = vmatprep.subr.mxu0 0.0
          %1987 = vmatpush1.msra.mxu0 0.0
          %1988 = vmatprep.subr.mxu0 0.0
          %1989 = vmatpush1.msra.mxu0 0.0
          %1990 = vmatprep.subr.mxu0 0.0
          %1991 = vmatpush1.msra.mxu0 0.0
          %1992 = vmatprep.subr.mxu0 0.0
          %1993 = vmatpush1.msra.mxu0 0.0
          %1994 = vmatprep.subr.mxu0 0.0
          %1995 = vmatpush1.msra.mxu0 0.0
          %1996 = vmatprep.subr.mxu0 0.0
          %1997 = vmatpush1.msra.mxu0 0.0
          %1998 = vmatprep.mubr.f32.mxu0 0.0
          %1999 = vmatmul.mubr.f32.gmra.mrb[0].mxu0 %v1910
          %v2000 = vpop.f32.mrb[0].mxu0
          %v2001 = vadd.f32 %v1932, %v2000
          %v2002 = vpop.f32.mrb[0].mxu0
          %2003 = vdwg.mxu0
          %vm2004 = vcmask 74752
          %v2005 = vsel %vm2004, %v2001, -inf
          %2006 = vmax.xlane.f32.xlu0 %v2005
          %v2007 = vpop.xlane.xlu0 %2006
          %v2008 = vsub.f32 %v2001, %v2007
          %v2009 = vmul.f32 %v2008, 1.442695
          %v2010 = vpow.pop %v2009
          %v2011 = vsel %vm2004, %v2010, 0.0
          %2012 = vadd.xlane.f32.xlu0 %v2011
          %v2013 = vpop.xlane.xlu0 %2012
          %v2014 = vlog2.pop %v2013
          %v2015 = vmul.f32 %v2014, 0.6931472
          %v2016 = vsub.f32 %v2008, %v2015
          %2017 = vst.msk [vmem:[#allocation3] sm:$0x3] %vm2004, %v2016
        $region48: #{net_forward.3} parent=39 // pred_fallthru
          _
        // Predicated region
        $region49: #{net_forward.3} parent=39 // pred_check
          %p2018 = pneg %p145
        $region50: #{net_forward.3} parent=39 // pred_check_branch
          %2020 = sbr.rel (%p2018) target = $region52
        $region51: #{net_forward.3} parent=39 // pred_region
          %s2022 = ssub.s32 32, 32
          %2023 = vsyncadd [#allocation4], %s2022
          %s2025 = sshll.u32 [#allocation3], 4
          %s2026 = int_to_ptr.vmem [resolvable:$true] %s2025
          %2028 = dma.vmem_to_hbm [thread:$0]  %s2026, 32, %s5, [#allocation4]
        $region52: #{net_forward.3} parent=39 // pred_fallthru
          _
        // Predicated region
        $region53: #{net_forward.3} parent=39 // pred_check
          %p2029 = pneg %p145
        $region54: #{net_forward.3} parent=39 // pred_check_branch
          %2031 = sbr.rel (%p2029) target = $region56
        $region55: #{net_forward.3} parent=39 // pred_region
          %2032 = dma.done [#allocation4], 32
        $region56: #{net_forward.3} parent=39 // pred_fallthru
          _
      $region40: #{net_forward.3} parent=5 // pred_fallthru
        _
      %p2033 = scmp.le.s32.totalorder 2, %s12
      // Predicated region
      $region57: #{net_forward.3} parent=5 // pred_check
        %p2034 = pneg %p2033
      $region58: #{net_forward.3} parent=5 // pred_check_branch
        %2036 = sbr.rel (%p2034) target = $region60
      $region59: #{net_forward.3} parent=5 // pred_region
        %s2037 = ssub.s32 %s12, 2
      $region60: #{net_forward.3} parent=5 // pred_fallthru
        _
    $region6: #{net_forward.3} parent=1 // loop_footer
      %s16 = sadd.s32 1, %s12
    $region7: #{net_forward.3} parent=1 // loop_footer_branch
      %11 = sbr.rel target = $region3
    $region8: #{net_forward.3} parent=1 // loop_exit
      _
    %2038 = vsyncpa [#allocation4], 1
    %s2039 = scalar_lea.sflag [#allocation4], 1
    %2040 = vsyncpa %s2039, 1

// kernel: net_forward.2
$region0: #{net_forward.2}
  #allocation0 [shape = 'u32[]', space=smem, size = 0x4, offset = 0x4, fixed_abs, tag = 'smem constant byte address 0x4 - core index']
  #allocation1 [shape = 'u32[144,128]{1,0:T(1,128)}', space=vmem, size = 0x12000, scoped, tag = 'internal scratch']
  #allocation2 [shape = 'f32[676,32]{1,0:T(8,128)}', space=vmem, size = 0x55000, scoped, tag = 'scratch operand']
  #allocation3 [shape = 'f32[622,64]{1,0:T(8,128)}', space=vmem, size = 0x4e000, scoped, tag = 'scratch operand']
  %s0 = inlined_call_operand.vmem [shape: f32[2,676,9], index: 0, kind: input, shape index: {}]
  %s1 = inlined_call_operand.vmem [shape: f32[9,32], index: 1, kind: input, shape index: {}]
  %s2 = inlined_call_operand.vmem [shape: f32[1,32], index: 2, kind: input, shape index: {}]
  %s3 = inlined_call_operand.vmem [shape: f32[9,32,64], index: 3, kind: input, shape index: {}]
  %s4 = inlined_call_operand.vmem [shape: f32[1,64], index: 4, kind: input, shape index: {}]
  %s5 = inlined_call_operand.vmem [shape: bf16[2,12,12,64], index: 5, kind: output, shape index: {}]
  %s6 = sld [smem:[#allocation0]]
  $region53: #{net_forward.2} parent=0
    _
  %s8 = ssub.s32 1, %s6
  %s9 = scalar_select 0, %s8, %s6
  loop: start=0, step=1, limit=4
  $region2: #{net_forward.2} parent=0 // loop_pre_header
    _
  $region3: #{net_forward.2} parent=0 // loop_header
    %s11 = sphi 0, %s15
    %p12 = scmp.ge.s32.totalorder %s11, 4
    %s21 = sphi 0, %s23
    %s24 = sphi 0, %s21
    %s25 = sphi 0, %s24
    %s41 = sphi 0, %s25
    %s45 = sphi 0, %s45
    %s47 = sphi 0, %s45
    %s48 = sphi 0, %s47
    %s62 = sphi 0, %s48
    %s66 = sphi 0, %s66
    %s68 = sphi 0, %s66
    %s69 = sphi 0, %s68
    %s83 = sphi 0, %s69
    %s87 = sphi 0, %s87
    %s89 = sphi 0, %s87
    %s90 = sphi 0, %s89
    %s104 = sphi 0, %s90
    %s108 = sphi 0, %s108
    %s110 = sphi 0, %s108
    %s111 = sphi 0, %s110
    %s125 = sphi 0, %s111
    %s131 = sphi 0, %s133
    %s134 = sphi 0, %s131
    %s135 = sphi 0, %s134
    %s151 = sphi 0, %s135
  $region4: #{net_forward.2} parent=0 // loop_header_branch
    %14 = sbr.rel (%p12) target = $region8
  $region5: #{net_forward.2} parent=0 // loop_body
    %s16 = ssub.s32 %s11, 1
    %s17 = ssub.s32 %s11, 2
    %s18 = sadd.s32 %s11, 1
    %s19 = ssub.s32 %s11, %s18
    %p20 = scmp.eq.s32.totalorder %s19, 0
    %s22 = sadd.s32 %s21, 1
    %s23 = scalar_select %p20, %s21, %s22
    %p26 = pneg %p20
    %p27 = scmp.eq.s32.totalorder %s11, 1
    %p28 = por %p26, %p27
    %p29 = scmp.ne.s32.totalorder %s21, %s24
    %p30 = scmp.eq.s32.totalorder %s11, 0
    %p31 = por %p29, %p30
    %p32 = scmp.ne.s32.totalorder %s21, %s24
    %p33 = scmp.eq.s32.totalorder %s16, 1
    %p34 = por %p32, %p33
    %p35 = scmp.ne.s32.totalorder %s24, %s25
    %p36 = scmp.eq.s32.totalorder %s16, 0
    %p37 = por %p35, %p36
    %p38 = scmp.ne.s32.totalorder %s24, %s25
    %p39 = scmp.eq.s32.totalorder %s17, 1
    %p40 = por %p38, %p39
    %p42 = scmp.ne.s32.totalorder %s25, %s41
    %p43 = scmp.eq.s32.totalorder %s17, 0
    %p44 = por %p42, %p43
    %s46 = sadd.s32 %s45, 1
    %p49 = scmp.eq.s32.totalorder %s11, 1
    %p50 = scmp.ne.s32.totalorder %s45, %s47
    %p51 = scmp.eq.s32.totalorder %s11, 0
    %p52 = por %p50, %p51
    %p53 = scmp.ne.s32.totalorder %s45, %s47
    %p54 = scmp.eq.s32.totalorder %s16, 1
    %p55 = por %p53, %p54
    %p56 = scmp.ne.s32.totalorder %s47, %s48
    %p57 = scmp.eq.s32.totalorder %s16, 0
    %p58 = por %p56, %p57
    %p59 = scmp.ne.s32.totalorder %s47, %s48
    %p60 = scmp.eq.s32.totalorder %s17, 1
    %p61 = por %p59, %p60
    %p63 = scmp.ne.s32.totalorder %s48, %s62
    %p64 = scmp.eq.s32.totalorder %s17, 0
    %p65 = por %p63, %p64
    %s67 = sadd.s32 %s66, 1
    %p70 = scmp.eq.s32.totalorder %s11, 1
    %p71 = scmp.ne.s32.totalorder %s66, %s68
    %p72 = scmp.eq.s32.totalorder %s11, 0
    %p73 = por %p71, %p72
    %p74 = scmp.ne.s32.totalorder %s66, %s68
    %p75 = scmp.eq.s32.totalorder %s16, 1
    %p76 = por %p74, %p75
    %p77 = scmp.ne.s32.totalorder %s68, %s69
    %p78 = scmp.eq.s32.totalorder %s16, 0
    %p79 = por %p77, %p78
    %p80 = scmp.ne.s32.totalorder %s68, %s69
    %p81 = scmp.eq.s32.totalorder %s17, 1
    %p82 = por %p80, %p81
    %p84 = scmp.ne.s32.totalorder %s69, %s83
    %p85 = scmp.eq.s32.totalorder %s17, 0
    %p86 = por %p84, %p85
    %s88 = sadd.s32 %s87, 1
    %p91 = scmp.eq.s32.totalorder %s11, 1
    %p92 = scmp.ne.s32.totalorder %s87, %s89
    %p93 = scmp.eq.s32.totalorder %s11, 0
    %p94 = por %p92, %p93
    %p95 = scmp.ne.s32.totalorder %s87, %s89
    %p96 = scmp.eq.s32.totalorder %s16, 1
    %p97 = por %p95, %p96
    %p98 = scmp.ne.s32.totalorder %s89, %s90
    %p99 = scmp.eq.s32.totalorder %s16, 0
    %p100 = por %p98, %p99
    %p101 = scmp.ne.s32.totalorder %s89, %s90
    %p102 = scmp.eq.s32.totalorder %s17, 1
    %p103 = por %p101, %p102
    %p105 = scmp.ne.s32.totalorder %s90, %s104
    %p106 = scmp.eq.s32.totalorder %s17, 0
    %p107 = por %p105, %p106
    %s109 = sadd.s32 %s108, 1
    %p112 = scmp.eq.s32.totalorder %s11, 1
    %p113 = scmp.ne.s32.totalorder %s108, %s110
    %p114 = scmp.eq.s32.totalorder %s11, 0
    %p115 = por %p113, %p114
    %p116 = scmp.ne.s32.totalorder %s108, %s110
    %p117 = scmp.eq.s32.totalorder %s16, 1
    %p118 = por %p116, %p117
    %p119 = scmp.ne.s32.totalorder %s110, %s111
    %p120 = scmp.eq.s32.totalorder %s16, 0
    %p121 = por %p119, %p120
    %p122 = scmp.ne.s32.totalorder %s110, %s111
    %p123 = scmp.eq.s32.totalorder %s17, 1
    %p124 = por %p122, %p123
    %p126 = scmp.ne.s32.totalorder %s111, %s125
    %p127 = scmp.eq.s32.totalorder %s17, 0
    %p128 = por %p126, %p127
    %s129 = ssub.s32 %s11, %s18
    %p130 = scmp.eq.s32.totalorder %s129, 0
    %s132 = sadd.s32 %s131, 1
    %s133 = scalar_select %p130, %s131, %s132
    %p136 = pneg %p130
    %p137 = scmp.eq.s32.totalorder %s11, 1
    %p138 = por %p136, %p137
    %p139 = scmp.ne.s32.totalorder %s131, %s134
    %p140 = scmp.eq.s32.totalorder %s11, 0
    %p141 = por %p139, %p140
    %p142 = scmp.ne.s32.totalorder %s131, %s134
    %p143 = scmp.eq.s32.totalorder %s16, 1
    %p144 = por %p142, %p143
    %p145 = scmp.ne.s32.totalorder %s134, %s135
    %p146 = scmp.eq.s32.totalorder %s16, 0
    %p147 = por %p145, %p146
    %p148 = scmp.ne.s32.totalorder %s134, %s135
    %p149 = scmp.eq.s32.totalorder %s17, 1
    %p150 = por %p148, %p149
    %p152 = scmp.ne.s32.totalorder %s135, %s151
    %p153 = scmp.eq.s32.totalorder %s17, 0
    %p154 = por %p152, %p153
    %p155 = scmp.le.s32.totalorder 1, %s11
    %p156 = scmp.lt.s32.totalorder %s11, 3
    %p157 = pnand %p155, %p156
    %p158 = pneg %p157
    // Predicated region
    $region9: #{net_forward.2} parent=5 // pred_check
      _
    $region10: #{net_forward.2} parent=5 // pred_check_branch
      %160 = sbr.rel (%p157) target = $region12
    $region11: #{net_forward.2} parent=5 // pred_region
      %s161 = ssub.s32 %s11, 1
      // Predicated region
      $region13: #{net_forward.2} parent=11 // pred_check
        %p162 = pneg %p58
      $region14: #{net_forward.2} parent=11 // pred_check_branch
        %164 = sbr.rel (%p162) target = $region16
      $region15: #{net_forward.2} parent=11 // pred_region
        _
      $region16: #{net_forward.2} parent=11 // pred_fallthru
        _
      // Predicated region
      $region17: #{net_forward.2} parent=11 // pred_check
        %p165 = pneg %p79
      $region18: #{net_forward.2} parent=11 // pred_check_branch
        %167 = sbr.rel (%p165) target = $region20
      $region19: #{net_forward.2} parent=11 // pred_region
        _
      $region20: #{net_forward.2} parent=11 // pred_fallthru
        _
      // Predicated region
      $region21: #{net_forward.2} parent=11 // pred_check
        %p168 = pneg %p100
      $region22: #{net_forward.2} parent=11 // pred_check_branch
        %170 = sbr.rel (%p168) target = $region24
      $region23: #{net_forward.2} parent=11 // pred_region
        _
      $region24: #{net_forward.2} parent=11 // pred_fallthru
        _
      // Predicated region
      $region25: #{net_forward.2} parent=11 // pred_check
        %p171 = pneg %p121
      $region26: #{net_forward.2} parent=11 // pred_check_branch
        %173 = sbr.rel (%p171) target = $region28
      $region27: #{net_forward.2} parent=11 // pred_region
        _
      $region28: #{net_forward.2} parent=11 // pred_fallthru
        _
    $region12: #{net_forward.2} parent=5 // pred_fallthru
      _
    %p174 = scmp.lt.s32.totalorder %s11, 2
    // Predicated region
    $region29: #{net_forward.2} parent=5 // pred_check
      %p175 = pneg %p174
    $region30: #{net_forward.2} parent=5 // pred_check_branch
      %177 = sbr.rel (%p175) target = $region32
    $region31: #{net_forward.2} parent=5 // pred_region
      // Predicated region
      $region33: #{net_forward.2} parent=31 // pred_check
        %p178 = pneg %p31
      $region34: #{net_forward.2} parent=31 // pred_check_branch
        %180 = sbr.rel (%p178) target = $region36
      $region35: #{net_forward.2} parent=31 // pred_region
        %p181 = scmp.lt.s32.totalorder %s11, 1
        %s182 = scalar_select %p181, %s11, 1
        %s183 = smul.addr %s182, 85
        %s184 = smul.addr %s183, 8
        %s185 = scalar_lea.vmem %s0, %s184
      $region36: #{net_forward.2} parent=31 // pred_fallthru
        _
    $region32: #{net_forward.2} parent=5 // pred_fallthru
      _
    %p186 = scmp.le.s32.totalorder 1, %s11
    %p187 = scmp.lt.s32.totalorder %s11, 3
    %p188 = pnand %p186, %p187
    %p189 = pneg %p188
    // Predicated region
    $region37: #{net_forward.2} parent=5 // pred_check
      _
    $region38: #{net_forward.2} parent=5 // pred_check_branch
      %191 = sbr.rel (%p188) target = $region40
    $region39: #{net_forward.2} parent=5 // pred_region
      %s192 = ssub.s32 %s11, 1
      %p193 = scmp.lt.s32.totalorder %s16, 1
      %s194 = scalar_select %p193, %s16, 1
      %s195 = smul.addr %s194, 85
      %s196 = smul.addr %s195, 8
      %s197 = scalar_lea.vmem %s0, %s196
      %p198 = pneg %p37
      %p199 = pneg %p34
      %p200 = pneg %p58
      %p201 = pneg %p55
      %p202 = pneg %p79
      %p203 = pneg %p76
      %p204 = pneg %p100
      %p205 = pneg %p97
      %p206 = pneg %p121
      %p207 = pneg %p118
      %p208 = pneg %p147
      %p209 = pneg %p144
      %p210 = scmp.lt.s32.totalorder %s16, 1
      %s211 = scalar_select %p210, %s16, 1
      %s212 = smul.addr %s211, 24
      %s213 = smul.addr %s212, 4
      %s214 = scalar_lea.vmem %s5, %s213
      %p215 = scmp.lt.s32.totalorder %s16, 1
      %s216 = scalar_select %p215, %s16, 1
      %s217 = smul.addr %s216, 85
      %s218 = smul.addr %s217, 8
      %s219 = scalar_lea.vmem %s0, %s218
      %p220 = scmp.lt.s32.totalorder %s16, 1
      %s221 = scalar_select %p220, %s16, 1
      %s222 = smul.addr %s221, 24
      %s223 = smul.addr %s222, 4
      %s224 = scalar_lea.vmem %s5, %s223
      %v225 = vld [vmem:[%s219] sm:$0xff]
      %v226 = vld [vmem:[%s219 + $0x8] sm:$0xff]
      %v227 = vld [vmem:[%s219 + $0x10] sm:$0xff]
      %v228 = vld [vmem:[%s219 + $0x18] sm:$0xff]
      %v229 = vld [vmem:[%s219 + $0x20] sm:$0xff]
      %v230 = vld [vmem:[%s219 + $0x28] sm:$0xff]
      %v231 = vld [vmem:[%s219 + $0x30] sm:$0xff]
      %v232 = vld [vmem:[%s219 + $0x38] sm:$0xff]
      %v233 = vld [vmem:[%s219 + $0x40] sm:$0xff]
      %v234 = vld [vmem:[%s219 + $0x48] sm:$0xff]
      %v235 = vld [vmem:[%s219 + $0x50] sm:$0xff]
      %v236 = vld [vmem:[%s219 + $0x58] sm:$0xff]
      %v237 = vld [vmem:[%s219 + $0x60] sm:$0xff]
      %v238 = vld [vmem:[%s219 + $0x68] sm:$0xff]
      %v239 = vld [vmem:[%s219 + $0x70] sm:$0xff]
      %v240 = vld [vmem:[%s219 + $0x78] sm:$0xff]
      %v241 = vld [vmem:[%s219 + $0x80] sm:$0xff]
      %v242 = vld [vmem:[%s219 + $0x88] sm:$0xff]
      %v243 = vld [vmem:[%s219 + $0x90] sm:$0xff]
      %v244 = vld [vmem:[%s219 + $0x98] sm:$0xff]
      %v245 = vld [vmem:[%s219 + $0xa0] sm:$0xff]
      %v246 = vld [vmem:[%s219 + $0xa8] sm:$0xff]
      %v247 = vld [vmem:[%s219 + $0xb0] sm:$0xff]
      %v248 = vld [vmem:[%s219 + $0xb8] sm:$0xff]
      %v249 = vld [vmem:[%s219 + $0xc0] sm:$0xff]
      %v250 = vld [vmem:[%s219 + $0xc8] sm:$0xff]
      %v251 = vld [vmem:[%s219 + $0xd0] sm:$0xff]
      %v252 = vld [vmem:[%s219 + $0xd8] sm:$0xff]
      %v253 = vld [vmem:[%s219 + $0xe0] sm:$0xff]
      %v254 = vld [vmem:[%s219 + $0xe8] sm:$0xff]
      %v255 = vld [vmem:[%s219 + $0xf0] sm:$0xff]
      %v256 = vld [vmem:[%s219 + $0xf8] sm:$0xff]
      %v257 = vld [vmem:[%s219 + $0x100] sm:$0xff]
      %v258 = vld [vmem:[%s219 + $0x108] sm:$0xff]
      %v259 = vld [vmem:[%s219 + $0x110] sm:$0xff]
      %v260 = vld [vmem:[%s219 + $0x118] sm:$0xff]
      %v261 = vld [vmem:[%s219 + $0x120] sm:$0xff]
      %v262 = vld [vmem:[%s219 + $0x128] sm:$0xff]
      %v263 = vld [vmem:[%s219 + $0x130] sm:$0xff]
      %v264 = vld [vmem:[%s219 + $0x138] sm:$0xff]
      %v265 = vld [vmem:[%s219 + $0x140] sm:$0xff]
      %v266 = vld [vmem:[%s219 + $0x148] sm:$0xff]
      %v267 = vld [vmem:[%s219 + $0x150] sm:$0xff]
      %v268 = vld [vmem:[%s219 + $0x158] sm:$0xff]
      %v269 = vld [vmem:[%s219 + $0x160] sm:$0xff]
      %v270 = vld [vmem:[%s219 + $0x168] sm:$0xff]
      %v271 = vld [vmem:[%s219 + $0x170] sm:$0xff]
      %v272 = vld [vmem:[%s219 + $0x178] sm:$0xff]
      %v273 = vld [vmem:[%s219 + $0x180] sm:$0xff]
      %v274 = vld [vmem:[%s219 + $0x188] sm:$0xff]
      %v275 = vld [vmem:[%s219 + $0x190] sm:$0xff]
      %v276 = vld [vmem:[%s219 + $0x198] sm:$0xff]
      %v277 = vld [vmem:[%s219 + $0x1a0] sm:$0xff]
      %v278 = vld [vmem:[%s219 + $0x1a8] sm:$0xff]
      %v279 = vld [vmem:[%s219 + $0x1b0] sm:$0xff]
      %v280 = vld [vmem:[%s219 + $0x1b8] sm:$0xff]
      %v281 = vld [vmem:[%s219 + $0x1c0] sm:$0xff]
      %v282 = vld [vmem:[%s219 + $0x1c8] sm:$0xff]
      %v283 = vld [vmem:[%s219 + $0x1d0] sm:$0xff]
      %v284 = vld [vmem:[%s219 + $0x1d8] sm:$0xff]
      %v285 = vld [vmem:[%s219 + $0x1e0] sm:$0xff]
      %v286 = vld [vmem:[%s219 + $0x1e8] sm:$0xff]
      %v287 = vld [vmem:[%s219 + $0x1f0] sm:$0xff]
      %v288 = vld [vmem:[%s219 + $0x1f8] sm:$0xff]
      %v289 = vld [vmem:[%s219 + $0x200] sm:$0xff]
      %v290 = vld [vmem:[%s219 + $0x208] sm:$0xff]
      %v291 = vld [vmem:[%s219 + $0x210] sm:$0xff]
      %v292 = vld [vmem:[%s219 + $0x218] sm:$0xff]
      %v293 = vld [vmem:[%s219 + $0x220] sm:$0xff]
      %v294 = vld [vmem:[%s219 + $0x228] sm:$0xff]
      %v295 = vld [vmem:[%s219 + $0x230] sm:$0xff]
      %v296 = vld [vmem:[%s219 + $0x238] sm:$0xff]
      %v297 = vld [vmem:[%s219 + $0x240] sm:$0xff]
      %v298 = vld [vmem:[%s219 + $0x248] sm:$0xff]
      %v299 = vld [vmem:[%s219 + $0x250] sm:$0xff]
      %v300 = vld [vmem:[%s219 + $0x258] sm:$0xff]
      %v301 = vld [vmem:[%s219 + $0x260] sm:$0xff]
      %v302 = vld [vmem:[%s219 + $0x268] sm:$0xff]
      %v303 = vld [vmem:[%s219 + $0x270] sm:$0xff]
      %v304 = vld [vmem:[%s219 + $0x278] sm:$0xff]
      %v305 = vld [vmem:[%s219 + $0x280] sm:$0xff]
      %v306 = vld [vmem:[%s219 + $0x288] sm:$0xff]
      %v307 = vld [vmem:[%s219 + $0x290] sm:$0xff]
      %v308 = vld [vmem:[%s219 + $0x298] sm:$0xff]
      %v309 = vld [vmem:[%s219 + $0x2a0] sm:$0xf]
      %v310 = vld [vmem:[%s1] sm:$0xff]
      %v311 = vld [vmem:[%s1 + $0x8] sm:$0x1]
      %v312 = vld [vmem:[%s2] sm:$0x1]
      %v314 = vlaneseq
      %v315 = vshrl.u32 %v314, 7
      %v316 = vsub.s32 0, %v315
      %v317 = vrot.slane %v312, %v316
      %vm319 = vcmask 72704
      %v321 = vsel %vm319, %v225, 0
      %v324 = vsel %vm319, %v226, 0
      %v327 = vsel %vm319, %v227, 0
      %v330 = vsel %vm319, %v228, 0
      %v333 = vsel %vm319, %v229, 0
      %v336 = vsel %vm319, %v230, 0
      %v339 = vsel %vm319, %v231, 0
      %v342 = vsel %vm319, %v232, 0
      %v345 = vsel %vm319, %v233, 0
      %v348 = vsel %vm319, %v234, 0
      %v351 = vsel %vm319, %v235, 0
      %v354 = vsel %vm319, %v236, 0
      %v357 = vsel %vm319, %v237, 0
      %v360 = vsel %vm319, %v238, 0
      %v363 = vsel %vm319, %v239, 0
      %v366 = vsel %vm319, %v240, 0
      %v369 = vsel %vm319, %v241, 0
      %v372 = vsel %vm319, %v242, 0
      %v375 = vsel %vm319, %v243, 0
      %v378 = vsel %vm319, %v244, 0
      %v381 = vsel %vm319, %v245, 0
      %v384 = vsel %vm319, %v246, 0
      %v387 = vsel %vm319, %v247, 0
      %v390 = vsel %vm319, %v248, 0
      %v393 = vsel %vm319, %v249, 0
      %v396 = vsel %vm319, %v250, 0
      %v399 = vsel %vm319, %v251, 0
      %v402 = vsel %vm319, %v252, 0
      %v405 = vsel %vm319, %v253, 0
      %v408 = vsel %vm319, %v254, 0
      %v411 = vsel %vm319, %v255, 0
      %v414 = vsel %vm319, %v256, 0
      %v417 = vsel %vm319, %v257, 0
      %v420 = vsel %vm319, %v258, 0
      %v423 = vsel %vm319, %v259, 0
      %v426 = vsel %vm319, %v260, 0
      %v429 = vsel %vm319, %v261, 0
      %v432 = vsel %vm319, %v262, 0
      %v435 = vsel %vm319, %v263, 0
      %v438 = vsel %vm319, %v264, 0
      %v441 = vsel %vm319, %v265, 0
      %v444 = vsel %vm319, %v266, 0
      %v447 = vsel %vm319, %v267, 0
      %v450 = vsel %vm319, %v268, 0
      %v453 = vsel %vm319, %v269, 0
      %v456 = vsel %vm319, %v270, 0
      %v459 = vsel %vm319, %v271, 0
      %v462 = vsel %vm319, %v272, 0
      %v465 = vsel %vm319, %v273, 0
      %v468 = vsel %vm319, %v274, 0
      %v471 = vsel %vm319, %v275, 0
      %v474 = vsel %vm319, %v276, 0
      %v477 = vsel %vm319, %v277, 0
      %v480 = vsel %vm319, %v278, 0
      %v483 = vsel %vm319, %v279, 0
      %v486 = vsel %vm319, %v280, 0
      %v489 = vsel %vm319, %v281, 0
      %v492 = vsel %vm319, %v282, 0
      %v495 = vsel %vm319, %v283, 0
      %v498 = vsel %vm319, %v284, 0
      %v501 = vsel %vm319, %v285, 0
      %v504 = vsel %vm319, %v286, 0
      %v507 = vsel %vm319, %v287, 0
      %v510 = vsel %vm319, %v288, 0
      %v513 = vsel %vm319, %v289, 0
      %v516 = vsel %vm319, %v290, 0
      %v519 = vsel %vm319, %v291, 0
      %v522 = vsel %vm319, %v292, 0
      %v525 = vsel %vm319, %v293, 0
      %v528 = vsel %vm319, %v294, 0
      %v531 = vsel %vm319, %v295, 0
      %v534 = vsel %vm319, %v296, 0
      %v537 = vsel %vm319, %v297, 0
      %v540 = vsel %vm319, %v298, 0
      %v543 = vsel %vm319, %v299, 0
      %v546 = vsel %vm319, %v300, 0
      %v549 = vsel %vm319, %v301, 0
      %v552 = vsel %vm319, %v302, 0
      %v555 = vsel %vm319, %v303, 0
      %v558 = vsel %vm319, %v304, 0
      %v561 = vsel %vm319, %v305, 0
      %v564 = vsel %vm319, %v306, 0
      %v567 = vsel %vm319, %v307, 0
      %v570 = vsel %vm319, %v308, 0
      %v573 = vsel %vm319, %v309, 0
      %vm575 = vcmask 1040384
      %v577 = vsel %vm575, %v311, 0
      %579 = vmatprep.subr.mxu0 0.0
      %580 = vmatpush1.msra.mxu0 %v310
      %581 = vmatprep.subr.mxu0 0.0
      %582 = vmatpush1.msra.mxu0 %v577
      %583 = vmatprep.subr.mxu0 0.0
      %584 = vmatpush1.msra.mxu0 0.0
      %585 = vmatprep.subr.mxu0 0.0
      %586 = vmatpush1.msra.mxu0 0.0
      %587 = vmatprep.subr.mxu0 0.0
      %588 = vmatpush1.msra.mxu0 0.0
      %589 = vmatprep.subr.mxu0 0.0
      %590 = vmatpush1.msra.mxu0 0.0
      %591 = vmatprep.subr.mxu0 0.0
      %592 = vmatpush1.msra.mxu0 0.0
      %593 = vmatprep.subr.mxu0 0.0
      %594 = vmatpush1.msra.mxu0 0.0
      %595 = vmatprep.subr.mxu0 0.0
      %596 = vmatpush1.msra.mxu0 0.0
      %597 = vmatprep.subr.mxu0 0.0
      %598 = vmatpush1.msra.mxu0 0.0
      %599 = vmatprep.subr.mxu0 0.0
      %600 = vmatpush1.msra.mxu0 0.0
      %601 = vmatprep.subr.mxu0 0.0
      %602 = vmatpush1.msra.mxu0 0.0
      %603 = vmatprep.subr.mxu0 0.0
      %604 = vmatpush1.msra.mxu0 0.0
      %605 = vmatprep.subr.mxu0 0.0
      %606 = vmatpush1.msra.mxu0 0.0
      %607 = vmatprep.subr.mxu0 0.0
      %608 = vmatpush1.msra.mxu0 0.0
      %609 = vmatprep.subr.mxu0 0.0
      %610 = vmatpush1.msra.mxu0 0.0
      %611 = vmatprep.subr.mxu0 0.0
      %612 = vmatpush1.msra.mxu0 0.0
      %613 = vmatprep.subr.mxu0 0.0
      %614 = vmatpush1.msra.mxu0 0.0
      %615 = vmatprep.subr.mxu0 0.0
      %616 = vmatpush1.msra.mxu0 0.0
      %617 = vmatprep.subr.mxu0 0.0
      %618 = vmatpush1.msra.mxu0 0.0
      %619 = vmatprep.subr.mxu0 0.0
      %620 = vmatpush1.msra.mxu0 0.0
      %621 = vmatprep.subr.mxu0 0.0
      %622 = vmatpush1.msra.mxu0 0.0
      %623 = vmatprep.subr.mxu0 0.0
      %624 = vmatpush1.msra.mxu0 0.0
      %625 = vmatprep.subr.mxu0 0.0
      %626 = vmatpush1.msra.mxu0 0.0
      %627 = vmatprep.subr.mxu0 0.0
      %628 = vmatpush1.msra.mxu0 0.0
      %629 = vmatprep.subr.mxu0 0.0
      %630 = vmatpush1.msra.mxu0 0.0
      %631 = vmatprep.subr.mxu0 0.0
      %632 = vmatpush1.msra.mxu0 0.0
      %633 = vmatprep.subr.mxu0 0.0
      %634 = vmatpush1.msra.mxu0 0.0
      %635 = vmatprep.subr.mxu0 0.0
      %636 = vmatpush1.msra.mxu0 0.0
      %637 = vmatprep.subr.mxu0 0.0
      %638 = vmatpush1.msra.mxu0 0.0
      %639 = vmatprep.subr.mxu0 0.0
      %640 = vmatpush1.msra.mxu0 0.0
      %641 = vmatprep.subr.mxu0 0.0
      %642 = vmatpush1.msra.mxu0 0.0
      %643 = vmatprep.mubr.f32.mxu0 0.0
      %644 = vmatmul.mubr.f32.gmra.mrb[0].mxu0 %v321
      %v645 = vpop.f32.mrb[0].mxu0
      %v646 = vadd.f32 %v317, %v645
      %v647 = vpop.f32.mrb[0].mxu0
      %648 = vmatprep.mubr.f32.mxu0 0.0
      %649 = vmatmul.mubr.f32.gmra.mrb[0].mxu0 %v324
      %v650 = vpop.f32.mrb[0].mxu0
      %v651 = vadd.f32 %v317, %v650
      %v652 = vpop.f32.mrb[0].mxu0
      %653 = vmatprep.mubr.f32.mxu0 0.0
      %654 = vmatmul.mubr.f32.gmra.mrb[0].mxu0 %v327
      %v655 = vpop.f32.mrb[0].mxu0
      %v656 = vadd.f32 %v317, %v655
      %v657 = vpop.f32.mrb[0].mxu0
      %658 = vmatprep.mubr.f32.mxu0 0.0
      %659 = vmatmul.mubr.f32.gmra.mrb[0].mxu0 %v330
      %v660 = vpop.f32.mrb[0].mxu0
      %v661 = vadd.f32 %v317, %v660
      %v662 = vpop.f32.mrb[0].mxu0
      %663 = vmatprep.mubr.f32.mxu0 0.0
      %664 = vmatmul.mubr.f32.gmra.mrb[0].mxu0 %v333
      %v665 = vpop.f32.mrb[0].mxu0
      %v666 = vadd.f32 %v317, %v665
      %v667 = vpop.f32.mrb[0].mxu0
      %668 = vmatprep.mubr.f32.mxu0 0.0
      %669 = vmatmul.mubr.f32.gmra.mrb[0].mxu0 %v336
      %v670 = vpop.f32.mrb[0].mxu0
      %v671 = vadd.f32 %v317, %v670
      %v672 = vpop.f32.mrb[0].mxu0
      %673 = vmatprep.mubr.f32.mxu0 0.0
      %674 = vmatmul.mubr.f32.gmra.mrb[0].mxu0 %v339
      %v675 = vpop.f32.mrb[0].mxu0
      %v676 = vadd.f32 %v317, %v675
      %v677 = vpop.f32.mrb[0].mxu0
      %678 = vmatprep.mubr.f32.mxu0 0.0
      %679 = vmatmul.mubr.f32.gmra.mrb[0].mxu0 %v342
      %v680 = vpop.f32.mrb[0].mxu0
      %v681 = vadd.f32 %v317, %v680
      %v682 = vpop.f32.mrb[0].mxu0
      %683 = vmatprep.mubr.f32.mxu0 0.0
      %684 = vmatmul.mubr.f32.gmra.mrb[0].mxu0 %v345
      %v685 = vpop.f32.mrb[0].mxu0
      %v686 = vadd.f32 %v317, %v685
      %v687 = vpop.f32.mrb[0].mxu0
      %688 = vmatprep.mubr.f32.mxu0 0.0
      %689 = vmatmul.mubr.f32.gmra.mrb[0].mxu0 %v348
      %v690 = vpop.f32.mrb[0].mxu0
      %v691 = vadd.f32 %v317, %v690
      %v692 = vpop.f32.mrb[0].mxu0
      %693 = vmatprep.mubr.f32.mxu0 0.0
      %694 = vmatmul.mubr.f32.gmra.mrb[0].mxu0 %v351
      %v695 = vpop.f32.mrb[0].mxu0
      %v696 = vadd.f32 %v317, %v695
      %v697 = vpop.f32.mrb[0].mxu0
      %698 = vmatprep.mubr.f32.mxu0 0.0
      %699 = vmatmul.mubr.f32.gmra.mrb[0].mxu0 %v354
      %v700 = vpop.f32.mrb[0].mxu0
      %v701 = vadd.f32 %v317, %v700
      %v702 = vpop.f32.mrb[0].mxu0
      %703 = vmatprep.mubr.f32.mxu0 0.0
      %704 = vmatmul.mubr.f32.gmra.mrb[0].mxu0 %v357
      %v705 = vpop.f32.mrb[0].mxu0
      %v706 = vadd.f32 %v317, %v705
      %v707 = vpop.f32.mrb[0].mxu0
      %708 = vmatprep.mubr.f32.mxu0 0.0
      %709 = vmatmul.mubr.f32.gmra.mrb[0].mxu0 %v360
      %v710 = vpop.f32.mrb[0].mxu0
      %v711 = vadd.f32 %v317, %v710
      %v712 = vpop.f32.mrb[0].mxu0
      %713 = vmatprep.mubr.f32.mxu0 0.0
      %714 = vmatmul.mubr.f32.gmra.mrb[0].mxu0 %v363
      %v715 = vpop.f32.mrb[0].mxu0
      %v716 = vadd.f32 %v317, %v715
      %v717 = vpop.f32.mrb[0].mxu0
      %718 = vmatprep.mubr.f32.mxu0 0.0
      %719 = vmatmul.mubr.f32.gmra.mrb[0].mxu0 %v366
      %v720 = vpop.f32.mrb[0].mxu0
      %v721 = vadd.f32 %v317, %v720
      %v722 = vpop.f32.mrb[0].mxu0
      %723 = vmatprep.mubr.f32.mxu0 0.0
      %724 = vmatmul.mubr.f32.gmra.mrb[0].mxu0 %v369
      %v725 = vpop.f32.mrb[0].mxu0
      %v726 = vadd.f32 %v317, %v725
      %v727 = vpop.f32.mrb[0].mxu0
      %728 = vmatprep.mubr.f32.mxu0 0.0
      %729 = vmatmul.mubr.f32.gmra.mrb[0].mxu0 %v372
      %v730 = vpop.f32.mrb[0].mxu0
      %v731 = vadd.f32 %v317, %v730
      %v732 = vpop.f32.mrb[0].mxu0
      %733 = vmatprep.mubr.f32.mxu0 0.0
      %734 = vmatmul.mubr.f32.gmra.mrb[0].mxu0 %v375
      %v735 = vpop.f32.mrb[0].mxu0
      %v736 = vadd.f32 %v317, %v735
      %v737 = vpop.f32.mrb[0].mxu0
      %738 = vmatprep.mubr.f32.mxu0 0.0
      %739 = vmatmul.mubr.f32.gmra.mrb[0].mxu0 %v378
      %v740 = vpop.f32.mrb[0].mxu0
      %v741 = vadd.f32 %v317, %v740
      %v742 = vpop.f32.mrb[0].mxu0
      %743 = vmatprep.mubr.f32.mxu0 0.0
      %744 = vmatmul.mubr.f32.gmra.mrb[0].mxu0 %v381
      %v745 = vpop.f32.mrb[0].mxu0
      %v746 = vadd.f32 %v317, %v745
      %v747 = vpop.f32.mrb[0].mxu0
      %748 = vmatprep.mubr.f32.mxu0 0.0
      %749 = vmatmul.mubr.f32.gmra.mrb[0].mxu0 %v384
      %v750 = vpop.f32.mrb[0].mxu0
      %v751 = vadd.f32 %v317, %v750
      %v752 = vpop.f32.mrb[0].mxu0
      %753 = vmatprep.mubr.f32.mxu0 0.0
      %754 = vmatmul.mubr.f32.gmra.mrb[0].mxu0 %v387
      %v755 = vpop.f32.mrb[0].mxu0
      %v756 = vadd.f32 %v317, %v755
      %v757 = vpop.f32.mrb[0].mxu0
      %758 = vmatprep.mubr.f32.mxu0 0.0
      %759 = vmatmul.mubr.f32.gmra.mrb[0].mxu0 %v390
      %v760 = vpop.f32.mrb[0].mxu0
      %v761 = vadd.f32 %v317, %v760
      %v762 = vpop.f32.mrb[0].mxu0
      %763 = vmatprep.mubr.f32.mxu0 0.0
      %764 = vmatmul.mubr.f32.gmra.mrb[0].mxu0 %v393
      %v765 = vpop.f32.mrb[0].mxu0
      %v766 = vadd.f32 %v317, %v765
      %v767 = vpop.f32.mrb[0].mxu0
      %768 = vmatprep.mubr.f32.mxu0 0.0
      %769 = vmatmul.mubr.f32.gmra.mrb[0].mxu0 %v396
      %v770 = vpop.f32.mrb[0].mxu0
      %v771 = vadd.f32 %v317, %v770
      %v772 = vpop.f32.mrb[0].mxu0
      %773 = vmatprep.mubr.f32.mxu0 0.0
      %774 = vmatmul.mubr.f32.gmra.mrb[0].mxu0 %v399
      %v775 = vpop.f32.mrb[0].mxu0
      %v776 = vadd.f32 %v317, %v775
      %v777 = vpop.f32.mrb[0].mxu0
      %778 = vmatprep.mubr.f32.mxu0 0.0
      %779 = vmatmul.mubr.f32.gmra.mrb[0].mxu0 %v402
      %v780 = vpop.f32.mrb[0].mxu0
      %v781 = vadd.f32 %v317, %v780
      %v782 = vpop.f32.mrb[0].mxu0
      %783 = vmatprep.mubr.f32.mxu0 0.0
      %784 = vmatmul.mubr.f32.gmra.mrb[0].mxu0 %v405
      %v785 = vpop.f32.mrb[0].mxu0
      %v786 = vadd.f32 %v317, %v785
      %v787 = vpop.f32.mrb[0].mxu0
      %788 = vmatprep.mubr.f32.mxu0 0.0
      %789 = vmatmul.mubr.f32.gmra.mrb[0].mxu0 %v408
      %v790 = vpop.f32.mrb[0].mxu0
      %v791 = vadd.f32 %v317, %v790
      %v792 = vpop.f32.mrb[0].mxu0
      %793 = vmatprep.mubr.f32.mxu0 0.0
      %794 = vmatmul.mubr.f32.gmra.mrb[0].mxu0 %v411
      %v795 = vpop.f32.mrb[0].mxu0
      %v796 = vadd.f32 %v317, %v795
      %v797 = vpop.f32.mrb[0].mxu0
      %798 = vmatprep.mubr.f32.mxu0 0.0
      %799 = vmatmul.mubr.f32.gmra.mrb[0].mxu0 %v414
      %v800 = vpop.f32.mrb[0].mxu0
      %v801 = vadd.f32 %v317, %v800
      %v802 = vpop.f32.mrb[0].mxu0
      %803 = vmatprep.mubr.f32.mxu0 0.0
      %804 = vmatmul.mubr.f32.gmra.mrb[0].mxu0 %v417
      %v805 = vpop.f32.mrb[0].mxu0
      %v806 = vadd.f32 %v317, %v805
      %v807 = vpop.f32.mrb[0].mxu0
      %808 = vmatprep.mubr.f32.mxu0 0.0
      %809 = vmatmul.mubr.f32.gmra.mrb[0].mxu0 %v420
      %v810 = vpop.f32.mrb[0].mxu0
      %v811 = vadd.f32 %v317, %v810
      %v812 = vpop.f32.mrb[0].mxu0
      %813 = vmatprep.mubr.f32.mxu0 0.0
      %814 = vmatmul.mubr.f32.gmra.mrb[0].mxu0 %v423
      %v815 = vpop.f32.mrb[0].mxu0
      %v816 = vadd.f32 %v317, %v815
      %v817 = vpop.f32.mrb[0].mxu0
      %818 = vmatprep.mubr.f32.mxu0 0.0
      %819 = vmatmul.mubr.f32.gmra.mrb[0].mxu0 %v426
      %v820 = vpop.f32.mrb[0].mxu0
      %v821 = vadd.f32 %v317, %v820
      %v822 = vpop.f32.mrb[0].mxu0
      %823 = vmatprep.mubr.f32.mxu0 0.0
      %824 = vmatmul.mubr.f32.gmra.mrb[0].mxu0 %v429
      %v825 = vpop.f32.mrb[0].mxu0
      %v826 = vadd.f32 %v317, %v825
      %v827 = vpop.f32.mrb[0].mxu0
      %828 = vmatprep.mubr.f32.mxu0 0.0
      %829 = vmatmul.mubr.f32.gmra.mrb[0].mxu0 %v432
      %v830 = vpop.f32.mrb[0].mxu0
      %v831 = vadd.f32 %v317, %v830
      %v832 = vpop.f32.mrb[0].mxu0
      %833 = vmatprep.mubr.f32.mxu0 0.0
      %834 = vmatmul.mubr.f32.gmra.mrb[0].mxu0 %v435
      %v835 = vpop.f32.mrb[0].mxu0
      %v836 = vadd.f32 %v317, %v835
      %v837 = vpop.f32.mrb[0].mxu0
      %838 = vmatprep.mubr.f32.mxu0 0.0
      %839 = vmatmul.mubr.f32.gmra.mrb[0].mxu0 %v438
      %v840 = vpop.f32.mrb[0].mxu0
      %v841 = vadd.f32 %v317, %v840
      %v842 = vpop.f32.mrb[0].mxu0
      %843 = vmatprep.mubr.f32.mxu0 0.0
      %844 = vmatmul.mubr.f32.gmra.mrb[0].mxu0 %v441
      %v845 = vpop.f32.mrb[0].mxu0
      %v846 = vadd.f32 %v317, %v845
      %v847 = vpop.f32.mrb[0].mxu0
      %848 = vmatprep.mubr.f32.mxu0 0.0
      %849 = vmatmul.mubr.f32.gmra.mrb[0].mxu0 %v444
      %v850 = vpop.f32.mrb[0].mxu0
      %v851 = vadd.f32 %v317, %v850
      %v852 = vpop.f32.mrb[0].mxu0
      %853 = vmatprep.mubr.f32.mxu0 0.0
      %854 = vmatmul.mubr.f32.gmra.mrb[0].mxu0 %v447
      %v855 = vpop.f32.mrb[0].mxu0
      %v856 = vadd.f32 %v317, %v855
      %v857 = vpop.f32.mrb[0].mxu0
      %858 = vmatprep.mubr.f32.mxu0 0.0
      %859 = vmatmul.mubr.f32.gmra.mrb[0].mxu0 %v450
      %v860 = vpop.f32.mrb[0].mxu0
      %v861 = vadd.f32 %v317, %v860
      %v862 = vpop.f32.mrb[0].mxu0
      %863 = vmatprep.mubr.f32.mxu0 0.0
      %864 = vmatmul.mubr.f32.gmra.mrb[0].mxu0 %v453
      %v865 = vpop.f32.mrb[0].mxu0
      %v866 = vadd.f32 %v317, %v865
      %v867 = vpop.f32.mrb[0].mxu0
      %868 = vmatprep.mubr.f32.mxu0 0.0
      %869 = vmatmul.mubr.f32.gmra.mrb[0].mxu0 %v456
      %v870 = vpop.f32.mrb[0].mxu0
      %v871 = vadd.f32 %v317, %v870
      %v872 = vpop.f32.mrb[0].mxu0
      %873 = vmatprep.mubr.f32.mxu0 0.0
      %874 = vmatmul.mubr.f32.gmra.mrb[0].mxu0 %v459
      %v875 = vpop.f32.mrb[0].mxu0
      %v876 = vadd.f32 %v317, %v875
      %v877 = vpop.f32.mrb[0].mxu0
      %878 = vmatprep.mubr.f32.mxu0 0.0
      %879 = vmatmul.mubr.f32.gmra.mrb[0].mxu0 %v462
      %v880 = vpop.f32.mrb[0].mxu0
      %v881 = vadd.f32 %v317, %v880
      %v882 = vpop.f32.mrb[0].mxu0
      %883 = vmatprep.mubr.f32.mxu0 0.0
      %884 = vmatmul.mubr.f32.gmra.mrb[0].mxu0 %v465
      %v885 = vpop.f32.mrb[0].mxu0
      %v886 = vadd.f32 %v317, %v885
      %v887 = vpop.f32.mrb[0].mxu0
      %888 = vmatprep.mubr.f32.mxu0 0.0
      %889 = vmatmul.mubr.f32.gmra.mrb[0].mxu0 %v468
      %v890 = vpop.f32.mrb[0].mxu0
      %v891 = vadd.f32 %v317, %v890
      %v892 = vpop.f32.mrb[0].mxu0
      %893 = vmatprep.mubr.f32.mxu0 0.0
      %894 = vmatmul.mubr.f32.gmra.mrb[0].mxu0 %v471
      %v895 = vpop.f32.mrb[0].mxu0
      %v896 = vadd.f32 %v317, %v895
      %v897 = vpop.f32.mrb[0].mxu0
      %898 = vmatprep.mubr.f32.mxu0 0.0
      %899 = vmatmul.mubr.f32.gmra.mrb[0].mxu0 %v474
      %v900 = vpop.f32.mrb[0].mxu0
      %v901 = vadd.f32 %v317, %v900
      %v902 = vpop.f32.mrb[0].mxu0
      %903 = vmatprep.mubr.f32.mxu0 0.0
      %904 = vmatmul.mubr.f32.gmra.mrb[0].mxu0 %v477
      %v905 = vpop.f32.mrb[0].mxu0
      %v906 = vadd.f32 %v317, %v905
      %v907 = vpop.f32.mrb[0].mxu0
      %908 = vmatprep.mubr.f32.mxu0 0.0
      %909 = vmatmul.mubr.f32.gmra.mrb[0].mxu0 %v480
      %v910 = vpop.f32.mrb[0].mxu0
      %v911 = vadd.f32 %v317, %v910
      %v912 = vpop.f32.mrb[0].mxu0
      %913 = vmatprep.mubr.f32.mxu0 0.0
      %914 = vmatmul.mubr.f32.gmra.mrb[0].mxu0 %v483
      %v915 = vpop.f32.mrb[0].mxu0
      %v916 = vadd.f32 %v317, %v915
      %v917 = vpop.f32.mrb[0].mxu0
      %918 = vmatprep.mubr.f32.mxu0 0.0
      %919 = vmatmul.mubr.f32.gmra.mrb[0].mxu0 %v486
      %v920 = vpop.f32.mrb[0].mxu0
      %v921 = vadd.f32 %v317, %v920
      %v922 = vpop.f32.mrb[0].mxu0
      %923 = vmatprep.mubr.f32.mxu0 0.0
      %924 = vmatmul.mubr.f32.gmra.mrb[0].mxu0 %v489
      %v925 = vpop.f32.mrb[0].mxu0
      %v926 = vadd.f32 %v317, %v925
      %v927 = vpop.f32.mrb[0].mxu0
      %928 = vmatprep.mubr.f32.mxu0 0.0
      %929 = vmatmul.mubr.f32.gmra.mrb[0].mxu0 %v492
      %v930 = vpop.f32.mrb[0].mxu0
      %v931 = vadd.f32 %v317, %v930
      %v932 = vpop.f32.mrb[0].mxu0
      %933 = vmatprep.mubr.f32.mxu0 0.0
      %934 = vmatmul.mubr.f32.gmra.mrb[0].mxu0 %v495
      %v935 = vpop.f32.mrb[0].mxu0
      %v936 = vadd.f32 %v317, %v935
      %v937 = vpop.f32.mrb[0].mxu0
      %938 = vmatprep.mubr.f32.mxu0 0.0
      %939 = vmatmul.mubr.f32.gmra.mrb[0].mxu0 %v498
      %v940 = vpop.f32.mrb[0].mxu0
      %v941 = vadd.f32 %v317, %v940
      %v942 = vpop.f32.mrb[0].mxu0
      %943 = vmatprep.mubr.f32.mxu0 0.0
      %944 = vmatmul.mubr.f32.gmra.mrb[0].mxu0 %v501
      %v945 = vpop.f32.mrb[0].mxu0
      %v946 = vadd.f32 %v317, %v945
      %v947 = vpop.f32.mrb[0].mxu0
      %948 = vmatprep.mubr.f32.mxu0 0.0
      %949 = vmatmul.mubr.f32.gmra.mrb[0].mxu0 %v504
      %v950 = vpop.f32.mrb[0].mxu0
      %v951 = vadd.f32 %v317, %v950
      %v952 = vpop.f32.mrb[0].mxu0
      %953 = vmatprep.mubr.f32.mxu0 0.0
      %954 = vmatmul.mubr.f32.gmra.mrb[0].mxu0 %v507
      %v955 = vpop.f32.mrb[0].mxu0
      %v956 = vadd.f32 %v317, %v955
      %v957 = vpop.f32.mrb[0].mxu0
      %958 = vmatprep.mubr.f32.mxu0 0.0
      %959 = vmatmul.mubr.f32.gmra.mrb[0].mxu0 %v510
      %v960 = vpop.f32.mrb[0].mxu0
      %v961 = vadd.f32 %v317, %v960
      %v962 = vpop.f32.mrb[0].mxu0
      %963 = vmatprep.mubr.f32.mxu0 0.0
      %964 = vmatmul.mubr.f32.gmra.mrb[0].mxu0 %v513
      %v965 = vpop.f32.mrb[0].mxu0
      %v966 = vadd.f32 %v317, %v965
      %v967 = vpop.f32.mrb[0].mxu0
      %968 = vmatprep.mubr.f32.mxu0 0.0
      %969 = vmatmul.mubr.f32.gmra.mrb[0].mxu0 %v516
      %v970 = vpop.f32.mrb[0].mxu0
      %v971 = vadd.f32 %v317, %v970
      %v972 = vpop.f32.mrb[0].mxu0
      %973 = vmatprep.mubr.f32.mxu0 0.0
      %974 = vmatmul.mubr.f32.gmra.mrb[0].mxu0 %v519
      %v975 = vpop.f32.mrb[0].mxu0
      %v976 = vadd.f32 %v317, %v975
      %v977 = vpop.f32.mrb[0].mxu0
      %978 = vmatprep.mubr.f32.mxu0 0.0
      %979 = vmatmul.mubr.f32.gmra.mrb[0].mxu0 %v522
      %v980 = vpop.f32.mrb[0].mxu0
      %v981 = vadd.f32 %v317, %v980
      %v982 = vpop.f32.mrb[0].mxu0
      %983 = vmatprep.mubr.f32.mxu0 0.0
      %984 = vmatmul.mubr.f32.gmra.mrb[0].mxu0 %v525
      %v985 = vpop.f32.mrb[0].mxu0
      %v986 = vadd.f32 %v317, %v985
      %v987 = vpop.f32.mrb[0].mxu0
      %988 = vmatprep.mubr.f32.mxu0 0.0
      %989 = vmatmul.mubr.f32.gmra.mrb[0].mxu0 %v528
      %v990 = vpop.f32.mrb[0].mxu0
      %v991 = vadd.f32 %v317, %v990
      %v992 = vpop.f32.mrb[0].mxu0
      %993 = vmatprep.mubr.f32.mxu0 0.0
      %994 = vmatmul.mubr.f32.gmra.mrb[0].mxu0 %v531
      %v995 = vpop.f32.mrb[0].mxu0
      %v996 = vadd.f32 %v317, %v995
      %v997 = vpop.f32.mrb[0].mxu0
      %998 = vmatprep.mubr.f32.mxu0 0.0
      %999 = vmatmul.mubr.f32.gmra.mrb[0].mxu0 %v534
      %v1000 = vpop.f32.mrb[0].mxu0
      %v1001 = vadd.f32 %v317, %v1000
      %v1002 = vpop.f32.mrb[0].mxu0
      %1003 = vmatprep.mubr.f32.mxu0 0.0
      %1004 = vmatmul.mubr.f32.gmra.mrb[0].mxu0 %v537
      %v1005 = vpop.f32.mrb[0].mxu0
      %v1006 = vadd.f32 %v317, %v1005
      %v1007 = vpop.f32.mrb[0].mxu0
      %1008 = vmatprep.mubr.f32.mxu0 0.0
      %1009 = vmatmul.mubr.f32.gmra.mrb[0].mxu0 %v540
      %v1010 = vpop.f32.mrb[0].mxu0
      %v1011 = vadd.f32 %v317, %v1010
      %v1012 = vpop.f32.mrb[0].mxu0
      %1013 = vmatprep.mubr.f32.mxu0 0.0
      %1014 = vmatmul.mubr.f32.gmra.mrb[0].mxu0 %v543
      %v1015 = vpop.f32.mrb[0].mxu0
      %v1016 = vadd.f32 %v317, %v1015
      %v1017 = vpop.f32.mrb[0].mxu0
      %1018 = vmatprep.mubr.f32.mxu0 0.0
      %1019 = vmatmul.mubr.f32.gmra.mrb[0].mxu0 %v546
      %v1020 = vpop.f32.mrb[0].mxu0
      %v1021 = vadd.f32 %v317, %v1020
      %v1022 = vpop.f32.mrb[0].mxu0
      %1023 = vmatprep.mubr.f32.mxu0 0.0
      %1024 = vmatmul.mubr.f32.gmra.mrb[0].mxu0 %v549
      %v1025 = vpop.f32.mrb[0].mxu0
      %v1026 = vadd.f32 %v317, %v1025
      %v1027 = vpop.f32.mrb[0].mxu0
      %1028 = vmatprep.mubr.f32.mxu0 0.0
      %1029 = vmatmul.mubr.f32.gmra.mrb[0].mxu0 %v552
      %v1030 = vpop.f32.mrb[0].mxu0
      %v1031 = vadd.f32 %v317, %v1030
      %v1032 = vpop.f32.mrb[0].mxu0
      %1033 = vmatprep.mubr.f32.mxu0 0.0
      %1034 = vmatmul.mubr.f32.gmra.mrb[0].mxu0 %v555
      %v1035 = vpop.f32.mrb[0].mxu0
      %v1036 = vadd.f32 %v317, %v1035
      %v1037 = vpop.f32.mrb[0].mxu0
      %1038 = vmatprep.mubr.f32.mxu0 0.0
      %1039 = vmatmul.mubr.f32.gmra.mrb[0].mxu0 %v558
      %v1040 = vpop.f32.mrb[0].mxu0
      %v1041 = vadd.f32 %v317, %v1040
      %v1042 = vpop.f32.mrb[0].mxu0
      %1043 = vmatprep.mubr.f32.mxu0 0.0
      %1044 = vmatmul.mubr.f32.gmra.mrb[0].mxu0 %v561
      %v1045 = vpop.f32.mrb[0].mxu0
      %v1046 = vadd.f32 %v317, %v1045
      %v1047 = vpop.f32.mrb[0].mxu0
      %1048 = vmatprep.mubr.f32.mxu0 0.0
      %1049 = vmatmul.mubr.f32.gmra.mrb[0].mxu0 %v564
      %v1050 = vpop.f32.mrb[0].mxu0
      %v1051 = vadd.f32 %v317, %v1050
      %v1052 = vpop.f32.mrb[0].mxu0
      %1053 = vmatprep.mubr.f32.mxu0 0.0
      %1054 = vmatmul.mubr.f32.gmra.mrb[0].mxu0 %v567
      %v1055 = vpop.f32.mrb[0].mxu0
      %v1056 = vadd.f32 %v317, %v1055
      %v1057 = vpop.f32.mrb[0].mxu0
      %1058 = vmatprep.mubr.f32.mxu0 0.0
      %1059 = vmatmul.mubr.f32.gmra.mrb[0].mxu0 %v570
      %v1060 = vpop.f32.mrb[0].mxu0
      %v1061 = vadd.f32 %v317, %v1060
      %v1062 = vpop.f32.mrb[0].mxu0
      %1063 = vmatprep.mubr.f32.mxu0 0.0
      %1064 = vmatmul.mubr.f32.gmra.mrb[0].mxu0 %v573
      %v1065 = vpop.f32.mrb[0].mxu0
      %v1066 = vadd.f32 %v317, %v1065
      %v1067 = vpop.f32.mrb[0].mxu0
      %1068 = vdwg.mxu0
      %v1069 = vmax.f32 %v646, 0.0
      %v1070 = vmax.f32 %v651, 0.0
      %v1071 = vmax.f32 %v656, 0.0
      %v1072 = vmax.f32 %v661, 0.0
      %v1073 = vmax.f32 %v666, 0.0
      %v1074 = vmax.f32 %v671, 0.0
      %v1075 = vmax.f32 %v676, 0.0
      %v1076 = vmax.f32 %v681, 0.0
      %v1077 = vmax.f32 %v686, 0.0
      %v1078 = vmax.f32 %v691, 0.0
      %v1079 = vmax.f32 %v696, 0.0
      %v1080 = vmax.f32 %v701, 0.0
      %v1081 = vmax.f32 %v706, 0.0
      %v1082 = vmax.f32 %v711, 0.0
      %v1083 = vmax.f32 %v716, 0.0
      %v1084 = vmax.f32 %v721, 0.0
      %v1085 = vmax.f32 %v726, 0.0
      %v1086 = vmax.f32 %v731, 0.0
      %v1087 = vmax.f32 %v736, 0.0
      %v1088 = vmax.f32 %v741, 0.0
      %v1089 = vmax.f32 %v746, 0.0
      %v1090 = vmax.f32 %v751, 0.0
      %v1091 = vmax.f32 %v756, 0.0
      %v1092 = vmax.f32 %v761, 0.0
      %v1093 = vmax.f32 %v766, 0.0
      %v1094 = vmax.f32 %v771, 0.0
      %v1095 = vmax.f32 %v776, 0.0
      %v1096 = vmax.f32 %v781, 0.0
      %v1097 = vmax.f32 %v786, 0.0
      %v1098 = vmax.f32 %v791, 0.0
      %v1099 = vmax.f32 %v796, 0.0
      %v1100 = vmax.f32 %v801, 0.0
      %v1101 = vmax.f32 %v806, 0.0
      %v1102 = vmax.f32 %v811, 0.0
      %v1103 = vmax.f32 %v816, 0.0
      %v1104 = vmax.f32 %v821, 0.0
      %v1105 = vmax.f32 %v826, 0.0
      %v1106 = vmax.f32 %v831, 0.0
      %v1107 = vmax.f32 %v836, 0.0
      %v1108 = vmax.f32 %v841, 0.0
      %v1109 = vmax.f32 %v846, 0.0
      %v1110 = vmax.f32 %v851, 0.0
      %v1111 = vmax.f32 %v856, 0.0
      %v1112 = vmax.f32 %v861, 0.0
      %v1113 = vmax.f32 %v866, 0.0
      %v1114 = vmax.f32 %v871, 0.0
      %v1115 = vmax.f32 %v876, 0.0
      %v1116 = vmax.f32 %v881, 0.0
      %v1117 = vmax.f32 %v886, 0.0
      %v1118 = vmax.f32 %v891, 0.0
      %v1119 = vmax.f32 %v896, 0.0
      %v1120 = vmax.f32 %v901, 0.0
      %v1121 = vmax.f32 %v906, 0.0
      %v1122 = vmax.f32 %v911, 0.0
      %v1123 = vmax.f32 %v916, 0.0
      %v1124 = vmax.f32 %v921, 0.0
      %v1125 = vmax.f32 %v926, 0.0
      %v1126 = vmax.f32 %v931, 0.0
      %v1127 = vmax.f32 %v936, 0.0
      %v1128 = vmax.f32 %v941, 0.0
      %v1129 = vmax.f32 %v946, 0.0
      %v1130 = vmax.f32 %v951, 0.0
      %v1131 = vmax.f32 %v956, 0.0
      %v1132 = vmax.f32 %v961, 0.0
      %v1133 = vmax.f32 %v966, 0.0
      %v1134 = vmax.f32 %v971, 0.0
      %v1135 = vmax.f32 %v976, 0.0
      %v1136 = vmax.f32 %v981, 0.0
      %v1137 = vmax.f32 %v986, 0.0
      %v1138 = vmax.f32 %v991, 0.0
      %v1139 = vmax.f32 %v996, 0.0
      %v1140 = vmax.f32 %v1001, 0.0
      %v1141 = vmax.f32 %v1006, 0.0
      %v1142 = vmax.f32 %v1011, 0.0
      %v1143 = vmax.f32 %v1016, 0.0
      %v1144 = vmax.f32 %v1021, 0.0
      %v1145 = vmax.f32 %v1026, 0.0
      %v1146 = vmax.f32 %v1031, 0.0
      %v1147 = vmax.f32 %v1036, 0.0
      %v1148 = vmax.f32 %v1041, 0.0
      %v1149 = vmax.f32 %v1046, 0.0
      %v1150 = vmax.f32 %v1051, 0.0
      %v1151 = vmax.f32 %v1056, 0.0
      %v1152 = vmax.f32 %v1061, 0.0
      %v1153 = vmax.f32 %v1066, 0.0
      %vm1154 = vcmask 261120
      %1155 = vst.msk [vmem:[#allocation2] sm:$0xff] %vm1154, %v1069
      %1156 = vst.msk [vmem:[#allocation2 + $0x8] sm:$0xff] %vm1154, %v1070
      %1157 = vst.msk [vmem:[#allocation2 + $0x10] sm:$0xff] %vm1154, %v1071
      %1158 = vst.msk [vmem:[#allocation2 + $0x18] sm:$0xff] %vm1154, %v1072
      %1159 = vst.msk [vmem:[#allocation2 + $0x20] sm:$0xff] %vm1154, %v1073
      %1160 = vst.msk [vmem:[#allocation2 + $0x28] sm:$0xff] %vm1154, %v1074
      %1161 = vst.msk [vmem:[#allocation2 + $0x30] sm:$0xff] %vm1154, %v1075
      %1162 = vst.msk [vmem:[#allocation2 + $0x38] sm:$0xff] %vm1154, %v1076
      %1163 = vst.msk [vmem:[#allocation2 + $0x40] sm:$0xff] %vm1154, %v1077
      %1164 = vst.msk [vmem:[#allocation2 + $0x48] sm:$0xff] %vm1154, %v1078
      %1165 = vst.msk [vmem:[#allocation2 + $0x50] sm:$0xff] %vm1154, %v1079
      %1166 = vst.msk [vmem:[#allocation2 + $0x58] sm:$0xff] %vm1154, %v1080
      %1167 = vst.msk [vmem:[#allocation2 + $0x60] sm:$0xff] %vm1154, %v1081
      %1168 = vst.msk [vmem:[#allocation2 + $0x68] sm:$0xff] %vm1154, %v1082
      %1169 = vst.msk [vmem:[#allocation2 + $0x70] sm:$0xff] %vm1154, %v1083
      %1170 = vst.msk [vmem:[#allocation2 + $0x78] sm:$0xff] %vm1154, %v1084
      %1171 = vst.msk [vmem:[#allocation2 + $0x80] sm:$0xff] %vm1154, %v1085
      %1172 = vst.msk [vmem:[#allocation2 + $0x88] sm:$0xff] %vm1154, %v1086
      %1173 = vst.msk [vmem:[#allocation2 + $0x90] sm:$0xff] %vm1154, %v1087
      %1174 = vst.msk [vmem:[#allocation2 + $0x98] sm:$0xff] %vm1154, %v1088
      %1175 = vst.msk [vmem:[#allocation2 + $0xa0] sm:$0xff] %vm1154, %v1089
      %1176 = vst.msk [vmem:[#allocation2 + $0xa8] sm:$0xff] %vm1154, %v1090
      %1177 = vst.msk [vmem:[#allocation2 + $0xb0] sm:$0xff] %vm1154, %v1091
      %1178 = vst.msk [vmem:[#allocation2 + $0xb8] sm:$0xff] %vm1154, %v1092
      %1179 = vst.msk [vmem:[#allocation2 + $0xc0] sm:$0xff] %vm1154, %v1093
      %1180 = vst.msk [vmem:[#allocation2 + $0xc8] sm:$0xff] %vm1154, %v1094
      %1181 = vst.msk [vmem:[#allocation2 + $0xd0] sm:$0xff] %vm1154, %v1095
      %1182 = vst.msk [vmem:[#allocation2 + $0xd8] sm:$0xff] %vm1154, %v1096
      %1183 = vst.msk [vmem:[#allocation2 + $0xe0] sm:$0xff] %vm1154, %v1097
      %1184 = vst.msk [vmem:[#allocation2 + $0xe8] sm:$0xff] %vm1154, %v1098
      %1185 = vst.msk [vmem:[#allocation2 + $0xf0] sm:$0xff] %vm1154, %v1099
      %1186 = vst.msk [vmem:[#allocation2 + $0xf8] sm:$0xff] %vm1154, %v1100
      %1187 = vst.msk [vmem:[#allocation2 + $0x100] sm:$0xff] %vm1154, %v1101
      %1188 = vst.msk [vmem:[#allocation2 + $0x108] sm:$0xff] %vm1154, %v1102
      %1189 = vst.msk [vmem:[#allocation2 + $0x110] sm:$0xff] %vm1154, %v1103
      %1190 = vst.msk [vmem:[#allocation2 + $0x118] sm:$0xff] %vm1154, %v1104
      %1191 = vst.msk [vmem:[#allocation2 + $0x120] sm:$0xff] %vm1154, %v1105
      %1192 = vst.msk [vmem:[#allocation2 + $0x128] sm:$0xff] %vm1154, %v1106
      %1193 = vst.msk [vmem:[#allocation2 + $0x130] sm:$0xff] %vm1154, %v1107
      %1194 = vst.msk [vmem:[#allocation2 + $0x138] sm:$0xff] %vm1154, %v1108
      %1195 = vst.msk [vmem:[#allocation2 + $0x140] sm:$0xff] %vm1154, %v1109
      %1196 = vst.msk [vmem:[#allocation2 + $0x148] sm:$0xff] %vm1154, %v1110
      %1197 = vst.msk [vmem:[#allocation2 + $0x150] sm:$0xff] %vm1154, %v1111
      %1198 = vst.msk [vmem:[#allocation2 + $0x158] sm:$0xff] %vm1154, %v1112
      %1199 = vst.msk [vmem:[#allocation2 + $0x160] sm:$0xff] %vm1154, %v1113
      %1200 = vst.msk [vmem:[#allocation2 + $0x168] sm:$0xff] %vm1154, %v1114
      %1201 = vst.msk [vmem:[#allocation2 + $0x170] sm:$0xff] %vm1154, %v1115
      %1202 = vst.msk [vmem:[#allocation2 + $0x178] sm:$0xff] %vm1154, %v1116
      %1203 = vst.msk [vmem:[#allocation2 + $0x180] sm:$0xff] %vm1154, %v1117
      %1204 = vst.msk [vmem:[#allocation2 + $0x188] sm:$0xff] %vm1154, %v1118
      %1205 = vst.msk [vmem:[#allocation2 + $0x190] sm:$0xff] %vm1154, %v1119
      %1206 = vst.msk [vmem:[#allocation2 + $0x198] sm:$0xff] %vm1154, %v1120
      %1207 = vst.msk [vmem:[#allocation2 + $0x1a0] sm:$0xff] %vm1154, %v1121
      %1208 = vst.msk [vmem:[#allocation2 + $0x1a8] sm:$0xff] %vm1154, %v1122
      %1209 = vst.msk [vmem:[#allocation2 + $0x1b0] sm:$0xff] %vm1154, %v1123
      %1210 = vst.msk [vmem:[#allocation2 + $0x1b8] sm:$0xff] %vm1154, %v1124
      %1211 = vst.msk [vmem:[#allocation2 + $0x1c0] sm:$0xff] %vm1154, %v1125
      %1212 = vst.msk [vmem:[#allocation2 + $0x1c8] sm:$0xff] %vm1154, %v1126
      %1213 = vst.msk [vmem:[#allocation2 + $0x1d0] sm:$0xff] %vm1154, %v1127
      %1214 = vst.msk [vmem:[#allocation2 + $0x1d8] sm:$0xff] %vm1154, %v1128
      %1215 = vst.msk [vmem:[#allocation2 + $0x1e0] sm:$0xff] %vm1154, %v1129
      %1216 = vst.msk [vmem:[#allocation2 + $0x1e8] sm:$0xff] %vm1154, %v1130
      %1217 = vst.msk [vmem:[#allocation2 + $0x1f0] sm:$0xff] %vm1154, %v1131
      %1218 = vst.msk [vmem:[#allocation2 + $0x1f8] sm:$0xff] %vm1154, %v1132
      %1219 = vst.msk [vmem:[#allocation2 + $0x200] sm:$0xff] %vm1154, %v1133
      %1220 = vst.msk [vmem:[#allocation2 + $0x208] sm:$0xff] %vm1154, %v1134
      %1221 = vst.msk [vmem:[#allocation2 + $0x210] sm:$0xff] %vm1154, %v1135
      %1222 = vst.msk [vmem:[#allocation2 + $0x218] sm:$0xff] %vm1154, %v1136
      %1223 = vst.msk [vmem:[#allocation2 + $0x220] sm:$0xff] %vm1154, %v1137
      %1224 = vst.msk [vmem:[#allocation2 + $0x228] sm:$0xff] %vm1154, %v1138
      %1225 = vst.msk [vmem:[#allocation2 + $0x230] sm:$0xff] %vm1154, %v1139
      %1226 = vst.msk [vmem:[#allocation2 + $0x238] sm:$0xff] %vm1154, %v1140
      %1227 = vst.msk [vmem:[#allocation2 + $0x240] sm:$0xff] %vm1154, %v1141
      %1228 = vst.msk [vmem:[#allocation2 + $0x248] sm:$0xff] %vm1154, %v1142
      %1229 = vst.msk [vmem:[#allocation2 + $0x250] sm:$0xff] %vm1154, %v1143
      %1230 = vst.msk [vmem:[#allocation2 + $0x258] sm:$0xff] %vm1154, %v1144
      %1231 = vst.msk [vmem:[#allocation2 + $0x260] sm:$0xff] %vm1154, %v1145
      %1232 = vst.msk [vmem:[#allocation2 + $0x268] sm:$0xff] %vm1154, %v1146
      %1233 = vst.msk [vmem:[#allocation2 + $0x270] sm:$0xff] %vm1154, %v1147
      %1234 = vst.msk [vmem:[#allocation2 + $0x278] sm:$0xff] %vm1154, %v1148
      %1235 = vst.msk [vmem:[#allocation2 + $0x280] sm:$0xff] %vm1154, %v1149
      %1236 = vst.msk [vmem:[#allocation2 + $0x288] sm:$0xff] %vm1154, %v1150
      %1237 = vst.msk [vmem:[#allocation2 + $0x290] sm:$0xff] %vm1154, %v1151
      %1238 = vst.msk [vmem:[#allocation2 + $0x298] sm:$0xff] %vm1154, %v1152
      %vm1239 = vcmask 257024
      %1240 = vst.msk [vmem:[#allocation2 + $0x2a0] sm:$0xf] %vm1239, %v1153
      %v1241 = vld [vmem:[#allocation2] sm:$0xff]
      %v1242 = vld [vmem:[#allocation2 + $0x8] sm:$0xff]
      %v1243 = vld [vmem:[#allocation2 + $0x10] sm:$0xff]
      %v1244 = vld [vmem:[#allocation2 + $0x18] sm:$0xff]
      %v1245 = vld [vmem:[#allocation2 + $0x20] sm:$0xff]
      %v1246 = vld [vmem:[#allocation2 + $0x28] sm:$0xff]
      %v1247 = vld [vmem:[#allocation2 + $0x30] sm:$0xff]
      %v1248 = vld [vmem:[#allocation2 + $0x38] sm:$0xff]
      %v1249 = vld [vmem:[#allocation2 + $0x40] sm:$0xff]
      %v1250 = vld [vmem:[#allocation2 + $0x48] sm:$0xff]
      %v1251 = vld [vmem:[#allocation2 + $0x50] sm:$0xff]
      %v1252 = vld [vmem:[#allocation2 + $0x58] sm:$0xff]
      %v1253 = vld [vmem:[#allocation2 + $0x60] sm:$0xff]
      %v1254 = vld [vmem:[#allocation2 + $0x68] sm:$0xff]
      %v1255 = vld [vmem:[#allocation2 + $0x70] sm:$0xff]
      %v1256 = vld [vmem:[#allocation2 + $0x78] sm:$0xff]
      %v1257 = vld [vmem:[#allocation2 + $0x80] sm:$0xff]
      %v1258 = vld [vmem:[#allocation2 + $0x88] sm:$0xff]
      %v1259 = vld [vmem:[#allocation2 + $0x90] sm:$0xff]
      %v1260 = vld [vmem:[#allocation2 + $0x98] sm:$0xff]
      %v1261 = vld [vmem:[#allocation2 + $0xa0] sm:$0xff]
      %v1262 = vld [vmem:[#allocation2 + $0xa8] sm:$0xff]
      %v1263 = vld [vmem:[#allocation2 + $0xb0] sm:$0xff]
      %v1264 = vld [vmem:[#allocation2 + $0xb8] sm:$0xff]
      %v1265 = vld [vmem:[#allocation2 + $0xc0] sm:$0xff]
      %v1266 = vld [vmem:[#allocation2 + $0xc8] sm:$0xff]
      %v1267 = vld [vmem:[#allocation2 + $0xd0] sm:$0xff]
      %v1268 = vld [vmem:[#allocation2 + $0xd8] sm:$0xff]
      %v1269 = vld [vmem:[#allocation2 + $0xe0] sm:$0xff]
      %v1270 = vld [vmem:[#allocation2 + $0xe8] sm:$0xff]
      %v1271 = vld [vmem:[#allocation2 + $0xf0] sm:$0xff]
      %v1272 = vld [vmem:[#allocation2 + $0xf8] sm:$0xff]
      %v1273 = vld [vmem:[#allocation2 + $0x100] sm:$0xff]
      %v1274 = vld [vmem:[#allocation2 + $0x108] sm:$0xff]
      %v1275 = vld [vmem:[#allocation2 + $0x110] sm:$0xff]
      %v1276 = vld [vmem:[#allocation2 + $0x118] sm:$0xff]
      %v1277 = vld [vmem:[#allocation2 + $0x120] sm:$0xff]
      %v1278 = vld [vmem:[#allocation2 + $0x128] sm:$0xff]
      %v1279 = vld [vmem:[#allocation2 + $0x130] sm:$0xff]
      %v1280 = vld [vmem:[#allocation2 + $0x138] sm:$0xff]
      %v1281 = vld [vmem:[#allocation2 + $0x140] sm:$0xff]
      %v1282 = vld [vmem:[#allocation2 + $0x148] sm:$0xff]
      %v1283 = vld [vmem:[#allocation2 + $0x150] sm:$0xff]
      %v1284 = vld [vmem:[#allocation2 + $0x158] sm:$0xff]
      %v1285 = vld [vmem:[#allocation2 + $0x160] sm:$0xff]
      %v1286 = vld [vmem:[#allocation2 + $0x168] sm:$0xff]
      %v1287 = vld [vmem:[#allocation2 + $0x170] sm:$0xff]
      %v1288 = vld [vmem:[#allocation2 + $0x178] sm:$0xff]
      %v1289 = vld [vmem:[#allocation2 + $0x180] sm:$0xff]
      %v1290 = vld [vmem:[#allocation2 + $0x188] sm:$0xff]
      %v1291 = vld [vmem:[#allocation2 + $0x190] sm:$0xff]
      %v1292 = vld [vmem:[#allocation2 + $0x198] sm:$0xff]
      %v1293 = vld [vmem:[#allocation2 + $0x1a0] sm:$0xff]
      %v1294 = vld [vmem:[#allocation2 + $0x1a8] sm:$0xff]
      %v1295 = vld [vmem:[#allocation2 + $0x1b0] sm:$0xff]
      %v1296 = vld [vmem:[#allocation2 + $0x1b8] sm:$0xff]
      %v1297 = vld [vmem:[#allocation2 + $0x1c0] sm:$0xff]
      %v1298 = vld [vmem:[#allocation2 + $0x1c8] sm:$0xff]
      %v1299 = vld [vmem:[#allocation2 + $0x1d0] sm:$0xff]
      %v1300 = vld [vmem:[#allocation2 + $0x1d8] sm:$0xff]
      %v1301 = vld [vmem:[#allocation2 + $0x1e0] sm:$0xff]
      %v1302 = vld [vmem:[#allocation2 + $0x1e8] sm:$0xff]
      %v1303 = vld [vmem:[#allocation2 + $0x1f0] sm:$0xff]
      %v1304 = vld [vmem:[#allocation2 + $0x1f8] sm:$0xff]
      %v1305 = vld [vmem:[#allocation2 + $0x200] sm:$0xff]
      %v1306 = vld [vmem:[#allocation2 + $0x208] sm:$0xff]
      %v1307 = vld [vmem:[#allocation2 + $0x210] sm:$0xff]
      %v1308 = vld [vmem:[#allocation2 + $0x218] sm:$0xff]
      %v1309 = vld [vmem:[#allocation2 + $0x220] sm:$0xff]
      %v1310 = vld [vmem:[#allocation2 + $0x228] sm:$0xff]
      %v1311 = vld [vmem:[#allocation2 + $0x230] sm:$0xff]
      %v1312 = vld [vmem:[#allocation2 + $0x238] sm:$0xff]
      %v1313 = vld [vmem:[#allocation2 + $0x240] sm:$0xff]
      %v1314 = vld [vmem:[#allocation2 + $0x248] sm:$0xff]
      %v1315 = vld [vmem:[#allocation2 + $0x250] sm:$0xff]
      %v1316 = vld [vmem:[#allocation2 + $0x258] sm:$0xff]
      %v1317 = vld [vmem:[#allocation2 + $0x260] sm:$0xff]
      %v1318 = vld [vmem:[#allocation2 + $0x268] sm:$0x3f]
      %v1319 = vld [vmem:[%s3] sm:$0xff]
      %v1320 = vld [vmem:[%s3 + $0x8] sm:$0xff]
      %v1321 = vld [vmem:[%s3 + $0x10] sm:$0xff]
      %v1322 = vld [vmem:[%s3 + $0x18] sm:$0xff]
      %v1323 = vld [vmem:[#allocation2 + $0x1] sm:$0xff]
      %v1324 = vld [vmem:[#allocation2 + $0x9] sm:$0xff]
      %v1325 = vld [vmem:[#allocation2 + $0x11] sm:$0xff]
      %v1326 = vld [vmem:[#allocation2 + $0x19] sm:$0xff]
      %v1327 = vld [vmem:[#allocation2 + $0x21] sm:$0xff]
      %v1328 = vld [vmem:[#allocation2 + $0x29] sm:$0xff]
      %v1329 = vld [vmem:[#allocation2 + $0x31] sm:$0xff]
      %v1330 = vld [vmem:[#allocation2 + $0x39] sm:$0xff]
      %v1331 = vld [vmem:[#allocation2 + $0x41] sm:$0xff]
      %v1332 = vld [vmem:[#allocation2 + $0x49] sm:$0xff]
      %v1333 = vld [vmem:[#allocation2 + $0x51] sm:$0xff]
      %v1334 = vld [vmem:[#allocation2 + $0x59] sm:$0xff]
      %v1335 = vld [vmem:[#allocation2 + $0x61] sm:$0xff]
      %v1336 = vld [vmem:[#allocation2 + $0x69] sm:$0xff]
      %v1337 = vld [vmem:[#allocation2 + $0x71] sm:$0xff]
      %v1338 = vld [vmem:[#allocation2 + $0x79] sm:$0xff]
      %v1339 = vld [vmem:[#allocation2 + $0x81] sm:$0xff]
      %v1340 = vld [vmem:[#allocation2 + $0x89] sm:$0xff]
      %v1341 = vld [vmem:[#allocation2 + $0x91] sm:$0xff]
      %v1342 = vld [vmem:[#allocation2 + $0x99] sm:$0xff]
      %v1343 = vld [vmem:[#allocation2 + $0xa1] sm:$0xff]
      %v1344 = vld [vmem:[#allocation2 + $0xa9] sm:$0xff]
      %v1345 = vld [vmem:[#allocation2 + $0xb1] sm:$0xff]
      %v1346 = vld [vmem:[#allocation2 + $0xb9] sm:$0xff]
      %v1347 = vld [vmem:[#allocation2 + $0xc1] sm:$0xff]
      %v1348 = vld [vmem:[#allocation2 + $0xc9] sm:$0xff]
      %v1349 = vld [vmem:[#allocation2 + $0xd1] sm:$0xff]
      %v1350 = vld [vmem:[#allocation2 + $0xd9] sm:$0xff]
      %v1351 = vld [vmem:[#allocation2 + $0xe1] sm:$0xff]
      %v1352 = vld [vmem:[#allocation2 + $0xe9] sm:$0xff]
      %v1353 = vld [vmem:[#allocation2 + $0xf1] sm:$0xff]
      %v1354 = vld [vmem:[#allocation2 + $0xf9] sm:$0xff]
      %v1355 = vld [vmem:[#allocation2 + $0x101] sm:$0xff]
      %v1356 = vld [vmem:[#allocation2 + $0x109] sm:$0xff]
      %v1357 = vld [vmem:[#allocation2 + $0x111] sm:$0xff]
      %v1358 = vld [vmem:[#allocation2 + $0x119] sm:$0xff]
      %v1359 = vld [vmem:[#allocation2 + $0x121] sm:$0xff]
      %v1360 = vld [vmem:[#allocation2 + $0x129] sm:$0xff]
      %v1361 = vld [vmem:[#allocation2 + $0x131] sm:$0xff]
      %v1362 = vld [vmem:[#allocation2 + $0x139] sm:$0xff]
      %v1363 = vld [vmem:[#allocation2 + $0x141] sm:$0xff]
      %v1364 = vld [vmem:[#allocation2 + $0x149] sm:$0xff]
      %v1365 = vld [vmem:[#allocation2 + $0x151] sm:$0xff]
      %v1366 = vld [vmem:[#allocation2 + $0x159] sm:$0xff]
      %v1367 = vld [vmem:[#allocation2 + $0x161] sm:$0xff]
      %v1368 = vld [vmem:[#allocation2 + $0x169] sm:$0xff]
      %v1369 = vld [vmem:[#allocation2 + $0x171] sm:$0xff]
      %v1370 = vld [vmem:[#allocation2 + $0x179] sm:$0xff]
      %v1371 = vld [vmem:[#allocation2 + $0x181] sm:$0xff]
      %v1372 = vld [vmem:[#allocation2 + $0x189] sm:$0xff]
      %v1373 = vld [vmem:[#allocation2 + $0x191] sm:$0xff]
      %v1374 = vld [vmem:[#allocation2 + $0x199] sm:$0xff]
      %v1375 = vld [vmem:[#allocation2 + $0x1a1] sm:$0xff]
      %v1376 = vld [vmem:[#allocation2 + $0x1a9] sm:$0xff]
      %v1377 = vld [vmem:[#allocation2 + $0x1b1] sm:$0xff]
      %v1378 = vld [vmem:[#allocation2 + $0x1b9] sm:$0xff]
      %v1379 = vld [vmem:[#allocation2 + $0x1c1] sm:$0xff]
      %v1380 = vld [vmem:[#allocation2 + $0x1c9] sm:$0xff]
      %v1381 = vld [vmem:[#allocation2 + $0x1d1] sm:$0xff]
      %v1382 = vld [vmem:[#allocation2 + $0x1d9] sm:$0xff]
      %v1383 = vld [vmem:[#allocation2 + $0x1e1] sm:$0xff]
      %v1384 = vld [vmem:[#allocation2 + $0x1e9] sm:$0xff]
      %v1385 = vld [vmem:[#allocation2 + $0x1f1] sm:$0xff]
      %v1386 = vld [vmem:[#allocation2 + $0x1f9] sm:$0xff]
      %v1387 = vld [vmem:[#allocation2 + $0x201] sm:$0xff]
      %v1388 = vld [vmem:[#allocation2 + $0x209] sm:$0xff]
      %v1389 = vld [vmem:[#allocation2 + $0x211] sm:$0xff]
      %v1390 = vld [vmem:[#allocation2 + $0x219] sm:$0xff]
      %v1391 = vld [vmem:[#allocation2 + $0x221] sm:$0xff]
      %v1392 = vld [vmem:[#allocation2 + $0x229] sm:$0xff]
      %v1393 = vld [vmem:[#allocation2 + $0x231] sm:$0xff]
      %v1394 = vld [vmem:[#allocation2 + $0x239] sm:$0xff]
      %v1395 = vld [vmem:[#allocation2 + $0x241] sm:$0xff]
      %v1396 = vld [vmem:[#allocation2 + $0x249] sm:$0xff]
      %v1397 = vld [vmem:[#allocation2 + $0x251] sm:$0xff]
      %v1398 = vld [vmem:[#allocation2 + $0x259] sm:$0xff]
      %v1399 = vld [vmem:[#allocation2 + $0x261] sm:$0xff]
      %v1400 = vld [vmem:[#allocation2 + $0x269] sm:$0x3f]
      %s1401 = scalar_lea.vmem %s3, 32
      %v1402 = vld [vmem:[%s1401] sm:$0xff]
      %v1403 = vld [vmem:[%s1401 + $0x8] sm:$0xff]
      %v1404 = vld [vmem:[%s1401 + $0x10] sm:$0xff]
      %v1405 = vld [vmem:[%s1401 + $0x18] sm:$0xff]
      %v1407 = vsel %vm1154, %v1323, 0
      %v1410 = vsel %vm1154, %v1324, 0
      %v1413 = vsel %vm1154, %v1325, 0
      %v1416 = vsel %vm1154, %v1326, 0
      %v1419 = vsel %vm1154, %v1327, 0
      %v1422 = vsel %vm1154, %v1328, 0
      %v1425 = vsel %vm1154, %v1329, 0
      %v1428 = vsel %vm1154, %v1330, 0
      %v1431 = vsel %vm1154, %v1331, 0
      %v1434 = vsel %vm1154, %v1332, 0
      %v1437 = vsel %vm1154, %v1333, 0
      %v1440 = vsel %vm1154, %v1334, 0
      %v1443 = vsel %vm1154, %v1335, 0
      %v1446 = vsel %vm1154, %v1336, 0
      %v1449 = vsel %vm1154, %v1337, 0
      %v1452 = vsel %vm1154, %v1338, 0
      %v1455 = vsel %vm1154, %v1339, 0
      %v1458 = vsel %vm1154, %v1340, 0
      %v1461 = vsel %vm1154, %v1341, 0
      %v1464 = vsel %vm1154, %v1342, 0
      %v1467 = vsel %vm1154, %v1343, 0
      %v1470 = vsel %vm1154, %v1344, 0
      %v1473 = vsel %vm1154, %v1345, 0
      %v1476 = vsel %vm1154, %v1346, 0
      %v1479 = vsel %vm1154, %v1347, 0
      %v1482 = vsel %vm1154, %v1348, 0
      %v1485 = vsel %vm1154, %v1349, 0
      %v1488 = vsel %vm1154, %v1350, 0
      %v1491 = vsel %vm1154, %v1351, 0
      %v1494 = vsel %vm1154, %v1352, 0
      %v1497 = vsel %vm1154, %v1353, 0
      %v1500 = vsel %vm1154, %v1354, 0
      %v1503 = vsel %vm1154, %v1355, 0
      %v1506 = vsel %vm1154, %v1356, 0
      %v1509 = vsel %vm1154, %v1357, 0
      %v1512 = vsel %vm1154, %v1358, 0
      %v1515 = vsel %vm1154, %v1359, 0
      %v1518 = vsel %vm1154, %v1360, 0
      %v1521 = vsel %vm1154, %v1361, 0
      %v1524 = vsel %vm1154, %v1362, 0
      %v1527 = vsel %vm1154, %v1363, 0
      %v1530 = vsel %vm1154, %v1364, 0
      %v1533 = vsel %vm1154, %v1365, 0
      %v1536 = vsel %vm1154, %v1366, 0
      %v1539 = vsel %vm1154, %v1367, 0
      %v1542 = vsel %vm1154, %v1368, 0
      %v1545 = vsel %vm1154, %v1369, 0
      %v1548 = vsel %vm1154, %v1370, 0
      %v1551 = vsel %vm1154, %v1371, 0
      %v1554 = vsel %vm1154, %v1372, 0
      %v1557 = vsel %vm1154, %v1373, 0
      %v1560 = vsel %vm1154, %v1374, 0
      %v1563 = vsel %vm1154, %v1375, 0
      %v1566 = vsel %vm1154, %v1376, 0
      %v1569 = vsel %vm1154, %v1377, 0
      %v1572 = vsel %vm1154, %v1378, 0
      %v1575 = vsel %vm1154, %v1379, 0
      %v1578 = vsel %vm1154, %v1380, 0
      %v1581 = vsel %vm1154, %v1381, 0
      %v1584 = vsel %vm1154, %v1382, 0
      %v1587 = vsel %vm1154, %v1383, 0
      %v1590 = vsel %vm1154, %v1384, 0
      %v1593 = vsel %vm1154, %v1385, 0
      %v1596 = vsel %vm1154, %v1386, 0
      %v1599 = vsel %vm1154, %v1387, 0
      %v1602 = vsel %vm1154, %v1388, 0
      %v1605 = vsel %vm1154, %v1389, 0
      %v1608 = vsel %vm1154, %v1390, 0
      %v1611 = vsel %vm1154, %v1391, 0
      %v1614 = vsel %vm1154, %v1392, 0
      %v1617 = vsel %vm1154, %v1393, 0
      %v1620 = vsel %vm1154, %v1394, 0
      %v1623 = vsel %vm1154, %v1395, 0
      %v1626 = vsel %vm1154, %v1396, 0
      %v1629 = vsel %vm1154, %v1397, 0
      %v1632 = vsel %vm1154, %v1398, 0
      %v1635 = vsel %vm1154, %v1399, 0
      %v1638 = vsel %vm1154, %v1400, 0
      %1640 = vmatprep.subr.mxu0 0.0
      %1641 = vmatpush1.msra.mxu0 %v1402
      %1642 = vmatprep.subr.mxu0 0.0
      %1643 = vmatpush1.msra.mxu0 %v1403
      %1644 = vmatprep.subr.mxu0 0.0
      %1645 = vmatpush1.msra.mxu0 %v1404
      %1646 = vmatprep.subr.mxu0 0.0
      %1647 = vmatpush1.msra.mxu0 %v1405
      %1648 = vmatprep.subr.mxu0 0.0
      %1649 = vmatpush1.msra.mxu0 0.0
      %1650 = vmatprep.subr.mxu0 0.0
      %1651 = vmatpush1.msra.mxu0 0.0
      %1652 = vmatprep.subr.mxu0 0.0
      %1653 = vmatpush1.msra.mxu0 0.0
      %1654 = vmatprep.subr.mxu0 0.0
      %1655 = vmatpush1.msra.mxu0 0.0
      %1656 = vmatprep.subr.mxu0 0.0
      %1657 = vmatpush1.msra.mxu0 0.0
      %1658 = vmatprep.subr.mxu0 0.0
      %1659 = vmatpush1.msra.mxu0 0.0
      %1660 = vmatprep.subr.mxu0 0.0
      %1661 = vmatpush1.msra.mxu0 0.0
      %1662 = vmatprep.subr.mxu0 0.0
      %1663 = vmatpush1.msra.mxu0 0.0
      %1664 = vmatprep.subr.mxu0 0.0
      %1665 = vmatpush1.msra.mxu0 0.0
      %1666 = vmatprep.subr.mxu0 0.0
      %1667 = vmatpush1.msra.mxu0 0.0
      %1668 = vmatprep.subr.mxu0 0.0
      %1669 = vmatpush1.msra.mxu0 0.0
      %1670 = vmatprep.subr.mxu0 0.0
      %1671 = vmatpush1.msra.mxu0 0.0
      %1672 = vmatprep.subr.mxu0 0.0
      %1673 = vmatpush1.msra.mxu0 0.0
      %1674 = vmatprep.subr.mxu0 0.0
      %1675 = vmatpush1.msra.mxu0 0.0
      %1676 = vmatprep.subr.mxu0 0.0
      %1677 = vmatpush1.msra.mxu0 0.0
      %1678 = vmatprep.subr.mxu0 0.0
      %1679 = vmatpush1.msra.mxu0 0.0
      %1680 = vmatprep.subr.mxu0 0.0
      %1681 = vmatpush1.msra.mxu0 0.0
      %1682 = vmatprep.subr.mxu0 0.0
      %1683 = vmatpush1.msra.mxu0 0.0
      %1684 = vmatprep.subr.mxu0 0.0
      %1685 = vmatpush1.msra.mxu0 0.0
      %1686 = vmatprep.subr.mxu0 0.0
      %1687 = vmatpush1.msra.mxu0 0.0
      %1688 = vmatprep.subr.mxu0 0.0
      %1689 = vmatpush1.msra.mxu0 0.0
      %1690 = vmatprep.subr.mxu0 0.0
      %1691 = vmatpush1.msra.mxu0 0.0
      %1692 = vmatprep.subr.mxu0 0.0
      %1693 = vmatpush1.msra.mxu0 0.0
      %1694 = vmatprep.subr.mxu0 0.0
      %1695 = vmatpush1.msra.mxu0 0.0
      %1696 = vmatprep.subr.mxu0 0.0
      %1697 = vmatpush1.msra.mxu0 0.0
      %1698 = vmatprep.subr.mxu0 0.0
      %1699 = vmatpush1.msra.mxu0 0.0
      %1700 = vmatprep.subr.mxu0 0.0
      %1701 = vmatpush1.msra.mxu0 0.0
      %1702 = vmatprep.subr.mxu0 0.0
      %1703 = vmatpush1.msra.mxu0 0.0
      %1704 = vmatprep.mubr.f32.mxu0 0.0
      %1705 = vmatmul.mubr.f32.gmra.mrb[0].mxu0 %v1407
      %v1706 = vpop.f32.mrb[0].mxu0
      %v1707 = vadd.f32 0.0, %v1706
      %v1708 = vpop.f32.mrb[0].mxu0
      %1709 = vmatprep.mubr.f32.mxu0 0.0
      %1710 = vmatmul.mubr.f32.gmra.mrb[0].mxu0 %v1410
      %v1711 = vpop.f32.mrb[0].mxu0
      %v1712 = vadd.f32 0.0, %v1711
      %v1713 = vpop.f32.mrb[0].mxu0
      %1714 = vmatprep.mubr.f32.mxu0 0.0
      %1715 = vmatmul.mubr.f32.gmra.mrb[0].mxu0 %v1413
      %v1716 = vpop.f32.mrb[0].mxu0
      %v1717 = vadd.f32 0.0, %v1716
      %v1718 = vpop.f32.mrb[0].mxu0
      %1719 = vmatprep.mubr.f32.mxu0 0.0
      %1720 = vmatmul.mubr.f32.gmra.mrb[0].mxu0 %v1416
      %v1721 = vpop.f32.mrb[0].mxu0
      %v1722 = vadd.f32 0.0, %v1721
      %v1723 = vpop.f32.mrb[0].mxu0
      %1724 = vmatprep.mubr.f32.mxu0 0.0
      %1725 = vmatmul.mubr.f32.gmra.mrb[0].mxu0 %v1419
      %v1726 = vpop.f32.mrb[0].mxu0
      %v1727 = vadd.f32 0.0, %v1726
      %v1728 = vpop.f32.mrb[0].mxu0
      %1729 = vmatprep.mubr.f32.mxu0 0.0
      %1730 = vmatmul.mubr.f32.gmra.mrb[0].mxu0 %v1422
      %v1731 = vpop.f32.mrb[0].mxu0
      %v1732 = vadd.f32 0.0, %v1731
      %v1733 = vpop.f32.mrb[0].mxu0
      %1734 = vmatprep.mubr.f32.mxu0 0.0
      %1735 = vmatmul.mubr.f32.gmra.mrb[0].mxu0 %v1425
      %v1736 = vpop.f32.mrb[0].mxu0
      %v1737 = vadd.f32 0.0, %v1736
      %v1738 = vpop.f32.mrb[0].mxu0
      %1739 = vmatprep.mubr.f32.mxu0 0.0
      %1740 = vmatmul.mubr.f32.gmra.mrb[0].mxu0 %v1428
      %v1741 = vpop.f32.mrb[0].mxu0
      %v1742 = vadd.f32 0.0, %v1741
      %v1743 = vpop.f32.mrb[0].mxu0
      %1744 = vmatprep.mubr.f32.mxu0 0.0
      %1745 = vmatmul.mubr.f32.gmra.mrb[0].mxu0 %v1431
      %v1746 = vpop.f32.mrb[0].mxu0
      %v1747 = vadd.f32 0.0, %v1746
      %v1748 = vpop.f32.mrb[0].mxu0
      %1749 = vmatprep.mubr.f32.mxu0 0.0
      %1750 = vmatmul.mubr.f32.gmra.mrb[0].mxu0 %v1434
      %v1751 = vpop.f32.mrb[0].mxu0
      %v1752 = vadd.f32 0.0, %v1751
      %v1753 = vpop.f32.mrb[0].mxu0
      %1754 = vmatprep.mubr.f32.mxu0 0.0
      %1755 = vmatmul.mubr.f32.gmra.mrb[0].mxu0 %v1437
      %v1756 = vpop.f32.mrb[0].mxu0
      %v1757 = vadd.f32 0.0, %v1756
      %v1758 = vpop.f32.mrb[0].mxu0
      %1759 = vmatprep.mubr.f32.mxu0 0.0
      %1760 = vmatmul.mubr.f32.gmra.mrb[0].mxu0 %v1440
      %v1761 = vpop.f32.mrb[0].mxu0
      %v1762 = vadd.f32 0.0, %v1761
      %v1763 = vpop.f32.mrb[0].mxu0
      %1764 = vmatprep.mubr.f32.mxu0 0.0
      %1765 = vmatmul.mubr.f32.gmra.mrb[0].mxu0 %v1443
      %v1766 = vpop.f32.mrb[0].mxu0
      %v1767 = vadd.f32 0.0, %v1766
      %v1768 = vpop.f32.mrb[0].mxu0
      %1769 = vmatprep.mubr.f32.mxu0 0.0
      %1770 = vmatmul.mubr.f32.gmra.mrb[0].mxu0 %v1446
      %v1771 = vpop.f32.mrb[0].mxu0
      %v1772 = vadd.f32 0.0, %v1771
      %v1773 = vpop.f32.mrb[0].mxu0
      %1774 = vmatprep.mubr.f32.mxu0 0.0
      %1775 = vmatmul.mubr.f32.gmra.mrb[0].mxu0 %v1449
      %v1776 = vpop.f32.mrb[0].mxu0
      %v1777 = vadd.f32 0.0, %v1776
      %v1778 = vpop.f32.mrb[0].mxu0
      %1779 = vmatprep.mubr.f32.mxu0 0.0
      %1780 = vmatmul.mubr.f32.gmra.mrb[0].mxu0 %v1452
      %v1781 = vpop.f32.mrb[0].mxu0
      %v1782 = vadd.f32 0.0, %v1781
      %v1783 = vpop.f32.mrb[0].mxu0
      %1784 = vmatprep.mubr.f32.mxu0 0.0
      %1785 = vmatmul.mubr.f32.gmra.mrb[0].mxu0 %v1455
      %v1786 = vpop.f32.mrb[0].mxu0
      %v1787 = vadd.f32 0.0, %v1786
      %v1788 = vpop.f32.mrb[0].mxu0
      %1789 = vmatprep.mubr.f32.mxu0 0.0
      %1790 = vmatmul.mubr.f32.gmra.mrb[0].mxu0 %v1458
      %v1791 = vpop.f32.mrb[0].mxu0
      %v1792 = vadd.f32 0.0, %v1791
      %v1793 = vpop.f32.mrb[0].mxu0
      %1794 = vmatprep.mubr.f32.mxu0 0.0
      %1795 = vmatmul.mubr.f32.gmra.mrb[0].mxu0 %v1461
      %v1796 = vpop.f32.mrb[0].mxu0
      %v1797 = vadd.f32 0.0, %v1796
      %v1798 = vpop.f32.mrb[0].mxu0
      %1799 = vmatprep.mubr.f32.mxu0 0.0
      %1800 = vmatmul.mubr.f32.gmra.mrb[0].mxu0 %v1464
      %v1801 = vpop.f32.mrb[0].mxu0
      %v1802 = vadd.f32 0.0, %v1801
      %v1803 = vpop.f32.mrb[0].mxu0
      %1804 = vmatprep.mubr.f32.mxu0 0.0
      %1805 = vmatmul.mubr.f32.gmra.mrb[0].mxu0 %v1467
      %v1806 = vpop.f32.mrb[0].mxu0
      %v1807 = vadd.f32 0.0, %v1806
      %v1808 = vpop.f32.mrb[0].mxu0
      %1809 = vmatprep.mubr.f32.mxu0 0.0
      %1810 = vmatmul.mubr.f32.gmra.mrb[0].mxu0 %v1470
      %v1811 = vpop.f32.mrb[0].mxu0
      %v1812 = vadd.f32 0.0, %v1811
      %v1813 = vpop.f32.mrb[0].mxu0
      %1814 = vmatprep.mubr.f32.mxu0 0.0
      %1815 = vmatmul.mubr.f32.gmra.mrb[0].mxu0 %v1473
      %v1816 = vpop.f32.mrb[0].mxu0
      %v1817 = vadd.f32 0.0, %v1816
      %v1818 = vpop.f32.mrb[0].mxu0
      %1819 = vmatprep.mubr.f32.mxu0 0.0
      %1820 = vmatmul.mubr.f32.gmra.mrb[0].mxu0 %v1476
      %v1821 = vpop.f32.mrb[0].mxu0
      %v1822 = vadd.f32 0.0, %v1821
      %v1823 = vpop.f32.mrb[0].mxu0
      %1824 = vmatprep.mubr.f32.mxu0 0.0
      %1825 = vmatmul.mubr.f32.gmra.mrb[0].mxu0 %v1479
      %v1826 = vpop.f32.mrb[0].mxu0
      %v1827 = vadd.f32 0.0, %v1826
      %v1828 = vpop.f32.mrb[0].mxu0
      %1829 = vmatprep.mubr.f32.mxu0 0.0
      %1830 = vmatmul.mubr.f32.gmra.mrb[0].mxu0 %v1482
      %v1831 = vpop.f32.mrb[0].mxu0
      %v1832 = vadd.f32 0.0, %v1831
      %v1833 = vpop.f32.mrb[0].mxu0
      %1834 = vmatprep.mubr.f32.mxu0 0.0
      %1835 = vmatmul.mubr.f32.gmra.mrb[0].mxu0 %v1485
      %v1836 = vpop.f32.mrb[0].mxu0
      %v1837 = vadd.f32 0.0, %v1836
      %v1838 = vpop.f32.mrb[0].mxu0
      %1839 = vmatprep.mubr.f32.mxu0 0.0
      %1840 = vmatmul.mubr.f32.gmra.mrb[0].mxu0 %v1488
      %v1841 = vpop.f32.mrb[0].mxu0
      %v1842 = vadd.f32 0.0, %v1841
      %v1843 = vpop.f32.mrb[0].mxu0
      %1844 = vmatprep.mubr.f32.mxu0 0.0
      %1845 = vmatmul.mubr.f32.gmra.mrb[0].mxu0 %v1491
      %v1846 = vpop.f32.mrb[0].mxu0
      %v1847 = vadd.f32 0.0, %v1846
      %v1848 = vpop.f32.mrb[0].mxu0
      %1849 = vmatprep.mubr.f32.mxu0 0.0
      %1850 = vmatmul.mubr.f32.gmra.mrb[0].mxu0 %v1494
      %v1851 = vpop.f32.mrb[0].mxu0
      %v1852 = vadd.f32 0.0, %v1851
      %v1853 = vpop.f32.mrb[0].mxu0
      %1854 = vmatprep.mubr.f32.mxu0 0.0
      %1855 = vmatmul.mubr.f32.gmra.mrb[0].mxu0 %v1497
      %v1856 = vpop.f32.mrb[0].mxu0
      %v1857 = vadd.f32 0.0, %v1856
      %v1858 = vpop.f32.mrb[0].mxu0
      %1859 = vmatprep.mubr.f32.mxu0 0.0
      %1860 = vmatmul.mubr.f32.gmra.mrb[0].mxu0 %v1500
      %v1861 = vpop.f32.mrb[0].mxu0
      %v1862 = vadd.f32 0.0, %v1861
      %v1863 = vpop.f32.mrb[0].mxu0
      %1864 = vmatprep.mubr.f32.mxu0 0.0
      %1865 = vmatmul.mubr.f32.gmra.mrb[0].mxu0 %v1503
      %v1866 = vpop.f32.mrb[0].mxu0
      %v1867 = vadd.f32 0.0, %v1866
      %v1868 = vpop.f32.mrb[0].mxu0
      %1869 = vmatprep.mubr.f32.mxu0 0.0
      %1870 = vmatmul.mubr.f32.gmra.mrb[0].mxu0 %v1506
      %v1871 = vpop.f32.mrb[0].mxu0
      %v1872 = vadd.f32 0.0, %v1871
      %v1873 = vpop.f32.mrb[0].mxu0
      %1874 = vmatprep.mubr.f32.mxu0 0.0
      %1875 = vmatmul.mubr.f32.gmra.mrb[0].mxu0 %v1509
      %v1876 = vpop.f32.mrb[0].mxu0
      %v1877 = vadd.f32 0.0, %v1876
      %v1878 = vpop.f32.mrb[0].mxu0
      %1879 = vmatprep.mubr.f32.mxu0 0.0
      %1880 = vmatmul.mubr.f32.gmra.mrb[0].mxu0 %v1512
      %v1881 = vpop.f32.mrb[0].mxu0
      %v1882 = vadd.f32 0.0, %v1881
      %v1883 = vpop.f32.mrb[0].mxu0
      %1884 = vmatprep.mubr.f32.mxu0 0.0
      %1885 = vmatmul.mubr.f32.gmra.mrb[0].mxu0 %v1515
      %v1886 = vpop.f32.mrb[0].mxu0
      %v1887 = vadd.f32 0.0, %v1886
      %v1888 = vpop.f32.mrb[0].mxu0
      %1889 = vmatprep.mubr.f32.mxu0 0.0
      %1890 = vmatmul.mubr.f32.gmra.mrb[0].mxu0 %v1518
      %v1891 = vpop.f32.mrb[0].mxu0
      %v1892 = vadd.f32 0.0, %v1891
      %v1893 = vpop.f32.mrb[0].mxu0
      %1894 = vmatprep.mubr.f32.mxu0 0.0
      %1895 = vmatmul.mubr.f32.gmra.mrb[0].mxu0 %v1521
      %v1896 = vpop.f32.mrb[0].mxu0
      %v1897 = vadd.f32 0.0, %v1896
      %v1898 = vpop.f32.mrb[0].mxu0
      %1899 = vmatprep.mubr.f32.mxu0 0.0
      %1900 = vmatmul.mubr.f32.gmra.mrb[0].mxu0 %v1524
      %v1901 = vpop.f32.mrb[0].mxu0
      %v1902 = vadd.f32 0.0, %v1901
      %v1903 = vpop.f32.mrb[0].mxu0
      %1904 = vmatprep.mubr.f32.mxu0 0.0
      %1905 = vmatmul.mubr.f32.gmra.mrb[0].mxu0 %v1527
      %v1906 = vpop.f32.mrb[0].mxu0
      %v1907 = vadd.f32 0.0, %v1906
      %v1908 = vpop.f32.mrb[0].mxu0
      %1909 = vmatprep.mubr.f32.mxu0 0.0
      %1910 = vmatmul.mubr.f32.gmra.mrb[0].mxu0 %v1530
      %v1911 = vpop.f32.mrb[0].mxu0
      %v1912 = vadd.f32 0.0, %v1911
      %v1913 = vpop.f32.mrb[0].mxu0
      %1914 = vmatprep.mubr.f32.mxu0 0.0
      %1915 = vmatmul.mubr.f32.gmra.mrb[0].mxu0 %v1533
      %v1916 = vpop.f32.mrb[0].mxu0
      %v1917 = vadd.f32 0.0, %v1916
      %v1918 = vpop.f32.mrb[0].mxu0
      %1919 = vmatprep.mubr.f32.mxu0 0.0
      %1920 = vmatmul.mubr.f32.gmra.mrb[0].mxu0 %v1536
      %v1921 = vpop.f32.mrb[0].mxu0
      %v1922 = vadd.f32 0.0, %v1921
      %v1923 = vpop.f32.mrb[0].mxu0
      %1924 = vmatprep.mubr.f32.mxu0 0.0
      %1925 = vmatmul.mubr.f32.gmra.mrb[0].mxu0 %v1539
      %v1926 = vpop.f32.mrb[0].mxu0
      %v1927 = vadd.f32 0.0, %v1926
      %v1928 = vpop.f32.mrb[0].mxu0
      %1929 = vmatprep.mubr.f32.mxu0 0.0
      %1930 = vmatmul.mubr.f32.gmra.mrb[0].mxu0 %v1542
      %v1931 = vpop.f32.mrb[0].mxu0
      %v1932 = vadd.f32 0.0, %v1931
      %v1933 = vpop.f32.mrb[0].mxu0
      %1934 = vmatprep.mubr.f32.mxu0 0.0
      %1935 = vmatmul.mubr.f32.gmra.mrb[0].mxu0 %v1545
      %v1936 = vpop.f32.mrb[0].mxu0
      %v1937 = vadd.f32 0.0, %v1936
      %v1938 = vpop.f32.mrb[0].mxu0
      %1939 = vmatprep.mubr.f32.mxu0 0.0
      %1940 = vmatmul.mubr.f32.gmra.mrb[0].mxu0 %v1548
      %v1941 = vpop.f32.mrb[0].mxu0
      %v1942 = vadd.f32 0.0, %v1941
      %v1943 = vpop.f32.mrb[0].mxu0
      %1944 = vmatprep.mubr.f32.mxu0 0.0
      %1945 = vmatmul.mubr.f32.gmra.mrb[0].mxu0 %v1551
      %v1946 = vpop.f32.mrb[0].mxu0
      %v1947 = vadd.f32 0.0, %v1946
      %v1948 = vpop.f32.mrb[0].mxu0
      %1949 = vmatprep.mubr.f32.mxu0 0.0
      %1950 = vmatmul.mubr.f32.gmra.mrb[0].mxu0 %v1554
      %v1951 = vpop.f32.mrb[0].mxu0
      %v1952 = vadd.f32 0.0, %v1951
      %v1953 = vpop.f32.mrb[0].mxu0
      %1954 = vmatprep.mubr.f32.mxu0 0.0
      %1955 = vmatmul.mubr.f32.gmra.mrb[0].mxu0 %v1557
      %v1956 = vpop.f32.mrb[0].mxu0
      %v1957 = vadd.f32 0.0, %v1956
      %v1958 = vpop.f32.mrb[0].mxu0
      %1959 = vmatprep.mubr.f32.mxu0 0.0
      %1960 = vmatmul.mubr.f32.gmra.mrb[0].mxu0 %v1560
      %v1961 = vpop.f32.mrb[0].mxu0
      %v1962 = vadd.f32 0.0, %v1961
      %v1963 = vpop.f32.mrb[0].mxu0
      %1964 = vmatprep.mubr.f32.mxu0 0.0
      %1965 = vmatmul.mubr.f32.gmra.mrb[0].mxu0 %v1563
      %v1966 = vpop.f32.mrb[0].mxu0
      %v1967 = vadd.f32 0.0, %v1966
      %v1968 = vpop.f32.mrb[0].mxu0
      %1969 = vmatprep.mubr.f32.mxu0 0.0
      %1970 = vmatmul.mubr.f32.gmra.mrb[0].mxu0 %v1566
      %v1971 = vpop.f32.mrb[0].mxu0
      %v1972 = vadd.f32 0.0, %v1971
      %v1973 = vpop.f32.mrb[0].mxu0
      %1974 = vmatprep.mubr.f32.mxu0 0.0
      %1975 = vmatmul.mubr.f32.gmra.mrb[0].mxu0 %v1569
      %v1976 = vpop.f32.mrb[0].mxu0
      %v1977 = vadd.f32 0.0, %v1976
      %v1978 = vpop.f32.mrb[0].mxu0
      %1979 = vmatprep.mubr.f32.mxu0 0.0
      %1980 = vmatmul.mubr.f32.gmra.mrb[0].mxu0 %v1572
      %v1981 = vpop.f32.mrb[0].mxu0
      %v1982 = vadd.f32 0.0, %v1981
      %v1983 = vpop.f32.mrb[0].mxu0
      %1984 = vmatprep.mubr.f32.mxu0 0.0
      %1985 = vmatmul.mubr.f32.gmra.mrb[0].mxu0 %v1575
      %v1986 = vpop.f32.mrb[0].mxu0
      %v1987 = vadd.f32 0.0, %v1986
      %v1988 = vpop.f32.mrb[0].mxu0
      %1989 = vmatprep.mubr.f32.mxu0 0.0
      %1990 = vmatmul.mubr.f32.gmra.mrb[0].mxu0 %v1578
      %v1991 = vpop.f32.mrb[0].mxu0
      %v1992 = vadd.f32 0.0, %v1991
      %v1993 = vpop.f32.mrb[0].mxu0
      %1994 = vmatprep.mubr.f32.mxu0 0.0
      %1995 = vmatmul.mubr.f32.gmra.mrb[0].mxu0 %v1581
      %v1996 = vpop.f32.mrb[0].mxu0
      %v1997 = vadd.f32 0.0, %v1996
      %v1998 = vpop.f32.mrb[0].mxu0
      %1999 = vmatprep.mubr.f32.mxu0 0.0
      %2000 = vmatmul.mubr.f32.gmra.mrb[0].mxu0 %v1584
      %v2001 = vpop.f32.mrb[0].mxu0
      %v2002 = vadd.f32 0.0, %v2001
      %v2003 = vpop.f32.mrb[0].mxu0
      %2004 = vmatprep.mubr.f32.mxu0 0.0
      %2005 = vmatmul.mubr.f32.gmra.mrb[0].mxu0 %v1587
      %v2006 = vpop.f32.mrb[0].mxu0
      %v2007 = vadd.f32 0.0, %v2006
      %v2008 = vpop.f32.mrb[0].mxu0
      %2009 = vmatprep.mubr.f32.mxu0 0.0
      %2010 = vmatmul.mubr.f32.gmra.mrb[0].mxu0 %v1590
      %v2011 = vpop.f32.mrb[0].mxu0
      %v2012 = vadd.f32 0.0, %v2011
      %v2013 = vpop.f32.mrb[0].mxu0
      %2014 = vmatprep.mubr.f32.mxu0 0.0
      %2015 = vmatmul.mubr.f32.gmra.mrb[0].mxu0 %v1593
      %v2016 = vpop.f32.mrb[0].mxu0
      %v2017 = vadd.f32 0.0, %v2016
      %v2018 = vpop.f32.mrb[0].mxu0
      %2019 = vmatprep.mubr.f32.mxu0 0.0
      %2020 = vmatmul.mubr.f32.gmra.mrb[0].mxu0 %v1596
      %v2021 = vpop.f32.mrb[0].mxu0
      %v2022 = vadd.f32 0.0, %v2021
      %v2023 = vpop.f32.mrb[0].mxu0
      %2024 = vmatprep.mubr.f32.mxu0 0.0
      %2025 = vmatmul.mubr.f32.gmra.mrb[0].mxu0 %v1599
      %v2026 = vpop.f32.mrb[0].mxu0
      %v2027 = vadd.f32 0.0, %v2026
      %v2028 = vpop.f32.mrb[0].mxu0
      %2029 = vmatprep.mubr.f32.mxu0 0.0
      %2030 = vmatmul.mubr.f32.gmra.mrb[0].mxu0 %v1602
      %v2031 = vpop.f32.mrb[0].mxu0
      %v2032 = vadd.f32 0.0, %v2031
      %v2033 = vpop.f32.mrb[0].mxu0
      %2034 = vmatprep.mubr.f32.mxu0 0.0
      %2035 = vmatmul.mubr.f32.gmra.mrb[0].mxu0 %v1605
      %v2036 = vpop.f32.mrb[0].mxu0
      %v2037 = vadd.f32 0.0, %v2036
      %v2038 = vpop.f32.mrb[0].mxu0
      %2039 = vmatprep.mubr.f32.mxu0 0.0
      %2040 = vmatmul.mubr.f32.gmra.mrb[0].mxu0 %v1608
      %v2041 = vpop.f32.mrb[0].mxu0
      %v2042 = vadd.f32 0.0, %v2041
      %v2043 = vpop.f32.mrb[0].mxu0
      %2044 = vmatprep.mubr.f32.mxu0 0.0
      %2045 = vmatmul.mubr.f32.gmra.mrb[0].mxu0 %v1611
      %v2046 = vpop.f32.mrb[0].mxu0
      %v2047 = vadd.f32 0.0, %v2046
      %v2048 = vpop.f32.mrb[0].mxu0
      %2049 = vmatprep.mubr.f32.mxu0 0.0
      %2050 = vmatmul.mubr.f32.gmra.mrb[0].mxu0 %v1614
      %v2051 = vpop.f32.mrb[0].mxu0
      %v2052 = vadd.f32 0.0, %v2051
      %v2053 = vpop.f32.mrb[0].mxu0
      %2054 = vmatprep.mubr.f32.mxu0 0.0
      %2055 = vmatmul.mubr.f32.gmra.mrb[0].mxu0 %v1617
      %v2056 = vpop.f32.mrb[0].mxu0
      %v2057 = vadd.f32 0.0, %v2056
      %v2058 = vpop.f32.mrb[0].mxu0
      %2059 = vmatprep.mubr.f32.mxu0 0.0
      %2060 = vmatmul.mubr.f32.gmra.mrb[0].mxu0 %v1620
      %v2061 = vpop.f32.mrb[0].mxu0
      %v2062 = vadd.f32 0.0, %v2061
      %v2063 = vpop.f32.mrb[0].mxu0
      %2064 = vmatprep.mubr.f32.mxu0 0.0
      %2065 = vmatmul.mubr.f32.gmra.mrb[0].mxu0 %v1623
      %v2066 = vpop.f32.mrb[0].mxu0
      %v2067 = vadd.f32 0.0, %v2066
      %v2068 = vpop.f32.mrb[0].mxu0
      %2069 = vmatprep.mubr.f32.mxu0 0.0
      %2070 = vmatmul.mubr.f32.gmra.mrb[0].mxu0 %v1626
      %v2071 = vpop.f32.mrb[0].mxu0
      %v2072 = vadd.f32 0.0, %v2071
      %v2073 = vpop.f32.mrb[0].mxu0
      %2074 = vmatprep.mubr.f32.mxu0 0.0
      %2075 = vmatmul.mubr.f32.gmra.mrb[0].mxu0 %v1629
      %v2076 = vpop.f32.mrb[0].mxu0
      %v2077 = vadd.f32 0.0, %v2076
      %v2078 = vpop.f32.mrb[0].mxu0
      %2079 = vmatprep.mubr.f32.mxu0 0.0
      %2080 = vmatmul.mubr.f32.gmra.mrb[0].mxu0 %v1632
      %v2081 = vpop.f32.mrb[0].mxu0
      %v2082 = vadd.f32 0.0, %v2081
      %v2083 = vpop.f32.mrb[0].mxu0
      %2084 = vmatprep.mubr.f32.mxu0 0.0
      %2085 = vmatmul.mubr.f32.gmra.mrb[0].mxu0 %v1635
      %v2086 = vpop.f32.mrb[0].mxu0
      %v2087 = vadd.f32 0.0, %v2086
      %v2088 = vpop.f32.mrb[0].mxu0
      %2089 = vmatprep.mubr.f32.mxu0 0.0
      %2090 = vmatmul.mubr.f32.gmra.mrb[0].mxu0 %v1638
      %v2091 = vpop.f32.mrb[0].mxu0
      %v2092 = vadd.f32 0.0, %v2091
      %v2093 = vpop.f32.mrb[0].mxu0
      %2094 = vdwg.mxu0
      %v2096 = vsel %vm1154, %v1241, 0
      %v2099 = vsel %vm1154, %v1242, 0
      %v2102 = vsel %vm1154, %v1243, 0
      %v2105 = vsel %vm1154, %v1244, 0
      %v2108 = vsel %vm1154, %v1245, 0
      %v2111 = vsel %vm1154, %v1246, 0
      %v2114 = vsel %vm1154, %v1247, 0
      %v2117 = vsel %vm1154, %v1248, 0
      %v2120 = vsel %vm1154, %v1249, 0
      %v2123 = vsel %vm1154, %v1250, 0
      %v2126 = vsel %vm1154, %v1251, 0
      %v2129 = vsel %vm1154, %v1252, 0
      %v2132 = vsel %vm1154, %v1253, 0
      %v2135 = vsel %vm1154, %v1254, 0
      %v2138 = vsel %vm1154, %v1255, 0
      %v2141 = vsel %vm1154, %v1256, 0
      %v2144 = vsel %vm1154, %v1257, 0
      %v2147 = vsel %vm1154, %v1258, 0
      %v2150 = vsel %vm1154, %v1259, 0
      %v2153 = vsel %vm1154, %v1260, 0
      %v2156 = vsel %vm1154, %v1261, 0
      %v2159 = vsel %vm1154, %v1262, 0
      %v2162 = vsel %vm1154, %v1263, 0
      %v2165 = vsel %vm1154, %v1264, 0
      %v2168 = vsel %vm1154, %v1265, 0
      %v2171 = vsel %vm1154, %v1266, 0
      %v2174 = vsel %vm1154, %v1267, 0
      %v2177 = vsel %vm1154, %v1268, 0
      %v2180 = vsel %vm1154, %v1269, 0
      %v2183 = vsel %vm1154, %v1270, 0
      %v2186 = vsel %vm1154, %v1271, 0
      %v2189 = vsel %vm1154, %v1272, 0
      %v2192 = vsel %vm1154, %v1273, 0
      %v2195 = vsel %vm1154, %v1274, 0
      %v2198 = vsel %vm1154, %v1275, 0
      %v2201 = vsel %vm1154, %v1276, 0
      %v2204 = vsel %vm1154, %v1277, 0
      %v2207 = vsel %vm1154, %v1278, 0
      %v2210 = vsel %vm1154, %v1279, 0
      %v2213 = vsel %vm1154, %v1280, 0
      %v2216 = vsel %vm1154, %v1281, 0
      %v2219 = vsel %vm1154, %v1282, 0
      %v2222 = vsel %vm1154, %v1283, 0
      %v2225 = vsel %vm1154, %v1284, 0
      %v2228 = vsel %vm1154, %v1285, 0
      %v2231 = vsel %vm1154, %v1286, 0
      %v2234 = vsel %vm1154, %v1287, 0
      %v2237 = vsel %vm1154, %v1288, 0
      %v2240 = vsel %vm1154, %v1289, 0
      %v2243 = vsel %vm1154, %v1290, 0
      %v2246 = vsel %vm1154, %v1291, 0
      %v2249 = vsel %vm1154, %v1292, 0
      %v2252 = vsel %vm1154, %v1293, 0
      %v2255 = vsel %vm1154, %v1294, 0
      %v2258 = vsel %vm1154, %v1295, 0
      %v2261 = vsel %vm1154, %v1296, 0
      %v2264 = vsel %vm1154, %v1297, 0
      %v2267 = vsel %vm1154, %v1298, 0
      %v2270 = vsel %vm1154, %v1299, 0
      %v2273 = vsel %vm1154, %v1300, 0
      %v2276 = vsel %vm1154, %v1301, 0
      %v2279 = vsel %vm1154, %v1302, 0
      %v2282 = vsel %vm1154, %v1303, 0
      %v2285 = vsel %vm1154, %v1304, 0
      %v2288 = vsel %vm1154, %v1305, 0
      %v2291 = vsel %vm1154, %v1306, 0
      %v2294 = vsel %vm1154, %v1307, 0
      %v2297 = vsel %vm1154, %v1308, 0
      %v2300 = vsel %vm1154, %v1309, 0
      %v2303 = vsel %vm1154, %v1310, 0
      %v2306 = vsel %vm1154, %v1311, 0
      %v2309 = vsel %vm1154, %v1312, 0
      %v2312 = vsel %vm1154, %v1313, 0
      %v2315 = vsel %vm1154, %v1314, 0
      %v2318 = vsel %vm1154, %v1315, 0
      %v2321 = vsel %vm1154, %v1316, 0
      %v2324 = vsel %vm1154, %v1317, 0
      %v2327 = vsel %vm1154, %v1318, 0
      %2329 = vmatprep.subr.mxu0 0.0
      %2330 = vmatpush1.msra.mxu0 %v1319
      %2331 = vmatprep.subr.mxu0 0.0
      %2332 = vmatpush1.msra.mxu0 %v1320
      %2333 = vmatprep.subr.mxu0 0.0
      %2334 = vmatpush1.msra.mxu0 %v1321
      %2335 = vmatprep.subr.mxu0 0.0
      %2336 = vmatpush1.msra.mxu0 %v1322
      %2337 = vmatprep.subr.mxu0 0.0
      %2338 = vmatpush1.msra.mxu0 0.0
      %2339 = vmatprep.subr.mxu0 0.0
      %2340 = vmatpush1.msra.mxu0 0.0
      %2341 = vmatprep.subr.mxu0 0.0
      %2342 = vmatpush1.msra.mxu0 0.0
      %2343 = vmatprep.subr.mxu0 0.0
      %2344 = vmatpush1.msra.mxu0 0.0
      %2345 = vmatprep.subr.mxu0 0.0
      %2346 = vmatpush1.msra.mxu0 0.0
      %2347 = vmatprep.subr.mxu0 0.0
      %2348 = vmatpush1.msra.mxu0 0.0
      %2349 = vmatprep.subr.mxu0 0.0
      %2350 = vmatpush1.msra.mxu0 0.0
      %2351 = vmatprep.subr.mxu0 0.0
      %2352 = vmatpush1.msra.mxu0 0.0
      %2353 = vmatprep.subr.mxu0 0.0
      %2354 = vmatpush1.msra.mxu0 0.0
      %2355 = vmatprep.subr.mxu0 0.0
      %2356 = vmatpush1.msra.mxu0 0.0
      %2357 = vmatprep.subr.mxu0 0.0
      %2358 = vmatpush1.msra.mxu0 0.0
      %2359 = vmatprep.subr.mxu0 0.0
      %2360 = vmatpush1.msra.mxu0 0.0
      %2361 = vmatprep.subr.mxu0 0.0
      %2362 = vmatpush1.msra.mxu0 0.0
      %2363 = vmatprep.subr.mxu0 0.0
      %2364 = vmatpush1.msra.mxu0 0.0
      %2365 = vmatprep.subr.mxu0 0.0
      %2366 = vmatpush1.msra.mxu0 0.0
      %2367 = vmatprep.subr.mxu0 0.0
      %2368 = vmatpush1.msra.mxu0 0.0
      %2369 = vmatprep.subr.mxu0 0.0
      %2370 = vmatpush1.msra.mxu0 0.0
      %2371 = vmatprep.subr.mxu0 0.0
      %2372 = vmatpush1.msra.mxu0 0.0
      %2373 = vmatprep.subr.mxu0 0.0
      %2374 = vmatpush1.msra.mxu0 0.0
      %2375 = vmatprep.subr.mxu0 0.0
      %2376 = vmatpush1.msra.mxu0 0.0
      %2377 = vmatprep.subr.mxu0 0.0
      %2378 = vmatpush1.msra.mxu0 0.0
      %2379 = vmatprep.subr.mxu0 0.0
      %2380 = vmatpush1.msra.mxu0 0.0
      %2381 = vmatprep.subr.mxu0 0.0
      %2382 = vmatpush1.msra.mxu0 0.0
      %2383 = vmatprep.subr.mxu0 0.0
      %2384 = vmatpush1.msra.mxu0 0.0
      %2385 = vmatprep.subr.mxu0 0.0
      %2386 = vmatpush1.msra.mxu0 0.0
      %2387 = vmatprep.subr.mxu0 0.0
      %2388 = vmatpush1.msra.mxu0 0.0
      %2389 = vmatprep.subr.mxu0 0.0
      %2390 = vmatpush1.msra.mxu0 0.0
      %2391 = vmatprep.subr.mxu0 0.0
      %2392 = vmatpush1.msra.mxu0 0.0
      %2393 = vmatprep.mubr.f32.mxu0 0.0
      %2394 = vmatmul.mubr.f32.gmra.mrb[0].mxu0 %v2096
      %v2395 = vpop.f32.mrb[0].mxu0
      %v2396 = vadd.f32 %v1707, %v2395
      %v2397 = vpop.f32.mrb[0].mxu0
      %2398 = vmatprep.mubr.f32.mxu0 0.0
      %2399 = vmatmul.mubr.f32.gmra.mrb[0].mxu0 %v2099
      %v2400 = vpop.f32.mrb[0].mxu0
      %v2401 = vadd.f32 %v1712, %v2400
      %v2402 = vpop.f32.mrb[0].mxu0
      %2403 = vmatprep.mubr.f32.mxu0 0.0
      %2404 = vmatmul.mubr.f32.gmra.mrb[0].mxu0 %v2102
      %v2405 = vpop.f32.mrb[0].mxu0
      %v2406 = vadd.f32 %v1717, %v2405
      %v2407 = vpop.f32.mrb[0].mxu0
      %2408 = vmatprep.mubr.f32.mxu0 0.0
      %2409 = vmatmul.mubr.f32.gmra.mrb[0].mxu0 %v2105
      %v2410 = vpop.f32.mrb[0].mxu0
      %v2411 = vadd.f32 %v1722, %v2410
      %v2412 = vpop.f32.mrb[0].mxu0
      %2413 = vmatprep.mubr.f32.mxu0 0.0
      %2414 = vmatmul.mubr.f32.gmra.mrb[0].mxu0 %v2108
      %v2415 = vpop.f32.mrb[0].mxu0
      %v2416 = vadd.f32 %v1727, %v2415
      %v2417 = vpop.f32.mrb[0].mxu0
      %2418 = vmatprep.mubr.f32.mxu0 0.0
      %2419 = vmatmul.mubr.f32.gmra.mrb[0].mxu0 %v2111
      %v2420 = vpop.f32.mrb[0].mxu0
      %v2421 = vadd.f32 %v1732, %v2420
      %v2422 = vpop.f32.mrb[0].mxu0
      %2423 = vmatprep.mubr.f32.mxu0 0.0
      %2424 = vmatmul.mubr.f32.gmra.mrb[0].mxu0 %v2114
      %v2425 = vpop.f32.mrb[0].mxu0
      %v2426 = vadd.f32 %v1737, %v2425
      %v2427 = vpop.f32.mrb[0].mxu0
      %2428 = vmatprep.mubr.f32.mxu0 0.0
      %2429 = vmatmul.mubr.f32.gmra.mrb[0].mxu0 %v2117
      %v2430 = vpop.f32.mrb[0].mxu0
      %v2431 = vadd.f32 %v1742, %v2430
      %v2432 = vpop.f32.mrb[0].mxu0
      %2433 = vmatprep.mubr.f32.mxu0 0.0
      %2434 = vmatmul.mubr.f32.gmra.mrb[0].mxu0 %v2120
      %v2435 = vpop.f32.mrb[0].mxu0
      %v2436 = vadd.f32 %v1747, %v2435
      %v2437 = vpop.f32.mrb[0].mxu0
      %2438 = vmatprep.mubr.f32.mxu0 0.0
      %2439 = vmatmul.mubr.f32.gmra.mrb[0].mxu0 %v2123
      %v2440 = vpop.f32.mrb[0].mxu0
      %v2441 = vadd.f32 %v1752, %v2440
      %v2442 = vpop.f32.mrb[0].mxu0
      %2443 = vmatprep.mubr.f32.mxu0 0.0
      %2444 = vmatmul.mubr.f32.gmra.mrb[0].mxu0 %v2126
      %v2445 = vpop.f32.mrb[0].mxu0
      %v2446 = vadd.f32 %v1757, %v2445
      %v2447 = vpop.f32.mrb[0].mxu0
      %2448 = vmatprep.mubr.f32.mxu0 0.0
      %2449 = vmatmul.mubr.f32.gmra.mrb[0].mxu0 %v2129
      %v2450 = vpop.f32.mrb[0].mxu0
      %v2451 = vadd.f32 %v1762, %v2450
      %v2452 = vpop.f32.mrb[0].mxu0
      %2453 = vmatprep.mubr.f32.mxu0 0.0
      %2454 = vmatmul.mubr.f32.gmra.mrb[0].mxu0 %v2132
      %v2455 = vpop.f32.mrb[0].mxu0
      %v2456 = vadd.f32 %v1767, %v2455
      %v2457 = vpop.f32.mrb[0].mxu0
      %2458 = vmatprep.mubr.f32.mxu0 0.0
      %2459 = vmatmul.mubr.f32.gmra.mrb[0].mxu0 %v2135
      %v2460 = vpop.f32.mrb[0].mxu0
      %v2461 = vadd.f32 %v1772, %v2460
      %v2462 = vpop.f32.mrb[0].mxu0
      %2463 = vmatprep.mubr.f32.mxu0 0.0
      %2464 = vmatmul.mubr.f32.gmra.mrb[0].mxu0 %v2138
      %v2465 = vpop.f32.mrb[0].mxu0
      %v2466 = vadd.f32 %v1777, %v2465
      %v2467 = vpop.f32.mrb[0].mxu0
      %2468 = vmatprep.mubr.f32.mxu0 0.0
      %2469 = vmatmul.mubr.f32.gmra.mrb[0].mxu0 %v2141
      %v2470 = vpop.f32.mrb[0].mxu0
      %v2471 = vadd.f32 %v1782, %v2470
      %v2472 = vpop.f32.mrb[0].mxu0
      %2473 = vmatprep.mubr.f32.mxu0 0.0
      %2474 = vmatmul.mubr.f32.gmra.mrb[0].mxu0 %v2144
      %v2475 = vpop.f32.mrb[0].mxu0
      %v2476 = vadd.f32 %v1787, %v2475
      %v2477 = vpop.f32.mrb[0].mxu0
      %2478 = vmatprep.mubr.f32.mxu0 0.0
      %2479 = vmatmul.mubr.f32.gmra.mrb[0].mxu0 %v2147
      %v2480 = vpop.f32.mrb[0].mxu0
      %v2481 = vadd.f32 %v1792, %v2480
      %v2482 = vpop.f32.mrb[0].mxu0
      %2483 = vmatprep.mubr.f32.mxu0 0.0
      %2484 = vmatmul.mubr.f32.gmra.mrb[0].mxu0 %v2150
      %v2485 = vpop.f32.mrb[0].mxu0
      %v2486 = vadd.f32 %v1797, %v2485
      %v2487 = vpop.f32.mrb[0].mxu0
      %2488 = vmatprep.mubr.f32.mxu0 0.0
      %2489 = vmatmul.mubr.f32.gmra.mrb[0].mxu0 %v2153
      %v2490 = vpop.f32.mrb[0].mxu0
      %v2491 = vadd.f32 %v1802, %v2490
      %v2492 = vpop.f32.mrb[0].mxu0
      %2493 = vmatprep.mubr.f32.mxu0 0.0
      %2494 = vmatmul.mubr.f32.gmra.mrb[0].mxu0 %v2156
      %v2495 = vpop.f32.mrb[0].mxu0
      %v2496 = vadd.f32 %v1807, %v2495
      %v2497 = vpop.f32.mrb[0].mxu0
      %2498 = vmatprep.mubr.f32.mxu0 0.0
      %2499 = vmatmul.mubr.f32.gmra.mrb[0].mxu0 %v2159
      %v2500 = vpop.f32.mrb[0].mxu0
      %v2501 = vadd.f32 %v1812, %v2500
      %v2502 = vpop.f32.mrb[0].mxu0
      %2503 = vmatprep.mubr.f32.mxu0 0.0
      %2504 = vmatmul.mubr.f32.gmra.mrb[0].mxu0 %v2162
      %v2505 = vpop.f32.mrb[0].mxu0
      %v2506 = vadd.f32 %v1817, %v2505
      %v2507 = vpop.f32.mrb[0].mxu0
      %2508 = vmatprep.mubr.f32.mxu0 0.0
      %2509 = vmatmul.mubr.f32.gmra.mrb[0].mxu0 %v2165
      %v2510 = vpop.f32.mrb[0].mxu0
      %v2511 = vadd.f32 %v1822, %v2510
      %v2512 = vpop.f32.mrb[0].mxu0
      %2513 = vmatprep.mubr.f32.mxu0 0.0
      %2514 = vmatmul.mubr.f32.gmra.mrb[0].mxu0 %v2168
      %v2515 = vpop.f32.mrb[0].mxu0
      %v2516 = vadd.f32 %v1827, %v2515
      %v2517 = vpop.f32.mrb[0].mxu0
      %2518 = vmatprep.mubr.f32.mxu0 0.0
      %2519 = vmatmul.mubr.f32.gmra.mrb[0].mxu0 %v2171
      %v2520 = vpop.f32.mrb[0].mxu0
      %v2521 = vadd.f32 %v1832, %v2520
      %v2522 = vpop.f32.mrb[0].mxu0
      %2523 = vmatprep.mubr.f32.mxu0 0.0
      %2524 = vmatmul.mubr.f32.gmra.mrb[0].mxu0 %v2174
      %v2525 = vpop.f32.mrb[0].mxu0
      %v2526 = vadd.f32 %v1837, %v2525
      %v2527 = vpop.f32.mrb[0].mxu0
      %2528 = vmatprep.mubr.f32.mxu0 0.0
      %2529 = vmatmul.mubr.f32.gmra.mrb[0].mxu0 %v2177
      %v2530 = vpop.f32.mrb[0].mxu0
      %v2531 = vadd.f32 %v1842, %v2530
      %v2532 = vpop.f32.mrb[0].mxu0
      %2533 = vmatprep.mubr.f32.mxu0 0.0
      %2534 = vmatmul.mubr.f32.gmra.mrb[0].mxu0 %v2180
      %v2535 = vpop.f32.mrb[0].mxu0
      %v2536 = vadd.f32 %v1847, %v2535
      %v2537 = vpop.f32.mrb[0].mxu0
      %2538 = vmatprep.mubr.f32.mxu0 0.0
      %2539 = vmatmul.mubr.f32.gmra.mrb[0].mxu0 %v2183
      %v2540 = vpop.f32.mrb[0].mxu0
      %v2541 = vadd.f32 %v1852, %v2540
      %v2542 = vpop.f32.mrb[0].mxu0
      %2543 = vmatprep.mubr.f32.mxu0 0.0
      %2544 = vmatmul.mubr.f32.gmra.mrb[0].mxu0 %v2186
      %v2545 = vpop.f32.mrb[0].mxu0
      %v2546 = vadd.f32 %v1857, %v2545
      %v2547 = vpop.f32.mrb[0].mxu0
      %2548 = vmatprep.mubr.f32.mxu0 0.0
      %2549 = vmatmul.mubr.f32.gmra.mrb[0].mxu0 %v2189
      %v2550 = vpop.f32.mrb[0].mxu0
      %v2551 = vadd.f32 %v1862, %v2550
      %v2552 = vpop.f32.mrb[0].mxu0
      %2553 = vmatprep.mubr.f32.mxu0 0.0
      %2554 = vmatmul.mubr.f32.gmra.mrb[0].mxu0 %v2192
      %v2555 = vpop.f32.mrb[0].mxu0
      %v2556 = vadd.f32 %v1867, %v2555
      %v2557 = vpop.f32.mrb[0].mxu0
      %2558 = vmatprep.mubr.f32.mxu0 0.0
      %2559 = vmatmul.mubr.f32.gmra.mrb[0].mxu0 %v2195
      %v2560 = vpop.f32.mrb[0].mxu0
      %v2561 = vadd.f32 %v1872, %v2560
      %v2562 = vpop.f32.mrb[0].mxu0
      %2563 = vmatprep.mubr.f32.mxu0 0.0
      %2564 = vmatmul.mubr.f32.gmra.mrb[0].mxu0 %v2198
      %v2565 = vpop.f32.mrb[0].mxu0
      %v2566 = vadd.f32 %v1877, %v2565
      %v2567 = vpop.f32.mrb[0].mxu0
      %2568 = vmatprep.mubr.f32.mxu0 0.0
      %2569 = vmatmul.mubr.f32.gmra.mrb[0].mxu0 %v2201
      %v2570 = vpop.f32.mrb[0].mxu0
      %v2571 = vadd.f32 %v1882, %v2570
      %v2572 = vpop.f32.mrb[0].mxu0
      %2573 = vmatprep.mubr.f32.mxu0 0.0
      %2574 = vmatmul.mubr.f32.gmra.mrb[0].mxu0 %v2204
      %v2575 = vpop.f32.mrb[0].mxu0
      %v2576 = vadd.f32 %v1887, %v2575
      %v2577 = vpop.f32.mrb[0].mxu0
      %2578 = vmatprep.mubr.f32.mxu0 0.0
      %2579 = vmatmul.mubr.f32.gmra.mrb[0].mxu0 %v2207
      %v2580 = vpop.f32.mrb[0].mxu0
      %v2581 = vadd.f32 %v1892, %v2580
      %v2582 = vpop.f32.mrb[0].mxu0
      %2583 = vmatprep.mubr.f32.mxu0 0.0
      %2584 = vmatmul.mubr.f32.gmra.mrb[0].mxu0 %v2210
      %v2585 = vpop.f32.mrb[0].mxu0
      %v2586 = vadd.f32 %v1897, %v2585
      %v2587 = vpop.f32.mrb[0].mxu0
      %2588 = vmatprep.mubr.f32.mxu0 0.0
      %2589 = vmatmul.mubr.f32.gmra.mrb[0].mxu0 %v2213
      %v2590 = vpop.f32.mrb[0].mxu0
      %v2591 = vadd.f32 %v1902, %v2590
      %v2592 = vpop.f32.mrb[0].mxu0
      %2593 = vmatprep.mubr.f32.mxu0 0.0
      %2594 = vmatmul.mubr.f32.gmra.mrb[0].mxu0 %v2216
      %v2595 = vpop.f32.mrb[0].mxu0
      %v2596 = vadd.f32 %v1907, %v2595
      %v2597 = vpop.f32.mrb[0].mxu0
      %2598 = vmatprep.mubr.f32.mxu0 0.0
      %2599 = vmatmul.mubr.f32.gmra.mrb[0].mxu0 %v2219
      %v2600 = vpop.f32.mrb[0].mxu0
      %v2601 = vadd.f32 %v1912, %v2600
      %v2602 = vpop.f32.mrb[0].mxu0
      %2603 = vmatprep.mubr.f32.mxu0 0.0
      %2604 = vmatmul.mubr.f32.gmra.mrb[0].mxu0 %v2222
      %v2605 = vpop.f32.mrb[0].mxu0
      %v2606 = vadd.f32 %v1917, %v2605
      %v2607 = vpop.f32.mrb[0].mxu0
      %2608 = vmatprep.mubr.f32.mxu0 0.0
      %2609 = vmatmul.mubr.f32.gmra.mrb[0].mxu0 %v2225
      %v2610 = vpop.f32.mrb[0].mxu0
      %v2611 = vadd.f32 %v1922, %v2610
      %v2612 = vpop.f32.mrb[0].mxu0
      %2613 = vmatprep.mubr.f32.mxu0 0.0
      %2614 = vmatmul.mubr.f32.gmra.mrb[0].mxu0 %v2228
      %v2615 = vpop.f32.mrb[0].mxu0
      %v2616 = vadd.f32 %v1927, %v2615
      %v2617 = vpop.f32.mrb[0].mxu0
      %2618 = vmatprep.mubr.f32.mxu0 0.0
      %2619 = vmatmul.mubr.f32.gmra.mrb[0].mxu0 %v2231
      %v2620 = vpop.f32.mrb[0].mxu0
      %v2621 = vadd.f32 %v1932, %v2620
      %v2622 = vpop.f32.mrb[0].mxu0
      %2623 = vmatprep.mubr.f32.mxu0 0.0
      %2624 = vmatmul.mubr.f32.gmra.mrb[0].mxu0 %v2234
      %v2625 = vpop.f32.mrb[0].mxu0
      %v2626 = vadd.f32 %v1937, %v2625
      %v2627 = vpop.f32.mrb[0].mxu0
      %2628 = vmatprep.mubr.f32.mxu0 0.0
      %2629 = vmatmul.mubr.f32.gmra.mrb[0].mxu0 %v2237
      %v2630 = vpop.f32.mrb[0].mxu0
      %v2631 = vadd.f32 %v1942, %v2630
      %v2632 = vpop.f32.mrb[0].mxu0
      %2633 = vmatprep.mubr.f32.mxu0 0.0
      %2634 = vmatmul.mubr.f32.gmra.mrb[0].mxu0 %v2240
      %v2635 = vpop.f32.mrb[0].mxu0
      %v2636 = vadd.f32 %v1947, %v2635
      %v2637 = vpop.f32.mrb[0].mxu0
      %2638 = vmatprep.mubr.f32.mxu0 0.0
      %2639 = vmatmul.mubr.f32.gmra.mrb[0].mxu0 %v2243
      %v2640 = vpop.f32.mrb[0].mxu0
      %v2641 = vadd.f32 %v1952, %v2640
      %v2642 = vpop.f32.mrb[0].mxu0
      %2643 = vmatprep.mubr.f32.mxu0 0.0
      %2644 = vmatmul.mubr.f32.gmra.mrb[0].mxu0 %v2246
      %v2645 = vpop.f32.mrb[0].mxu0
      %v2646 = vadd.f32 %v1957, %v2645
      %v2647 = vpop.f32.mrb[0].mxu0
      %2648 = vmatprep.mubr.f32.mxu0 0.0
      %2649 = vmatmul.mubr.f32.gmra.mrb[0].mxu0 %v2249
      %v2650 = vpop.f32.mrb[0].mxu0
      %v2651 = vadd.f32 %v1962, %v2650
      %v2652 = vpop.f32.mrb[0].mxu0
      %2653 = vmatprep.mubr.f32.mxu0 0.0
      %2654 = vmatmul.mubr.f32.gmra.mrb[0].mxu0 %v2252
      %v2655 = vpop.f32.mrb[0].mxu0
      %v2656 = vadd.f32 %v1967, %v2655
      %v2657 = vpop.f32.mrb[0].mxu0
      %2658 = vmatprep.mubr.f32.mxu0 0.0
      %2659 = vmatmul.mubr.f32.gmra.mrb[0].mxu0 %v2255
      %v2660 = vpop.f32.mrb[0].mxu0
      %v2661 = vadd.f32 %v1972, %v2660
      %v2662 = vpop.f32.mrb[0].mxu0
      %2663 = vmatprep.mubr.f32.mxu0 0.0
      %2664 = vmatmul.mubr.f32.gmra.mrb[0].mxu0 %v2258
      %v2665 = vpop.f32.mrb[0].mxu0
      %v2666 = vadd.f32 %v1977, %v2665
      %v2667 = vpop.f32.mrb[0].mxu0
      %2668 = vmatprep.mubr.f32.mxu0 0.0
      %2669 = vmatmul.mubr.f32.gmra.mrb[0].mxu0 %v2261
      %v2670 = vpop.f32.mrb[0].mxu0
      %v2671 = vadd.f32 %v1982, %v2670
      %v2672 = vpop.f32.mrb[0].mxu0
      %2673 = vmatprep.mubr.f32.mxu0 0.0
      %2674 = vmatmul.mubr.f32.gmra.mrb[0].mxu0 %v2264
      %v2675 = vpop.f32.mrb[0].mxu0
      %v2676 = vadd.f32 %v1987, %v2675
      %v2677 = vpop.f32.mrb[0].mxu0
      %2678 = vmatprep.mubr.f32.mxu0 0.0
      %2679 = vmatmul.mubr.f32.gmra.mrb[0].mxu0 %v2267
      %v2680 = vpop.f32.mrb[0].mxu0
      %v2681 = vadd.f32 %v1992, %v2680
      %v2682 = vpop.f32.mrb[0].mxu0
      %2683 = vmatprep.mubr.f32.mxu0 0.0
      %2684 = vmatmul.mubr.f32.gmra.mrb[0].mxu0 %v2270
      %v2685 = vpop.f32.mrb[0].mxu0
      %v2686 = vadd.f32 %v1997, %v2685
      %v2687 = vpop.f32.mrb[0].mxu0
      %2688 = vmatprep.mubr.f32.mxu0 0.0
      %2689 = vmatmul.mubr.f32.gmra.mrb[0].mxu0 %v2273
      %v2690 = vpop.f32.mrb[0].mxu0
      %v2691 = vadd.f32 %v2002, %v2690
      %v2692 = vpop.f32.mrb[0].mxu0
      %2693 = vmatprep.mubr.f32.mxu0 0.0
      %2694 = vmatmul.mubr.f32.gmra.mrb[0].mxu0 %v2276
      %v2695 = vpop.f32.mrb[0].mxu0
      %v2696 = vadd.f32 %v2007, %v2695
      %v2697 = vpop.f32.mrb[0].mxu0
      %2698 = vmatprep.mubr.f32.mxu0 0.0
      %2699 = vmatmul.mubr.f32.gmra.mrb[0].mxu0 %v2279
      %v2700 = vpop.f32.mrb[0].mxu0
      %v2701 = vadd.f32 %v2012, %v2700
      %v2702 = vpop.f32.mrb[0].mxu0
      %2703 = vmatprep.mubr.f32.mxu0 0.0
      %2704 = vmatmul.mubr.f32.gmra.mrb[0].mxu0 %v2282
      %v2705 = vpop.f32.mrb[0].mxu0
      %v2706 = vadd.f32 %v2017, %v2705
      %v2707 = vpop.f32.mrb[0].mxu0
      %2708 = vmatprep.mubr.f32.mxu0 0.0
      %2709 = vmatmul.mubr.f32.gmra.mrb[0].mxu0 %v2285
      %v2710 = vpop.f32.mrb[0].mxu0
      %v2711 = vadd.f32 %v2022, %v2710
      %v2712 = vpop.f32.mrb[0].mxu0
      %2713 = vmatprep.mubr.f32.mxu0 0.0
      %2714 = vmatmul.mubr.f32.gmra.mrb[0].mxu0 %v2288
      %v2715 = vpop.f32.mrb[0].mxu0
      %v2716 = vadd.f32 %v2027, %v2715
      %v2717 = vpop.f32.mrb[0].mxu0
      %2718 = vmatprep.mubr.f32.mxu0 0.0
      %2719 = vmatmul.mubr.f32.gmra.mrb[0].mxu0 %v2291
      %v2720 = vpop.f32.mrb[0].mxu0
      %v2721 = vadd.f32 %v2032, %v2720
      %v2722 = vpop.f32.mrb[0].mxu0
      %2723 = vmatprep.mubr.f32.mxu0 0.0
      %2724 = vmatmul.mubr.f32.gmra.mrb[0].mxu0 %v2294
      %v2725 = vpop.f32.mrb[0].mxu0
      %v2726 = vadd.f32 %v2037, %v2725
      %v2727 = vpop.f32.mrb[0].mxu0
      %2728 = vmatprep.mubr.f32.mxu0 0.0
      %2729 = vmatmul.mubr.f32.gmra.mrb[0].mxu0 %v2297
      %v2730 = vpop.f32.mrb[0].mxu0
      %v2731 = vadd.f32 %v2042, %v2730
      %v2732 = vpop.f32.mrb[0].mxu0
      %2733 = vmatprep.mubr.f32.mxu0 0.0
      %2734 = vmatmul.mubr.f32.gmra.mrb[0].mxu0 %v2300
      %v2735 = vpop.f32.mrb[0].mxu0
      %v2736 = vadd.f32 %v2047, %v2735
      %v2737 = vpop.f32.mrb[0].mxu0
      %2738 = vmatprep.mubr.f32.mxu0 0.0
      %2739 = vmatmul.mubr.f32.gmra.mrb[0].mxu0 %v2303
      %v2740 = vpop.f32.mrb[0].mxu0
      %v2741 = vadd.f32 %v2052, %v2740
      %v2742 = vpop.f32.mrb[0].mxu0
      %2743 = vmatprep.mubr.f32.mxu0 0.0
      %2744 = vmatmul.mubr.f32.gmra.mrb[0].mxu0 %v2306
      %v2745 = vpop.f32.mrb[0].mxu0
      %v2746 = vadd.f32 %v2057, %v2745
      %v2747 = vpop.f32.mrb[0].mxu0
      %2748 = vmatprep.mubr.f32.mxu0 0.0
      %2749 = vmatmul.mubr.f32.gmra.mrb[0].mxu0 %v2309
      %v2750 = vpop.f32.mrb[0].mxu0
      %v2751 = vadd.f32 %v2062, %v2750
      %v2752 = vpop.f32.mrb[0].mxu0
      %2753 = vmatprep.mubr.f32.mxu0 0.0
      %2754 = vmatmul.mubr.f32.gmra.mrb[0].mxu0 %v2312
      %v2755 = vpop.f32.mrb[0].mxu0
      %v2756 = vadd.f32 %v2067, %v2755
      %v2757 = vpop.f32.mrb[0].mxu0
      %2758 = vmatprep.mubr.f32.mxu0 0.0
      %2759 = vmatmul.mubr.f32.gmra.mrb[0].mxu0 %v2315
      %v2760 = vpop.f32.mrb[0].mxu0
      %v2761 = vadd.f32 %v2072, %v2760
      %v2762 = vpop.f32.mrb[0].mxu0
      %2763 = vmatprep.mubr.f32.mxu0 0.0
      %2764 = vmatmul.mubr.f32.gmra.mrb[0].mxu0 %v2318
      %v2765 = vpop.f32.mrb[0].mxu0
      %v2766 = vadd.f32 %v2077, %v2765
      %v2767 = vpop.f32.mrb[0].mxu0
      %2768 = vmatprep.mubr.f32.mxu0 0.0
      %2769 = vmatmul.mubr.f32.gmra.mrb[0].mxu0 %v2321
      %v2770 = vpop.f32.mrb[0].mxu0
      %v2771 = vadd.f32 %v2082, %v2770
      %v2772 = vpop.f32.mrb[0].mxu0
      %2773 = vmatprep.mubr.f32.mxu0 0.0
      %2774 = vmatmul.mubr.f32.gmra.mrb[0].mxu0 %v2324
      %v2775 = vpop.f32.mrb[0].mxu0
      %v2776 = vadd.f32 %v2087, %v2775
      %v2777 = vpop.f32.mrb[0].mxu0
      %2778 = vmatprep.mubr.f32.mxu0 0.0
      %2779 = vmatmul.mubr.f32.gmra.mrb[0].mxu0 %v2327
      %v2780 = vpop.f32.mrb[0].mxu0
      %v2781 = vadd.f32 %v2092, %v2780
      %v2782 = vpop.f32.mrb[0].mxu0
      %2783 = vdwg.mxu0
      %v2784 = vld [vmem:[#allocation2 + $0x2] sm:$0xff]
      %v2785 = vld [vmem:[#allocation2 + $0xa] sm:$0xff]
      %v2786 = vld [vmem:[#allocation2 + $0x12] sm:$0xff]
      %v2787 = vld [vmem:[#allocation2 + $0x1a] sm:$0xff]
      %v2788 = vld [vmem:[#allocation2 + $0x22] sm:$0xff]
      %v2789 = vld [vmem:[#allocation2 + $0x2a] sm:$0xff]
      %v2790 = vld [vmem:[#allocation2 + $0x32] sm:$0xff]
      %v2791 = vld [vmem:[#allocation2 + $0x3a] sm:$0xff]
      %v2792 = vld [vmem:[#allocation2 + $0x42] sm:$0xff]
      %v2793 = vld [vmem:[#allocation2 + $0x4a] sm:$0xff]
      %v2794 = vld [vmem:[#allocation2 + $0x52] sm:$0xff]
      %v2795 = vld [vmem:[#allocation2 + $0x5a] sm:$0xff]
      %v2796 = vld [vmem:[#allocation2 + $0x62] sm:$0xff]
      %v2797 = vld [vmem:[#allocation2 + $0x6a] sm:$0xff]
      %v2798 = vld [vmem:[#allocation2 + $0x72] sm:$0xff]
      %v2799 = vld [vmem:[#allocation2 + $0x7a] sm:$0xff]
      %v2800 = vld [vmem:[#allocation2 + $0x82] sm:$0xff]
      %v2801 = vld [vmem:[#allocation2 + $0x8a] sm:$0xff]
      %v2802 = vld [vmem:[#allocation2 + $0x92] sm:$0xff]
      %v2803 = vld [vmem:[#allocation2 + $0x9a] sm:$0xff]
      %v2804 = vld [vmem:[#allocation2 + $0xa2] sm:$0xff]
      %v2805 = vld [vmem:[#allocation2 + $0xaa] sm:$0xff]
      %v2806 = vld [vmem:[#allocation2 + $0xb2] sm:$0xff]
      %v2807 = vld [vmem:[#allocation2 + $0xba] sm:$0xff]
      %v2808 = vld [vmem:[#allocation2 + $0xc2] sm:$0xff]
      %v2809 = vld [vmem:[#allocation2 + $0xca] sm:$0xff]
      %v2810 = vld [vmem:[#allocation2 + $0xd2] sm:$0xff]
      %v2811 = vld [vmem:[#allocation2 + $0xda] sm:$0xff]
      %v2812 = vld [vmem:[#allocation2 + $0xe2] sm:$0xff]
      %v2813 = vld [vmem:[#allocation2 + $0xea] sm:$0xff]
      %v2814 = vld [vmem:[#allocation2 + $0xf2] sm:$0xff]
      %v2815 = vld [vmem:[#allocation2 + $0xfa] sm:$0xff]
      %v2816 = vld [vmem:[#allocation2 + $0x102] sm:$0xff]
      %v2817 = vld [vmem:[#allocation2 + $0x10a] sm:$0xff]
      %v2818 = vld [vmem:[#allocation2 + $0x112] sm:$0xff]
      %v2819 = vld [vmem:[#allocation2 + $0x11a] sm:$0xff]
      %v2820 = vld [vmem:[#allocation2 + $0x122] sm:$0xff]
      %v2821 = vld [vmem:[#allocation2 + $0x12a] sm:$0xff]
      %v2822 = vld [vmem:[#allocation2 + $0x132] sm:$0xff]
      %v2823 = vld [vmem:[#allocation2 + $0x13a] sm:$0xff]
      %v2824 = vld [vmem:[#allocation2 + $0x142] sm:$0xff]
      %v2825 = vld [vmem:[#allocation2 + $0x14a] sm:$0xff]
      %v2826 = vld [vmem:[#allocation2 + $0x152] sm:$0xff]
      %v2827 = vld [vmem:[#allocation2 + $0x15a] sm:$0xff]
      %v2828 = vld [vmem:[#allocation2 + $0x162] sm:$0xff]
      %v2829 = vld [vmem:[#allocation2 + $0x16a] sm:$0xff]
      %v2830 = vld [vmem:[#allocation2 + $0x172] sm:$0xff]
      %v2831 = vld [vmem:[#allocation2 + $0x17a] sm:$0xff]
      %v2832 = vld [vmem:[#allocation2 + $0x182] sm:$0xff]
      %v2833 = vld [vmem:[#allocation2 + $0x18a] sm:$0xff]
      %v2834 = vld [vmem:[#allocation2 + $0x192] sm:$0xff]
      %v2835 = vld [vmem:[#allocation2 + $0x19a] sm:$0xff]
      %v2836 = vld [vmem:[#allocation2 + $0x1a2] sm:$0xff]
      %v2837 = vld [vmem:[#allocation2 + $0x1aa] sm:$0xff]
      %v2838 = vld [vmem:[#allocation2 + $0x1b2] sm:$0xff]
      %v2839 = vld [vmem:[#allocation2 + $0x1ba] sm:$0xff]
      %v2840 = vld [vmem:[#allocation2 + $0x1c2] sm:$0xff]
      %v2841 = vld [vmem:[#allocation2 + $0x1ca] sm:$0xff]
      %v2842 = vld [vmem:[#allocation2 + $0x1d2] sm:$0xff]
      %v2843 = vld [vmem:[#allocation2 + $0x1da] sm:$0xff]
      %v2844 = vld [vmem:[#allocation2 + $0x1e2] sm:$0xff]
      %v2845 = vld [vmem:[#allocation2 + $0x1ea] sm:$0xff]
      %v2846 = vld [vmem:[#allocation2 + $0x1f2] sm:$0xff]
      %v2847 = vld [vmem:[#allocation2 + $0x1fa] sm:$0xff]
      %v2848 = vld [vmem:[#allocation2 + $0x202] sm:$0xff]
      %v2849 = vld [vmem:[#allocation2 + $0x20a] sm:$0xff]
      %v2850 = vld [vmem:[#allocation2 + $0x212] sm:$0xff]
      %v2851 = vld [vmem:[#allocation2 + $0x21a] sm:$0xff]
      %v2852 = vld [vmem:[#allocation2 + $0x222] sm:$0xff]
      %v2853 = vld [vmem:[#allocation2 + $0x22a] sm:$0xff]
      %v2854 = vld [vmem:[#allocation2 + $0x232] sm:$0xff]
      %v2855 = vld [vmem:[#allocation2 + $0x23a] sm:$0xff]
      %v2856 = vld [vmem:[#allocation2 + $0x242] sm:$0xff]
      %v2857 = vld [vmem:[#allocation2 + $0x24a] sm:$0xff]
      %v2858 = vld [vmem:[#allocation2 + $0x252] sm:$0xff]
      %v2859 = vld [vmem:[#allocation2 + $0x25a] sm:$0xff]
      %v2860 = vld [vmem:[#allocation2 + $0x262] sm:$0xff]
      %v2861 = vld [vmem:[#allocation2 + $0x26a] sm:$0x3f]
      %s2862 = scalar_lea.vmem %s3, 64
      %v2863 = vld [vmem:[%s2862] sm:$0xff]
      %v2864 = vld [vmem:[%s2862 + $0x8] sm:$0xff]
      %v2865 = vld [vmem:[%s2862 + $0x10] sm:$0xff]
      %v2866 = vld [vmem:[%s2862 + $0x18] sm:$0xff]
      %v2868 = vsel %vm1154, %v2784, 0
      %v2871 = vsel %vm1154, %v2785, 0
      %v2874 = vsel %vm1154, %v2786, 0
      %v2877 = vsel %vm1154, %v2787, 0
      %v2880 = vsel %vm1154, %v2788, 0
      %v2883 = vsel %vm1154, %v2789, 0
      %v2886 = vsel %vm1154, %v2790, 0
      %v2889 = vsel %vm1154, %v2791, 0
      %v2892 = vsel %vm1154, %v2792, 0
      %v2895 = vsel %vm1154, %v2793, 0
      %v2898 = vsel %vm1154, %v2794, 0
      %v2901 = vsel %vm1154, %v2795, 0
      %v2904 = vsel %vm1154, %v2796, 0
      %v2907 = vsel %vm1154, %v2797, 0
      %v2910 = vsel %vm1154, %v2798, 0
      %v2913 = vsel %vm1154, %v2799, 0
      %v2916 = vsel %vm1154, %v2800, 0
      %v2919 = vsel %vm1154, %v2801, 0
      %v2922 = vsel %vm1154, %v2802, 0
      %v2925 = vsel %vm1154, %v2803, 0
      %v2928 = vsel %vm1154, %v2804, 0
      %v2931 = vsel %vm1154, %v2805, 0
      %v2934 = vsel %vm1154, %v2806, 0
      %v2937 = vsel %vm1154, %v2807, 0
      %v2940 = vsel %vm1154, %v2808, 0
      %v2943 = vsel %vm1154, %v2809, 0
      %v2946 = vsel %vm1154, %v2810, 0
      %v2949 = vsel %vm1154, %v2811, 0
      %v2952 = vsel %vm1154, %v2812, 0
      %v2955 = vsel %vm1154, %v2813, 0
      %v2958 = vsel %vm1154, %v2814, 0
      %v2961 = vsel %vm1154, %v2815, 0
      %v2964 = vsel %vm1154, %v2816, 0
      %v2967 = vsel %vm1154, %v2817, 0
      %v2970 = vsel %vm1154, %v2818, 0
      %v2973 = vsel %vm1154, %v2819, 0
      %v2976 = vsel %vm1154, %v2820, 0
      %v2979 = vsel %vm1154, %v2821, 0
      %v2982 = vsel %vm1154, %v2822, 0
      %v2985 = vsel %vm1154, %v2823, 0
      %v2988 = vsel %vm1154, %v2824, 0
      %v2991 = vsel %vm1154, %v2825, 0
      %v2994 = vsel %vm1154, %v2826, 0
      %v2997 = vsel %vm1154, %v2827, 0
      %v3000 = vsel %vm1154, %v2828, 0
      %v3003 = vsel %vm1154, %v2829, 0
      %v3006 = vsel %vm1154, %v2830, 0
      %v3009 = vsel %vm1154, %v2831, 0
      %v3012 = vsel %vm1154, %v2832, 0
      %v3015 = vsel %vm1154, %v2833, 0
      %v3018 = vsel %vm1154, %v2834, 0
      %v3021 = vsel %vm1154, %v2835, 0
      %v3024 = vsel %vm1154, %v2836, 0
      %v3027 = vsel %vm1154, %v2837, 0
      %v3030 = vsel %vm1154, %v2838, 0
      %v3033 = vsel %vm1154, %v2839, 0
      %v3036 = vsel %vm1154, %v2840, 0
      %v3039 = vsel %vm1154, %v2841, 0
      %v3042 = vsel %vm1154, %v2842, 0
      %v3045 = vsel %vm1154, %v2843, 0
      %v3048 = vsel %vm1154, %v2844, 0
      %v3051 = vsel %vm1154, %v2845, 0
      %v3054 = vsel %vm1154, %v2846, 0
      %v3057 = vsel %vm1154, %v2847, 0
      %v3060 = vsel %vm1154, %v2848, 0
      %v3063 = vsel %vm1154, %v2849, 0
      %v3066 = vsel %vm1154, %v2850, 0
      %v3069 = vsel %vm1154, %v2851, 0
      %v3072 = vsel %vm1154, %v2852, 0
      %v3075 = vsel %vm1154, %v2853, 0
      %v3078 = vsel %vm1154, %v2854, 0
      %v3081 = vsel %vm1154, %v2855, 0
      %v3084 = vsel %vm1154, %v2856, 0
      %v3087 = vsel %vm1154, %v2857, 0
      %v3090 = vsel %vm1154, %v2858, 0
      %v3093 = vsel %vm1154, %v2859, 0
      %v3096 = vsel %vm1154, %v2860, 0
      %v3099 = vsel %vm1154, %v2861, 0
      %3101 = vmatprep.subr.mxu0 0.0
      %3102 = vmatpush1.msra.mxu0 %v2863
      %3103 = vmatprep.subr.mxu0 0.0
      %3104 = vmatpush1.msra.mxu0 %v2864
      %3105 = vmatprep.subr.mxu0 0.0
      %3106 = vmatpush1.msra.mxu0 %v2865
      %3107 = vmatprep.subr.mxu0 0.0
      %3108 = vmatpush1.msra.mxu0 %v2866
      %3109 = vmatprep.subr.mxu0 0.0
      %3110 = vmatpush1.msra.mxu0 0.0
      %3111 = vmatprep.subr.mxu0 0.0
      %3112 = vmatpush1.msra.mxu0 0.0
      %3113 = vmatprep.subr.mxu0 0.0
      %3114 = vmatpush1.msra.mxu0 0.0
      %3115 = vmatprep.subr.mxu0 0.0
      %3116 = vmatpush1.msra.mxu0 0.0
      %3117 = vmatprep.subr.mxu0 0.0
      %3118 = vmatpush1.msra.mxu0 0.0
      %3119 = vmatprep.subr.mxu0 0.0
      %3120 = vmatpush1.msra.mxu0 0.0
      %3121 = vmatprep.subr.mxu0 0.0
      %3122 = vmatpush1.msra.mxu0 0.0
      %3123 = vmatprep.subr.mxu0 0.0
      %3124 = vmatpush1.msra.mxu0 0.0
      %3125 = vmatprep.subr.mxu0 0.0
      %3126 = vmatpush1.msra.mxu0 0.0
      %3127 = vmatprep.subr.mxu0 0.0
      %3128 = vmatpush1.msra.mxu0 0.0
      %3129 = vmatprep.subr.mxu0 0.0
      %3130 = vmatpush1.msra.mxu0 0.0
      %3131 = vmatprep.subr.mxu0 0.0
      %3132 = vmatpush1.msra.mxu0 0.0
      %3133 = vmatprep.subr.mxu0 0.0
      %3134 = vmatpush1.msra.mxu0 0.0
      %3135 = vmatprep.subr.mxu0 0.0
      %3136 = vmatpush1.msra.mxu0 0.0
      %3137 = vmatprep.subr.mxu0 0.0
      %3138 = vmatpush1.msra.mxu0 0.0
      %3139 = vmatprep.subr.mxu0 0.0
      %3140 = vmatpush1.msra.mxu0 0.0
      %3141 = vmatprep.subr.mxu0 0.0
      %3142 = vmatpush1.msra.mxu0 0.0
      %3143 = vmatprep.subr.mxu0 0.0
      %3144 = vmatpush1.msra.mxu0 0.0
      %3145 = vmatprep.subr.mxu0 0.0
      %3146 = vmatpush1.msra.mxu0 0.0
      %3147 = vmatprep.subr.mxu0 0.0
      %3148 = vmatpush1.msra.mxu0 0.0
      %3149 = vmatprep.subr.mxu0 0.0
      %3150 = vmatpush1.msra.mxu0 0.0
      %3151 = vmatprep.subr.mxu0 0.0
      %3152 = vmatpush1.msra.mxu0 0.0
      %3153 = vmatprep.subr.mxu0 0.0
      %3154 = vmatpush1.msra.mxu0 0.0
      %3155 = vmatprep.subr.mxu0 0.0
      %3156 = vmatpush1.msra.mxu0 0.0
      %3157 = vmatprep.subr.mxu0 0.0
      %3158 = vmatpush1.msra.mxu0 0.0
      %3159 = vmatprep.subr.mxu0 0.0
      %3160 = vmatpush1.msra.mxu0 0.0
      %3161 = vmatprep.subr.mxu0 0.0
      %3162 = vmatpush1.msra.mxu0 0.0
      %3163 = vmatprep.subr.mxu0 0.0
      %3164 = vmatpush1.msra.mxu0 0.0
      %3165 = vmatprep.mubr.f32.mxu0 0.0
      %3166 = vmatmul.mubr.f32.gmra.mrb[0].mxu0 %v2868
      %v3167 = vpop.f32.mrb[0].mxu0
      %v3168 = vadd.f32 0.0, %v3167
      %v3169 = vpop.f32.mrb[0].mxu0
      %3170 = vmatprep.mubr.f32.mxu0 0.0
      %3171 = vmatmul.mubr.f32.gmra.mrb[0].mxu0 %v2871
      %v3172 = vpop.f32.mrb[0].mxu0
      %v3173 = vadd.f32 0.0, %v3172
      %v3174 = vpop.f32.mrb[0].mxu0
      %3175 = vmatprep.mubr.f32.mxu0 0.0
      %3176 = vmatmul.mubr.f32.gmra.mrb[0].mxu0 %v2874
      %v3177 = vpop.f32.mrb[0].mxu0
      %v3178 = vadd.f32 0.0, %v3177
      %v3179 = vpop.f32.mrb[0].mxu0
      %3180 = vmatprep.mubr.f32.mxu0 0.0
      %3181 = vmatmul.mubr.f32.gmra.mrb[0].mxu0 %v2877
      %v3182 = vpop.f32.mrb[0].mxu0
      %v3183 = vadd.f32 0.0, %v3182
      %v3184 = vpop.f32.mrb[0].mxu0
      %3185 = vmatprep.mubr.f32.mxu0 0.0
      %3186 = vmatmul.mubr.f32.gmra.mrb[0].mxu0 %v2880
      %v3187 = vpop.f32.mrb[0].mxu0
      %v3188 = vadd.f32 0.0, %v3187
      %v3189 = vpop.f32.mrb[0].mxu0
      %3190 = vmatprep.mubr.f32.mxu0 0.0
      %3191 = vmatmul.mubr.f32.gmra.mrb[0].mxu0 %v2883
      %v3192 = vpop.f32.mrb[0].mxu0
      %v3193 = vadd.f32 0.0, %v3192
      %v3194 = vpop.f32.mrb[0].mxu0
      %3195 = vmatprep.mubr.f32.mxu0 0.0
      %3196 = vmatmul.mubr.f32.gmra.mrb[0].mxu0 %v2886
      %v3197 = vpop.f32.mrb[0].mxu0
      %v3198 = vadd.f32 0.0, %v3197
      %v3199 = vpop.f32.mrb[0].mxu0
      %3200 = vmatprep.mubr.f32.mxu0 0.0
      %3201 = vmatmul.mubr.f32.gmra.mrb[0].mxu0 %v2889
      %v3202 = vpop.f32.mrb[0].mxu0
      %v3203 = vadd.f32 0.0, %v3202
      %v3204 = vpop.f32.mrb[0].mxu0
      %3205 = vmatprep.mubr.f32.mxu0 0.0
      %3206 = vmatmul.mubr.f32.gmra.mrb[0].mxu0 %v2892
      %v3207 = vpop.f32.mrb[0].mxu0
      %v3208 = vadd.f32 0.0, %v3207
      %v3209 = vpop.f32.mrb[0].mxu0
      %3210 = vmatprep.mubr.f32.mxu0 0.0
      %3211 = vmatmul.mubr.f32.gmra.mrb[0].mxu0 %v2895
      %v3212 = vpop.f32.mrb[0].mxu0
      %v3213 = vadd.f32 0.0, %v3212
      %v3214 = vpop.f32.mrb[0].mxu0
      %3215 = vmatprep.mubr.f32.mxu0 0.0
      %3216 = vmatmul.mubr.f32.gmra.mrb[0].mxu0 %v2898
      %v3217 = vpop.f32.mrb[0].mxu0
      %v3218 = vadd.f32 0.0, %v3217
      %v3219 = vpop.f32.mrb[0].mxu0
      %3220 = vmatprep.mubr.f32.mxu0 0.0
      %3221 = vmatmul.mubr.f32.gmra.mrb[0].mxu0 %v2901
      %v3222 = vpop.f32.mrb[0].mxu0
      %v3223 = vadd.f32 0.0, %v3222
      %v3224 = vpop.f32.mrb[0].mxu0
      %3225 = vmatprep.mubr.f32.mxu0 0.0
      %3226 = vmatmul.mubr.f32.gmra.mrb[0].mxu0 %v2904
      %v3227 = vpop.f32.mrb[0].mxu0
      %v3228 = vadd.f32 0.0, %v3227
      %v3229 = vpop.f32.mrb[0].mxu0
      %3230 = vmatprep.mubr.f32.mxu0 0.0
      %3231 = vmatmul.mubr.f32.gmra.mrb[0].mxu0 %v2907
      %v3232 = vpop.f32.mrb[0].mxu0
      %v3233 = vadd.f32 0.0, %v3232
      %v3234 = vpop.f32.mrb[0].mxu0
      %3235 = vmatprep.mubr.f32.mxu0 0.0
      %3236 = vmatmul.mubr.f32.gmra.mrb[0].mxu0 %v2910
      %v3237 = vpop.f32.mrb[0].mxu0
      %v3238 = vadd.f32 0.0, %v3237
      %v3239 = vpop.f32.mrb[0].mxu0
      %3240 = vmatprep.mubr.f32.mxu0 0.0
      %3241 = vmatmul.mubr.f32.gmra.mrb[0].mxu0 %v2913
      %v3242 = vpop.f32.mrb[0].mxu0
      %v3243 = vadd.f32 0.0, %v3242
      %v3244 = vpop.f32.mrb[0].mxu0
      %3245 = vmatprep.mubr.f32.mxu0 0.0
      %3246 = vmatmul.mubr.f32.gmra.mrb[0].mxu0 %v2916
      %v3247 = vpop.f32.mrb[0].mxu0
      %v3248 = vadd.f32 0.0, %v3247
      %v3249 = vpop.f32.mrb[0].mxu0
      %3250 = vmatprep.mubr.f32.mxu0 0.0
      %3251 = vmatmul.mubr.f32.gmra.mrb[0].mxu0 %v2919
      %v3252 = vpop.f32.mrb[0].mxu0
      %v3253 = vadd.f32 0.0, %v3252
      %v3254 = vpop.f32.mrb[0].mxu0
      %3255 = vmatprep.mubr.f32.mxu0 0.0
      %3256 = vmatmul.mubr.f32.gmra.mrb[0].mxu0 %v2922
      %v3257 = vpop.f32.mrb[0].mxu0
      %v3258 = vadd.f32 0.0, %v3257
      %v3259 = vpop.f32.mrb[0].mxu0
      %3260 = vmatprep.mubr.f32.mxu0 0.0
      %3261 = vmatmul.mubr.f32.gmra.mrb[0].mxu0 %v2925
      %v3262 = vpop.f32.mrb[0].mxu0
      %v3263 = vadd.f32 0.0, %v3262
      %v3264 = vpop.f32.mrb[0].mxu0
      %3265 = vmatprep.mubr.f32.mxu0 0.0
      %3266 = vmatmul.mubr.f32.gmra.mrb[0].mxu0 %v2928
      %v3267 = vpop.f32.mrb[0].mxu0
      %v3268 = vadd.f32 0.0, %v3267
      %v3269 = vpop.f32.mrb[0].mxu0
      %3270 = vmatprep.mubr.f32.mxu0 0.0
      %3271 = vmatmul.mubr.f32.gmra.mrb[0].mxu0 %v2931
      %v3272 = vpop.f32.mrb[0].mxu0
      %v3273 = vadd.f32 0.0, %v3272
      %v3274 = vpop.f32.mrb[0].mxu0
      %3275 = vmatprep.mubr.f32.mxu0 0.0
      %3276 = vmatmul.mubr.f32.gmra.mrb[0].mxu0 %v2934
      %v3277 = vpop.f32.mrb[0].mxu0
      %v3278 = vadd.f32 0.0, %v3277
      %v3279 = vpop.f32.mrb[0].mxu0
      %3280 = vmatprep.mubr.f32.mxu0 0.0
      %3281 = vmatmul.mubr.f32.gmra.mrb[0].mxu0 %v2937
      %v3282 = vpop.f32.mrb[0].mxu0
      %v3283 = vadd.f32 0.0, %v3282
      %v3284 = vpop.f32.mrb[0].mxu0
      %3285 = vmatprep.mubr.f32.mxu0 0.0
      %3286 = vmatmul.mubr.f32.gmra.mrb[0].mxu0 %v2940
      %v3287 = vpop.f32.mrb[0].mxu0
      %v3288 = vadd.f32 0.0, %v3287
      %v3289 = vpop.f32.mrb[0].mxu0
      %3290 = vmatprep.mubr.f32.mxu0 0.0
      %3291 = vmatmul.mubr.f32.gmra.mrb[0].mxu0 %v2943
      %v3292 = vpop.f32.mrb[0].mxu0
      %v3293 = vadd.f32 0.0, %v3292
      %v3294 = vpop.f32.mrb[0].mxu0
      %3295 = vmatprep.mubr.f32.mxu0 0.0
      %3296 = vmatmul.mubr.f32.gmra.mrb[0].mxu0 %v2946
      %v3297 = vpop.f32.mrb[0].mxu0
      %v3298 = vadd.f32 0.0, %v3297
      %v3299 = vpop.f32.mrb[0].mxu0
      %3300 = vmatprep.mubr.f32.mxu0 0.0
      %3301 = vmatmul.mubr.f32.gmra.mrb[0].mxu0 %v2949
      %v3302 = vpop.f32.mrb[0].mxu0
      %v3303 = vadd.f32 0.0, %v3302
      %v3304 = vpop.f32.mrb[0].mxu0
      %3305 = vmatprep.mubr.f32.mxu0 0.0
      %3306 = vmatmul.mubr.f32.gmra.mrb[0].mxu0 %v2952
      %v3307 = vpop.f32.mrb[0].mxu0
      %v3308 = vadd.f32 0.0, %v3307
      %v3309 = vpop.f32.mrb[0].mxu0
      %3310 = vmatprep.mubr.f32.mxu0 0.0
      %3311 = vmatmul.mubr.f32.gmra.mrb[0].mxu0 %v2955
      %v3312 = vpop.f32.mrb[0].mxu0
      %v3313 = vadd.f32 0.0, %v3312
      %v3314 = vpop.f32.mrb[0].mxu0
      %3315 = vmatprep.mubr.f32.mxu0 0.0
      %3316 = vmatmul.mubr.f32.gmra.mrb[0].mxu0 %v2958
      %v3317 = vpop.f32.mrb[0].mxu0
      %v3318 = vadd.f32 0.0, %v3317
      %v3319 = vpop.f32.mrb[0].mxu0
      %3320 = vmatprep.mubr.f32.mxu0 0.0
      %3321 = vmatmul.mubr.f32.gmra.mrb[0].mxu0 %v2961
      %v3322 = vpop.f32.mrb[0].mxu0
      %v3323 = vadd.f32 0.0, %v3322
      %v3324 = vpop.f32.mrb[0].mxu0
      %3325 = vmatprep.mubr.f32.mxu0 0.0
      %3326 = vmatmul.mubr.f32.gmra.mrb[0].mxu0 %v2964
      %v3327 = vpop.f32.mrb[0].mxu0
      %v3328 = vadd.f32 0.0, %v3327
      %v3329 = vpop.f32.mrb[0].mxu0
      %3330 = vmatprep.mubr.f32.mxu0 0.0
      %3331 = vmatmul.mubr.f32.gmra.mrb[0].mxu0 %v2967
      %v3332 = vpop.f32.mrb[0].mxu0
      %v3333 = vadd.f32 0.0, %v3332
      %v3334 = vpop.f32.mrb[0].mxu0
      %3335 = vmatprep.mubr.f32.mxu0 0.0
      %3336 = vmatmul.mubr.f32.gmra.mrb[0].mxu0 %v2970
      %v3337 = vpop.f32.mrb[0].mxu0
      %v3338 = vadd.f32 0.0, %v3337
      %v3339 = vpop.f32.mrb[0].mxu0
      %3340 = vmatprep.mubr.f32.mxu0 0.0
      %3341 = vmatmul.mubr.f32.gmra.mrb[0].mxu0 %v2973
      %v3342 = vpop.f32.mrb[0].mxu0
      %v3343 = vadd.f32 0.0, %v3342
      %v3344 = vpop.f32.mrb[0].mxu0
      %3345 = vmatprep.mubr.f32.mxu0 0.0
      %3346 = vmatmul.mubr.f32.gmra.mrb[0].mxu0 %v2976
      %v3347 = vpop.f32.mrb[0].mxu0
      %v3348 = vadd.f32 0.0, %v3347
      %v3349 = vpop.f32.mrb[0].mxu0
      %3350 = vmatprep.mubr.f32.mxu0 0.0
      %3351 = vmatmul.mubr.f32.gmra.mrb[0].mxu0 %v2979
      %v3352 = vpop.f32.mrb[0].mxu0
      %v3353 = vadd.f32 0.0, %v3352
      %v3354 = vpop.f32.mrb[0].mxu0
      %3355 = vmatprep.mubr.f32.mxu0 0.0
      %3356 = vmatmul.mubr.f32.gmra.mrb[0].mxu0 %v2982
      %v3357 = vpop.f32.mrb[0].mxu0
      %v3358 = vadd.f32 0.0, %v3357
      %v3359 = vpop.f32.mrb[0].mxu0
      %3360 = vmatprep.mubr.f32.mxu0 0.0
      %3361 = vmatmul.mubr.f32.gmra.mrb[0].mxu0 %v2985
      %v3362 = vpop.f32.mrb[0].mxu0
      %v3363 = vadd.f32 0.0, %v3362
      %v3364 = vpop.f32.mrb[0].mxu0
      %3365 = vmatprep.mubr.f32.mxu0 0.0
      %3366 = vmatmul.mubr.f32.gmra.mrb[0].mxu0 %v2988
      %v3367 = vpop.f32.mrb[0].mxu0
      %v3368 = vadd.f32 0.0, %v3367
      %v3369 = vpop.f32.mrb[0].mxu0
      %3370 = vmatprep.mubr.f32.mxu0 0.0
      %3371 = vmatmul.mubr.f32.gmra.mrb[0].mxu0 %v2991
      %v3372 = vpop.f32.mrb[0].mxu0
      %v3373 = vadd.f32 0.0, %v3372
      %v3374 = vpop.f32.mrb[0].mxu0
      %3375 = vmatprep.mubr.f32.mxu0 0.0
      %3376 = vmatmul.mubr.f32.gmra.mrb[0].mxu0 %v2994
      %v3377 = vpop.f32.mrb[0].mxu0
      %v3378 = vadd.f32 0.0, %v3377
      %v3379 = vpop.f32.mrb[0].mxu0
      %3380 = vmatprep.mubr.f32.mxu0 0.0
      %3381 = vmatmul.mubr.f32.gmra.mrb[0].mxu0 %v2997
      %v3382 = vpop.f32.mrb[0].mxu0
      %v3383 = vadd.f32 0.0, %v3382
      %v3384 = vpop.f32.mrb[0].mxu0
      %3385 = vmatprep.mubr.f32.mxu0 0.0
      %3386 = vmatmul.mubr.f32.gmra.mrb[0].mxu0 %v3000
      %v3387 = vpop.f32.mrb[0].mxu0
      %v3388 = vadd.f32 0.0, %v3387
      %v3389 = vpop.f32.mrb[0].mxu0
      %3390 = vmatprep.mubr.f32.mxu0 0.0
      %3391 = vmatmul.mubr.f32.gmra.mrb[0].mxu0 %v3003
      %v3392 = vpop.f32.mrb[0].mxu0
      %v3393 = vadd.f32 0.0, %v3392
      %v3394 = vpop.f32.mrb[0].mxu0
      %3395 = vmatprep.mubr.f32.mxu0 0.0
      %3396 = vmatmul.mubr.f32.gmra.mrb[0].mxu0 %v3006
      %v3397 = vpop.f32.mrb[0].mxu0
      %v3398 = vadd.f32 0.0, %v3397
      %v3399 = vpop.f32.mrb[0].mxu0
      %3400 = vmatprep.mubr.f32.mxu0 0.0
      %3401 = vmatmul.mubr.f32.gmra.mrb[0].mxu0 %v3009
      %v3402 = vpop.f32.mrb[0].mxu0
      %v3403 = vadd.f32 0.0, %v3402
      %v3404 = vpop.f32.mrb[0].mxu0
      %3405 = vmatprep.mubr.f32.mxu0 0.0
      %3406 = vmatmul.mubr.f32.gmra.mrb[0].mxu0 %v3012
      %v3407 = vpop.f32.mrb[0].mxu0
      %v3408 = vadd.f32 0.0, %v3407
      %v3409 = vpop.f32.mrb[0].mxu0
      %3410 = vmatprep.mubr.f32.mxu0 0.0
      %3411 = vmatmul.mubr.f32.gmra.mrb[0].mxu0 %v3015
      %v3412 = vpop.f32.mrb[0].mxu0
      %v3413 = vadd.f32 0.0, %v3412
      %v3414 = vpop.f32.mrb[0].mxu0
      %3415 = vmatprep.mubr.f32.mxu0 0.0
      %3416 = vmatmul.mubr.f32.gmra.mrb[0].mxu0 %v3018
      %v3417 = vpop.f32.mrb[0].mxu0
      %v3418 = vadd.f32 0.0, %v3417
      %v3419 = vpop.f32.mrb[0].mxu0
      %3420 = vmatprep.mubr.f32.mxu0 0.0
      %3421 = vmatmul.mubr.f32.gmra.mrb[0].mxu0 %v3021
      %v3422 = vpop.f32.mrb[0].mxu0
      %v3423 = vadd.f32 0.0, %v3422
      %v3424 = vpop.f32.mrb[0].mxu0
      %3425 = vmatprep.mubr.f32.mxu0 0.0
      %3426 = vmatmul.mubr.f32.gmra.mrb[0].mxu0 %v3024
      %v3427 = vpop.f32.mrb[0].mxu0
      %v3428 = vadd.f32 0.0, %v3427
      %v3429 = vpop.f32.mrb[0].mxu0
      %3430 = vmatprep.mubr.f32.mxu0 0.0
      %3431 = vmatmul.mubr.f32.gmra.mrb[0].mxu0 %v3027
      %v3432 = vpop.f32.mrb[0].mxu0
      %v3433 = vadd.f32 0.0, %v3432
      %v3434 = vpop.f32.mrb[0].mxu0
      %3435 = vmatprep.mubr.f32.mxu0 0.0
      %3436 = vmatmul.mubr.f32.gmra.mrb[0].mxu0 %v3030
      %v3437 = vpop.f32.mrb[0].mxu0
      %v3438 = vadd.f32 0.0, %v3437
      %v3439 = vpop.f32.mrb[0].mxu0
      %3440 = vmatprep.mubr.f32.mxu0 0.0
      %3441 = vmatmul.mubr.f32.gmra.mrb[0].mxu0 %v3033
      %v3442 = vpop.f32.mrb[0].mxu0
      %v3443 = vadd.f32 0.0, %v3442
      %v3444 = vpop.f32.mrb[0].mxu0
      %3445 = vmatprep.mubr.f32.mxu0 0.0
      %3446 = vmatmul.mubr.f32.gmra.mrb[0].mxu0 %v3036
      %v3447 = vpop.f32.mrb[0].mxu0
      %v3448 = vadd.f32 0.0, %v3447
      %v3449 = vpop.f32.mrb[0].mxu0
      %3450 = vmatprep.mubr.f32.mxu0 0.0
      %3451 = vmatmul.mubr.f32.gmra.mrb[0].mxu0 %v3039
      %v3452 = vpop.f32.mrb[0].mxu0
      %v3453 = vadd.f32 0.0, %v3452
      %v3454 = vpop.f32.mrb[0].mxu0
      %3455 = vmatprep.mubr.f32.mxu0 0.0
      %3456 = vmatmul.mubr.f32.gmra.mrb[0].mxu0 %v3042
      %v3457 = vpop.f32.mrb[0].mxu0
      %v3458 = vadd.f32 0.0, %v3457
      %v3459 = vpop.f32.mrb[0].mxu0
      %3460 = vmatprep.mubr.f32.mxu0 0.0
      %3461 = vmatmul.mubr.f32.gmra.mrb[0].mxu0 %v3045
      %v3462 = vpop.f32.mrb[0].mxu0
      %v3463 = vadd.f32 0.0, %v3462
      %v3464 = vpop.f32.mrb[0].mxu0
      %3465 = vmatprep.mubr.f32.mxu0 0.0
      %3466 = vmatmul.mubr.f32.gmra.mrb[0].mxu0 %v3048
      %v3467 = vpop.f32.mrb[0].mxu0
      %v3468 = vadd.f32 0.0, %v3467
      %v3469 = vpop.f32.mrb[0].mxu0
      %3470 = vmatprep.mubr.f32.mxu0 0.0
      %3471 = vmatmul.mubr.f32.gmra.mrb[0].mxu0 %v3051
      %v3472 = vpop.f32.mrb[0].mxu0
      %v3473 = vadd.f32 0.0, %v3472
      %v3474 = vpop.f32.mrb[0].mxu0
      %3475 = vmatprep.mubr.f32.mxu0 0.0
      %3476 = vmatmul.mubr.f32.gmra.mrb[0].mxu0 %v3054
      %v3477 = vpop.f32.mrb[0].mxu0
      %v3478 = vadd.f32 0.0, %v3477
      %v3479 = vpop.f32.mrb[0].mxu0
      %3480 = vmatprep.mubr.f32.mxu0 0.0
      %3481 = vmatmul.mubr.f32.gmra.mrb[0].mxu0 %v3057
      %v3482 = vpop.f32.mrb[0].mxu0
      %v3483 = vadd.f32 0.0, %v3482
      %v3484 = vpop.f32.mrb[0].mxu0
      %3485 = vmatprep.mubr.f32.mxu0 0.0
      %3486 = vmatmul.mubr.f32.gmra.mrb[0].mxu0 %v3060
      %v3487 = vpop.f32.mrb[0].mxu0
      %v3488 = vadd.f32 0.0, %v3487
      %v3489 = vpop.f32.mrb[0].mxu0
      %3490 = vmatprep.mubr.f32.mxu0 0.0
      %3491 = vmatmul.mubr.f32.gmra.mrb[0].mxu0 %v3063
      %v3492 = vpop.f32.mrb[0].mxu0
      %v3493 = vadd.f32 0.0, %v3492
      %v3494 = vpop.f32.mrb[0].mxu0
      %3495 = vmatprep.mubr.f32.mxu0 0.0
      %3496 = vmatmul.mubr.f32.gmra.mrb[0].mxu0 %v3066
      %v3497 = vpop.f32.mrb[0].mxu0
      %v3498 = vadd.f32 0.0, %v3497
      %v3499 = vpop.f32.mrb[0].mxu0
      %3500 = vmatprep.mubr.f32.mxu0 0.0
      %3501 = vmatmul.mubr.f32.gmra.mrb[0].mxu0 %v3069
      %v3502 = vpop.f32.mrb[0].mxu0
      %v3503 = vadd.f32 0.0, %v3502
      %v3504 = vpop.f32.mrb[0].mxu0
      %3505 = vmatprep.mubr.f32.mxu0 0.0
      %3506 = vmatmul.mubr.f32.gmra.mrb[0].mxu0 %v3072
      %v3507 = vpop.f32.mrb[0].mxu0
      %v3508 = vadd.f32 0.0, %v3507
      %v3509 = vpop.f32.mrb[0].mxu0
      %3510 = vmatprep.mubr.f32.mxu0 0.0
      %3511 = vmatmul.mubr.f32.gmra.mrb[0].mxu0 %v3075
      %v3512 = vpop.f32.mrb[0].mxu0
      %v3513 = vadd.f32 0.0, %v3512
      %v3514 = vpop.f32.mrb[0].mxu0
      %3515 = vmatprep.mubr.f32.mxu0 0.0
      %3516 = vmatmul.mubr.f32.gmra.mrb[0].mxu0 %v3078
      %v3517 = vpop.f32.mrb[0].mxu0
      %v3518 = vadd.f32 0.0, %v3517
      %v3519 = vpop.f32.mrb[0].mxu0
      %3520 = vmatprep.mubr.f32.mxu0 0.0
      %3521 = vmatmul.mubr.f32.gmra.mrb[0].mxu0 %v3081
      %v3522 = vpop.f32.mrb[0].mxu0
      %v3523 = vadd.f32 0.0, %v3522
      %v3524 = vpop.f32.mrb[0].mxu0
      %3525 = vmatprep.mubr.f32.mxu0 0.0
      %3526 = vmatmul.mubr.f32.gmra.mrb[0].mxu0 %v3084
      %v3527 = vpop.f32.mrb[0].mxu0
      %v3528 = vadd.f32 0.0, %v3527
      %v3529 = vpop.f32.mrb[0].mxu0
      %3530 = vmatprep.mubr.f32.mxu0 0.0
      %3531 = vmatmul.mubr.f32.gmra.mrb[0].mxu0 %v3087
      %v3532 = vpop.f32.mrb[0].mxu0
      %v3533 = vadd.f32 0.0, %v3532
      %v3534 = vpop.f32.mrb[0].mxu0
      %3535 = vmatprep.mubr.f32.mxu0 0.0
      %3536 = vmatmul.mubr.f32.gmra.mrb[0].mxu0 %v3090
      %v3537 = vpop.f32.mrb[0].mxu0
      %v3538 = vadd.f32 0.0, %v3537
      %v3539 = vpop.f32.mrb[0].mxu0
      %3540 = vmatprep.mubr.f32.mxu0 0.0
      %3541 = vmatmul.mubr.f32.gmra.mrb[0].mxu0 %v3093
      %v3542 = vpop.f32.mrb[0].mxu0
      %v3543 = vadd.f32 0.0, %v3542
      %v3544 = vpop.f32.mrb[0].mxu0
      %3545 = vmatprep.mubr.f32.mxu0 0.0
      %3546 = vmatmul.mubr.f32.gmra.mrb[0].mxu0 %v3096
      %v3547 = vpop.f32.mrb[0].mxu0
      %v3548 = vadd.f32 0.0, %v3547
      %v3549 = vpop.f32.mrb[0].mxu0
      %3550 = vmatprep.mubr.f32.mxu0 0.0
      %3551 = vmatmul.mubr.f32.gmra.mrb[0].mxu0 %v3099
      %v3552 = vpop.f32.mrb[0].mxu0
      %v3553 = vadd.f32 0.0, %v3552
      %v3554 = vpop.f32.mrb[0].mxu0
      %3555 = vdwg.mxu0
      %v3556 = vadd.f32 %v2396, %v3168
      %v3557 = vadd.f32 %v2401, %v3173
      %v3558 = vadd.f32 %v2406, %v3178
      %v3559 = vadd.f32 %v2411, %v3183
      %v3560 = vadd.f32 %v2416, %v3188
      %v3561 = vadd.f32 %v2421, %v3193
      %v3562 = vadd.f32 %v2426, %v3198
      %v3563 = vadd.f32 %v2431, %v3203
      %v3564 = vadd.f32 %v2436, %v3208
      %v3565 = vadd.f32 %v2441, %v3213
      %v3566 = vadd.f32 %v2446, %v3218
      %v3567 = vadd.f32 %v2451, %v3223
      %v3568 = vadd.f32 %v2456, %v3228
      %v3569 = vadd.f32 %v2461, %v3233
      %v3570 = vadd.f32 %v2466, %v3238
      %v3571 = vadd.f32 %v2471, %v3243
      %v3572 = vadd.f32 %v2476, %v3248
      %v3573 = vadd.f32 %v2481, %v3253
      %v3574 = vadd.f32 %v2486, %v3258
      %v3575 = vadd.f32 %v2491, %v3263
      %v3576 = vadd.f32 %v2496, %v3268
      %v3577 = vadd.f32 %v2501, %v3273
      %v3578 = vadd.f32 %v2506, %v3278
      %v3579 = vadd.f32 %v2511, %v3283
      %v3580 = vadd.f32 %v2516, %v3288
      %v3581 = vadd.f32 %v2521, %v3293
      %v3582 = vadd.f32 %v2526, %v3298
      %v3583 = vadd.f32 %v2531, %v3303
      %v3584 = vadd.f32 %v2536, %v3308
      %v3585 = vadd.f32 %v2541, %v3313
      %v3586 = vadd.f32 %v2546, %v3318
      %v3587 = vadd.f32 %v2551, %v3323
      %v3588 = vadd.f32 %v2556, %v3328
      %v3589 = vadd.f32 %v2561, %v3333
      %v3590 = vadd.f32 %v2566, %v3338
      %v3591 = vadd.f32 %v2571, %v3343
      %v3592 = vadd.f32 %v2576, %v3348
      %v3593 = vadd.f32 %v2581, %v3353
      %v3594 = vadd.f32 %v2586, %v3358
      %v3595 = vadd.f32 %v2591, %v3363
      %v3596 = vadd.f32 %v2596, %v3368
      %v3597 = vadd.f32 %v2601, %v3373
      %v3598 = vadd.f32 %v2606, %v3378
      %v3599 = vadd.f32 %v2611, %v3383
      %v3600 = vadd.f32 %v2616, %v3388
      %v3601 = vadd.f32 %v2621, %v3393
      %v3602 = vadd.f32 %v2626, %v3398
      %v3603 = vadd.f32 %v2631, %v3403
      %v3604 = vadd.f32 %v2636, %v3408
      %v3605 = vadd.f32 %v2641, %v3413
      %v3606 = vadd.f32 %v2646, %v3418
      %v3607 = vadd.f32 %v2651, %v3423
      %v3608 = vadd.f32 %v2656, %v3428
      %v3609 = vadd.f32 %v2661, %v3433
      %v3610 = vadd.f32 %v2666, %v3438
      %v3611 = vadd.f32 %v2671, %v3443
      %v3612 = vadd.f32 %v2676, %v3448
      %v3613 = vadd.f32 %v2681, %v3453
      %v3614 = vadd.f32 %v2686, %v3458
      %v3615 = vadd.f32 %v2691, %v3463
      %v3616 = vadd.f32 %v2696, %v3468
      %v3617 = vadd.f32 %v2701, %v3473
      %v3618 = vadd.f32 %v2706, %v3478
      %v3619 = vadd.f32 %v2711, %v3483
      %v3620 = vadd.f32 %v2716, %v3488
      %v3621 = vadd.f32 %v2721, %v3493
      %v3622 = vadd.f32 %v2726, %v3498
      %v3623 = vadd.f32 %v2731, %v3503
      %v3624 = vadd.f32 %v2736, %v3508
      %v3625 = vadd.f32 %v2741, %v3513
      %v3626 = vadd.f32 %v2746, %v3518
      %v3627 = vadd.f32 %v2751, %v3523
      %v3628 = vadd.f32 %v2756, %v3528
      %v3629 = vadd.f32 %v2761, %v3533
      %v3630 = vadd.f32 %v2766, %v3538
      %v3631 = vadd.f32 %v2771, %v3543
      %v3632 = vadd.f32 %v2776, %v3548
      %v3633 = vadd.f32 %v2781, %v3553
      %v3634 = vld [vmem:[#allocation2 + $0x1a] sm:$0xff]
      %v3635 = vld [vmem:[#allocation2 + $0x22] sm:$0xff]
      %v3636 = vld [vmem:[#allocation2 + $0x2a] sm:$0xff]
      %v3637 = vld [vmem:[#allocation2 + $0x32] sm:$0xff]
      %v3638 = vld [vmem:[#allocation2 + $0x3a] sm:$0xff]
      %v3639 = vld [vmem:[#allocation2 + $0x42] sm:$0xff]
      %v3640 = vld [vmem:[#allocation2 + $0x4a] sm:$0xff]
      %v3641 = vld [vmem:[#allocation2 + $0x52] sm:$0xff]
      %v3642 = vld [vmem:[#allocation2 + $0x5a] sm:$0xff]
      %v3643 = vld [vmem:[#allocation2 + $0x62] sm:$0xff]
      %v3644 = vld [vmem:[#allocation2 + $0x6a] sm:$0xff]
      %v3645 = vld [vmem:[#allocation2 + $0x72] sm:$0xff]
      %v3646 = vld [vmem:[#allocation2 + $0x7a] sm:$0xff]
      %v3647 = vld [vmem:[#allocation2 + $0x82] sm:$0xff]
      %v3648 = vld [vmem:[#allocation2 + $0x8a] sm:$0xff]
      %v3649 = vld [vmem:[#allocation2 + $0x92] sm:$0xff]
      %v3650 = vld [vmem:[#allocation2 + $0x9a] sm:$0xff]
      %v3651 = vld [vmem:[#allocation2 + $0xa2] sm:$0xff]
      %v3652 = vld [vmem:[#allocation2 + $0xaa] sm:$0xff]
      %v3653 = vld [vmem:[#allocation2 + $0xb2] sm:$0xff]
      %v3654 = vld [vmem:[#allocation2 + $0xba] sm:$0xff]
      %v3655 = vld [vmem:[#allocation2 + $0xc2] sm:$0xff]
      %v3656 = vld [vmem:[#allocation2 + $0xca] sm:$0xff]
      %v3657 = vld [vmem:[#allocation2 + $0xd2] sm:$0xff]
      %v3658 = vld [vmem:[#allocation2 + $0xda] sm:$0xff]
      %v3659 = vld [vmem:[#allocation2 + $0xe2] sm:$0xff]
      %v3660 = vld [vmem:[#allocation2 + $0xea] sm:$0xff]
      %v3661 = vld [vmem:[#allocation2 + $0xf2] sm:$0xff]
      %v3662 = vld [vmem:[#allocation2 + $0xfa] sm:$0xff]
      %v3663 = vld [vmem:[#allocation2 + $0x102] sm:$0xff]
      %v3664 = vld [vmem:[#allocation2 + $0x10a] sm:$0xff]
      %v3665 = vld [vmem:[#allocation2 + $0x112] sm:$0xff]
      %v3666 = vld [vmem:[#allocation2 + $0x11a] sm:$0xff]
      %v3667 = vld [vmem:[#allocation2 + $0x122] sm:$0xff]
      %v3668 = vld [vmem:[#allocation2 + $0x12a] sm:$0xff]
      %v3669 = vld [vmem:[#allocation2 + $0x132] sm:$0xff]
      %v3670 = vld [vmem:[#allocation2 + $0x13a] sm:$0xff]
      %v3671 = vld [vmem:[#allocation2 + $0x142] sm:$0xff]
      %v3672 = vld [vmem:[#allocation2 + $0x14a] sm:$0xff]
      %v3673 = vld [vmem:[#allocation2 + $0x152] sm:$0xff]
      %v3674 = vld [vmem:[#allocation2 + $0x15a] sm:$0xff]
      %v3675 = vld [vmem:[#allocation2 + $0x162] sm:$0xff]
      %v3676 = vld [vmem:[#allocation2 + $0x16a] sm:$0xff]
      %v3677 = vld [vmem:[#allocation2 + $0x172] sm:$0xff]
      %v3678 = vld [vmem:[#allocation2 + $0x17a] sm:$0xff]
      %v3679 = vld [vmem:[#allocation2 + $0x182] sm:$0xff]
      %v3680 = vld [vmem:[#allocation2 + $0x18a] sm:$0xff]
      %v3681 = vld [vmem:[#allocation2 + $0x192] sm:$0xff]
      %v3682 = vld [vmem:[#allocation2 + $0x19a] sm:$0xff]
      %v3683 = vld [vmem:[#allocation2 + $0x1a2] sm:$0xff]
      %v3684 = vld [vmem:[#allocation2 + $0x1aa] sm:$0xff]
      %v3685 = vld [vmem:[#allocation2 + $0x1b2] sm:$0xff]
      %v3686 = vld [vmem:[#allocation2 + $0x1ba] sm:$0xff]
      %v3687 = vld [vmem:[#allocation2 + $0x1c2] sm:$0xff]
      %v3688 = vld [vmem:[#allocation2 + $0x1ca] sm:$0xff]
      %v3689 = vld [vmem:[#allocation2 + $0x1d2] sm:$0xff]
      %v3690 = vld [vmem:[#allocation2 + $0x1da] sm:$0xff]
      %v3691 = vld [vmem:[#allocation2 + $0x1e2] sm:$0xff]
      %v3692 = vld [vmem:[#allocation2 + $0x1ea] sm:$0xff]
      %v3693 = vld [vmem:[#allocation2 + $0x1f2] sm:$0xff]
      %v3694 = vld [vmem:[#allocation2 + $0x1fa] sm:$0xff]
      %v3695 = vld [vmem:[#allocation2 + $0x202] sm:$0xff]
      %v3696 = vld [vmem:[#allocation2 + $0x20a] sm:$0xff]
      %v3697 = vld [vmem:[#allocation2 + $0x212] sm:$0xff]
      %v3698 = vld [vmem:[#allocation2 + $0x21a] sm:$0xff]
      %v3699 = vld [vmem:[#allocation2 + $0x222] sm:$0xff]
      %v3700 = vld [vmem:[#allocation2 + $0x22a] sm:$0xff]
      %v3701 = vld [vmem:[#allocation2 + $0x232] sm:$0xff]
      %v3702 = vld [vmem:[#allocation2 + $0x23a] sm:$0xff]
      %v3703 = vld [vmem:[#allocation2 + $0x242] sm:$0xff]
      %v3704 = vld [vmem:[#allocation2 + $0x24a] sm:$0xff]
      %v3705 = vld [vmem:[#allocation2 + $0x252] sm:$0xff]
      %v3706 = vld [vmem:[#allocation2 + $0x25a] sm:$0xff]
      %v3707 = vld [vmem:[#allocation2 + $0x262] sm:$0xff]
      %v3708 = vld [vmem:[#allocation2 + $0x26a] sm:$0xff]
      %v3709 = vld [vmem:[#allocation2 + $0x272] sm:$0xff]
      %v3710 = vld [vmem:[#allocation2 + $0x27a] sm:$0xff]
      %v3711 = vld [vmem:[#allocation2 + $0x282] sm:$0x3f]
      %s3712 = scalar_lea.vmem %s3, 96
      %v3713 = vld [vmem:[%s3712] sm:$0xff]
      %v3714 = vld [vmem:[%s3712 + $0x8] sm:$0xff]
      %v3715 = vld [vmem:[%s3712 + $0x10] sm:$0xff]
      %v3716 = vld [vmem:[%s3712 + $0x18] sm:$0xff]
      %v3718 = vsel %vm1154, %v3634, 0
      %v3721 = vsel %vm1154, %v3635, 0
      %v3724 = vsel %vm1154, %v3636, 0
      %v3727 = vsel %vm1154, %v3637, 0
      %v3730 = vsel %vm1154, %v3638, 0
      %v3733 = vsel %vm1154, %v3639, 0
      %v3736 = vsel %vm1154, %v3640, 0
      %v3739 = vsel %vm1154, %v3641, 0
      %v3742 = vsel %vm1154, %v3642, 0
      %v3745 = vsel %vm1154, %v3643, 0
      %v3748 = vsel %vm1154, %v3644, 0
      %v3751 = vsel %vm1154, %v3645, 0
      %v3754 = vsel %vm1154, %v3646, 0
      %v3757 = vsel %vm1154, %v3647, 0
      %v3760 = vsel %vm1154, %v3648, 0
      %v3763 = vsel %vm1154, %v3649, 0
      %v3766 = vsel %vm1154, %v3650, 0
      %v3769 = vsel %vm1154, %v3651, 0
      %v3772 = vsel %vm1154, %v3652, 0
      %v3775 = vsel %vm1154, %v3653, 0
      %v3778 = vsel %vm1154, %v3654, 0
      %v3781 = vsel %vm1154, %v3655, 0
      %v3784 = vsel %vm1154, %v3656, 0
      %v3787 = vsel %vm1154, %v3657, 0
      %v3790 = vsel %vm1154, %v3658, 0
      %v3793 = vsel %vm1154, %v3659, 0
      %v3796 = vsel %vm1154, %v3660, 0
      %v3799 = vsel %vm1154, %v3661, 0
      %v3802 = vsel %vm1154, %v3662, 0
      %v3805 = vsel %vm1154, %v3663, 0
      %v3808 = vsel %vm1154, %v3664, 0
      %v3811 = vsel %vm1154, %v3665, 0
      %v3814 = vsel %vm1154, %v3666, 0
      %v3817 = vsel %vm1154, %v3667, 0
      %v3820 = vsel %vm1154, %v3668, 0
      %v3823 = vsel %vm1154, %v3669, 0
      %v3826 = vsel %vm1154, %v3670, 0
      %v3829 = vsel %vm1154, %v3671, 0
      %v3832 = vsel %vm1154, %v3672, 0
      %v3835 = vsel %vm1154, %v3673, 0
      %v3838 = vsel %vm1154, %v3674, 0
      %v3841 = vsel %vm1154, %v3675, 0
      %v3844 = vsel %vm1154, %v3676, 0
      %v3847 = vsel %vm1154, %v3677, 0
      %v3850 = vsel %vm1154, %v3678, 0
      %v3853 = vsel %vm1154, %v3679, 0
      %v3856 = vsel %vm1154, %v3680, 0
      %v3859 = vsel %vm1154, %v3681, 0
      %v3862 = vsel %vm1154, %v3682, 0
      %v3865 = vsel %vm1154, %v3683, 0
      %v3868 = vsel %vm1154, %v3684, 0
      %v3871 = vsel %vm1154, %v3685, 0
      %v3874 = vsel %vm1154, %v3686, 0
      %v3877 = vsel %vm1154, %v3687, 0
      %v3880 = vsel %vm1154, %v3688, 0
      %v3883 = vsel %vm1154, %v3689, 0
      %v3886 = vsel %vm1154, %v3690, 0
      %v3889 = vsel %vm1154, %v3691, 0
      %v3892 = vsel %vm1154, %v3692, 0
      %v3895 = vsel %vm1154, %v3693, 0
      %v3898 = vsel %vm1154, %v3694, 0
      %v3901 = vsel %vm1154, %v3695, 0
      %v3904 = vsel %vm1154, %v3696, 0
      %v3907 = vsel %vm1154, %v3697, 0
      %v3910 = vsel %vm1154, %v3698, 0
      %v3913 = vsel %vm1154, %v3699, 0
      %v3916 = vsel %vm1154, %v3700, 0
      %v3919 = vsel %vm1154, %v3701, 0
      %v3922 = vsel %vm1154, %v3702, 0
      %v3925 = vsel %vm1154, %v3703, 0
      %v3928 = vsel %vm1154, %v3704, 0
      %v3931 = vsel %vm1154, %v3705, 0
      %v3934 = vsel %vm1154, %v3706, 0
      %v3937 = vsel %vm1154, %v3707, 0
      %v3940 = vsel %vm1154, %v3708, 0
      %v3943 = vsel %vm1154, %v3709, 0
      %v3946 = vsel %vm1154, %v3710, 0
      %v3949 = vsel %vm1154, %v3711, 0
      %3951 = vmatprep.subr.mxu0 0.0
      %3952 = vmatpush1.msra.mxu0 %v3713
      %3953 = vmatprep.subr.mxu0 0.0
      %3954 = vmatpush1.msra.mxu0 %v3714
      %3955 = vmatprep.subr.mxu0 0.0
      %3956 = vmatpush1.msra.mxu0 %v3715
      %3957 = vmatprep.subr.mxu0 0.0
      %3958 = vmatpush1.msra.mxu0 %v3716
      %3959 = vmatprep.subr.mxu0 0.0
      %3960 = vmatpush1.msra.mxu0 0.0
      %3961 = vmatprep.subr.mxu0 0.0
      %3962 = vmatpush1.msra.mxu0 0.0
      %3963 = vmatprep.subr.mxu0 0.0
      %3964 = vmatpush1.msra.mxu0 0.0
      %3965 = vmatprep.subr.mxu0 0.0
      %3966 = vmatpush1.msra.mxu0 0.0
      %3967 = vmatprep.subr.mxu0 0.0
      %3968 = vmatpush1.msra.mxu0 0.0
      %3969 = vmatprep.subr.mxu0 0.0
      %3970 = vmatpush1.msra.mxu0 0.0
      %3971 = vmatprep.subr.mxu0 0.0
      %3972 = vmatpush1.msra.mxu0 0.0
      %3973 = vmatprep.subr.mxu0 0.0
      %3974 = vmatpush1.msra.mxu0 0.0
      %3975 = vmatprep.subr.mxu0 0.0
      %3976 = vmatpush1.msra.mxu0 0.0
      %3977 = vmatprep.subr.mxu0 0.0
      %3978 = vmatpush1.msra.mxu0 0.0
      %3979 = vmatprep.subr.mxu0 0.0
      %3980 = vmatpush1.msra.mxu0 0.0
      %3981 = vmatprep.subr.mxu0 0.0
      %3982 = vmatpush1.msra.mxu0 0.0
      %3983 = vmatprep.subr.mxu0 0.0
      %3984 = vmatpush1.msra.mxu0 0.0
      %3985 = vmatprep.subr.mxu0 0.0
      %3986 = vmatpush1.msra.mxu0 0.0
      %3987 = vmatprep.subr.mxu0 0.0
      %3988 = vmatpush1.msra.mxu0 0.0
      %3989 = vmatprep.subr.mxu0 0.0
      %3990 = vmatpush1.msra.mxu0 0.0
      %3991 = vmatprep.subr.mxu0 0.0
      %3992 = vmatpush1.msra.mxu0 0.0
      %3993 = vmatprep.subr.mxu0 0.0
      %3994 = vmatpush1.msra.mxu0 0.0
      %3995 = vmatprep.subr.mxu0 0.0
      %3996 = vmatpush1.msra.mxu0 0.0
      %3997 = vmatprep.subr.mxu0 0.0
      %3998 = vmatpush1.msra.mxu0 0.0
      %3999 = vmatprep.subr.mxu0 0.0
      %4000 = vmatpush1.msra.mxu0 0.0
      %4001 = vmatprep.subr.mxu0 0.0
      %4002 = vmatpush1.msra.mxu0 0.0
      %4003 = vmatprep.subr.mxu0 0.0
      %4004 = vmatpush1.msra.mxu0 0.0
      %4005 = vmatprep.subr.mxu0 0.0
      %4006 = vmatpush1.msra.mxu0 0.0
      %4007 = vmatprep.subr.mxu0 0.0
      %4008 = vmatpush1.msra.mxu0 0.0
      %4009 = vmatprep.subr.mxu0 0.0
      %4010 = vmatpush1.msra.mxu0 0.0
      %4011 = vmatprep.subr.mxu0 0.0
      %4012 = vmatpush1.msra.mxu0 0.0
      %4013 = vmatprep.subr.mxu0 0.0
      %4014 = vmatpush1.msra.mxu0 0.0
      %4015 = vmatprep.mubr.f32.mxu0 0.0
      %4016 = vmatmul.mubr.f32.gmra.mrb[0].mxu0 %v3718
      %v4017 = vpop.f32.mrb[0].mxu0
      %v4018 = vadd.f32 0.0, %v4017
      %v4019 = vpop.f32.mrb[0].mxu0
      %4020 = vmatprep.mubr.f32.mxu0 0.0
      %4021 = vmatmul.mubr.f32.gmra.mrb[0].mxu0 %v3721
      %v4022 = vpop.f32.mrb[0].mxu0
      %v4023 = vadd.f32 0.0, %v4022
      %v4024 = vpop.f32.mrb[0].mxu0
      %4025 = vmatprep.mubr.f32.mxu0 0.0
      %4026 = vmatmul.mubr.f32.gmra.mrb[0].mxu0 %v3724
      %v4027 = vpop.f32.mrb[0].mxu0
      %v4028 = vadd.f32 0.0, %v4027
      %v4029 = vpop.f32.mrb[0].mxu0
      %4030 = vmatprep.mubr.f32.mxu0 0.0
      %4031 = vmatmul.mubr.f32.gmra.mrb[0].mxu0 %v3727
      %v4032 = vpop.f32.mrb[0].mxu0
      %v4033 = vadd.f32 0.0, %v4032
      %v4034 = vpop.f32.mrb[0].mxu0
      %4035 = vmatprep.mubr.f32.mxu0 0.0
      %4036 = vmatmul.mubr.f32.gmra.mrb[0].mxu0 %v3730
      %v4037 = vpop.f32.mrb[0].mxu0
      %v4038 = vadd.f32 0.0, %v4037
      %v4039 = vpop.f32.mrb[0].mxu0
      %4040 = vmatprep.mubr.f32.mxu0 0.0
      %4041 = vmatmul.mubr.f32.gmra.mrb[0].mxu0 %v3733
      %v4042 = vpop.f32.mrb[0].mxu0
      %v4043 = vadd.f32 0.0, %v4042
      %v4044 = vpop.f32.mrb[0].mxu0
      %4045 = vmatprep.mubr.f32.mxu0 0.0
      %4046 = vmatmul.mubr.f32.gmra.mrb[0].mxu0 %v3736
      %v4047 = vpop.f32.mrb[0].mxu0
      %v4048 = vadd.f32 0.0, %v4047
      %v4049 = vpop.f32.mrb[0].mxu0
      %4050 = vmatprep.mubr.f32.mxu0 0.0
      %4051 = vmatmul.mubr.f32.gmra.mrb[0].mxu0 %v3739
      %v4052 = vpop.f32.mrb[0].mxu0
      %v4053 = vadd.f32 0.0, %v4052
      %v4054 = vpop.f32.mrb[0].mxu0
      %4055 = vmatprep.mubr.f32.mxu0 0.0
      %4056 = vmatmul.mubr.f32.gmra.mrb[0].mxu0 %v3742
      %v4057 = vpop.f32.mrb[0].mxu0
      %v4058 = vadd.f32 0.0, %v4057
      %v4059 = vpop.f32.mrb[0].mxu0
      %4060 = vmatprep.mubr.f32.mxu0 0.0
      %4061 = vmatmul.mubr.f32.gmra.mrb[0].mxu0 %v3745
      %v4062 = vpop.f32.mrb[0].mxu0
      %v4063 = vadd.f32 0.0, %v4062
      %v4064 = vpop.f32.mrb[0].mxu0
      %4065 = vmatprep.mubr.f32.mxu0 0.0
      %4066 = vmatmul.mubr.f32.gmra.mrb[0].mxu0 %v3748
      %v4067 = vpop.f32.mrb[0].mxu0
      %v4068 = vadd.f32 0.0, %v4067
      %v4069 = vpop.f32.mrb[0].mxu0
      %4070 = vmatprep.mubr.f32.mxu0 0.0
      %4071 = vmatmul.mubr.f32.gmra.mrb[0].mxu0 %v3751
      %v4072 = vpop.f32.mrb[0].mxu0
      %v4073 = vadd.f32 0.0, %v4072
      %v4074 = vpop.f32.mrb[0].mxu0
      %4075 = vmatprep.mubr.f32.mxu0 0.0
      %4076 = vmatmul.mubr.f32.gmra.mrb[0].mxu0 %v3754
      %v4077 = vpop.f32.mrb[0].mxu0
      %v4078 = vadd.f32 0.0, %v4077
      %v4079 = vpop.f32.mrb[0].mxu0
      %4080 = vmatprep.mubr.f32.mxu0 0.0
      %4081 = vmatmul.mubr.f32.gmra.mrb[0].mxu0 %v3757
      %v4082 = vpop.f32.mrb[0].mxu0
      %v4083 = vadd.f32 0.0, %v4082
      %v4084 = vpop.f32.mrb[0].mxu0
      %4085 = vmatprep.mubr.f32.mxu0 0.0
      %4086 = vmatmul.mubr.f32.gmra.mrb[0].mxu0 %v3760
      %v4087 = vpop.f32.mrb[0].mxu0
      %v4088 = vadd.f32 0.0, %v4087
      %v4089 = vpop.f32.mrb[0].mxu0
      %4090 = vmatprep.mubr.f32.mxu0 0.0
      %4091 = vmatmul.mubr.f32.gmra.mrb[0].mxu0 %v3763
      %v4092 = vpop.f32.mrb[0].mxu0
      %v4093 = vadd.f32 0.0, %v4092
      %v4094 = vpop.f32.mrb[0].mxu0
      %4095 = vmatprep.mubr.f32.mxu0 0.0
      %4096 = vmatmul.mubr.f32.gmra.mrb[0].mxu0 %v3766
      %v4097 = vpop.f32.mrb[0].mxu0
      %v4098 = vadd.f32 0.0, %v4097
      %v4099 = vpop.f32.mrb[0].mxu0
      %4100 = vmatprep.mubr.f32.mxu0 0.0
      %4101 = vmatmul.mubr.f32.gmra.mrb[0].mxu0 %v3769
      %v4102 = vpop.f32.mrb[0].mxu0
      %v4103 = vadd.f32 0.0, %v4102
      %v4104 = vpop.f32.mrb[0].mxu0
      %4105 = vmatprep.mubr.f32.mxu0 0.0
      %4106 = vmatmul.mubr.f32.gmra.mrb[0].mxu0 %v3772
      %v4107 = vpop.f32.mrb[0].mxu0
      %v4108 = vadd.f32 0.0, %v4107
      %v4109 = vpop.f32.mrb[0].mxu0
      %4110 = vmatprep.mubr.f32.mxu0 0.0
      %4111 = vmatmul.mubr.f32.gmra.mrb[0].mxu0 %v3775
      %v4112 = vpop.f32.mrb[0].mxu0
      %v4113 = vadd.f32 0.0, %v4112
      %v4114 = vpop.f32.mrb[0].mxu0
      %4115 = vmatprep.mubr.f32.mxu0 0.0
      %4116 = vmatmul.mubr.f32.gmra.mrb[0].mxu0 %v3778
      %v4117 = vpop.f32.mrb[0].mxu0
      %v4118 = vadd.f32 0.0, %v4117
      %v4119 = vpop.f32.mrb[0].mxu0
      %4120 = vmatprep.mubr.f32.mxu0 0.0
      %4121 = vmatmul.mubr.f32.gmra.mrb[0].mxu0 %v3781
      %v4122 = vpop.f32.mrb[0].mxu0
      %v4123 = vadd.f32 0.0, %v4122
      %v4124 = vpop.f32.mrb[0].mxu0
      %4125 = vmatprep.mubr.f32.mxu0 0.0
      %4126 = vmatmul.mubr.f32.gmra.mrb[0].mxu0 %v3784
      %v4127 = vpop.f32.mrb[0].mxu0
      %v4128 = vadd.f32 0.0, %v4127
      %v4129 = vpop.f32.mrb[0].mxu0
      %4130 = vmatprep.mubr.f32.mxu0 0.0
      %4131 = vmatmul.mubr.f32.gmra.mrb[0].mxu0 %v3787
      %v4132 = vpop.f32.mrb[0].mxu0
      %v4133 = vadd.f32 0.0, %v4132
      %v4134 = vpop.f32.mrb[0].mxu0
      %4135 = vmatprep.mubr.f32.mxu0 0.0
      %4136 = vmatmul.mubr.f32.gmra.mrb[0].mxu0 %v3790
      %v4137 = vpop.f32.mrb[0].mxu0
      %v4138 = vadd.f32 0.0, %v4137
      %v4139 = vpop.f32.mrb[0].mxu0
      %4140 = vmatprep.mubr.f32.mxu0 0.0
      %4141 = vmatmul.mubr.f32.gmra.mrb[0].mxu0 %v3793
      %v4142 = vpop.f32.mrb[0].mxu0
      %v4143 = vadd.f32 0.0, %v4142
      %v4144 = vpop.f32.mrb[0].mxu0
      %4145 = vmatprep.mubr.f32.mxu0 0.0
      %4146 = vmatmul.mubr.f32.gmra.mrb[0].mxu0 %v3796
      %v4147 = vpop.f32.mrb[0].mxu0
      %v4148 = vadd.f32 0.0, %v4147
      %v4149 = vpop.f32.mrb[0].mxu0
      %4150 = vmatprep.mubr.f32.mxu0 0.0
      %4151 = vmatmul.mubr.f32.gmra.mrb[0].mxu0 %v3799
      %v4152 = vpop.f32.mrb[0].mxu0
      %v4153 = vadd.f32 0.0, %v4152
      %v4154 = vpop.f32.mrb[0].mxu0
      %4155 = vmatprep.mubr.f32.mxu0 0.0
      %4156 = vmatmul.mubr.f32.gmra.mrb[0].mxu0 %v3802
      %v4157 = vpop.f32.mrb[0].mxu0
      %v4158 = vadd.f32 0.0, %v4157
      %v4159 = vpop.f32.mrb[0].mxu0
      %4160 = vmatprep.mubr.f32.mxu0 0.0
      %4161 = vmatmul.mubr.f32.gmra.mrb[0].mxu0 %v3805
      %v4162 = vpop.f32.mrb[0].mxu0
      %v4163 = vadd.f32 0.0, %v4162
      %v4164 = vpop.f32.mrb[0].mxu0
      %4165 = vmatprep.mubr.f32.mxu0 0.0
      %4166 = vmatmul.mubr.f32.gmra.mrb[0].mxu0 %v3808
      %v4167 = vpop.f32.mrb[0].mxu0
      %v4168 = vadd.f32 0.0, %v4167
      %v4169 = vpop.f32.mrb[0].mxu0
      %4170 = vmatprep.mubr.f32.mxu0 0.0
      %4171 = vmatmul.mubr.f32.gmra.mrb[0].mxu0 %v3811
      %v4172 = vpop.f32.mrb[0].mxu0
      %v4173 = vadd.f32 0.0, %v4172
      %v4174 = vpop.f32.mrb[0].mxu0
      %4175 = vmatprep.mubr.f32.mxu0 0.0
      %4176 = vmatmul.mubr.f32.gmra.mrb[0].mxu0 %v3814
      %v4177 = vpop.f32.mrb[0].mxu0
      %v4178 = vadd.f32 0.0, %v4177
      %v4179 = vpop.f32.mrb[0].mxu0
      %4180 = vmatprep.mubr.f32.mxu0 0.0
      %4181 = vmatmul.mubr.f32.gmra.mrb[0].mxu0 %v3817
      %v4182 = vpop.f32.mrb[0].mxu0
      %v4183 = vadd.f32 0.0, %v4182
      %v4184 = vpop.f32.mrb[0].mxu0
      %4185 = vmatprep.mubr.f32.mxu0 0.0
      %4186 = vmatmul.mubr.f32.gmra.mrb[0].mxu0 %v3820
      %v4187 = vpop.f32.mrb[0].mxu0
      %v4188 = vadd.f32 0.0, %v4187
      %v4189 = vpop.f32.mrb[0].mxu0
      %4190 = vmatprep.mubr.f32.mxu0 0.0
      %4191 = vmatmul.mubr.f32.gmra.mrb[0].mxu0 %v3823
      %v4192 = vpop.f32.mrb[0].mxu0
      %v4193 = vadd.f32 0.0, %v4192
      %v4194 = vpop.f32.mrb[0].mxu0
      %4195 = vmatprep.mubr.f32.mxu0 0.0
      %4196 = vmatmul.mubr.f32.gmra.mrb[0].mxu0 %v3826
      %v4197 = vpop.f32.mrb[0].mxu0
      %v4198 = vadd.f32 0.0, %v4197
      %v4199 = vpop.f32.mrb[0].mxu0
      %4200 = vmatprep.mubr.f32.mxu0 0.0
      %4201 = vmatmul.mubr.f32.gmra.mrb[0].mxu0 %v3829
      %v4202 = vpop.f32.mrb[0].mxu0
      %v4203 = vadd.f32 0.0, %v4202
      %v4204 = vpop.f32.mrb[0].mxu0
      %4205 = vmatprep.mubr.f32.mxu0 0.0
      %4206 = vmatmul.mubr.f32.gmra.mrb[0].mxu0 %v3832
      %v4207 = vpop.f32.mrb[0].mxu0
      %v4208 = vadd.f32 0.0, %v4207
      %v4209 = vpop.f32.mrb[0].mxu0
      %4210 = vmatprep.mubr.f32.mxu0 0.0
      %4211 = vmatmul.mubr.f32.gmra.mrb[0].mxu0 %v3835
      %v4212 = vpop.f32.mrb[0].mxu0
      %v4213 = vadd.f32 0.0, %v4212
      %v4214 = vpop.f32.mrb[0].mxu0
      %4215 = vmatprep.mubr.f32.mxu0 0.0
      %4216 = vmatmul.mubr.f32.gmra.mrb[0].mxu0 %v3838
      %v4217 = vpop.f32.mrb[0].mxu0
      %v4218 = vadd.f32 0.0, %v4217
      %v4219 = vpop.f32.mrb[0].mxu0
      %4220 = vmatprep.mubr.f32.mxu0 0.0
      %4221 = vmatmul.mubr.f32.gmra.mrb[0].mxu0 %v3841
      %v4222 = vpop.f32.mrb[0].mxu0
      %v4223 = vadd.f32 0.0, %v4222
      %v4224 = vpop.f32.mrb[0].mxu0
      %4225 = vmatprep.mubr.f32.mxu0 0.0
      %4226 = vmatmul.mubr.f32.gmra.mrb[0].mxu0 %v3844
      %v4227 = vpop.f32.mrb[0].mxu0
      %v4228 = vadd.f32 0.0, %v4227
      %v4229 = vpop.f32.mrb[0].mxu0
      %4230 = vmatprep.mubr.f32.mxu0 0.0
      %4231 = vmatmul.mubr.f32.gmra.mrb[0].mxu0 %v3847
      %v4232 = vpop.f32.mrb[0].mxu0
      %v4233 = vadd.f32 0.0, %v4232
      %v4234 = vpop.f32.mrb[0].mxu0
      %4235 = vmatprep.mubr.f32.mxu0 0.0
      %4236 = vmatmul.mubr.f32.gmra.mrb[0].mxu0 %v3850
      %v4237 = vpop.f32.mrb[0].mxu0
      %v4238 = vadd.f32 0.0, %v4237
      %v4239 = vpop.f32.mrb[0].mxu0
      %4240 = vmatprep.mubr.f32.mxu0 0.0
      %4241 = vmatmul.mubr.f32.gmra.mrb[0].mxu0 %v3853
      %v4242 = vpop.f32.mrb[0].mxu0
      %v4243 = vadd.f32 0.0, %v4242
      %v4244 = vpop.f32.mrb[0].mxu0
      %4245 = vmatprep.mubr.f32.mxu0 0.0
      %4246 = vmatmul.mubr.f32.gmra.mrb[0].mxu0 %v3856
      %v4247 = vpop.f32.mrb[0].mxu0
      %v4248 = vadd.f32 0.0, %v4247
      %v4249 = vpop.f32.mrb[0].mxu0
      %4250 = vmatprep.mubr.f32.mxu0 0.0
      %4251 = vmatmul.mubr.f32.gmra.mrb[0].mxu0 %v3859
      %v4252 = vpop.f32.mrb[0].mxu0
      %v4253 = vadd.f32 0.0, %v4252
      %v4254 = vpop.f32.mrb[0].mxu0
      %4255 = vmatprep.mubr.f32.mxu0 0.0
      %4256 = vmatmul.mubr.f32.gmra.mrb[0].mxu0 %v3862
      %v4257 = vpop.f32.mrb[0].mxu0
      %v4258 = vadd.f32 0.0, %v4257
      %v4259 = vpop.f32.mrb[0].mxu0
      %4260 = vmatprep.mubr.f32.mxu0 0.0
      %4261 = vmatmul.mubr.f32.gmra.mrb[0].mxu0 %v3865
      %v4262 = vpop.f32.mrb[0].mxu0
      %v4263 = vadd.f32 0.0, %v4262
      %v4264 = vpop.f32.mrb[0].mxu0
      %4265 = vmatprep.mubr.f32.mxu0 0.0
      %4266 = vmatmul.mubr.f32.gmra.mrb[0].mxu0 %v3868
      %v4267 = vpop.f32.mrb[0].mxu0
      %v4268 = vadd.f32 0.0, %v4267
      %v4269 = vpop.f32.mrb[0].mxu0
      %4270 = vmatprep.mubr.f32.mxu0 0.0
      %4271 = vmatmul.mubr.f32.gmra.mrb[0].mxu0 %v3871
      %v4272 = vpop.f32.mrb[0].mxu0
      %v4273 = vadd.f32 0.0, %v4272
      %v4274 = vpop.f32.mrb[0].mxu0
      %4275 = vmatprep.mubr.f32.mxu0 0.0
      %4276 = vmatmul.mubr.f32.gmra.mrb[0].mxu0 %v3874
      %v4277 = vpop.f32.mrb[0].mxu0
      %v4278 = vadd.f32 0.0, %v4277
      %v4279 = vpop.f32.mrb[0].mxu0
      %4280 = vmatprep.mubr.f32.mxu0 0.0
      %4281 = vmatmul.mubr.f32.gmra.mrb[0].mxu0 %v3877
      %v4282 = vpop.f32.mrb[0].mxu0
      %v4283 = vadd.f32 0.0, %v4282
      %v4284 = vpop.f32.mrb[0].mxu0
      %4285 = vmatprep.mubr.f32.mxu0 0.0
      %4286 = vmatmul.mubr.f32.gmra.mrb[0].mxu0 %v3880
      %v4287 = vpop.f32.mrb[0].mxu0
      %v4288 = vadd.f32 0.0, %v4287
      %v4289 = vpop.f32.mrb[0].mxu0
      %4290 = vmatprep.mubr.f32.mxu0 0.0
      %4291 = vmatmul.mubr.f32.gmra.mrb[0].mxu0 %v3883
      %v4292 = vpop.f32.mrb[0].mxu0
      %v4293 = vadd.f32 0.0, %v4292
      %v4294 = vpop.f32.mrb[0].mxu0
      %4295 = vmatprep.mubr.f32.mxu0 0.0
      %4296 = vmatmul.mubr.f32.gmra.mrb[0].mxu0 %v3886
      %v4297 = vpop.f32.mrb[0].mxu0
      %v4298 = vadd.f32 0.0, %v4297
      %v4299 = vpop.f32.mrb[0].mxu0
      %4300 = vmatprep.mubr.f32.mxu0 0.0
      %4301 = vmatmul.mubr.f32.gmra.mrb[0].mxu0 %v3889
      %v4302 = vpop.f32.mrb[0].mxu0
      %v4303 = vadd.f32 0.0, %v4302
      %v4304 = vpop.f32.mrb[0].mxu0
      %4305 = vmatprep.mubr.f32.mxu0 0.0
      %4306 = vmatmul.mubr.f32.gmra.mrb[0].mxu0 %v3892
      %v4307 = vpop.f32.mrb[0].mxu0
      %v4308 = vadd.f32 0.0, %v4307
      %v4309 = vpop.f32.mrb[0].mxu0
      %4310 = vmatprep.mubr.f32.mxu0 0.0
      %4311 = vmatmul.mubr.f32.gmra.mrb[0].mxu0 %v3895
      %v4312 = vpop.f32.mrb[0].mxu0
      %v4313 = vadd.f32 0.0, %v4312
      %v4314 = vpop.f32.mrb[0].mxu0
      %4315 = vmatprep.mubr.f32.mxu0 0.0
      %4316 = vmatmul.mubr.f32.gmra.mrb[0].mxu0 %v3898
      %v4317 = vpop.f32.mrb[0].mxu0
      %v4318 = vadd.f32 0.0, %v4317
      %v4319 = vpop.f32.mrb[0].mxu0
      %4320 = vmatprep.mubr.f32.mxu0 0.0
      %4321 = vmatmul.mubr.f32.gmra.mrb[0].mxu0 %v3901
      %v4322 = vpop.f32.mrb[0].mxu0
      %v4323 = vadd.f32 0.0, %v4322
      %v4324 = vpop.f32.mrb[0].mxu0
      %4325 = vmatprep.mubr.f32.mxu0 0.0
      %4326 = vmatmul.mubr.f32.gmra.mrb[0].mxu0 %v3904
      %v4327 = vpop.f32.mrb[0].mxu0
      %v4328 = vadd.f32 0.0, %v4327
      %v4329 = vpop.f32.mrb[0].mxu0
      %4330 = vmatprep.mubr.f32.mxu0 0.0
      %4331 = vmatmul.mubr.f32.gmra.mrb[0].mxu0 %v3907
      %v4332 = vpop.f32.mrb[0].mxu0
      %v4333 = vadd.f32 0.0, %v4332
      %v4334 = vpop.f32.mrb[0].mxu0
      %4335 = vmatprep.mubr.f32.mxu0 0.0
      %4336 = vmatmul.mubr.f32.gmra.mrb[0].mxu0 %v3910
      %v4337 = vpop.f32.mrb[0].mxu0
      %v4338 = vadd.f32 0.0, %v4337
      %v4339 = vpop.f32.mrb[0].mxu0
      %4340 = vmatprep.mubr.f32.mxu0 0.0
      %4341 = vmatmul.mubr.f32.gmra.mrb[0].mxu0 %v3913
      %v4342 = vpop.f32.mrb[0].mxu0
      %v4343 = vadd.f32 0.0, %v4342
      %v4344 = vpop.f32.mrb[0].mxu0
      %4345 = vmatprep.mubr.f32.mxu0 0.0
      %4346 = vmatmul.mubr.f32.gmra.mrb[0].mxu0 %v3916
      %v4347 = vpop.f32.mrb[0].mxu0
      %v4348 = vadd.f32 0.0, %v4347
      %v4349 = vpop.f32.mrb[0].mxu0
      %4350 = vmatprep.mubr.f32.mxu0 0.0
      %4351 = vmatmul.mubr.f32.gmra.mrb[0].mxu0 %v3919
      %v4352 = vpop.f32.mrb[0].mxu0
      %v4353 = vadd.f32 0.0, %v4352
      %v4354 = vpop.f32.mrb[0].mxu0
      %4355 = vmatprep.mubr.f32.mxu0 0.0
      %4356 = vmatmul.mubr.f32.gmra.mrb[0].mxu0 %v3922
      %v4357 = vpop.f32.mrb[0].mxu0
      %v4358 = vadd.f32 0.0, %v4357
      %v4359 = vpop.f32.mrb[0].mxu0
      %4360 = vmatprep.mubr.f32.mxu0 0.0
      %4361 = vmatmul.mubr.f32.gmra.mrb[0].mxu0 %v3925
      %v4362 = vpop.f32.mrb[0].mxu0
      %v4363 = vadd.f32 0.0, %v4362
      %v4364 = vpop.f32.mrb[0].mxu0
      %4365 = vmatprep.mubr.f32.mxu0 0.0
      %4366 = vmatmul.mubr.f32.gmra.mrb[0].mxu0 %v3928
      %v4367 = vpop.f32.mrb[0].mxu0
      %v4368 = vadd.f32 0.0, %v4367
      %v4369 = vpop.f32.mrb[0].mxu0
      %4370 = vmatprep.mubr.f32.mxu0 0.0
      %4371 = vmatmul.mubr.f32.gmra.mrb[0].mxu0 %v3931
      %v4372 = vpop.f32.mrb[0].mxu0
      %v4373 = vadd.f32 0.0, %v4372
      %v4374 = vpop.f32.mrb[0].mxu0
      %4375 = vmatprep.mubr.f32.mxu0 0.0
      %4376 = vmatmul.mubr.f32.gmra.mrb[0].mxu0 %v3934
      %v4377 = vpop.f32.mrb[0].mxu0
      %v4378 = vadd.f32 0.0, %v4377
      %v4379 = vpop.f32.mrb[0].mxu0
      %4380 = vmatprep.mubr.f32.mxu0 0.0
      %4381 = vmatmul.mubr.f32.gmra.mrb[0].mxu0 %v3937
      %v4382 = vpop.f32.mrb[0].mxu0
      %v4383 = vadd.f32 0.0, %v4382
      %v4384 = vpop.f32.mrb[0].mxu0
      %4385 = vmatprep.mubr.f32.mxu0 0.0
      %4386 = vmatmul.mubr.f32.gmra.mrb[0].mxu0 %v3940
      %v4387 = vpop.f32.mrb[0].mxu0
      %v4388 = vadd.f32 0.0, %v4387
      %v4389 = vpop.f32.mrb[0].mxu0
      %4390 = vmatprep.mubr.f32.mxu0 0.0
      %4391 = vmatmul.mubr.f32.gmra.mrb[0].mxu0 %v3943
      %v4392 = vpop.f32.mrb[0].mxu0
      %v4393 = vadd.f32 0.0, %v4392
      %v4394 = vpop.f32.mrb[0].mxu0
      %4395 = vmatprep.mubr.f32.mxu0 0.0
      %4396 = vmatmul.mubr.f32.gmra.mrb[0].mxu0 %v3946
      %v4397 = vpop.f32.mrb[0].mxu0
      %v4398 = vadd.f32 0.0, %v4397
      %v4399 = vpop.f32.mrb[0].mxu0
      %4400 = vmatprep.mubr.f32.mxu0 0.0
      %4401 = vmatmul.mubr.f32.gmra.mrb[0].mxu0 %v3949
      %v4402 = vpop.f32.mrb[0].mxu0
      %v4403 = vadd.f32 0.0, %v4402
      %v4404 = vpop.f32.mrb[0].mxu0
      %4405 = vdwg.mxu0
      %v4406 = vadd.f32 %v3556, %v4018
      %v4407 = vadd.f32 %v3557, %v4023
      %v4408 = vadd.f32 %v3558, %v4028
      %v4409 = vadd.f32 %v3559, %v4033
      %v4410 = vadd.f32 %v3560, %v4038
      %v4411 = vadd.f32 %v3561, %v4043
      %v4412 = vadd.f32 %v3562, %v4048
      %v4413 = vadd.f32 %v3563, %v4053
      %v4414 = vadd.f32 %v3564, %v4058
      %v4415 = vadd.f32 %v3565, %v4063
      %v4416 = vadd.f32 %v3566, %v4068
      %v4417 = vadd.f32 %v3567, %v4073
      %v4418 = vadd.f32 %v3568, %v4078
      %v4419 = vadd.f32 %v3569, %v4083
      %v4420 = vadd.f32 %v3570, %v4088
      %v4421 = vadd.f32 %v3571, %v4093
      %v4422 = vadd.f32 %v3572, %v4098
      %v4423 = vadd.f32 %v3573, %v4103
      %v4424 = vadd.f32 %v3574, %v4108
      %v4425 = vadd.f32 %v3575, %v4113
      %v4426 = vadd.f32 %v3576, %v4118
      %v4427 = vadd.f32 %v3577, %v4123
      %v4428 = vadd.f32 %v3578, %v4128
      %v4429 = vadd.f32 %v3579, %v4133
      %v4430 = vadd.f32 %v3580, %v4138
      %v4431 = vadd.f32 %v3581, %v4143
      %v4432 = vadd.f32 %v3582, %v4148
      %v4433 = vadd.f32 %v3583, %v4153
      %v4434 = vadd.f32 %v3584, %v4158
      %v4435 = vadd.f32 %v3585, %v4163
      %v4436 = vadd.f32 %v3586, %v4168
      %v4437 = vadd.f32 %v3587, %v4173
      %v4438 = vadd.f32 %v3588, %v4178
      %v4439 = vadd.f32 %v3589, %v4183
      %v4440 = vadd.f32 %v3590, %v4188
      %v4441 = vadd.f32 %v3591, %v4193
      %v4442 = vadd.f32 %v3592, %v4198
      %v4443 = vadd.f32 %v3593, %v4203
      %v4444 = vadd.f32 %v3594, %v4208
      %v4445 = vadd.f32 %v3595, %v4213
      %v4446 = vadd.f32 %v3596, %v4218
      %v4447 = vadd.f32 %v3597, %v4223
      %v4448 = vadd.f32 %v3598, %v4228
      %v4449 = vadd.f32 %v3599, %v4233
      %v4450 = vadd.f32 %v3600, %v4238
      %v4451 = vadd.f32 %v3601, %v4243
      %v4452 = vadd.f32 %v3602, %v4248
      %v4453 = vadd.f32 %v3603, %v4253
      %v4454 = vadd.f32 %v3604, %v4258
      %v4455 = vadd.f32 %v3605, %v4263
      %v4456 = vadd.f32 %v3606, %v4268
      %v4457 = vadd.f32 %v3607, %v4273
      %v4458 = vadd.f32 %v3608, %v4278
      %v4459 = vadd.f32 %v3609, %v4283
      %v4460 = vadd.f32 %v3610, %v4288
      %v4461 = vadd.f32 %v3611, %v4293
      %v4462 = vadd.f32 %v3612, %v4298
      %v4463 = vadd.f32 %v3613, %v4303
      %v4464 = vadd.f32 %v3614, %v4308
      %v4465 = vadd.f32 %v3615, %v4313
      %v4466 = vadd.f32 %v3616, %v4318
      %v4467 = vadd.f32 %v3617, %v4323
      %v4468 = vadd.f32 %v3618, %v4328
      %v4469 = vadd.f32 %v3619, %v4333
      %v4470 = vadd.f32 %v3620, %v4338
      %v4471 = vadd.f32 %v3621, %v4343
      %v4472 = vadd.f32 %v3622, %v4348
      %v4473 = vadd.f32 %v3623, %v4353
      %v4474 = vadd.f32 %v3624, %v4358
      %v4475 = vadd.f32 %v3625, %v4363
      %v4476 = vadd.f32 %v3626, %v4368
      %v4477 = vadd.f32 %v3627, %v4373
      %v4478 = vadd.f32 %v3628, %v4378
      %v4479 = vadd.f32 %v3629, %v4383
      %v4480 = vadd.f32 %v3630, %v4388
      %v4481 = vadd.f32 %v3631, %v4393
      %v4482 = vadd.f32 %v3632, %v4398
      %v4483 = vadd.f32 %v3633, %v4403
      %v4484 = vld [vmem:[#allocation2 + $0x1b] sm:$0xff]
      %v4485 = vld [vmem:[#allocation2 + $0x23] sm:$0xff]
      %v4486 = vld [vmem:[#allocation2 + $0x2b] sm:$0xff]
      %v4487 = vld [vmem:[#allocation2 + $0x33] sm:$0xff]
      %v4488 = vld [vmem:[#allocation2 + $0x3b] sm:$0xff]
      %v4489 = vld [vmem:[#allocation2 + $0x43] sm:$0xff]
      %v4490 = vld [vmem:[#allocation2 + $0x4b] sm:$0xff]
      %v4491 = vld [vmem:[#allocation2 + $0x53] sm:$0xff]
      %v4492 = vld [vmem:[#allocation2 + $0x5b] sm:$0xff]
      %v4493 = vld [vmem:[#allocation2 + $0x63] sm:$0xff]
      %v4494 = vld [vmem:[#allocation2 + $0x6b] sm:$0xff]
      %v4495 = vld [vmem:[#allocation2 + $0x73] sm:$0xff]
      %v4496 = vld [vmem:[#allocation2 + $0x7b] sm:$0xff]
      %v4497 = vld [vmem:[#allocation2 + $0x83] sm:$0xff]
      %v4498 = vld [vmem:[#allocation2 + $0x8b] sm:$0xff]
      %v4499 = vld [vmem:[#allocation2 + $0x93] sm:$0xff]
      %v4500 = vld [vmem:[#allocation2 + $0x9b] sm:$0xff]
      %v4501 = vld [vmem:[#allocation2 + $0xa3] sm:$0xff]
      %v4502 = vld [vmem:[#allocation2 + $0xab] sm:$0xff]
      %v4503 = vld [vmem:[#allocation2 + $0xb3] sm:$0xff]
      %v4504 = vld [vmem:[#allocation2 + $0xbb] sm:$0xff]
      %v4505 = vld [vmem:[#allocation2 + $0xc3] sm:$0xff]
      %v4506 = vld [vmem:[#allocation2 + $0xcb] sm:$0xff]
      %v4507 = vld [vmem:[#allocation2 + $0xd3] sm:$0xff]
      %v4508 = vld [vmem:[#allocation2 + $0xdb] sm:$0xff]
      %v4509 = vld [vmem:[#allocation2 + $0xe3] sm:$0xff]
      %v4510 = vld [vmem:[#allocation2 + $0xeb] sm:$0xff]
      %v4511 = vld [vmem:[#allocation2 + $0xf3] sm:$0xff]
      %v4512 = vld [vmem:[#allocation2 + $0xfb] sm:$0xff]
      %v4513 = vld [vmem:[#allocation2 + $0x103] sm:$0xff]
      %v4514 = vld [vmem:[#allocation2 + $0x10b] sm:$0xff]
      %v4515 = vld [vmem:[#allocation2 + $0x113] sm:$0xff]
      %v4516 = vld [vmem:[#allocation2 + $0x11b] sm:$0xff]
      %v4517 = vld [vmem:[#allocation2 + $0x123] sm:$0xff]
      %v4518 = vld [vmem:[#allocation2 + $0x12b] sm:$0xff]
      %v4519 = vld [vmem:[#allocation2 + $0x133] sm:$0xff]
      %v4520 = vld [vmem:[#allocation2 + $0x13b] sm:$0xff]
      %v4521 = vld [vmem:[#allocation2 + $0x143] sm:$0xff]
      %v4522 = vld [vmem:[#allocation2 + $0x14b] sm:$0xff]
      %v4523 = vld [vmem:[#allocation2 + $0x153] sm:$0xff]
      %v4524 = vld [vmem:[#allocation2 + $0x15b] sm:$0xff]
      %v4525 = vld [vmem:[#allocation2 + $0x163] sm:$0xff]
      %v4526 = vld [vmem:[#allocation2 + $0x16b] sm:$0xff]
      %v4527 = vld [vmem:[#allocation2 + $0x173] sm:$0xff]
      %v4528 = vld [vmem:[#allocation2 + $0x17b] sm:$0xff]
      %v4529 = vld [vmem:[#allocation2 + $0x183] sm:$0xff]
      %v4530 = vld [vmem:[#allocation2 + $0x18b] sm:$0xff]
      %v4531 = vld [vmem:[#allocation2 + $0x193] sm:$0xff]
      %v4532 = vld [vmem:[#allocation2 + $0x19b] sm:$0xff]
      %v4533 = vld [vmem:[#allocation2 + $0x1a3] sm:$0xff]
      %v4534 = vld [vmem:[#allocation2 + $0x1ab] sm:$0xff]
      %v4535 = vld [vmem:[#allocation2 + $0x1b3] sm:$0xff]
      %v4536 = vld [vmem:[#allocation2 + $0x1bb] sm:$0xff]
      %v4537 = vld [vmem:[#allocation2 + $0x1c3] sm:$0xff]
      %v4538 = vld [vmem:[#allocation2 + $0x1cb] sm:$0xff]
      %v4539 = vld [vmem:[#allocation2 + $0x1d3] sm:$0xff]
      %v4540 = vld [vmem:[#allocation2 + $0x1db] sm:$0xff]
      %v4541 = vld [vmem:[#allocation2 + $0x1e3] sm:$0xff]
      %v4542 = vld [vmem:[#allocation2 + $0x1eb] sm:$0xff]
      %v4543 = vld [vmem:[#allocation2 + $0x1f3] sm:$0xff]
      %v4544 = vld [vmem:[#allocation2 + $0x1fb] sm:$0xff]
      %v4545 = vld [vmem:[#allocation2 + $0x203] sm:$0xff]
      %v4546 = vld [vmem:[#allocation2 + $0x20b] sm:$0xff]
      %v4547 = vld [vmem:[#allocation2 + $0x213] sm:$0xff]
      %v4548 = vld [vmem:[#allocation2 + $0x21b] sm:$0xff]
      %v4549 = vld [vmem:[#allocation2 + $0x223] sm:$0xff]
      %v4550 = vld [vmem:[#allocation2 + $0x22b] sm:$0xff]
      %v4551 = vld [vmem:[#allocation2 + $0x233] sm:$0xff]
      %v4552 = vld [vmem:[#allocation2 + $0x23b] sm:$0xff]
      %v4553 = vld [vmem:[#allocation2 + $0x243] sm:$0xff]
      %v4554 = vld [vmem:[#allocation2 + $0x24b] sm:$0xff]
      %v4555 = vld [vmem:[#allocation2 + $0x253] sm:$0xff]
      %v4556 = vld [vmem:[#allocation2 + $0x25b] sm:$0xff]
      %v4557 = vld [vmem:[#allocation2 + $0x263] sm:$0xff]
      %v4558 = vld [vmem:[#allocation2 + $0x26b] sm:$0xff]
      %v4559 = vld [vmem:[#allocation2 + $0x273] sm:$0xff]
      %v4560 = vld [vmem:[#allocation2 + $0x27b] sm:$0xff]
      %v4561 = vld [vmem:[#allocation2 + $0x283] sm:$0x3f]
      %s4562 = scalar_lea.vmem %s3, 128
      %v4563 = vld [vmem:[%s4562] sm:$0xff]
      %v4564 = vld [vmem:[%s4562 + $0x8] sm:$0xff]
      %v4565 = vld [vmem:[%s4562 + $0x10] sm:$0xff]
      %v4566 = vld [vmem:[%s4562 + $0x18] sm:$0xff]
      %v4568 = vsel %vm1154, %v4484, 0
      %v4571 = vsel %vm1154, %v4485, 0
      %v4574 = vsel %vm1154, %v4486, 0
      %v4577 = vsel %vm1154, %v4487, 0
      %v4580 = vsel %vm1154, %v4488, 0
      %v4583 = vsel %vm1154, %v4489, 0
      %v4586 = vsel %vm1154, %v4490, 0
      %v4589 = vsel %vm1154, %v4491, 0
      %v4592 = vsel %vm1154, %v4492, 0
      %v4595 = vsel %vm1154, %v4493, 0
      %v4598 = vsel %vm1154, %v4494, 0
      %v4601 = vsel %vm1154, %v4495, 0
      %v4604 = vsel %vm1154, %v4496, 0
      %v4607 = vsel %vm1154, %v4497, 0
      %v4610 = vsel %vm1154, %v4498, 0
      %v4613 = vsel %vm1154, %v4499, 0
      %v4616 = vsel %vm1154, %v4500, 0
      %v4619 = vsel %vm1154, %v4501, 0
      %v4622 = vsel %vm1154, %v4502, 0
      %v4625 = vsel %vm1154, %v4503, 0
      %v4628 = vsel %vm1154, %v4504, 0
      %v4631 = vsel %vm1154, %v4505, 0
      %v4634 = vsel %vm1154, %v4506, 0
      %v4637 = vsel %vm1154, %v4507, 0
      %v4640 = vsel %vm1154, %v4508, 0
      %v4643 = vsel %vm1154, %v4509, 0
      %v4646 = vsel %vm1154, %v4510, 0
      %v4649 = vsel %vm1154, %v4511, 0
      %v4652 = vsel %vm1154, %v4512, 0
      %v4655 = vsel %vm1154, %v4513, 0
      %v4658 = vsel %vm1154, %v4514, 0
      %v4661 = vsel %vm1154, %v4515, 0
      %v4664 = vsel %vm1154, %v4516, 0
      %v4667 = vsel %vm1154, %v4517, 0
      %v4670 = vsel %vm1154, %v4518, 0
      %v4673 = vsel %vm1154, %v4519, 0
      %v4676 = vsel %vm1154, %v4520, 0
      %v4679 = vsel %vm1154, %v4521, 0
      %v4682 = vsel %vm1154, %v4522, 0
      %v4685 = vsel %vm1154, %v4523, 0
      %v4688 = vsel %vm1154, %v4524, 0
      %v4691 = vsel %vm1154, %v4525, 0
      %v4694 = vsel %vm1154, %v4526, 0
      %v4697 = vsel %vm1154, %v4527, 0
      %v4700 = vsel %vm1154, %v4528, 0
      %v4703 = vsel %vm1154, %v4529, 0
      %v4706 = vsel %vm1154, %v4530, 0
      %v4709 = vsel %vm1154, %v4531, 0
      %v4712 = vsel %vm1154, %v4532, 0
      %v4715 = vsel %vm1154, %v4533, 0
      %v4718 = vsel %vm1154, %v4534, 0
      %v4721 = vsel %vm1154, %v4535, 0
      %v4724 = vsel %vm1154, %v4536, 0
      %v4727 = vsel %vm1154, %v4537, 0
      %v4730 = vsel %vm1154, %v4538, 0
      %v4733 = vsel %vm1154, %v4539, 0
      %v4736 = vsel %vm1154, %v4540, 0
      %v4739 = vsel %vm1154, %v4541, 0
      %v4742 = vsel %vm1154, %v4542, 0
      %v4745 = vsel %vm1154, %v4543, 0
      %v4748 = vsel %vm1154, %v4544, 0
      %v4751 = vsel %vm1154, %v4545, 0
      %v4754 = vsel %vm1154, %v4546, 0
      %v4757 = vsel %vm1154, %v4547, 0
      %v4760 = vsel %vm1154, %v4548, 0
      %v4763 = vsel %vm1154, %v4549, 0
      %v4766 = vsel %vm1154, %v4550, 0
      %v4769 = vsel %vm1154, %v4551, 0
      %v4772 = vsel %vm1154, %v4552, 0
      %v4775 = vsel %vm1154, %v4553, 0
      %v4778 = vsel %vm1154, %v4554, 0
      %v4781 = vsel %vm1154, %v4555, 0
      %v4784 = vsel %vm1154, %v4556, 0
      %v4787 = vsel %vm1154, %v4557, 0
      %v4790 = vsel %vm1154, %v4558, 0
      %v4793 = vsel %vm1154, %v4559, 0
      %v4796 = vsel %vm1154, %v4560, 0
      %v4799 = vsel %vm1154, %v4561, 0
      %4801 = vmatprep.subr.mxu0 0.0
      %4802 = vmatpush1.msra.mxu0 %v4563
      %4803 = vmatprep.subr.mxu0 0.0
      %4804 = vmatpush1.msra.mxu0 %v4564
      %4805 = vmatprep.subr.mxu0 0.0
      %4806 = vmatpush1.msra.mxu0 %v4565
      %4807 = vmatprep.subr.mxu0 0.0
      %4808 = vmatpush1.msra.mxu0 %v4566
      %4809 = vmatprep.subr.mxu0 0.0
      %4810 = vmatpush1.msra.mxu0 0.0
      %4811 = vmatprep.subr.mxu0 0.0
      %4812 = vmatpush1.msra.mxu0 0.0
      %4813 = vmatprep.subr.mxu0 0.0
      %4814 = vmatpush1.msra.mxu0 0.0
      %4815 = vmatprep.subr.mxu0 0.0
      %4816 = vmatpush1.msra.mxu0 0.0
      %4817 = vmatprep.subr.mxu0 0.0
      %4818 = vmatpush1.msra.mxu0 0.0
      %4819 = vmatprep.subr.mxu0 0.0
      %4820 = vmatpush1.msra.mxu0 0.0
      %4821 = vmatprep.subr.mxu0 0.0
      %4822 = vmatpush1.msra.mxu0 0.0
      %4823 = vmatprep.subr.mxu0 0.0
      %4824 = vmatpush1.msra.mxu0 0.0
      %4825 = vmatprep.subr.mxu0 0.0
      %4826 = vmatpush1.msra.mxu0 0.0
      %4827 = vmatprep.subr.mxu0 0.0
      %4828 = vmatpush1.msra.mxu0 0.0
      %4829 = vmatprep.subr.mxu0 0.0
      %4830 = vmatpush1.msra.mxu0 0.0
      %4831 = vmatprep.subr.mxu0 0.0
      %4832 = vmatpush1.msra.mxu0 0.0
      %4833 = vmatprep.subr.mxu0 0.0
      %4834 = vmatpush1.msra.mxu0 0.0
      %4835 = vmatprep.subr.mxu0 0.0
      %4836 = vmatpush1.msra.mxu0 0.0
      %4837 = vmatprep.subr.mxu0 0.0
      %4838 = vmatpush1.msra.mxu0 0.0
      %4839 = vmatprep.subr.mxu0 0.0
      %4840 = vmatpush1.msra.mxu0 0.0
      %4841 = vmatprep.subr.mxu0 0.0
      %4842 = vmatpush1.msra.mxu0 0.0
      %4843 = vmatprep.subr.mxu0 0.0
      %4844 = vmatpush1.msra.mxu0 0.0
      %4845 = vmatprep.subr.mxu0 0.0
      %4846 = vmatpush1.msra.mxu0 0.0
      %4847 = vmatprep.subr.mxu0 0.0
      %4848 = vmatpush1.msra.mxu0 0.0
      %4849 = vmatprep.subr.mxu0 0.0
      %4850 = vmatpush1.msra.mxu0 0.0
      %4851 = vmatprep.subr.mxu0 0.0
      %4852 = vmatpush1.msra.mxu0 0.0
      %4853 = vmatprep.subr.mxu0 0.0
      %4854 = vmatpush1.msra.mxu0 0.0
      %4855 = vmatprep.subr.mxu0 0.0
      %4856 = vmatpush1.msra.mxu0 0.0
      %4857 = vmatprep.subr.mxu0 0.0
      %4858 = vmatpush1.msra.mxu0 0.0
      %4859 = vmatprep.subr.mxu0 0.0
      %4860 = vmatpush1.msra.mxu0 0.0
      %4861 = vmatprep.subr.mxu0 0.0
      %4862 = vmatpush1.msra.mxu0 0.0
      %4863 = vmatprep.subr.mxu0 0.0
      %4864 = vmatpush1.msra.mxu0 0.0
      %4865 = vmatprep.mubr.f32.mxu0 0.0
      %4866 = vmatmul.mubr.f32.gmra.mrb[0].mxu0 %v4568
      %v4867 = vpop.f32.mrb[0].mxu0
      %v4868 = vadd.f32 0.0, %v4867
      %v4869 = vpop.f32.mrb[0].mxu0
      %4870 = vmatprep.mubr.f32.mxu0 0.0
      %4871 = vmatmul.mubr.f32.gmra.mrb[0].mxu0 %v4571
      %v4872 = vpop.f32.mrb[0].mxu0
      %v4873 = vadd.f32 0.0, %v4872
      %v4874 = vpop.f32.mrb[0].mxu0
      %4875 = vmatprep.mubr.f32.mxu0 0.0
      %4876 = vmatmul.mubr.f32.gmra.mrb[0].mxu0 %v4574
      %v4877 = vpop.f32.mrb[0].mxu0
      %v4878 = vadd.f32 0.0, %v4877
      %v4879 = vpop.f32.mrb[0].mxu0
      %4880 = vmatprep.mubr.f32.mxu0 0.0
      %4881 = vmatmul.mubr.f32.gmra.mrb[0].mxu0 %v4577
      %v4882 = vpop.f32.mrb[0].mxu0
      %v4883 = vadd.f32 0.0, %v4882
      %v4884 = vpop.f32.mrb[0].mxu0
      %4885 = vmatprep.mubr.f32.mxu0 0.0
      %4886 = vmatmul.mubr.f32.gmra.mrb[0].mxu0 %v4580
      %v4887 = vpop.f32.mrb[0].mxu0
      %v4888 = vadd.f32 0.0, %v4887
      %v4889 = vpop.f32.mrb[0].mxu0
      %4890 = vmatprep.mubr.f32.mxu0 0.0
      %4891 = vmatmul.mubr.f32.gmra.mrb[0].mxu0 %v4583
      %v4892 = vpop.f32.mrb[0].mxu0
      %v4893 = vadd.f32 0.0, %v4892
      %v4894 = vpop.f32.mrb[0].mxu0
      %4895 = vmatprep.mubr.f32.mxu0 0.0
      %4896 = vmatmul.mubr.f32.gmra.mrb[0].mxu0 %v4586
      %v4897 = vpop.f32.mrb[0].mxu0
      %v4898 = vadd.f32 0.0, %v4897
      %v4899 = vpop.f32.mrb[0].mxu0
      %4900 = vmatprep.mubr.f32.mxu0 0.0
      %4901 = vmatmul.mubr.f32.gmra.mrb[0].mxu0 %v4589
      %v4902 = vpop.f32.mrb[0].mxu0
      %v4903 = vadd.f32 0.0, %v4902
      %v4904 = vpop.f32.mrb[0].mxu0
      %4905 = vmatprep.mubr.f32.mxu0 0.0
      %4906 = vmatmul.mubr.f32.gmra.mrb[0].mxu0 %v4592
      %v4907 = vpop.f32.mrb[0].mxu0
      %v4908 = vadd.f32 0.0, %v4907
      %v4909 = vpop.f32.mrb[0].mxu0
      %4910 = vmatprep.mubr.f32.mxu0 0.0
      %4911 = vmatmul.mubr.f32.gmra.mrb[0].mxu0 %v4595
      %v4912 = vpop.f32.mrb[0].mxu0
      %v4913 = vadd.f32 0.0, %v4912
      %v4914 = vpop.f32.mrb[0].mxu0
      %4915 = vmatprep.mubr.f32.mxu0 0.0
      %4916 = vmatmul.mubr.f32.gmra.mrb[0].mxu0 %v4598
      %v4917 = vpop.f32.mrb[0].mxu0
      %v4918 = vadd.f32 0.0, %v4917
      %v4919 = vpop.f32.mrb[0].mxu0
      %4920 = vmatprep.mubr.f32.mxu0 0.0
      %4921 = vmatmul.mubr.f32.gmra.mrb[0].mxu0 %v4601
      %v4922 = vpop.f32.mrb[0].mxu0
      %v4923 = vadd.f32 0.0, %v4922
      %v4924 = vpop.f32.mrb[0].mxu0
      %4925 = vmatprep.mubr.f32.mxu0 0.0
      %4926 = vmatmul.mubr.f32.gmra.mrb[0].mxu0 %v4604
      %v4927 = vpop.f32.mrb[0].mxu0
      %v4928 = vadd.f32 0.0, %v4927
      %v4929 = vpop.f32.mrb[0].mxu0
      %4930 = vmatprep.mubr.f32.mxu0 0.0
      %4931 = vmatmul.mubr.f32.gmra.mrb[0].mxu0 %v4607
      %v4932 = vpop.f32.mrb[0].mxu0
      %v4933 = vadd.f32 0.0, %v4932
      %v4934 = vpop.f32.mrb[0].mxu0
      %4935 = vmatprep.mubr.f32.mxu0 0.0
      %4936 = vmatmul.mubr.f32.gmra.mrb[0].mxu0 %v4610
      %v4937 = vpop.f32.mrb[0].mxu0
      %v4938 = vadd.f32 0.0, %v4937
      %v4939 = vpop.f32.mrb[0].mxu0
      %4940 = vmatprep.mubr.f32.mxu0 0.0
      %4941 = vmatmul.mubr.f32.gmra.mrb[0].mxu0 %v4613
      %v4942 = vpop.f32.mrb[0].mxu0
      %v4943 = vadd.f32 0.0, %v4942
      %v4944 = vpop.f32.mrb[0].mxu0
      %4945 = vmatprep.mubr.f32.mxu0 0.0
      %4946 = vmatmul.mubr.f32.gmra.mrb[0].mxu0 %v4616
      %v4947 = vpop.f32.mrb[0].mxu0
      %v4948 = vadd.f32 0.0, %v4947
      %v4949 = vpop.f32.mrb[0].mxu0
      %4950 = vmatprep.mubr.f32.mxu0 0.0
      %4951 = vmatmul.mubr.f32.gmra.mrb[0].mxu0 %v4619
      %v4952 = vpop.f32.mrb[0].mxu0
      %v4953 = vadd.f32 0.0, %v4952
      %v4954 = vpop.f32.mrb[0].mxu0
      %4955 = vmatprep.mubr.f32.mxu0 0.0
      %4956 = vmatmul.mubr.f32.gmra.mrb[0].mxu0 %v4622
      %v4957 = vpop.f32.mrb[0].mxu0
      %v4958 = vadd.f32 0.0, %v4957
      %v4959 = vpop.f32.mrb[0].mxu0
      %4960 = vmatprep.mubr.f32.mxu0 0.0
      %4961 = vmatmul.mubr.f32.gmra.mrb[0].mxu0 %v4625
      %v4962 = vpop.f32.mrb[0].mxu0
      %v4963 = vadd.f32 0.0, %v4962
      %v4964 = vpop.f32.mrb[0].mxu0
      %4965 = vmatprep.mubr.f32.mxu0 0.0
      %4966 = vmatmul.mubr.f32.gmra.mrb[0].mxu0 %v4628
      %v4967 = vpop.f32.mrb[0].mxu0
      %v4968 = vadd.f32 0.0, %v4967
      %v4969 = vpop.f32.mrb[0].mxu0
      %4970 = vmatprep.mubr.f32.mxu0 0.0
      %4971 = vmatmul.mubr.f32.gmra.mrb[0].mxu0 %v4631
      %v4972 = vpop.f32.mrb[0].mxu0
      %v4973 = vadd.f32 0.0, %v4972
      %v4974 = vpop.f32.mrb[0].mxu0
      %4975 = vmatprep.mubr.f32.mxu0 0.0
      %4976 = vmatmul.mubr.f32.gmra.mrb[0].mxu0 %v4634
      %v4977 = vpop.f32.mrb[0].mxu0
      %v4978 = vadd.f32 0.0, %v4977
      %v4979 = vpop.f32.mrb[0].mxu0
      %4980 = vmatprep.mubr.f32.mxu0 0.0
      %4981 = vmatmul.mubr.f32.gmra.mrb[0].mxu0 %v4637
      %v4982 = vpop.f32.mrb[0].mxu0
      %v4983 = vadd.f32 0.0, %v4982
      %v4984 = vpop.f32.mrb[0].mxu0
      %4985 = vmatprep.mubr.f32.mxu0 0.0
      %4986 = vmatmul.mubr.f32.gmra.mrb[0].mxu0 %v4640
      %v4987 = vpop.f32.mrb[0].mxu0
      %v4988 = vadd.f32 0.0, %v4987
      %v4989 = vpop.f32.mrb[0].mxu0
      %4990 = vmatprep.mubr.f32.mxu0 0.0
      %4991 = vmatmul.mubr.f32.gmra.mrb[0].mxu0 %v4643
      %v4992 = vpop.f32.mrb[0].mxu0
      %v4993 = vadd.f32 0.0, %v4992
      %v4994 = vpop.f32.mrb[0].mxu0
      %4995 = vmatprep.mubr.f32.mxu0 0.0
      %4996 = vmatmul.mubr.f32.gmra.mrb[0].mxu0 %v4646
      %v4997 = vpop.f32.mrb[0].mxu0
      %v4998 = vadd.f32 0.0, %v4997
      %v4999 = vpop.f32.mrb[0].mxu0
      %5000 = vmatprep.mubr.f32.mxu0 0.0
      %5001 = vmatmul.mubr.f32.gmra.mrb[0].mxu0 %v4649
      %v5002 = vpop.f32.mrb[0].mxu0
      %v5003 = vadd.f32 0.0, %v5002
      %v5004 = vpop.f32.mrb[0].mxu0
      %5005 = vmatprep.mubr.f32.mxu0 0.0
      %5006 = vmatmul.mubr.f32.gmra.mrb[0].mxu0 %v4652
      %v5007 = vpop.f32.mrb[0].mxu0
      %v5008 = vadd.f32 0.0, %v5007
      %v5009 = vpop.f32.mrb[0].mxu0
      %5010 = vmatprep.mubr.f32.mxu0 0.0
      %5011 = vmatmul.mubr.f32.gmra.mrb[0].mxu0 %v4655
      %v5012 = vpop.f32.mrb[0].mxu0
      %v5013 = vadd.f32 0.0, %v5012
      %v5014 = vpop.f32.mrb[0].mxu0
      %5015 = vmatprep.mubr.f32.mxu0 0.0
      %5016 = vmatmul.mubr.f32.gmra.mrb[0].mxu0 %v4658
      %v5017 = vpop.f32.mrb[0].mxu0
      %v5018 = vadd.f32 0.0, %v5017
      %v5019 = vpop.f32.mrb[0].mxu0
      %5020 = vmatprep.mubr.f32.mxu0 0.0
      %5021 = vmatmul.mubr.f32.gmra.mrb[0].mxu0 %v4661
      %v5022 = vpop.f32.mrb[0].mxu0
      %v5023 = vadd.f32 0.0, %v5022
      %v5024 = vpop.f32.mrb[0].mxu0
      %5025 = vmatprep.mubr.f32.mxu0 0.0
      %5026 = vmatmul.mubr.f32.gmra.mrb[0].mxu0 %v4664
      %v5027 = vpop.f32.mrb[0].mxu0
      %v5028 = vadd.f32 0.0, %v5027
      %v5029 = vpop.f32.mrb[0].mxu0
      %5030 = vmatprep.mubr.f32.mxu0 0.0
      %5031 = vmatmul.mubr.f32.gmra.mrb[0].mxu0 %v4667
      %v5032 = vpop.f32.mrb[0].mxu0
      %v5033 = vadd.f32 0.0, %v5032
      %v5034 = vpop.f32.mrb[0].mxu0
      %5035 = vmatprep.mubr.f32.mxu0 0.0
      %5036 = vmatmul.mubr.f32.gmra.mrb[0].mxu0 %v4670
      %v5037 = vpop.f32.mrb[0].mxu0
      %v5038 = vadd.f32 0.0, %v5037
      %v5039 = vpop.f32.mrb[0].mxu0
      %5040 = vmatprep.mubr.f32.mxu0 0.0
      %5041 = vmatmul.mubr.f32.gmra.mrb[0].mxu0 %v4673
      %v5042 = vpop.f32.mrb[0].mxu0
      %v5043 = vadd.f32 0.0, %v5042
      %v5044 = vpop.f32.mrb[0].mxu0
      %5045 = vmatprep.mubr.f32.mxu0 0.0
      %5046 = vmatmul.mubr.f32.gmra.mrb[0].mxu0 %v4676
      %v5047 = vpop.f32.mrb[0].mxu0
      %v5048 = vadd.f32 0.0, %v5047
      %v5049 = vpop.f32.mrb[0].mxu0
      %5050 = vmatprep.mubr.f32.mxu0 0.0
      %5051 = vmatmul.mubr.f32.gmra.mrb[0].mxu0 %v4679
      %v5052 = vpop.f32.mrb[0].mxu0
      %v5053 = vadd.f32 0.0, %v5052
      %v5054 = vpop.f32.mrb[0].mxu0
      %5055 = vmatprep.mubr.f32.mxu0 0.0
      %5056 = vmatmul.mubr.f32.gmra.mrb[0].mxu0 %v4682
      %v5057 = vpop.f32.mrb[0].mxu0
      %v5058 = vadd.f32 0.0, %v5057
      %v5059 = vpop.f32.mrb[0].mxu0
      %5060 = vmatprep.mubr.f32.mxu0 0.0
      %5061 = vmatmul.mubr.f32.gmra.mrb[0].mxu0 %v4685
      %v5062 = vpop.f32.mrb[0].mxu0
      %v5063 = vadd.f32 0.0, %v5062
      %v5064 = vpop.f32.mrb[0].mxu0
      %5065 = vmatprep.mubr.f32.mxu0 0.0
      %5066 = vmatmul.mubr.f32.gmra.mrb[0].mxu0 %v4688
      %v5067 = vpop.f32.mrb[0].mxu0
      %v5068 = vadd.f32 0.0, %v5067
      %v5069 = vpop.f32.mrb[0].mxu0
      %5070 = vmatprep.mubr.f32.mxu0 0.0
      %5071 = vmatmul.mubr.f32.gmra.mrb[0].mxu0 %v4691
      %v5072 = vpop.f32.mrb[0].mxu0
      %v5073 = vadd.f32 0.0, %v5072
      %v5074 = vpop.f32.mrb[0].mxu0
      %5075 = vmatprep.mubr.f32.mxu0 0.0
      %5076 = vmatmul.mubr.f32.gmra.mrb[0].mxu0 %v4694
      %v5077 = vpop.f32.mrb[0].mxu0
      %v5078 = vadd.f32 0.0, %v5077
      %v5079 = vpop.f32.mrb[0].mxu0
      %5080 = vmatprep.mubr.f32.mxu0 0.0
      %5081 = vmatmul.mubr.f32.gmra.mrb[0].mxu0 %v4697
      %v5082 = vpop.f32.mrb[0].mxu0
      %v5083 = vadd.f32 0.0, %v5082
      %v5084 = vpop.f32.mrb[0].mxu0
      %5085 = vmatprep.mubr.f32.mxu0 0.0
      %5086 = vmatmul.mubr.f32.gmra.mrb[0].mxu0 %v4700
      %v5087 = vpop.f32.mrb[0].mxu0
      %v5088 = vadd.f32 0.0, %v5087
      %v5089 = vpop.f32.mrb[0].mxu0
      %5090 = vmatprep.mubr.f32.mxu0 0.0
      %5091 = vmatmul.mubr.f32.gmra.mrb[0].mxu0 %v4703
      %v5092 = vpop.f32.mrb[0].mxu0
      %v5093 = vadd.f32 0.0, %v5092
      %v5094 = vpop.f32.mrb[0].mxu0
      %5095 = vmatprep.mubr.f32.mxu0 0.0
      %5096 = vmatmul.mubr.f32.gmra.mrb[0].mxu0 %v4706
      %v5097 = vpop.f32.mrb[0].mxu0
      %v5098 = vadd.f32 0.0, %v5097
      %v5099 = vpop.f32.mrb[0].mxu0
      %5100 = vmatprep.mubr.f32.mxu0 0.0
      %5101 = vmatmul.mubr.f32.gmra.mrb[0].mxu0 %v4709
      %v5102 = vpop.f32.mrb[0].mxu0
      %v5103 = vadd.f32 0.0, %v5102
      %v5104 = vpop.f32.mrb[0].mxu0
      %5105 = vmatprep.mubr.f32.mxu0 0.0
      %5106 = vmatmul.mubr.f32.gmra.mrb[0].mxu0 %v4712
      %v5107 = vpop.f32.mrb[0].mxu0
      %v5108 = vadd.f32 0.0, %v5107
      %v5109 = vpop.f32.mrb[0].mxu0
      %5110 = vmatprep.mubr.f32.mxu0 0.0
      %5111 = vmatmul.mubr.f32.gmra.mrb[0].mxu0 %v4715
      %v5112 = vpop.f32.mrb[0].mxu0
      %v5113 = vadd.f32 0.0, %v5112
      %v5114 = vpop.f32.mrb[0].mxu0
      %5115 = vmatprep.mubr.f32.mxu0 0.0
      %5116 = vmatmul.mubr.f32.gmra.mrb[0].mxu0 %v4718
      %v5117 = vpop.f32.mrb[0].mxu0
      %v5118 = vadd.f32 0.0, %v5117
      %v5119 = vpop.f32.mrb[0].mxu0
      %5120 = vmatprep.mubr.f32.mxu0 0.0
      %5121 = vmatmul.mubr.f32.gmra.mrb[0].mxu0 %v4721
      %v5122 = vpop.f32.mrb[0].mxu0
      %v5123 = vadd.f32 0.0, %v5122
      %v5124 = vpop.f32.mrb[0].mxu0
      %5125 = vmatprep.mubr.f32.mxu0 0.0
      %5126 = vmatmul.mubr.f32.gmra.mrb[0].mxu0 %v4724
      %v5127 = vpop.f32.mrb[0].mxu0
      %v5128 = vadd.f32 0.0, %v5127
      %v5129 = vpop.f32.mrb[0].mxu0
      %5130 = vmatprep.mubr.f32.mxu0 0.0
      %5131 = vmatmul.mubr.f32.gmra.mrb[0].mxu0 %v4727
      %v5132 = vpop.f32.mrb[0].mxu0
      %v5133 = vadd.f32 0.0, %v5132
      %v5134 = vpop.f32.mrb[0].mxu0
      %5135 = vmatprep.mubr.f32.mxu0 0.0
      %5136 = vmatmul.mubr.f32.gmra.mrb[0].mxu0 %v4730
      %v5137 = vpop.f32.mrb[0].mxu0
      %v5138 = vadd.f32 0.0, %v5137
      %v5139 = vpop.f32.mrb[0].mxu0
      %5140 = vmatprep.mubr.f32.mxu0 0.0
      %5141 = vmatmul.mubr.f32.gmra.mrb[0].mxu0 %v4733
      %v5142 = vpop.f32.mrb[0].mxu0
      %v5143 = vadd.f32 0.0, %v5142
      %v5144 = vpop.f32.mrb[0].mxu0
      %5145 = vmatprep.mubr.f32.mxu0 0.0
      %5146 = vmatmul.mubr.f32.gmra.mrb[0].mxu0 %v4736
      %v5147 = vpop.f32.mrb[0].mxu0
      %v5148 = vadd.f32 0.0, %v5147
      %v5149 = vpop.f32.mrb[0].mxu0
      %5150 = vmatprep.mubr.f32.mxu0 0.0
      %5151 = vmatmul.mubr.f32.gmra.mrb[0].mxu0 %v4739
      %v5152 = vpop.f32.mrb[0].mxu0
      %v5153 = vadd.f32 0.0, %v5152
      %v5154 = vpop.f32.mrb[0].mxu0
      %5155 = vmatprep.mubr.f32.mxu0 0.0
      %5156 = vmatmul.mubr.f32.gmra.mrb[0].mxu0 %v4742
      %v5157 = vpop.f32.mrb[0].mxu0
      %v5158 = vadd.f32 0.0, %v5157
      %v5159 = vpop.f32.mrb[0].mxu0
      %5160 = vmatprep.mubr.f32.mxu0 0.0
      %5161 = vmatmul.mubr.f32.gmra.mrb[0].mxu0 %v4745
      %v5162 = vpop.f32.mrb[0].mxu0
      %v5163 = vadd.f32 0.0, %v5162
      %v5164 = vpop.f32.mrb[0].mxu0
      %5165 = vmatprep.mubr.f32.mxu0 0.0
      %5166 = vmatmul.mubr.f32.gmra.mrb[0].mxu0 %v4748
      %v5167 = vpop.f32.mrb[0].mxu0
      %v5168 = vadd.f32 0.0, %v5167
      %v5169 = vpop.f32.mrb[0].mxu0
      %5170 = vmatprep.mubr.f32.mxu0 0.0
      %5171 = vmatmul.mubr.f32.gmra.mrb[0].mxu0 %v4751
      %v5172 = vpop.f32.mrb[0].mxu0
      %v5173 = vadd.f32 0.0, %v5172
      %v5174 = vpop.f32.mrb[0].mxu0
      %5175 = vmatprep.mubr.f32.mxu0 0.0
      %5176 = vmatmul.mubr.f32.gmra.mrb[0].mxu0 %v4754
      %v5177 = vpop.f32.mrb[0].mxu0
      %v5178 = vadd.f32 0.0, %v5177
      %v5179 = vpop.f32.mrb[0].mxu0
      %5180 = vmatprep.mubr.f32.mxu0 0.0
      %5181 = vmatmul.mubr.f32.gmra.mrb[0].mxu0 %v4757
      %v5182 = vpop.f32.mrb[0].mxu0
      %v5183 = vadd.f32 0.0, %v5182
      %v5184 = vpop.f32.mrb[0].mxu0
      %5185 = vmatprep.mubr.f32.mxu0 0.0
      %5186 = vmatmul.mubr.f32.gmra.mrb[0].mxu0 %v4760
      %v5187 = vpop.f32.mrb[0].mxu0
      %v5188 = vadd.f32 0.0, %v5187
      %v5189 = vpop.f32.mrb[0].mxu0
      %5190 = vmatprep.mubr.f32.mxu0 0.0
      %5191 = vmatmul.mubr.f32.gmra.mrb[0].mxu0 %v4763
      %v5192 = vpop.f32.mrb[0].mxu0
      %v5193 = vadd.f32 0.0, %v5192
      %v5194 = vpop.f32.mrb[0].mxu0
      %5195 = vmatprep.mubr.f32.mxu0 0.0
      %5196 = vmatmul.mubr.f32.gmra.mrb[0].mxu0 %v4766
      %v5197 = vpop.f32.mrb[0].mxu0
      %v5198 = vadd.f32 0.0, %v5197
      %v5199 = vpop.f32.mrb[0].mxu0
      %5200 = vmatprep.mubr.f32.mxu0 0.0
      %5201 = vmatmul.mubr.f32.gmra.mrb[0].mxu0 %v4769
      %v5202 = vpop.f32.mrb[0].mxu0
      %v5203 = vadd.f32 0.0, %v5202
      %v5204 = vpop.f32.mrb[0].mxu0
      %5205 = vmatprep.mubr.f32.mxu0 0.0
      %5206 = vmatmul.mubr.f32.gmra.mrb[0].mxu0 %v4772
      %v5207 = vpop.f32.mrb[0].mxu0
      %v5208 = vadd.f32 0.0, %v5207
      %v5209 = vpop.f32.mrb[0].mxu0
      %5210 = vmatprep.mubr.f32.mxu0 0.0
      %5211 = vmatmul.mubr.f32.gmra.mrb[0].mxu0 %v4775
      %v5212 = vpop.f32.mrb[0].mxu0
      %v5213 = vadd.f32 0.0, %v5212
      %v5214 = vpop.f32.mrb[0].mxu0
      %5215 = vmatprep.mubr.f32.mxu0 0.0
      %5216 = vmatmul.mubr.f32.gmra.mrb[0].mxu0 %v4778
      %v5217 = vpop.f32.mrb[0].mxu0
      %v5218 = vadd.f32 0.0, %v5217
      %v5219 = vpop.f32.mrb[0].mxu0
      %5220 = vmatprep.mubr.f32.mxu0 0.0
      %5221 = vmatmul.mubr.f32.gmra.mrb[0].mxu0 %v4781
      %v5222 = vpop.f32.mrb[0].mxu0
      %v5223 = vadd.f32 0.0, %v5222
      %v5224 = vpop.f32.mrb[0].mxu0
      %5225 = vmatprep.mubr.f32.mxu0 0.0
      %5226 = vmatmul.mubr.f32.gmra.mrb[0].mxu0 %v4784
      %v5227 = vpop.f32.mrb[0].mxu0
      %v5228 = vadd.f32 0.0, %v5227
      %v5229 = vpop.f32.mrb[0].mxu0
      %5230 = vmatprep.mubr.f32.mxu0 0.0
      %5231 = vmatmul.mubr.f32.gmra.mrb[0].mxu0 %v4787
      %v5232 = vpop.f32.mrb[0].mxu0
      %v5233 = vadd.f32 0.0, %v5232
      %v5234 = vpop.f32.mrb[0].mxu0
      %5235 = vmatprep.mubr.f32.mxu0 0.0
      %5236 = vmatmul.mubr.f32.gmra.mrb[0].mxu0 %v4790
      %v5237 = vpop.f32.mrb[0].mxu0
      %v5238 = vadd.f32 0.0, %v5237
      %v5239 = vpop.f32.mrb[0].mxu0
      %5240 = vmatprep.mubr.f32.mxu0 0.0
      %5241 = vmatmul.mubr.f32.gmra.mrb[0].mxu0 %v4793
      %v5242 = vpop.f32.mrb[0].mxu0
      %v5243 = vadd.f32 0.0, %v5242
      %v5244 = vpop.f32.mrb[0].mxu0
      %5245 = vmatprep.mubr.f32.mxu0 0.0
      %5246 = vmatmul.mubr.f32.gmra.mrb[0].mxu0 %v4796
      %v5247 = vpop.f32.mrb[0].mxu0
      %v5248 = vadd.f32 0.0, %v5247
      %v5249 = vpop.f32.mrb[0].mxu0
      %5250 = vmatprep.mubr.f32.mxu0 0.0
      %5251 = vmatmul.mubr.f32.gmra.mrb[0].mxu0 %v4799
      %v5252 = vpop.f32.mrb[0].mxu0
      %v5253 = vadd.f32 0.0, %v5252
      %v5254 = vpop.f32.mrb[0].mxu0
      %5255 = vdwg.mxu0
      %v5256 = vadd.f32 %v4406, %v4868
      %v5257 = vadd.f32 %v4407, %v4873
      %v5258 = vadd.f32 %v4408, %v4878
      %v5259 = vadd.f32 %v4409, %v4883
      %v5260 = vadd.f32 %v4410, %v4888
      %v5261 = vadd.f32 %v4411, %v4893
      %v5262 = vadd.f32 %v4412, %v4898
      %v5263 = vadd.f32 %v4413, %v4903
      %v5264 = vadd.f32 %v4414, %v4908
      %v5265 = vadd.f32 %v4415, %v4913
      %v5266 = vadd.f32 %v4416, %v4918
      %v5267 = vadd.f32 %v4417, %v4923
      %v5268 = vadd.f32 %v4418, %v4928
      %v5269 = vadd.f32 %v4419, %v4933
      %v5270 = vadd.f32 %v4420, %v4938
      %v5271 = vadd.f32 %v4421, %v4943
      %v5272 = vadd.f32 %v4422, %v4948
      %v5273 = vadd.f32 %v4423, %v4953
      %v5274 = vadd.f32 %v4424, %v4958
      %v5275 = vadd.f32 %v4425, %v4963
      %v5276 = vadd.f32 %v4426, %v4968
      %v5277 = vadd.f32 %v4427, %v4973
      %v5278 = vadd.f32 %v4428, %v4978
      %v5279 = vadd.f32 %v4429, %v4983
      %v5280 = vadd.f32 %v4430, %v4988
      %v5281 = vadd.f32 %v4431, %v4993
      %v5282 = vadd.f32 %v4432, %v4998
      %v5283 = vadd.f32 %v4433, %v5003
      %v5284 = vadd.f32 %v4434, %v5008
      %v5285 = vadd.f32 %v4435, %v5013
      %v5286 = vadd.f32 %v4436, %v5018
      %v5287 = vadd.f32 %v4437, %v5023
      %v5288 = vadd.f32 %v4438, %v5028
      %v5289 = vadd.f32 %v4439, %v5033
      %v5290 = vadd.f32 %v4440, %v5038
      %v5291 = vadd.f32 %v4441, %v5043
      %v5292 = vadd.f32 %v4442, %v5048
      %v5293 = vadd.f32 %v4443, %v5053
      %v5294 = vadd.f32 %v4444, %v5058
      %v5295 = vadd.f32 %v4445, %v5063
      %v5296 = vadd.f32 %v4446, %v5068
      %v5297 = vadd.f32 %v4447, %v5073
      %v5298 = vadd.f32 %v4448, %v5078
      %v5299 = vadd.f32 %v4449, %v5083
      %v5300 = vadd.f32 %v4450, %v5088
      %v5301 = vadd.f32 %v4451, %v5093
      %v5302 = vadd.f32 %v4452, %v5098
      %v5303 = vadd.f32 %v4453, %v5103
      %v5304 = vadd.f32 %v4454, %v5108
      %v5305 = vadd.f32 %v4455, %v5113
      %v5306 = vadd.f32 %v4456, %v5118
      %v5307 = vadd.f32 %v4457, %v5123
      %v5308 = vadd.f32 %v4458, %v5128
      %v5309 = vadd.f32 %v4459, %v5133
      %v5310 = vadd.f32 %v4460, %v5138
      %v5311 = vadd.f32 %v4461, %v5143
      %v5312 = vadd.f32 %v4462, %v5148
      %v5313 = vadd.f32 %v4463, %v5153
      %v5314 = vadd.f32 %v4464, %v5158
      %v5315 = vadd.f32 %v4465, %v5163
      %v5316 = vadd.f32 %v4466, %v5168
      %v5317 = vadd.f32 %v4467, %v5173
      %v5318 = vadd.f32 %v4468, %v5178
      %v5319 = vadd.f32 %v4469, %v5183
      %v5320 = vadd.f32 %v4470, %v5188
      %v5321 = vadd.f32 %v4471, %v5193
      %v5322 = vadd.f32 %v4472, %v5198
      %v5323 = vadd.f32 %v4473, %v5203
      %v5324 = vadd.f32 %v4474, %v5208
      %v5325 = vadd.f32 %v4475, %v5213
      %v5326 = vadd.f32 %v4476, %v5218
      %v5327 = vadd.f32 %v4477, %v5223
      %v5328 = vadd.f32 %v4478, %v5228
      %v5329 = vadd.f32 %v4479, %v5233
      %v5330 = vadd.f32 %v4480, %v5238
      %v5331 = vadd.f32 %v4481, %v5243
      %v5332 = vadd.f32 %v4482, %v5248
      %v5333 = vadd.f32 %v4483, %v5253
      %v5334 = vld [vmem:[#allocation2 + $0x1c] sm:$0xff]
      %v5335 = vld [vmem:[#allocation2 + $0x24] sm:$0xff]
      %v5336 = vld [vmem:[#allocation2 + $0x2c] sm:$0xff]
      %v5337 = vld [vmem:[#allocation2 + $0x34] sm:$0xff]
      %v5338 = vld [vmem:[#allocation2 + $0x3c] sm:$0xff]
      %v5339 = vld [vmem:[#allocation2 + $0x44] sm:$0xff]
      %v5340 = vld [vmem:[#allocation2 + $0x4c] sm:$0xff]
      %v5341 = vld [vmem:[#allocation2 + $0x54] sm:$0xff]
      %v5342 = vld [vmem:[#allocation2 + $0x5c] sm:$0xff]
      %v5343 = vld [vmem:[#allocation2 + $0x64] sm:$0xff]
      %v5344 = vld [vmem:[#allocation2 + $0x6c] sm:$0xff]
      %v5345 = vld [vmem:[#allocation2 + $0x74] sm:$0xff]
      %v5346 = vld [vmem:[#allocation2 + $0x7c] sm:$0xff]
      %v5347 = vld [vmem:[#allocation2 + $0x84] sm:$0xff]
      %v5348 = vld [vmem:[#allocation2 + $0x8c] sm:$0xff]
      %v5349 = vld [vmem:[#allocation2 + $0x94] sm:$0xff]
      %v5350 = vld [vmem:[#allocation2 + $0x9c] sm:$0xff]
      %v5351 = vld [vmem:[#allocation2 + $0xa4] sm:$0xff]
      %v5352 = vld [vmem:[#allocation2 + $0xac] sm:$0xff]
      %v5353 = vld [vmem:[#allocation2 + $0xb4] sm:$0xff]
      %v5354 = vld [vmem:[#allocation2 + $0xbc] sm:$0xff]
      %v5355 = vld [vmem:[#allocation2 + $0xc4] sm:$0xff]
      %v5356 = vld [vmem:[#allocation2 + $0xcc] sm:$0xff]
      %v5357 = vld [vmem:[#allocation2 + $0xd4] sm:$0xff]
      %v5358 = vld [vmem:[#allocation2 + $0xdc] sm:$0xff]
      %v5359 = vld [vmem:[#allocation2 + $0xe4] sm:$0xff]
      %v5360 = vld [vmem:[#allocation2 + $0xec] sm:$0xff]
      %v5361 = vld [vmem:[#allocation2 + $0xf4] sm:$0xff]
      %v5362 = vld [vmem:[#allocation2 + $0xfc] sm:$0xff]
      %v5363 = vld [vmem:[#allocation2 + $0x104] sm:$0xff]
      %v5364 = vld [vmem:[#allocation2 + $0x10c] sm:$0xff]
      %v5365 = vld [vmem:[#allocation2 + $0x114] sm:$0xff]
      %v5366 = vld [vmem:[#allocation2 + $0x11c] sm:$0xff]
      %v5367 = vld [vmem:[#allocation2 + $0x124] sm:$0xff]
      %v5368 = vld [vmem:[#allocation2 + $0x12c] sm:$0xff]
      %v5369 = vld [vmem:[#allocation2 + $0x134] sm:$0xff]
      %v5370 = vld [vmem:[#allocation2 + $0x13c] sm:$0xff]
      %v5371 = vld [vmem:[#allocation2 + $0x144] sm:$0xff]
      %v5372 = vld [vmem:[#allocation2 + $0x14c] sm:$0xff]
      %v5373 = vld [vmem:[#allocation2 + $0x154] sm:$0xff]
      %v5374 = vld [vmem:[#allocation2 + $0x15c] sm:$0xff]
      %v5375 = vld [vmem:[#allocation2 + $0x164] sm:$0xff]
      %v5376 = vld [vmem:[#allocation2 + $0x16c] sm:$0xff]
      %v5377 = vld [vmem:[#allocation2 + $0x174] sm:$0xff]
      %v5378 = vld [vmem:[#allocation2 + $0x17c] sm:$0xff]
      %v5379 = vld [vmem:[#allocation2 + $0x184] sm:$0xff]
      %v5380 = vld [vmem:[#allocation2 + $0x18c] sm:$0xff]
      %v5381 = vld [vmem:[#allocation2 + $0x194] sm:$0xff]
      %v5382 = vld [vmem:[#allocation2 + $0x19c] sm:$0xff]
      %v5383 = vld [vmem:[#allocation2 + $0x1a4] sm:$0xff]
      %v5384 = vld [vmem:[#allocation2 + $0x1ac] sm:$0xff]
      %v5385 = vld [vmem:[#allocation2 + $0x1b4] sm:$0xff]
      %v5386 = vld [vmem:[#allocation2 + $0x1bc] sm:$0xff]
      %v5387 = vld [vmem:[#allocation2 + $0x1c4] sm:$0xff]
      %v5388 = vld [vmem:[#allocation2 + $0x1cc] sm:$0xff]
      %v5389 = vld [vmem:[#allocation2 + $0x1d4] sm:$0xff]
      %v5390 = vld [vmem:[#allocation2 + $0x1dc] sm:$0xff]
      %v5391 = vld [vmem:[#allocation2 + $0x1e4] sm:$0xff]
      %v5392 = vld [vmem:[#allocation2 + $0x1ec] sm:$0xff]
      %v5393 = vld [vmem:[#allocation2 + $0x1f4] sm:$0xff]
      %v5394 = vld [vmem:[#allocation2 + $0x1fc] sm:$0xff]
      %v5395 = vld [vmem:[#allocation2 + $0x204] sm:$0xff]
      %v5396 = vld [vmem:[#allocation2 + $0x20c] sm:$0xff]
      %v5397 = vld [vmem:[#allocation2 + $0x214] sm:$0xff]
      %v5398 = vld [vmem:[#allocation2 + $0x21c] sm:$0xff]
      %v5399 = vld [vmem:[#allocation2 + $0x224] sm:$0xff]
      %v5400 = vld [vmem:[#allocation2 + $0x22c] sm:$0xff]
      %v5401 = vld [vmem:[#allocation2 + $0x234] sm:$0xff]
      %v5402 = vld [vmem:[#allocation2 + $0x23c] sm:$0xff]
      %v5403 = vld [vmem:[#allocation2 + $0x244] sm:$0xff]
      %v5404 = vld [vmem:[#allocation2 + $0x24c] sm:$0xff]
      %v5405 = vld [vmem:[#allocation2 + $0x254] sm:$0xff]
      %v5406 = vld [vmem:[#allocation2 + $0x25c] sm:$0xff]
      %v5407 = vld [vmem:[#allocation2 + $0x264] sm:$0xff]
      %v5408 = vld [vmem:[#allocation2 + $0x26c] sm:$0xff]
      %v5409 = vld [vmem:[#allocation2 + $0x274] sm:$0xff]
      %v5410 = vld [vmem:[#allocation2 + $0x27c] sm:$0xff]
      %v5411 = vld [vmem:[#allocation2 + $0x284] sm:$0x3f]
      %s5412 = scalar_lea.vmem %s3, 160
      %v5413 = vld [vmem:[%s5412] sm:$0xff]
      %v5414 = vld [vmem:[%s5412 + $0x8] sm:$0xff]
      %v5415 = vld [vmem:[%s5412 + $0x10] sm:$0xff]
      %v5416 = vld [vmem:[%s5412 + $0x18] sm:$0xff]
      %v5418 = vsel %vm1154, %v5334, 0
      %v5421 = vsel %vm1154, %v5335, 0
      %v5424 = vsel %vm1154, %v5336, 0
      %v5427 = vsel %vm1154, %v5337, 0
      %v5430 = vsel %vm1154, %v5338, 0
      %v5433 = vsel %vm1154, %v5339, 0
      %v5436 = vsel %vm1154, %v5340, 0
      %v5439 = vsel %vm1154, %v5341, 0
      %v5442 = vsel %vm1154, %v5342, 0
      %v5445 = vsel %vm1154, %v5343, 0
      %v5448 = vsel %vm1154, %v5344, 0
      %v5451 = vsel %vm1154, %v5345, 0
      %v5454 = vsel %vm1154, %v5346, 0
      %v5457 = vsel %vm1154, %v5347, 0
      %v5460 = vsel %vm1154, %v5348, 0
      %v5463 = vsel %vm1154, %v5349, 0
      %v5466 = vsel %vm1154, %v5350, 0
      %v5469 = vsel %vm1154, %v5351, 0
      %v5472 = vsel %vm1154, %v5352, 0
      %v5475 = vsel %vm1154, %v5353, 0
      %v5478 = vsel %vm1154, %v5354, 0
      %v5481 = vsel %vm1154, %v5355, 0
      %v5484 = vsel %vm1154, %v5356, 0
      %v5487 = vsel %vm1154, %v5357, 0
      %v5490 = vsel %vm1154, %v5358, 0
      %v5493 = vsel %vm1154, %v5359, 0
      %v5496 = vsel %vm1154, %v5360, 0
      %v5499 = vsel %vm1154, %v5361, 0
      %v5502 = vsel %vm1154, %v5362, 0
      %v5505 = vsel %vm1154, %v5363, 0
      %v5508 = vsel %vm1154, %v5364, 0
      %v5511 = vsel %vm1154, %v5365, 0
      %v5514 = vsel %vm1154, %v5366, 0
      %v5517 = vsel %vm1154, %v5367, 0
      %v5520 = vsel %vm1154, %v5368, 0
      %v5523 = vsel %vm1154, %v5369, 0
      %v5526 = vsel %vm1154, %v5370, 0
      %v5529 = vsel %vm1154, %v5371, 0
      %v5532 = vsel %vm1154, %v5372, 0
      %v5535 = vsel %vm1154, %v5373, 0
      %v5538 = vsel %vm1154, %v5374, 0
      %v5541 = vsel %vm1154, %v5375, 0
      %v5544 = vsel %vm1154, %v5376, 0
      %v5547 = vsel %vm1154, %v5377, 0
      %v5550 = vsel %vm1154, %v5378, 0
      %v5553 = vsel %vm1154, %v5379, 0
      %v5556 = vsel %vm1154, %v5380, 0
      %v5559 = vsel %vm1154, %v5381, 0
      %v5562 = vsel %vm1154, %v5382, 0
      %v5565 = vsel %vm1154, %v5383, 0
      %v5568 = vsel %vm1154, %v5384, 0
      %v5571 = vsel %vm1154, %v5385, 0
      %v5574 = vsel %vm1154, %v5386, 0
      %v5577 = vsel %vm1154, %v5387, 0
      %v5580 = vsel %vm1154, %v5388, 0
      %v5583 = vsel %vm1154, %v5389, 0
      %v5586 = vsel %vm1154, %v5390, 0
      %v5589 = vsel %vm1154, %v5391, 0
      %v5592 = vsel %vm1154, %v5392, 0
      %v5595 = vsel %vm1154, %v5393, 0
      %v5598 = vsel %vm1154, %v5394, 0
      %v5601 = vsel %vm1154, %v5395, 0
      %v5604 = vsel %vm1154, %v5396, 0
      %v5607 = vsel %vm1154, %v5397, 0
      %v5610 = vsel %vm1154, %v5398, 0
      %v5613 = vsel %vm1154, %v5399, 0
      %v5616 = vsel %vm1154, %v5400, 0
      %v5619 = vsel %vm1154, %v5401, 0
      %v5622 = vsel %vm1154, %v5402, 0
      %v5625 = vsel %vm1154, %v5403, 0
      %v5628 = vsel %vm1154, %v5404, 0
      %v5631 = vsel %vm1154, %v5405, 0
      %v5634 = vsel %vm1154, %v5406, 0
      %v5637 = vsel %vm1154, %v5407, 0
      %v5640 = vsel %vm1154, %v5408, 0
      %v5643 = vsel %vm1154, %v5409, 0
      %v5646 = vsel %vm1154, %v5410, 0
      %v5649 = vsel %vm1154, %v5411, 0
      %5651 = vmatprep.subr.mxu0 0.0
      %5652 = vmatpush1.msra.mxu0 %v5413
      %5653 = vmatprep.subr.mxu0 0.0
      %5654 = vmatpush1.msra.mxu0 %v5414
      %5655 = vmatprep.subr.mxu0 0.0
      %5656 = vmatpush1.msra.mxu0 %v5415
      %5657 = vmatprep.subr.mxu0 0.0
      %5658 = vmatpush1.msra.mxu0 %v5416
      %5659 = vmatprep.subr.mxu0 0.0
      %5660 = vmatpush1.msra.mxu0 0.0
      %5661 = vmatprep.subr.mxu0 0.0
      %5662 = vmatpush1.msra.mxu0 0.0
      %5663 = vmatprep.subr.mxu0 0.0
      %5664 = vmatpush1.msra.mxu0 0.0
      %5665 = vmatprep.subr.mxu0 0.0
      %5666 = vmatpush1.msra.mxu0 0.0
      %5667 = vmatprep.subr.mxu0 0.0
      %5668 = vmatpush1.msra.mxu0 0.0
      %5669 = vmatprep.subr.mxu0 0.0
      %5670 = vmatpush1.msra.mxu0 0.0
      %5671 = vmatprep.subr.mxu0 0.0
      %5672 = vmatpush1.msra.mxu0 0.0
      %5673 = vmatprep.subr.mxu0 0.0
      %5674 = vmatpush1.msra.mxu0 0.0
      %5675 = vmatprep.subr.mxu0 0.0
      %5676 = vmatpush1.msra.mxu0 0.0
      %5677 = vmatprep.subr.mxu0 0.0
      %5678 = vmatpush1.msra.mxu0 0.0
      %5679 = vmatprep.subr.mxu0 0.0
      %5680 = vmatpush1.msra.mxu0 0.0
      %5681 = vmatprep.subr.mxu0 0.0
      %5682 = vmatpush1.msra.mxu0 0.0
      %5683 = vmatprep.subr.mxu0 0.0
      %5684 = vmatpush1.msra.mxu0 0.0
      %5685 = vmatprep.subr.mxu0 0.0
      %5686 = vmatpush1.msra.mxu0 0.0
      %5687 = vmatprep.subr.mxu0 0.0
      %5688 = vmatpush1.msra.mxu0 0.0
      %5689 = vmatprep.subr.mxu0 0.0
      %5690 = vmatpush1.msra.mxu0 0.0
      %5691 = vmatprep.subr.mxu0 0.0
      %5692 = vmatpush1.msra.mxu0 0.0
      %5693 = vmatprep.subr.mxu0 0.0
      %5694 = vmatpush1.msra.mxu0 0.0
      %5695 = vmatprep.subr.mxu0 0.0
      %5696 = vmatpush1.msra.mxu0 0.0
      %5697 = vmatprep.subr.mxu0 0.0
      %5698 = vmatpush1.msra.mxu0 0.0
      %5699 = vmatprep.subr.mxu0 0.0
      %5700 = vmatpush1.msra.mxu0 0.0
      %5701 = vmatprep.subr.mxu0 0.0
      %5702 = vmatpush1.msra.mxu0 0.0
      %5703 = vmatprep.subr.mxu0 0.0
      %5704 = vmatpush1.msra.mxu0 0.0
      %5705 = vmatprep.subr.mxu0 0.0
      %5706 = vmatpush1.msra.mxu0 0.0
      %5707 = vmatprep.subr.mxu0 0.0
      %5708 = vmatpush1.msra.mxu0 0.0
      %5709 = vmatprep.subr.mxu0 0.0
      %5710 = vmatpush1.msra.mxu0 0.0
      %5711 = vmatprep.subr.mxu0 0.0
      %5712 = vmatpush1.msra.mxu0 0.0
      %5713 = vmatprep.subr.mxu0 0.0
      %5714 = vmatpush1.msra.mxu0 0.0
      %5715 = vmatprep.mubr.f32.mxu0 0.0
      %5716 = vmatmul.mubr.f32.gmra.mrb[0].mxu0 %v5418
      %v5717 = vpop.f32.mrb[0].mxu0
      %v5718 = vadd.f32 0.0, %v5717
      %v5719 = vpop.f32.mrb[0].mxu0
      %5720 = vmatprep.mubr.f32.mxu0 0.0
      %5721 = vmatmul.mubr.f32.gmra.mrb[0].mxu0 %v5421
      %v5722 = vpop.f32.mrb[0].mxu0
      %v5723 = vadd.f32 0.0, %v5722
      %v5724 = vpop.f32.mrb[0].mxu0
      %5725 = vmatprep.mubr.f32.mxu0 0.0
      %5726 = vmatmul.mubr.f32.gmra.mrb[0].mxu0 %v5424
      %v5727 = vpop.f32.mrb[0].mxu0
      %v5728 = vadd.f32 0.0, %v5727
      %v5729 = vpop.f32.mrb[0].mxu0
      %5730 = vmatprep.mubr.f32.mxu0 0.0
      %5731 = vmatmul.mubr.f32.gmra.mrb[0].mxu0 %v5427
      %v5732 = vpop.f32.mrb[0].mxu0
      %v5733 = vadd.f32 0.0, %v5732
      %v5734 = vpop.f32.mrb[0].mxu0
      %5735 = vmatprep.mubr.f32.mxu0 0.0
      %5736 = vmatmul.mubr.f32.gmra.mrb[0].mxu0 %v5430
      %v5737 = vpop.f32.mrb[0].mxu0
      %v5738 = vadd.f32 0.0, %v5737
      %v5739 = vpop.f32.mrb[0].mxu0
      %5740 = vmatprep.mubr.f32.mxu0 0.0
      %5741 = vmatmul.mubr.f32.gmra.mrb[0].mxu0 %v5433
      %v5742 = vpop.f32.mrb[0].mxu0
      %v5743 = vadd.f32 0.0, %v5742
      %v5744 = vpop.f32.mrb[0].mxu0
      %5745 = vmatprep.mubr.f32.mxu0 0.0
      %5746 = vmatmul.mubr.f32.gmra.mrb[0].mxu0 %v5436
      %v5747 = vpop.f32.mrb[0].mxu0
      %v5748 = vadd.f32 0.0, %v5747
      %v5749 = vpop.f32.mrb[0].mxu0
      %5750 = vmatprep.mubr.f32.mxu0 0.0
      %5751 = vmatmul.mubr.f32.gmra.mrb[0].mxu0 %v5439
      %v5752 = vpop.f32.mrb[0].mxu0
      %v5753 = vadd.f32 0.0, %v5752
      %v5754 = vpop.f32.mrb[0].mxu0
      %5755 = vmatprep.mubr.f32.mxu0 0.0
      %5756 = vmatmul.mubr.f32.gmra.mrb[0].mxu0 %v5442
      %v5757 = vpop.f32.mrb[0].mxu0
      %v5758 = vadd.f32 0.0, %v5757
      %v5759 = vpop.f32.mrb[0].mxu0
      %5760 = vmatprep.mubr.f32.mxu0 0.0
      %5761 = vmatmul.mubr.f32.gmra.mrb[0].mxu0 %v5445
      %v5762 = vpop.f32.mrb[0].mxu0
      %v5763 = vadd.f32 0.0, %v5762
      %v5764 = vpop.f32.mrb[0].mxu0
      %5765 = vmatprep.mubr.f32.mxu0 0.0
      %5766 = vmatmul.mubr.f32.gmra.mrb[0].mxu0 %v5448
      %v5767 = vpop.f32.mrb[0].mxu0
      %v5768 = vadd.f32 0.0, %v5767
      %v5769 = vpop.f32.mrb[0].mxu0
      %5770 = vmatprep.mubr.f32.mxu0 0.0
      %5771 = vmatmul.mubr.f32.gmra.mrb[0].mxu0 %v5451
      %v5772 = vpop.f32.mrb[0].mxu0
      %v5773 = vadd.f32 0.0, %v5772
      %v5774 = vpop.f32.mrb[0].mxu0
      %5775 = vmatprep.mubr.f32.mxu0 0.0
      %5776 = vmatmul.mubr.f32.gmra.mrb[0].mxu0 %v5454
      %v5777 = vpop.f32.mrb[0].mxu0
      %v5778 = vadd.f32 0.0, %v5777
      %v5779 = vpop.f32.mrb[0].mxu0
      %5780 = vmatprep.mubr.f32.mxu0 0.0
      %5781 = vmatmul.mubr.f32.gmra.mrb[0].mxu0 %v5457
      %v5782 = vpop.f32.mrb[0].mxu0
      %v5783 = vadd.f32 0.0, %v5782
      %v5784 = vpop.f32.mrb[0].mxu0
      %5785 = vmatprep.mubr.f32.mxu0 0.0
      %5786 = vmatmul.mubr.f32.gmra.mrb[0].mxu0 %v5460
      %v5787 = vpop.f32.mrb[0].mxu0
      %v5788 = vadd.f32 0.0, %v5787
      %v5789 = vpop.f32.mrb[0].mxu0
      %5790 = vmatprep.mubr.f32.mxu0 0.0
      %5791 = vmatmul.mubr.f32.gmra.mrb[0].mxu0 %v5463
      %v5792 = vpop.f32.mrb[0].mxu0
      %v5793 = vadd.f32 0.0, %v5792
      %v5794 = vpop.f32.mrb[0].mxu0
      %5795 = vmatprep.mubr.f32.mxu0 0.0
      %5796 = vmatmul.mubr.f32.gmra.mrb[0].mxu0 %v5466
      %v5797 = vpop.f32.mrb[0].mxu0
      %v5798 = vadd.f32 0.0, %v5797
      %v5799 = vpop.f32.mrb[0].mxu0
      %5800 = vmatprep.mubr.f32.mxu0 0.0
      %5801 = vmatmul.mubr.f32.gmra.mrb[0].mxu0 %v5469
      %v5802 = vpop.f32.mrb[0].mxu0
      %v5803 = vadd.f32 0.0, %v5802
      %v5804 = vpop.f32.mrb[0].mxu0
      %5805 = vmatprep.mubr.f32.mxu0 0.0
      %5806 = vmatmul.mubr.f32.gmra.mrb[0].mxu0 %v5472
      %v5807 = vpop.f32.mrb[0].mxu0
      %v5808 = vadd.f32 0.0, %v5807
      %v5809 = vpop.f32.mrb[0].mxu0
      %5810 = vmatprep.mubr.f32.mxu0 0.0
      %5811 = vmatmul.mubr.f32.gmra.mrb[0].mxu0 %v5475
      %v5812 = vpop.f32.mrb[0].mxu0
      %v5813 = vadd.f32 0.0, %v5812
      %v5814 = vpop.f32.mrb[0].mxu0
      %5815 = vmatprep.mubr.f32.mxu0 0.0
      %5816 = vmatmul.mubr.f32.gmra.mrb[0].mxu0 %v5478
      %v5817 = vpop.f32.mrb[0].mxu0
      %v5818 = vadd.f32 0.0, %v5817
      %v5819 = vpop.f32.mrb[0].mxu0
      %5820 = vmatprep.mubr.f32.mxu0 0.0
      %5821 = vmatmul.mubr.f32.gmra.mrb[0].mxu0 %v5481
      %v5822 = vpop.f32.mrb[0].mxu0
      %v5823 = vadd.f32 0.0, %v5822
      %v5824 = vpop.f32.mrb[0].mxu0
      %5825 = vmatprep.mubr.f32.mxu0 0.0
      %5826 = vmatmul.mubr.f32.gmra.mrb[0].mxu0 %v5484
      %v5827 = vpop.f32.mrb[0].mxu0
      %v5828 = vadd.f32 0.0, %v5827
      %v5829 = vpop.f32.mrb[0].mxu0
      %5830 = vmatprep.mubr.f32.mxu0 0.0
      %5831 = vmatmul.mubr.f32.gmra.mrb[0].mxu0 %v5487
      %v5832 = vpop.f32.mrb[0].mxu0
      %v5833 = vadd.f32 0.0, %v5832
      %v5834 = vpop.f32.mrb[0].mxu0
      %5835 = vmatprep.mubr.f32.mxu0 0.0
      %5836 = vmatmul.mubr.f32.gmra.mrb[0].mxu0 %v5490
      %v5837 = vpop.f32.mrb[0].mxu0
      %v5838 = vadd.f32 0.0, %v5837
      %v5839 = vpop.f32.mrb[0].mxu0
      %5840 = vmatprep.mubr.f32.mxu0 0.0
      %5841 = vmatmul.mubr.f32.gmra.mrb[0].mxu0 %v5493
      %v5842 = vpop.f32.mrb[0].mxu0
      %v5843 = vadd.f32 0.0, %v5842
      %v5844 = vpop.f32.mrb[0].mxu0
      %5845 = vmatprep.mubr.f32.mxu0 0.0
      %5846 = vmatmul.mubr.f32.gmra.mrb[0].mxu0 %v5496
      %v5847 = vpop.f32.mrb[0].mxu0
      %v5848 = vadd.f32 0.0, %v5847
      %v5849 = vpop.f32.mrb[0].mxu0
      %5850 = vmatprep.mubr.f32.mxu0 0.0
      %5851 = vmatmul.mubr.f32.gmra.mrb[0].mxu0 %v5499
      %v5852 = vpop.f32.mrb[0].mxu0
      %v5853 = vadd.f32 0.0, %v5852
      %v5854 = vpop.f32.mrb[0].mxu0
      %5855 = vmatprep.mubr.f32.mxu0 0.0
      %5856 = vmatmul.mubr.f32.gmra.mrb[0].mxu0 %v5502
      %v5857 = vpop.f32.mrb[0].mxu0
      %v5858 = vadd.f32 0.0, %v5857
      %v5859 = vpop.f32.mrb[0].mxu0
      %5860 = vmatprep.mubr.f32.mxu0 0.0
      %5861 = vmatmul.mubr.f32.gmra.mrb[0].mxu0 %v5505
      %v5862 = vpop.f32.mrb[0].mxu0
      %v5863 = vadd.f32 0.0, %v5862
      %v5864 = vpop.f32.mrb[0].mxu0
      %5865 = vmatprep.mubr.f32.mxu0 0.0
      %5866 = vmatmul.mubr.f32.gmra.mrb[0].mxu0 %v5508
      %v5867 = vpop.f32.mrb[0].mxu0
      %v5868 = vadd.f32 0.0, %v5867
      %v5869 = vpop.f32.mrb[0].mxu0
      %5870 = vmatprep.mubr.f32.mxu0 0.0
      %5871 = vmatmul.mubr.f32.gmra.mrb[0].mxu0 %v5511
      %v5872 = vpop.f32.mrb[0].mxu0
      %v5873 = vadd.f32 0.0, %v5872
      %v5874 = vpop.f32.mrb[0].mxu0
      %5875 = vmatprep.mubr.f32.mxu0 0.0
      %5876 = vmatmul.mubr.f32.gmra.mrb[0].mxu0 %v5514
      %v5877 = vpop.f32.mrb[0].mxu0
      %v5878 = vadd.f32 0.0, %v5877
      %v5879 = vpop.f32.mrb[0].mxu0
      %5880 = vmatprep.mubr.f32.mxu0 0.0
      %5881 = vmatmul.mubr.f32.gmra.mrb[0].mxu0 %v5517
      %v5882 = vpop.f32.mrb[0].mxu0
      %v5883 = vadd.f32 0.0, %v5882
      %v5884 = vpop.f32.mrb[0].mxu0
      %5885 = vmatprep.mubr.f32.mxu0 0.0
      %5886 = vmatmul.mubr.f32.gmra.mrb[0].mxu0 %v5520
      %v5887 = vpop.f32.mrb[0].mxu0
      %v5888 = vadd.f32 0.0, %v5887
      %v5889 = vpop.f32.mrb[0].mxu0
      %5890 = vmatprep.mubr.f32.mxu0 0.0
      %5891 = vmatmul.mubr.f32.gmra.mrb[0].mxu0 %v5523
      %v5892 = vpop.f32.mrb[0].mxu0
      %v5893 = vadd.f32 0.0, %v5892
      %v5894 = vpop.f32.mrb[0].mxu0
      %5895 = vmatprep.mubr.f32.mxu0 0.0
      %5896 = vmatmul.mubr.f32.gmra.mrb[0].mxu0 %v5526
      %v5897 = vpop.f32.mrb[0].mxu0
      %v5898 = vadd.f32 0.0, %v5897
      %v5899 = vpop.f32.mrb[0].mxu0
      %5900 = vmatprep.mubr.f32.mxu0 0.0
      %5901 = vmatmul.mubr.f32.gmra.mrb[0].mxu0 %v5529
      %v5902 = vpop.f32.mrb[0].mxu0
      %v5903 = vadd.f32 0.0, %v5902
      %v5904 = vpop.f32.mrb[0].mxu0
      %5905 = vmatprep.mubr.f32.mxu0 0.0
      %5906 = vmatmul.mubr.f32.gmra.mrb[0].mxu0 %v5532
      %v5907 = vpop.f32.mrb[0].mxu0
      %v5908 = vadd.f32 0.0, %v5907
      %v5909 = vpop.f32.mrb[0].mxu0
      %5910 = vmatprep.mubr.f32.mxu0 0.0
      %5911 = vmatmul.mubr.f32.gmra.mrb[0].mxu0 %v5535
      %v5912 = vpop.f32.mrb[0].mxu0
      %v5913 = vadd.f32 0.0, %v5912
      %v5914 = vpop.f32.mrb[0].mxu0
      %5915 = vmatprep.mubr.f32.mxu0 0.0
      %5916 = vmatmul.mubr.f32.gmra.mrb[0].mxu0 %v5538
      %v5917 = vpop.f32.mrb[0].mxu0
      %v5918 = vadd.f32 0.0, %v5917
      %v5919 = vpop.f32.mrb[0].mxu0
      %5920 = vmatprep.mubr.f32.mxu0 0.0
      %5921 = vmatmul.mubr.f32.gmra.mrb[0].mxu0 %v5541
      %v5922 = vpop.f32.mrb[0].mxu0
      %v5923 = vadd.f32 0.0, %v5922
      %v5924 = vpop.f32.mrb[0].mxu0
      %5925 = vmatprep.mubr.f32.mxu0 0.0
      %5926 = vmatmul.mubr.f32.gmra.mrb[0].mxu0 %v5544
      %v5927 = vpop.f32.mrb[0].mxu0
      %v5928 = vadd.f32 0.0, %v5927
      %v5929 = vpop.f32.mrb[0].mxu0
      %5930 = vmatprep.mubr.f32.mxu0 0.0
      %5931 = vmatmul.mubr.f32.gmra.mrb[0].mxu0 %v5547
      %v5932 = vpop.f32.mrb[0].mxu0
      %v5933 = vadd.f32 0.0, %v5932
      %v5934 = vpop.f32.mrb[0].mxu0
      %5935 = vmatprep.mubr.f32.mxu0 0.0
      %5936 = vmatmul.mubr.f32.gmra.mrb[0].mxu0 %v5550
      %v5937 = vpop.f32.mrb[0].mxu0
      %v5938 = vadd.f32 0.0, %v5937
      %v5939 = vpop.f32.mrb[0].mxu0
      %5940 = vmatprep.mubr.f32.mxu0 0.0
      %5941 = vmatmul.mubr.f32.gmra.mrb[0].mxu0 %v5553
      %v5942 = vpop.f32.mrb[0].mxu0
      %v5943 = vadd.f32 0.0, %v5942
      %v5944 = vpop.f32.mrb[0].mxu0
      %5945 = vmatprep.mubr.f32.mxu0 0.0
      %5946 = vmatmul.mubr.f32.gmra.mrb[0].mxu0 %v5556
      %v5947 = vpop.f32.mrb[0].mxu0
      %v5948 = vadd.f32 0.0, %v5947
      %v5949 = vpop.f32.mrb[0].mxu0
      %5950 = vmatprep.mubr.f32.mxu0 0.0
      %5951 = vmatmul.mubr.f32.gmra.mrb[0].mxu0 %v5559
      %v5952 = vpop.f32.mrb[0].mxu0
      %v5953 = vadd.f32 0.0, %v5952
      %v5954 = vpop.f32.mrb[0].mxu0
      %5955 = vmatprep.mubr.f32.mxu0 0.0
      %5956 = vmatmul.mubr.f32.gmra.mrb[0].mxu0 %v5562
      %v5957 = vpop.f32.mrb[0].mxu0
      %v5958 = vadd.f32 0.0, %v5957
      %v5959 = vpop.f32.mrb[0].mxu0
      %5960 = vmatprep.mubr.f32.mxu0 0.0
      %5961 = vmatmul.mubr.f32.gmra.mrb[0].mxu0 %v5565
      %v5962 = vpop.f32.mrb[0].mxu0
      %v5963 = vadd.f32 0.0, %v5962
      %v5964 = vpop.f32.mrb[0].mxu0
      %5965 = vmatprep.mubr.f32.mxu0 0.0
      %5966 = vmatmul.mubr.f32.gmra.mrb[0].mxu0 %v5568
      %v5967 = vpop.f32.mrb[0].mxu0
      %v5968 = vadd.f32 0.0, %v5967
      %v5969 = vpop.f32.mrb[0].mxu0
      %5970 = vmatprep.mubr.f32.mxu0 0.0
      %5971 = vmatmul.mubr.f32.gmra.mrb[0].mxu0 %v5571
      %v5972 = vpop.f32.mrb[0].mxu0
      %v5973 = vadd.f32 0.0, %v5972
      %v5974 = vpop.f32.mrb[0].mxu0
      %5975 = vmatprep.mubr.f32.mxu0 0.0
      %5976 = vmatmul.mubr.f32.gmra.mrb[0].mxu0 %v5574
      %v5977 = vpop.f32.mrb[0].mxu0
      %v5978 = vadd.f32 0.0, %v5977
      %v5979 = vpop.f32.mrb[0].mxu0
      %5980 = vmatprep.mubr.f32.mxu0 0.0
      %5981 = vmatmul.mubr.f32.gmra.mrb[0].mxu0 %v5577
      %v5982 = vpop.f32.mrb[0].mxu0
      %v5983 = vadd.f32 0.0, %v5982
      %v5984 = vpop.f32.mrb[0].mxu0
      %5985 = vmatprep.mubr.f32.mxu0 0.0
      %5986 = vmatmul.mubr.f32.gmra.mrb[0].mxu0 %v5580
      %v5987 = vpop.f32.mrb[0].mxu0
      %v5988 = vadd.f32 0.0, %v5987
      %v5989 = vpop.f32.mrb[0].mxu0
      %5990 = vmatprep.mubr.f32.mxu0 0.0
      %5991 = vmatmul.mubr.f32.gmra.mrb[0].mxu0 %v5583
      %v5992 = vpop.f32.mrb[0].mxu0
      %v5993 = vadd.f32 0.0, %v5992
      %v5994 = vpop.f32.mrb[0].mxu0
      %5995 = vmatprep.mubr.f32.mxu0 0.0
      %5996 = vmatmul.mubr.f32.gmra.mrb[0].mxu0 %v5586
      %v5997 = vpop.f32.mrb[0].mxu0
      %v5998 = vadd.f32 0.0, %v5997
      %v5999 = vpop.f32.mrb[0].mxu0
      %6000 = vmatprep.mubr.f32.mxu0 0.0
      %6001 = vmatmul.mubr.f32.gmra.mrb[0].mxu0 %v5589
      %v6002 = vpop.f32.mrb[0].mxu0
      %v6003 = vadd.f32 0.0, %v6002
      %v6004 = vpop.f32.mrb[0].mxu0
      %6005 = vmatprep.mubr.f32.mxu0 0.0
      %6006 = vmatmul.mubr.f32.gmra.mrb[0].mxu0 %v5592
      %v6007 = vpop.f32.mrb[0].mxu0
      %v6008 = vadd.f32 0.0, %v6007
      %v6009 = vpop.f32.mrb[0].mxu0
      %6010 = vmatprep.mubr.f32.mxu0 0.0
      %6011 = vmatmul.mubr.f32.gmra.mrb[0].mxu0 %v5595
      %v6012 = vpop.f32.mrb[0].mxu0
      %v6013 = vadd.f32 0.0, %v6012
      %v6014 = vpop.f32.mrb[0].mxu0
      %6015 = vmatprep.mubr.f32.mxu0 0.0
      %6016 = vmatmul.mubr.f32.gmra.mrb[0].mxu0 %v5598
      %v6017 = vpop.f32.mrb[0].mxu0
      %v6018 = vadd.f32 0.0, %v6017
      %v6019 = vpop.f32.mrb[0].mxu0
      %6020 = vmatprep.mubr.f32.mxu0 0.0
      %6021 = vmatmul.mubr.f32.gmra.mrb[0].mxu0 %v5601
      %v6022 = vpop.f32.mrb[0].mxu0
      %v6023 = vadd.f32 0.0, %v6022
      %v6024 = vpop.f32.mrb[0].mxu0
      %6025 = vmatprep.mubr.f32.mxu0 0.0
      %6026 = vmatmul.mubr.f32.gmra.mrb[0].mxu0 %v5604
      %v6027 = vpop.f32.mrb[0].mxu0
      %v6028 = vadd.f32 0.0, %v6027
      %v6029 = vpop.f32.mrb[0].mxu0
      %6030 = vmatprep.mubr.f32.mxu0 0.0
      %6031 = vmatmul.mubr.f32.gmra.mrb[0].mxu0 %v5607
      %v6032 = vpop.f32.mrb[0].mxu0
      %v6033 = vadd.f32 0.0, %v6032
      %v6034 = vpop.f32.mrb[0].mxu0
      %6035 = vmatprep.mubr.f32.mxu0 0.0
      %6036 = vmatmul.mubr.f32.gmra.mrb[0].mxu0 %v5610
      %v6037 = vpop.f32.mrb[0].mxu0
      %v6038 = vadd.f32 0.0, %v6037
      %v6039 = vpop.f32.mrb[0].mxu0
      %6040 = vmatprep.mubr.f32.mxu0 0.0
      %6041 = vmatmul.mubr.f32.gmra.mrb[0].mxu0 %v5613
      %v6042 = vpop.f32.mrb[0].mxu0
      %v6043 = vadd.f32 0.0, %v6042
      %v6044 = vpop.f32.mrb[0].mxu0
      %6045 = vmatprep.mubr.f32.mxu0 0.0
      %6046 = vmatmul.mubr.f32.gmra.mrb[0].mxu0 %v5616
      %v6047 = vpop.f32.mrb[0].mxu0
      %v6048 = vadd.f32 0.0, %v6047
      %v6049 = vpop.f32.mrb[0].mxu0
      %6050 = vmatprep.mubr.f32.mxu0 0.0
      %6051 = vmatmul.mubr.f32.gmra.mrb[0].mxu0 %v5619
      %v6052 = vpop.f32.mrb[0].mxu0
      %v6053 = vadd.f32 0.0, %v6052
      %v6054 = vpop.f32.mrb[0].mxu0
      %6055 = vmatprep.mubr.f32.mxu0 0.0
      %6056 = vmatmul.mubr.f32.gmra.mrb[0].mxu0 %v5622
      %v6057 = vpop.f32.mrb[0].mxu0
      %v6058 = vadd.f32 0.0, %v6057
      %v6059 = vpop.f32.mrb[0].mxu0
      %6060 = vmatprep.mubr.f32.mxu0 0.0
      %6061 = vmatmul.mubr.f32.gmra.mrb[0].mxu0 %v5625
      %v6062 = vpop.f32.mrb[0].mxu0
      %v6063 = vadd.f32 0.0, %v6062
      %v6064 = vpop.f32.mrb[0].mxu0
      %6065 = vmatprep.mubr.f32.mxu0 0.0
      %6066 = vmatmul.mubr.f32.gmra.mrb[0].mxu0 %v5628
      %v6067 = vpop.f32.mrb[0].mxu0
      %v6068 = vadd.f32 0.0, %v6067
      %v6069 = vpop.f32.mrb[0].mxu0
      %6070 = vmatprep.mubr.f32.mxu0 0.0
      %6071 = vmatmul.mubr.f32.gmra.mrb[0].mxu0 %v5631
      %v6072 = vpop.f32.mrb[0].mxu0
      %v6073 = vadd.f32 0.0, %v6072
      %v6074 = vpop.f32.mrb[0].mxu0
      %6075 = vmatprep.mubr.f32.mxu0 0.0
      %6076 = vmatmul.mubr.f32.gmra.mrb[0].mxu0 %v5634
      %v6077 = vpop.f32.mrb[0].mxu0
      %v6078 = vadd.f32 0.0, %v6077
      %v6079 = vpop.f32.mrb[0].mxu0
      %6080 = vmatprep.mubr.f32.mxu0 0.0
      %6081 = vmatmul.mubr.f32.gmra.mrb[0].mxu0 %v5637
      %v6082 = vpop.f32.mrb[0].mxu0
      %v6083 = vadd.f32 0.0, %v6082
      %v6084 = vpop.f32.mrb[0].mxu0
      %6085 = vmatprep.mubr.f32.mxu0 0.0
      %6086 = vmatmul.mubr.f32.gmra.mrb[0].mxu0 %v5640
      %v6087 = vpop.f32.mrb[0].mxu0
      %v6088 = vadd.f32 0.0, %v6087
      %v6089 = vpop.f32.mrb[0].mxu0
      %6090 = vmatprep.mubr.f32.mxu0 0.0
      %6091 = vmatmul.mubr.f32.gmra.mrb[0].mxu0 %v5643
      %v6092 = vpop.f32.mrb[0].mxu0
      %v6093 = vadd.f32 0.0, %v6092
      %v6094 = vpop.f32.mrb[0].mxu0
      %6095 = vmatprep.mubr.f32.mxu0 0.0
      %6096 = vmatmul.mubr.f32.gmra.mrb[0].mxu0 %v5646
      %v6097 = vpop.f32.mrb[0].mxu0
      %v6098 = vadd.f32 0.0, %v6097
      %v6099 = vpop.f32.mrb[0].mxu0
      %6100 = vmatprep.mubr.f32.mxu0 0.0
      %6101 = vmatmul.mubr.f32.gmra.mrb[0].mxu0 %v5649
      %v6102 = vpop.f32.mrb[0].mxu0
      %v6103 = vadd.f32 0.0, %v6102
      %v6104 = vpop.f32.mrb[0].mxu0
      %6105 = vdwg.mxu0
      %v6106 = vadd.f32 %v5256, %v5718
      %v6107 = vadd.f32 %v5257, %v5723
      %v6108 = vadd.f32 %v5258, %v5728
      %v6109 = vadd.f32 %v5259, %v5733
      %v6110 = vadd.f32 %v5260, %v5738
      %v6111 = vadd.f32 %v5261, %v5743
      %v6112 = vadd.f32 %v5262, %v5748
      %v6113 = vadd.f32 %v5263, %v5753
      %v6114 = vadd.f32 %v5264, %v5758
      %v6115 = vadd.f32 %v5265, %v5763
      %v6116 = vadd.f32 %v5266, %v5768
      %v6117 = vadd.f32 %v5267, %v5773
      %v6118 = vadd.f32 %v5268, %v5778
      %v6119 = vadd.f32 %v5269, %v5783
      %v6120 = vadd.f32 %v5270, %v5788
      %v6121 = vadd.f32 %v5271, %v5793
      %v6122 = vadd.f32 %v5272, %v5798
      %v6123 = vadd.f32 %v5273, %v5803
      %v6124 = vadd.f32 %v5274, %v5808
      %v6125 = vadd.f32 %v5275, %v5813
      %v6126 = vadd.f32 %v5276, %v5818
      %v6127 = vadd.f32 %v5277, %v5823
      %v6128 = vadd.f32 %v5278, %v5828
      %v6129 = vadd.f32 %v5279, %v5833
      %v6130 = vadd.f32 %v5280, %v5838
      %v6131 = vadd.f32 %v5281, %v5843
      %v6132 = vadd.f32 %v5282, %v5848
      %v6133 = vadd.f32 %v5283, %v5853
      %v6134 = vadd.f32 %v5284, %v5858
      %v6135 = vadd.f32 %v5285, %v5863
      %v6136 = vadd.f32 %v5286, %v5868
      %v6137 = vadd.f32 %v5287, %v5873
      %v6138 = vadd.f32 %v5288, %v5878
      %v6139 = vadd.f32 %v5289, %v5883
      %v6140 = vadd.f32 %v5290, %v5888
      %v6141 = vadd.f32 %v5291, %v5893
      %v6142 = vadd.f32 %v5292, %v5898
      %v6143 = vadd.f32 %v5293, %v5903
      %v6144 = vadd.f32 %v5294, %v5908
      %v6145 = vadd.f32 %v5295, %v5913
      %v6146 = vadd.f32 %v5296, %v5918
      %v6147 = vadd.f32 %v5297, %v5923
      %v6148 = vadd.f32 %v5298, %v5928
      %v6149 = vadd.f32 %v5299, %v5933
      %v6150 = vadd.f32 %v5300, %v5938
      %v6151 = vadd.f32 %v5301, %v5943
      %v6152 = vadd.f32 %v5302, %v5948
      %v6153 = vadd.f32 %v5303, %v5953
      %v6154 = vadd.f32 %v5304, %v5958
      %v6155 = vadd.f32 %v5305, %v5963
      %v6156 = vadd.f32 %v5306, %v5968
      %v6157 = vadd.f32 %v5307, %v5973
      %v6158 = vadd.f32 %v5308, %v5978
      %v6159 = vadd.f32 %v5309, %v5983
      %v6160 = vadd.f32 %v5310, %v5988
      %v6161 = vadd.f32 %v5311, %v5993
      %v6162 = vadd.f32 %v5312, %v5998
      %v6163 = vadd.f32 %v5313, %v6003
      %v6164 = vadd.f32 %v5314, %v6008
      %v6165 = vadd.f32 %v5315, %v6013
      %v6166 = vadd.f32 %v5316, %v6018
      %v6167 = vadd.f32 %v5317, %v6023
      %v6168 = vadd.f32 %v5318, %v6028
      %v6169 = vadd.f32 %v5319, %v6033
      %v6170 = vadd.f32 %v5320, %v6038
      %v6171 = vadd.f32 %v5321, %v6043
      %v6172 = vadd.f32 %v5322, %v6048
      %v6173 = vadd.f32 %v5323, %v6053
      %v6174 = vadd.f32 %v5324, %v6058
      %v6175 = vadd.f32 %v5325, %v6063
      %v6176 = vadd.f32 %v5326, %v6068
      %v6177 = vadd.f32 %v5327, %v6073
      %v6178 = vadd.f32 %v5328, %v6078
      %v6179 = vadd.f32 %v5329, %v6083
      %v6180 = vadd.f32 %v5330, %v6088
      %v6181 = vadd.f32 %v5331, %v6093
      %v6182 = vadd.f32 %v5332, %v6098
      %v6183 = vadd.f32 %v5333, %v6103
      %v6184 = vld [vmem:[#allocation2 + $0x34] sm:$0xff]
      %v6185 = vld [vmem:[#allocation2 + $0x3c] sm:$0xff]
      %v6186 = vld [vmem:[#allocation2 + $0x44] sm:$0xff]
      %v6187 = vld [vmem:[#allocation2 + $0x4c] sm:$0xff]
      %v6188 = vld [vmem:[#allocation2 + $0x54] sm:$0xff]
      %v6189 = vld [vmem:[#allocation2 + $0x5c] sm:$0xff]
      %v6190 = vld [vmem:[#allocation2 + $0x64] sm:$0xff]
      %v6191 = vld [vmem:[#allocation2 + $0x6c] sm:$0xff]
      %v6192 = vld [vmem:[#allocation2 + $0x74] sm:$0xff]
      %v6193 = vld [vmem:[#allocation2 + $0x7c] sm:$0xff]
      %v6194 = vld [vmem:[#allocation2 + $0x84] sm:$0xff]
      %v6195 = vld [vmem:[#allocation2 + $0x8c] sm:$0xff]
      %v6196 = vld [vmem:[#allocation2 + $0x94] sm:$0xff]
      %v6197 = vld [vmem:[#allocation2 + $0x9c] sm:$0xff]
      %v6198 = vld [vmem:[#allocation2 + $0xa4] sm:$0xff]
      %v6199 = vld [vmem:[#allocation2 + $0xac] sm:$0xff]
      %v6200 = vld [vmem:[#allocation2 + $0xb4] sm:$0xff]
      %v6201 = vld [vmem:[#allocation2 + $0xbc] sm:$0xff]
      %v6202 = vld [vmem:[#allocation2 + $0xc4] sm:$0xff]
      %v6203 = vld [vmem:[#allocation2 + $0xcc] sm:$0xff]
      %v6204 = vld [vmem:[#allocation2 + $0xd4] sm:$0xff]
      %v6205 = vld [vmem:[#allocation2 + $0xdc] sm:$0xff]
      %v6206 = vld [vmem:[#allocation2 + $0xe4] sm:$0xff]
      %v6207 = vld [vmem:[#allocation2 + $0xec] sm:$0xff]
      %v6208 = vld [vmem:[#allocation2 + $0xf4] sm:$0xff]
      %v6209 = vld [vmem:[#allocation2 + $0xfc] sm:$0xff]
      %v6210 = vld [vmem:[#allocation2 + $0x104] sm:$0xff]
      %v6211 = vld [vmem:[#allocation2 + $0x10c] sm:$0xff]
      %v6212 = vld [vmem:[#allocation2 + $0x114] sm:$0xff]
      %v6213 = vld [vmem:[#allocation2 + $0x11c] sm:$0xff]
      %v6214 = vld [vmem:[#allocation2 + $0x124] sm:$0xff]
      %v6215 = vld [vmem:[#allocation2 + $0x12c] sm:$0xff]
      %v6216 = vld [vmem:[#allocation2 + $0x134] sm:$0xff]
      %v6217 = vld [vmem:[#allocation2 + $0x13c] sm:$0xff]
      %v6218 = vld [vmem:[#allocation2 + $0x144] sm:$0xff]
      %v6219 = vld [vmem:[#allocation2 + $0x14c] sm:$0xff]
      %v6220 = vld [vmem:[#allocation2 + $0x154] sm:$0xff]
      %v6221 = vld [vmem:[#allocation2 + $0x15c] sm:$0xff]
      %v6222 = vld [vmem:[#allocation2 + $0x164] sm:$0xff]
      %v6223 = vld [vmem:[#allocation2 + $0x16c] sm:$0xff]
      %v6224 = vld [vmem:[#allocation2 + $0x174] sm:$0xff]
      %v6225 = vld [vmem:[#allocation2 + $0x17c] sm:$0xff]
      %v6226 = vld [vmem:[#allocation2 + $0x184] sm:$0xff]
      %v6227 = vld [vmem:[#allocation2 + $0x18c] sm:$0xff]
      %v6228 = vld [vmem:[#allocation2 + $0x194] sm:$0xff]
      %v6229 = vld [vmem:[#allocation2 + $0x19c] sm:$0xff]
      %v6230 = vld [vmem:[#allocation2 + $0x1a4] sm:$0xff]
      %v6231 = vld [vmem:[#allocation2 + $0x1ac] sm:$0xff]
      %v6232 = vld [vmem:[#allocation2 + $0x1b4] sm:$0xff]
      %v6233 = vld [vmem:[#allocation2 + $0x1bc] sm:$0xff]
      %v6234 = vld [vmem:[#allocation2 + $0x1c4] sm:$0xff]
      %v6235 = vld [vmem:[#allocation2 + $0x1cc] sm:$0xff]
      %v6236 = vld [vmem:[#allocation2 + $0x1d4] sm:$0xff]
      %v6237 = vld [vmem:[#allocation2 + $0x1dc] sm:$0xff]
      %v6238 = vld [vmem:[#allocation2 + $0x1e4] sm:$0xff]
      %v6239 = vld [vmem:[#allocation2 + $0x1ec] sm:$0xff]
      %v6240 = vld [vmem:[#allocation2 + $0x1f4] sm:$0xff]
      %v6241 = vld [vmem:[#allocation2 + $0x1fc] sm:$0xff]
      %v6242 = vld [vmem:[#allocation2 + $0x204] sm:$0xff]
      %v6243 = vld [vmem:[#allocation2 + $0x20c] sm:$0xff]
      %v6244 = vld [vmem:[#allocation2 + $0x214] sm:$0xff]
      %v6245 = vld [vmem:[#allocation2 + $0x21c] sm:$0xff]
      %v6246 = vld [vmem:[#allocation2 + $0x224] sm:$0xff]
      %v6247 = vld [vmem:[#allocation2 + $0x22c] sm:$0xff]
      %v6248 = vld [vmem:[#allocation2 + $0x234] sm:$0xff]
      %v6249 = vld [vmem:[#allocation2 + $0x23c] sm:$0xff]
      %v6250 = vld [vmem:[#allocation2 + $0x244] sm:$0xff]
      %v6251 = vld [vmem:[#allocation2 + $0x24c] sm:$0xff]
      %v6252 = vld [vmem:[#allocation2 + $0x254] sm:$0xff]
      %v6253 = vld [vmem:[#allocation2 + $0x25c] sm:$0xff]
      %v6254 = vld [vmem:[#allocation2 + $0x264] sm:$0xff]
      %v6255 = vld [vmem:[#allocation2 + $0x26c] sm:$0xff]
      %v6256 = vld [vmem:[#allocation2 + $0x274] sm:$0xff]
      %v6257 = vld [vmem:[#allocation2 + $0x27c] sm:$0xff]
      %v6258 = vld [vmem:[#allocation2 + $0x284] sm:$0xff]
      %v6259 = vld [vmem:[#allocation2 + $0x28c] sm:$0xff]
      %v6260 = vld [vmem:[#allocation2 + $0x294] sm:$0xff]
      %v6261 = vld [vmem:[#allocation2 + $0x29c] sm:$0x3f]
      %s6262 = scalar_lea.vmem %s3, 192
      %v6263 = vld [vmem:[%s6262] sm:$0xff]
      %v6264 = vld [vmem:[%s6262 + $0x8] sm:$0xff]
      %v6265 = vld [vmem:[%s6262 + $0x10] sm:$0xff]
      %v6266 = vld [vmem:[%s6262 + $0x18] sm:$0xff]
      %v6268 = vsel %vm1154, %v6184, 0
      %v6271 = vsel %vm1154, %v6185, 0
      %v6274 = vsel %vm1154, %v6186, 0
      %v6277 = vsel %vm1154, %v6187, 0
      %v6280 = vsel %vm1154, %v6188, 0
      %v6283 = vsel %vm1154, %v6189, 0
      %v6286 = vsel %vm1154, %v6190, 0
      %v6289 = vsel %vm1154, %v6191, 0
      %v6292 = vsel %vm1154, %v6192, 0
      %v6295 = vsel %vm1154, %v6193, 0
      %v6298 = vsel %vm1154, %v6194, 0
      %v6301 = vsel %vm1154, %v6195, 0
      %v6304 = vsel %vm1154, %v6196, 0
      %v6307 = vsel %vm1154, %v6197, 0
      %v6310 = vsel %vm1154, %v6198, 0
      %v6313 = vsel %vm1154, %v6199, 0
      %v6316 = vsel %vm1154, %v6200, 0
      %v6319 = vsel %vm1154, %v6201, 0
      %v6322 = vsel %vm1154, %v6202, 0
      %v6325 = vsel %vm1154, %v6203, 0
      %v6328 = vsel %vm1154, %v6204, 0
      %v6331 = vsel %vm1154, %v6205, 0
      %v6334 = vsel %vm1154, %v6206, 0
      %v6337 = vsel %vm1154, %v6207, 0
      %v6340 = vsel %vm1154, %v6208, 0
      %v6343 = vsel %vm1154, %v6209, 0
      %v6346 = vsel %vm1154, %v6210, 0
      %v6349 = vsel %vm1154, %v6211, 0
      %v6352 = vsel %vm1154, %v6212, 0
      %v6355 = vsel %vm1154, %v6213, 0
      %v6358 = vsel %vm1154, %v6214, 0
      %v6361 = vsel %vm1154, %v6215, 0
      %v6364 = vsel %vm1154, %v6216, 0
      %v6367 = vsel %vm1154, %v6217, 0
      %v6370 = vsel %vm1154, %v6218, 0
      %v6373 = vsel %vm1154, %v6219, 0
      %v6376 = vsel %vm1154, %v6220, 0
      %v6379 = vsel %vm1154, %v6221, 0
      %v6382 = vsel %vm1154, %v6222, 0
      %v6385 = vsel %vm1154, %v6223, 0
      %v6388 = vsel %vm1154, %v6224, 0
      %v6391 = vsel %vm1154, %v6225, 0
      %v6394 = vsel %vm1154, %v6226, 0
      %v6397 = vsel %vm1154, %v6227, 0
      %v6400 = vsel %vm1154, %v6228, 0
      %v6403 = vsel %vm1154, %v6229, 0
      %v6406 = vsel %vm1154, %v6230, 0
      %v6409 = vsel %vm1154, %v6231, 0
      %v6412 = vsel %vm1154, %v6232, 0
      %v6415 = vsel %vm1154, %v6233, 0
      %v6418 = vsel %vm1154, %v6234, 0
      %v6421 = vsel %vm1154, %v6235, 0
      %v6424 = vsel %vm1154, %v6236, 0
      %v6427 = vsel %vm1154, %v6237, 0
      %v6430 = vsel %vm1154, %v6238, 0
      %v6433 = vsel %vm1154, %v6239, 0
      %v6436 = vsel %vm1154, %v6240, 0
      %v6439 = vsel %vm1154, %v6241, 0
      %v6442 = vsel %vm1154, %v6242, 0
      %v6445 = vsel %vm1154, %v6243, 0
      %v6448 = vsel %vm1154, %v6244, 0
      %v6451 = vsel %vm1154, %v6245, 0
      %v6454 = vsel %vm1154, %v6246, 0
      %v6457 = vsel %vm1154, %v6247, 0
      %v6460 = vsel %vm1154, %v6248, 0
      %v6463 = vsel %vm1154, %v6249, 0
      %v6466 = vsel %vm1154, %v6250, 0
      %v6469 = vsel %vm1154, %v6251, 0
      %v6472 = vsel %vm1154, %v6252, 0
      %v6475 = vsel %vm1154, %v6253, 0
      %v6478 = vsel %vm1154, %v6254, 0
      %v6481 = vsel %vm1154, %v6255, 0
      %v6484 = vsel %vm1154, %v6256, 0
      %v6487 = vsel %vm1154, %v6257, 0
      %v6490 = vsel %vm1154, %v6258, 0
      %v6493 = vsel %vm1154, %v6259, 0
      %v6496 = vsel %vm1154, %v6260, 0
      %v6499 = vsel %vm1154, %v6261, 0
      %6501 = vmatprep.subr.mxu0 0.0
      %6502 = vmatpush1.msra.mxu0 %v6263
      %6503 = vmatprep.subr.mxu0 0.0
      %6504 = vmatpush1.msra.mxu0 %v6264
      %6505 = vmatprep.subr.mxu0 0.0
      %6506 = vmatpush1.msra.mxu0 %v6265
      %6507 = vmatprep.subr.mxu0 0.0
      %6508 = vmatpush1.msra.mxu0 %v6266
      %6509 = vmatprep.subr.mxu0 0.0
      %6510 = vmatpush1.msra.mxu0 0.0
      %6511 = vmatprep.subr.mxu0 0.0
      %6512 = vmatpush1.msra.mxu0 0.0
      %6513 = vmatprep.subr.mxu0 0.0
      %6514 = vmatpush1.msra.mxu0 0.0
      %6515 = vmatprep.subr.mxu0 0.0
      %6516 = vmatpush1.msra.mxu0 0.0
      %6517 = vmatprep.subr.mxu0 0.0
      %6518 = vmatpush1.msra.mxu0 0.0
      %6519 = vmatprep.subr.mxu0 0.0
      %6520 = vmatpush1.msra.mxu0 0.0
      %6521 = vmatprep.subr.mxu0 0.0
      %6522 = vmatpush1.msra.mxu0 0.0
      %6523 = vmatprep.subr.mxu0 0.0
      %6524 = vmatpush1.msra.mxu0 0.0
      %6525 = vmatprep.subr.mxu0 0.0
      %6526 = vmatpush1.msra.mxu0 0.0
      %6527 = vmatprep.subr.mxu0 0.0
      %6528 = vmatpush1.msra.mxu0 0.0
      %6529 = vmatprep.subr.mxu0 0.0
      %6530 = vmatpush1.msra.mxu0 0.0
      %6531 = vmatprep.subr.mxu0 0.0
      %6532 = vmatpush1.msra.mxu0 0.0
      %6533 = vmatprep.subr.mxu0 0.0
      %6534 = vmatpush1.msra.mxu0 0.0
      %6535 = vmatprep.subr.mxu0 0.0
      %6536 = vmatpush1.msra.mxu0 0.0
      %6537 = vmatprep.subr.mxu0 0.0
      %6538 = vmatpush1.msra.mxu0 0.0
      %6539 = vmatprep.subr.mxu0 0.0
      %6540 = vmatpush1.msra.mxu0 0.0
      %6541 = vmatprep.subr.mxu0 0.0
      %6542 = vmatpush1.msra.mxu0 0.0
      %6543 = vmatprep.subr.mxu0 0.0
      %6544 = vmatpush1.msra.mxu0 0.0
      %6545 = vmatprep.subr.mxu0 0.0
      %6546 = vmatpush1.msra.mxu0 0.0
      %6547 = vmatprep.subr.mxu0 0.0
      %6548 = vmatpush1.msra.mxu0 0.0
      %6549 = vmatprep.subr.mxu0 0.0
      %6550 = vmatpush1.msra.mxu0 0.0
      %6551 = vmatprep.subr.mxu0 0.0
      %6552 = vmatpush1.msra.mxu0 0.0
      %6553 = vmatprep.subr.mxu0 0.0
      %6554 = vmatpush1.msra.mxu0 0.0
      %6555 = vmatprep.subr.mxu0 0.0
      %6556 = vmatpush1.msra.mxu0 0.0
      %6557 = vmatprep.subr.mxu0 0.0
      %6558 = vmatpush1.msra.mxu0 0.0
      %6559 = vmatprep.subr.mxu0 0.0
      %6560 = vmatpush1.msra.mxu0 0.0
      %6561 = vmatprep.subr.mxu0 0.0
      %6562 = vmatpush1.msra.mxu0 0.0
      %6563 = vmatprep.subr.mxu0 0.0
      %6564 = vmatpush1.msra.mxu0 0.0
      %6565 = vmatprep.mubr.f32.mxu0 0.0
      %6566 = vmatmul.mubr.f32.gmra.mrb[0].mxu0 %v6268
      %v6567 = vpop.f32.mrb[0].mxu0
      %v6568 = vadd.f32 0.0, %v6567
      %v6569 = vpop.f32.mrb[0].mxu0
      %6570 = vmatprep.mubr.f32.mxu0 0.0
      %6571 = vmatmul.mubr.f32.gmra.mrb[0].mxu0 %v6271
      %v6572 = vpop.f32.mrb[0].mxu0
      %v6573 = vadd.f32 0.0, %v6572
      %v6574 = vpop.f32.mrb[0].mxu0
      %6575 = vmatprep.mubr.f32.mxu0 0.0
      %6576 = vmatmul.mubr.f32.gmra.mrb[0].mxu0 %v6274
      %v6577 = vpop.f32.mrb[0].mxu0
      %v6578 = vadd.f32 0.0, %v6577
      %v6579 = vpop.f32.mrb[0].mxu0
      %6580 = vmatprep.mubr.f32.mxu0 0.0
      %6581 = vmatmul.mubr.f32.gmra.mrb[0].mxu0 %v6277
      %v6582 = vpop.f32.mrb[0].mxu0
      %v6583 = vadd.f32 0.0, %v6582
      %v6584 = vpop.f32.mrb[0].mxu0
      %6585 = vmatprep.mubr.f32.mxu0 0.0
      %6586 = vmatmul.mubr.f32.gmra.mrb[0].mxu0 %v6280
      %v6587 = vpop.f32.mrb[0].mxu0
      %v6588 = vadd.f32 0.0, %v6587
      %v6589 = vpop.f32.mrb[0].mxu0
      %6590 = vmatprep.mubr.f32.mxu0 0.0
      %6591 = vmatmul.mubr.f32.gmra.mrb[0].mxu0 %v6283
      %v6592 = vpop.f32.mrb[0].mxu0
      %v6593 = vadd.f32 0.0, %v6592
      %v6594 = vpop.f32.mrb[0].mxu0
      %6595 = vmatprep.mubr.f32.mxu0 0.0
      %6596 = vmatmul.mubr.f32.gmra.mrb[0].mxu0 %v6286
      %v6597 = vpop.f32.mrb[0].mxu0
      %v6598 = vadd.f32 0.0, %v6597
      %v6599 = vpop.f32.mrb[0].mxu0
      %6600 = vmatprep.mubr.f32.mxu0 0.0
      %6601 = vmatmul.mubr.f32.gmra.mrb[0].mxu0 %v6289
      %v6602 = vpop.f32.mrb[0].mxu0
      %v6603 = vadd.f32 0.0, %v6602
      %v6604 = vpop.f32.mrb[0].mxu0
      %6605 = vmatprep.mubr.f32.mxu0 0.0
      %6606 = vmatmul.mubr.f32.gmra.mrb[0].mxu0 %v6292
      %v6607 = vpop.f32.mrb[0].mxu0
      %v6608 = vadd.f32 0.0, %v6607
      %v6609 = vpop.f32.mrb[0].mxu0
      %6610 = vmatprep.mubr.f32.mxu0 0.0
      %6611 = vmatmul.mubr.f32.gmra.mrb[0].mxu0 %v6295
      %v6612 = vpop.f32.mrb[0].mxu0
      %v6613 = vadd.f32 0.0, %v6612
      %v6614 = vpop.f32.mrb[0].mxu0
      %6615 = vmatprep.mubr.f32.mxu0 0.0
      %6616 = vmatmul.mubr.f32.gmra.mrb[0].mxu0 %v6298
      %v6617 = vpop.f32.mrb[0].mxu0
      %v6618 = vadd.f32 0.0, %v6617
      %v6619 = vpop.f32.mrb[0].mxu0
      %6620 = vmatprep.mubr.f32.mxu0 0.0
      %6621 = vmatmul.mubr.f32.gmra.mrb[0].mxu0 %v6301
      %v6622 = vpop.f32.mrb[0].mxu0
      %v6623 = vadd.f32 0.0, %v6622
      %v6624 = vpop.f32.mrb[0].mxu0
      %6625 = vmatprep.mubr.f32.mxu0 0.0
      %6626 = vmatmul.mubr.f32.gmra.mrb[0].mxu0 %v6304
      %v6627 = vpop.f32.mrb[0].mxu0
      %v6628 = vadd.f32 0.0, %v6627
      %v6629 = vpop.f32.mrb[0].mxu0
      %6630 = vmatprep.mubr.f32.mxu0 0.0
      %6631 = vmatmul.mubr.f32.gmra.mrb[0].mxu0 %v6307
      %v6632 = vpop.f32.mrb[0].mxu0
      %v6633 = vadd.f32 0.0, %v6632
      %v6634 = vpop.f32.mrb[0].mxu0
      %6635 = vmatprep.mubr.f32.mxu0 0.0
      %6636 = vmatmul.mubr.f32.gmra.mrb[0].mxu0 %v6310
      %v6637 = vpop.f32.mrb[0].mxu0
      %v6638 = vadd.f32 0.0, %v6637
      %v6639 = vpop.f32.mrb[0].mxu0
      %6640 = vmatprep.mubr.f32.mxu0 0.0
      %6641 = vmatmul.mubr.f32.gmra.mrb[0].mxu0 %v6313
      %v6642 = vpop.f32.mrb[0].mxu0
      %v6643 = vadd.f32 0.0, %v6642
      %v6644 = vpop.f32.mrb[0].mxu0
      %6645 = vmatprep.mubr.f32.mxu0 0.0
      %6646 = vmatmul.mubr.f32.gmra.mrb[0].mxu0 %v6316
      %v6647 = vpop.f32.mrb[0].mxu0
      %v6648 = vadd.f32 0.0, %v6647
      %v6649 = vpop.f32.mrb[0].mxu0
      %6650 = vmatprep.mubr.f32.mxu0 0.0
      %6651 = vmatmul.mubr.f32.gmra.mrb[0].mxu0 %v6319
      %v6652 = vpop.f32.mrb[0].mxu0
      %v6653 = vadd.f32 0.0, %v6652
      %v6654 = vpop.f32.mrb[0].mxu0
      %6655 = vmatprep.mubr.f32.mxu0 0.0
      %6656 = vmatmul.mubr.f32.gmra.mrb[0].mxu0 %v6322
      %v6657 = vpop.f32.mrb[0].mxu0
      %v6658 = vadd.f32 0.0, %v6657
      %v6659 = vpop.f32.mrb[0].mxu0
      %6660 = vmatprep.mubr.f32.mxu0 0.0
      %6661 = vmatmul.mubr.f32.gmra.mrb[0].mxu0 %v6325
      %v6662 = vpop.f32.mrb[0].mxu0
      %v6663 = vadd.f32 0.0, %v6662
      %v6664 = vpop.f32.mrb[0].mxu0
      %6665 = vmatprep.mubr.f32.mxu0 0.0
      %6666 = vmatmul.mubr.f32.gmra.mrb[0].mxu0 %v6328
      %v6667 = vpop.f32.mrb[0].mxu0
      %v6668 = vadd.f32 0.0, %v6667
      %v6669 = vpop.f32.mrb[0].mxu0
      %6670 = vmatprep.mubr.f32.mxu0 0.0
      %6671 = vmatmul.mubr.f32.gmra.mrb[0].mxu0 %v6331
      %v6672 = vpop.f32.mrb[0].mxu0
      %v6673 = vadd.f32 0.0, %v6672
      %v6674 = vpop.f32.mrb[0].mxu0
      %6675 = vmatprep.mubr.f32.mxu0 0.0
      %6676 = vmatmul.mubr.f32.gmra.mrb[0].mxu0 %v6334
      %v6677 = vpop.f32.mrb[0].mxu0
      %v6678 = vadd.f32 0.0, %v6677
      %v6679 = vpop.f32.mrb[0].mxu0
      %6680 = vmatprep.mubr.f32.mxu0 0.0
      %6681 = vmatmul.mubr.f32.gmra.mrb[0].mxu0 %v6337
      %v6682 = vpop.f32.mrb[0].mxu0
      %v6683 = vadd.f32 0.0, %v6682
      %v6684 = vpop.f32.mrb[0].mxu0
      %6685 = vmatprep.mubr.f32.mxu0 0.0
      %6686 = vmatmul.mubr.f32.gmra.mrb[0].mxu0 %v6340
      %v6687 = vpop.f32.mrb[0].mxu0
      %v6688 = vadd.f32 0.0, %v6687
      %v6689 = vpop.f32.mrb[0].mxu0
      %6690 = vmatprep.mubr.f32.mxu0 0.0
      %6691 = vmatmul.mubr.f32.gmra.mrb[0].mxu0 %v6343
      %v6692 = vpop.f32.mrb[0].mxu0
      %v6693 = vadd.f32 0.0, %v6692
      %v6694 = vpop.f32.mrb[0].mxu0
      %6695 = vmatprep.mubr.f32.mxu0 0.0
      %6696 = vmatmul.mubr.f32.gmra.mrb[0].mxu0 %v6346
      %v6697 = vpop.f32.mrb[0].mxu0
      %v6698 = vadd.f32 0.0, %v6697
      %v6699 = vpop.f32.mrb[0].mxu0
      %6700 = vmatprep.mubr.f32.mxu0 0.0
      %6701 = vmatmul.mubr.f32.gmra.mrb[0].mxu0 %v6349
      %v6702 = vpop.f32.mrb[0].mxu0
      %v6703 = vadd.f32 0.0, %v6702
      %v6704 = vpop.f32.mrb[0].mxu0
      %6705 = vmatprep.mubr.f32.mxu0 0.0
      %6706 = vmatmul.mubr.f32.gmra.mrb[0].mxu0 %v6352
      %v6707 = vpop.f32.mrb[0].mxu0
      %v6708 = vadd.f32 0.0, %v6707
      %v6709 = vpop.f32.mrb[0].mxu0
      %6710 = vmatprep.mubr.f32.mxu0 0.0
      %6711 = vmatmul.mubr.f32.gmra.mrb[0].mxu0 %v6355
      %v6712 = vpop.f32.mrb[0].mxu0
      %v6713 = vadd.f32 0.0, %v6712
      %v6714 = vpop.f32.mrb[0].mxu0
      %6715 = vmatprep.mubr.f32.mxu0 0.0
      %6716 = vmatmul.mubr.f32.gmra.mrb[0].mxu0 %v6358
      %v6717 = vpop.f32.mrb[0].mxu0
      %v6718 = vadd.f32 0.0, %v6717
      %v6719 = vpop.f32.mrb[0].mxu0
      %6720 = vmatprep.mubr.f32.mxu0 0.0
      %6721 = vmatmul.mubr.f32.gmra.mrb[0].mxu0 %v6361
      %v6722 = vpop.f32.mrb[0].mxu0
      %v6723 = vadd.f32 0.0, %v6722
      %v6724 = vpop.f32.mrb[0].mxu0
      %6725 = vmatprep.mubr.f32.mxu0 0.0
      %6726 = vmatmul.mubr.f32.gmra.mrb[0].mxu0 %v6364
      %v6727 = vpop.f32.mrb[0].mxu0
      %v6728 = vadd.f32 0.0, %v6727
      %v6729 = vpop.f32.mrb[0].mxu0
      %6730 = vmatprep.mubr.f32.mxu0 0.0
      %6731 = vmatmul.mubr.f32.gmra.mrb[0].mxu0 %v6367
      %v6732 = vpop.f32.mrb[0].mxu0
      %v6733 = vadd.f32 0.0, %v6732
      %v6734 = vpop.f32.mrb[0].mxu0
      %6735 = vmatprep.mubr.f32.mxu0 0.0
      %6736 = vmatmul.mubr.f32.gmra.mrb[0].mxu0 %v6370
      %v6737 = vpop.f32.mrb[0].mxu0
      %v6738 = vadd.f32 0.0, %v6737
      %v6739 = vpop.f32.mrb[0].mxu0
      %6740 = vmatprep.mubr.f32.mxu0 0.0
      %6741 = vmatmul.mubr.f32.gmra.mrb[0].mxu0 %v6373
      %v6742 = vpop.f32.mrb[0].mxu0
      %v6743 = vadd.f32 0.0, %v6742
      %v6744 = vpop.f32.mrb[0].mxu0
      %6745 = vmatprep.mubr.f32.mxu0 0.0
      %6746 = vmatmul.mubr.f32.gmra.mrb[0].mxu0 %v6376
      %v6747 = vpop.f32.mrb[0].mxu0
      %v6748 = vadd.f32 0.0, %v6747
      %v6749 = vpop.f32.mrb[0].mxu0
      %6750 = vmatprep.mubr.f32.mxu0 0.0
      %6751 = vmatmul.mubr.f32.gmra.mrb[0].mxu0 %v6379
      %v6752 = vpop.f32.mrb[0].mxu0
      %v6753 = vadd.f32 0.0, %v6752
      %v6754 = vpop.f32.mrb[0].mxu0
      %6755 = vmatprep.mubr.f32.mxu0 0.0
      %6756 = vmatmul.mubr.f32.gmra.mrb[0].mxu0 %v6382
      %v6757 = vpop.f32.mrb[0].mxu0
      %v6758 = vadd.f32 0.0, %v6757
      %v6759 = vpop.f32.mrb[0].mxu0
      %6760 = vmatprep.mubr.f32.mxu0 0.0
      %6761 = vmatmul.mubr.f32.gmra.mrb[0].mxu0 %v6385
      %v6762 = vpop.f32.mrb[0].mxu0
      %v6763 = vadd.f32 0.0, %v6762
      %v6764 = vpop.f32.mrb[0].mxu0
      %6765 = vmatprep.mubr.f32.mxu0 0.0
      %6766 = vmatmul.mubr.f32.gmra.mrb[0].mxu0 %v6388
      %v6767 = vpop.f32.mrb[0].mxu0
      %v6768 = vadd.f32 0.0, %v6767
      %v6769 = vpop.f32.mrb[0].mxu0
      %6770 = vmatprep.mubr.f32.mxu0 0.0
      %6771 = vmatmul.mubr.f32.gmra.mrb[0].mxu0 %v6391
      %v6772 = vpop.f32.mrb[0].mxu0
      %v6773 = vadd.f32 0.0, %v6772
      %v6774 = vpop.f32.mrb[0].mxu0
      %6775 = vmatprep.mubr.f32.mxu0 0.0
      %6776 = vmatmul.mubr.f32.gmra.mrb[0].mxu0 %v6394
      %v6777 = vpop.f32.mrb[0].mxu0
      %v6778 = vadd.f32 0.0, %v6777
      %v6779 = vpop.f32.mrb[0].mxu0
      %6780 = vmatprep.mubr.f32.mxu0 0.0
      %6781 = vmatmul.mubr.f32.gmra.mrb[0].mxu0 %v6397
      %v6782 = vpop.f32.mrb[0].mxu0
      %v6783 = vadd.f32 0.0, %v6782
      %v6784 = vpop.f32.mrb[0].mxu0
      %6785 = vmatprep.mubr.f32.mxu0 0.0
      %6786 = vmatmul.mubr.f32.gmra.mrb[0].mxu0 %v6400
      %v6787 = vpop.f32.mrb[0].mxu0
      %v6788 = vadd.f32 0.0, %v6787
      %v6789 = vpop.f32.mrb[0].mxu0
      %6790 = vmatprep.mubr.f32.mxu0 0.0
      %6791 = vmatmul.mubr.f32.gmra.mrb[0].mxu0 %v6403
      %v6792 = vpop.f32.mrb[0].mxu0
      %v6793 = vadd.f32 0.0, %v6792
      %v6794 = vpop.f32.mrb[0].mxu0
      %6795 = vmatprep.mubr.f32.mxu0 0.0
      %6796 = vmatmul.mubr.f32.gmra.mrb[0].mxu0 %v6406
      %v6797 = vpop.f32.mrb[0].mxu0
      %v6798 = vadd.f32 0.0, %v6797
      %v6799 = vpop.f32.mrb[0].mxu0
      %6800 = vmatprep.mubr.f32.mxu0 0.0
      %6801 = vmatmul.mubr.f32.gmra.mrb[0].mxu0 %v6409
      %v6802 = vpop.f32.mrb[0].mxu0
      %v6803 = vadd.f32 0.0, %v6802
      %v6804 = vpop.f32.mrb[0].mxu0
      %6805 = vmatprep.mubr.f32.mxu0 0.0
      %6806 = vmatmul.mubr.f32.gmra.mrb[0].mxu0 %v6412
      %v6807 = vpop.f32.mrb[0].mxu0
      %v6808 = vadd.f32 0.0, %v6807
      %v6809 = vpop.f32.mrb[0].mxu0
      %6810 = vmatprep.mubr.f32.mxu0 0.0
      %6811 = vmatmul.mubr.f32.gmra.mrb[0].mxu0 %v6415
      %v6812 = vpop.f32.mrb[0].mxu0
      %v6813 = vadd.f32 0.0, %v6812
      %v6814 = vpop.f32.mrb[0].mxu0
      %6815 = vmatprep.mubr.f32.mxu0 0.0
      %6816 = vmatmul.mubr.f32.gmra.mrb[0].mxu0 %v6418
      %v6817 = vpop.f32.mrb[0].mxu0
      %v6818 = vadd.f32 0.0, %v6817
      %v6819 = vpop.f32.mrb[0].mxu0
      %6820 = vmatprep.mubr.f32.mxu0 0.0
      %6821 = vmatmul.mubr.f32.gmra.mrb[0].mxu0 %v6421
      %v6822 = vpop.f32.mrb[0].mxu0
      %v6823 = vadd.f32 0.0, %v6822
      %v6824 = vpop.f32.mrb[0].mxu0
      %6825 = vmatprep.mubr.f32.mxu0 0.0
      %6826 = vmatmul.mubr.f32.gmra.mrb[0].mxu0 %v6424
      %v6827 = vpop.f32.mrb[0].mxu0
      %v6828 = vadd.f32 0.0, %v6827
      %v6829 = vpop.f32.mrb[0].mxu0
      %6830 = vmatprep.mubr.f32.mxu0 0.0
      %6831 = vmatmul.mubr.f32.gmra.mrb[0].mxu0 %v6427
      %v6832 = vpop.f32.mrb[0].mxu0
      %v6833 = vadd.f32 0.0, %v6832
      %v6834 = vpop.f32.mrb[0].mxu0
      %6835 = vmatprep.mubr.f32.mxu0 0.0
      %6836 = vmatmul.mubr.f32.gmra.mrb[0].mxu0 %v6430
      %v6837 = vpop.f32.mrb[0].mxu0
      %v6838 = vadd.f32 0.0, %v6837
      %v6839 = vpop.f32.mrb[0].mxu0
      %6840 = vmatprep.mubr.f32.mxu0 0.0
      %6841 = vmatmul.mubr.f32.gmra.mrb[0].mxu0 %v6433
      %v6842 = vpop.f32.mrb[0].mxu0
      %v6843 = vadd.f32 0.0, %v6842
      %v6844 = vpop.f32.mrb[0].mxu0
      %6845 = vmatprep.mubr.f32.mxu0 0.0
      %6846 = vmatmul.mubr.f32.gmra.mrb[0].mxu0 %v6436
      %v6847 = vpop.f32.mrb[0].mxu0
      %v6848 = vadd.f32 0.0, %v6847
      %v6849 = vpop.f32.mrb[0].mxu0
      %6850 = vmatprep.mubr.f32.mxu0 0.0
      %6851 = vmatmul.mubr.f32.gmra.mrb[0].mxu0 %v6439
      %v6852 = vpop.f32.mrb[0].mxu0
      %v6853 = vadd.f32 0.0, %v6852
      %v6854 = vpop.f32.mrb[0].mxu0
      %6855 = vmatprep.mubr.f32.mxu0 0.0
      %6856 = vmatmul.mubr.f32.gmra.mrb[0].mxu0 %v6442
      %v6857 = vpop.f32.mrb[0].mxu0
      %v6858 = vadd.f32 0.0, %v6857
      %v6859 = vpop.f32.mrb[0].mxu0
      %6860 = vmatprep.mubr.f32.mxu0 0.0
      %6861 = vmatmul.mubr.f32.gmra.mrb[0].mxu0 %v6445
      %v6862 = vpop.f32.mrb[0].mxu0
      %v6863 = vadd.f32 0.0, %v6862
      %v6864 = vpop.f32.mrb[0].mxu0
      %6865 = vmatprep.mubr.f32.mxu0 0.0
      %6866 = vmatmul.mubr.f32.gmra.mrb[0].mxu0 %v6448
      %v6867 = vpop.f32.mrb[0].mxu0
      %v6868 = vadd.f32 0.0, %v6867
      %v6869 = vpop.f32.mrb[0].mxu0
      %6870 = vmatprep.mubr.f32.mxu0 0.0
      %6871 = vmatmul.mubr.f32.gmra.mrb[0].mxu0 %v6451
      %v6872 = vpop.f32.mrb[0].mxu0
      %v6873 = vadd.f32 0.0, %v6872
      %v6874 = vpop.f32.mrb[0].mxu0
      %6875 = vmatprep.mubr.f32.mxu0 0.0
      %6876 = vmatmul.mubr.f32.gmra.mrb[0].mxu0 %v6454
      %v6877 = vpop.f32.mrb[0].mxu0
      %v6878 = vadd.f32 0.0, %v6877
      %v6879 = vpop.f32.mrb[0].mxu0
      %6880 = vmatprep.mubr.f32.mxu0 0.0
      %6881 = vmatmul.mubr.f32.gmra.mrb[0].mxu0 %v6457
      %v6882 = vpop.f32.mrb[0].mxu0
      %v6883 = vadd.f32 0.0, %v6882
      %v6884 = vpop.f32.mrb[0].mxu0
      %6885 = vmatprep.mubr.f32.mxu0 0.0
      %6886 = vmatmul.mubr.f32.gmra.mrb[0].mxu0 %v6460
      %v6887 = vpop.f32.mrb[0].mxu0
      %v6888 = vadd.f32 0.0, %v6887
      %v6889 = vpop.f32.mrb[0].mxu0
      %6890 = vmatprep.mubr.f32.mxu0 0.0
      %6891 = vmatmul.mubr.f32.gmra.mrb[0].mxu0 %v6463
      %v6892 = vpop.f32.mrb[0].mxu0
      %v6893 = vadd.f32 0.0, %v6892
      %v6894 = vpop.f32.mrb[0].mxu0
      %6895 = vmatprep.mubr.f32.mxu0 0.0
      %6896 = vmatmul.mubr.f32.gmra.mrb[0].mxu0 %v6466
      %v6897 = vpop.f32.mrb[0].mxu0
      %v6898 = vadd.f32 0.0, %v6897
      %v6899 = vpop.f32.mrb[0].mxu0
      %6900 = vmatprep.mubr.f32.mxu0 0.0
      %6901 = vmatmul.mubr.f32.gmra.mrb[0].mxu0 %v6469
      %v6902 = vpop.f32.mrb[0].mxu0
      %v6903 = vadd.f32 0.0, %v6902
      %v6904 = vpop.f32.mrb[0].mxu0
      %6905 = vmatprep.mubr.f32.mxu0 0.0
      %6906 = vmatmul.mubr.f32.gmra.mrb[0].mxu0 %v6472
      %v6907 = vpop.f32.mrb[0].mxu0
      %v6908 = vadd.f32 0.0, %v6907
      %v6909 = vpop.f32.mrb[0].mxu0
      %6910 = vmatprep.mubr.f32.mxu0 0.0
      %6911 = vmatmul.mubr.f32.gmra.mrb[0].mxu0 %v6475
      %v6912 = vpop.f32.mrb[0].mxu0
      %v6913 = vadd.f32 0.0, %v6912
      %v6914 = vpop.f32.mrb[0].mxu0
      %6915 = vmatprep.mubr.f32.mxu0 0.0
      %6916 = vmatmul.mubr.f32.gmra.mrb[0].mxu0 %v6478
      %v6917 = vpop.f32.mrb[0].mxu0
      %v6918 = vadd.f32 0.0, %v6917
      %v6919 = vpop.f32.mrb[0].mxu0
      %6920 = vmatprep.mubr.f32.mxu0 0.0
      %6921 = vmatmul.mubr.f32.gmra.mrb[0].mxu0 %v6481
      %v6922 = vpop.f32.mrb[0].mxu0
      %v6923 = vadd.f32 0.0, %v6922
      %v6924 = vpop.f32.mrb[0].mxu0
      %6925 = vmatprep.mubr.f32.mxu0 0.0
      %6926 = vmatmul.mubr.f32.gmra.mrb[0].mxu0 %v6484
      %v6927 = vpop.f32.mrb[0].mxu0
      %v6928 = vadd.f32 0.0, %v6927
      %v6929 = vpop.f32.mrb[0].mxu0
      %6930 = vmatprep.mubr.f32.mxu0 0.0
      %6931 = vmatmul.mubr.f32.gmra.mrb[0].mxu0 %v6487
      %v6932 = vpop.f32.mrb[0].mxu0
      %v6933 = vadd.f32 0.0, %v6932
      %v6934 = vpop.f32.mrb[0].mxu0
      %6935 = vmatprep.mubr.f32.mxu0 0.0
      %6936 = vmatmul.mubr.f32.gmra.mrb[0].mxu0 %v6490
      %v6937 = vpop.f32.mrb[0].mxu0
      %v6938 = vadd.f32 0.0, %v6937
      %v6939 = vpop.f32.mrb[0].mxu0
      %6940 = vmatprep.mubr.f32.mxu0 0.0
      %6941 = vmatmul.mubr.f32.gmra.mrb[0].mxu0 %v6493
      %v6942 = vpop.f32.mrb[0].mxu0
      %v6943 = vadd.f32 0.0, %v6942
      %v6944 = vpop.f32.mrb[0].mxu0
      %6945 = vmatprep.mubr.f32.mxu0 0.0
      %6946 = vmatmul.mubr.f32.gmra.mrb[0].mxu0 %v6496
      %v6947 = vpop.f32.mrb[0].mxu0
      %v6948 = vadd.f32 0.0, %v6947
      %v6949 = vpop.f32.mrb[0].mxu0
      %6950 = vmatprep.mubr.f32.mxu0 0.0
      %6951 = vmatmul.mubr.f32.gmra.mrb[0].mxu0 %v6499
      %v6952 = vpop.f32.mrb[0].mxu0
      %v6953 = vadd.f32 0.0, %v6952
      %v6954 = vpop.f32.mrb[0].mxu0
      %6955 = vdwg.mxu0
      %v6956 = vadd.f32 %v6106, %v6568
      %v6957 = vadd.f32 %v6107, %v6573
      %v6958 = vadd.f32 %v6108, %v6578
      %v6959 = vadd.f32 %v6109, %v6583
      %v6960 = vadd.f32 %v6110, %v6588
      %v6961 = vadd.f32 %v6111, %v6593
      %v6962 = vadd.f32 %v6112, %v6598
      %v6963 = vadd.f32 %v6113, %v6603
      %v6964 = vadd.f32 %v6114, %v6608
      %v6965 = vadd.f32 %v6115, %v6613
      %v6966 = vadd.f32 %v6116, %v6618
      %v6967 = vadd.f32 %v6117, %v6623
      %v6968 = vadd.f32 %v6118, %v6628
      %v6969 = vadd.f32 %v6119, %v6633
      %v6970 = vadd.f32 %v6120, %v6638
      %v6971 = vadd.f32 %v6121, %v6643
      %v6972 = vadd.f32 %v6122, %v6648
      %v6973 = vadd.f32 %v6123, %v6653
      %v6974 = vadd.f32 %v6124, %v6658
      %v6975 = vadd.f32 %v6125, %v6663
      %v6976 = vadd.f32 %v6126, %v6668
      %v6977 = vadd.f32 %v6127, %v6673
      %v6978 = vadd.f32 %v6128, %v6678
      %v6979 = vadd.f32 %v6129, %v6683
      %v6980 = vadd.f32 %v6130, %v6688
      %v6981 = vadd.f32 %v6131, %v6693
      %v6982 = vadd.f32 %v6132, %v6698
      %v6983 = vadd.f32 %v6133, %v6703
      %v6984 = vadd.f32 %v6134, %v6708
      %v6985 = vadd.f32 %v6135, %v6713
      %v6986 = vadd.f32 %v6136, %v6718
      %v6987 = vadd.f32 %v6137, %v6723
      %v6988 = vadd.f32 %v6138, %v6728
      %v6989 = vadd.f32 %v6139, %v6733
      %v6990 = vadd.f32 %v6140, %v6738
      %v6991 = vadd.f32 %v6141, %v6743
      %v6992 = vadd.f32 %v6142, %v6748
      %v6993 = vadd.f32 %v6143, %v6753
      %v6994 = vadd.f32 %v6144, %v6758
      %v6995 = vadd.f32 %v6145, %v6763
      %v6996 = vadd.f32 %v6146, %v6768
      %v6997 = vadd.f32 %v6147, %v6773
      %v6998 = vadd.f32 %v6148, %v6778
      %v6999 = vadd.f32 %v6149, %v6783
      %v7000 = vadd.f32 %v6150, %v6788
      %v7001 = vadd.f32 %v6151, %v6793
      %v7002 = vadd.f32 %v6152, %v6798
      %v7003 = vadd.f32 %v6153, %v6803
      %v7004 = vadd.f32 %v6154, %v6808
      %v7005 = vadd.f32 %v6155, %v6813
      %v7006 = vadd.f32 %v6156, %v6818
      %v7007 = vadd.f32 %v6157, %v6823
      %v7008 = vadd.f32 %v6158, %v6828
      %v7009 = vadd.f32 %v6159, %v6833
      %v7010 = vadd.f32 %v6160, %v6838
      %v7011 = vadd.f32 %v6161, %v6843
      %v7012 = vadd.f32 %v6162, %v6848
      %v7013 = vadd.f32 %v6163, %v6853
      %v7014 = vadd.f32 %v6164, %v6858
      %v7015 = vadd.f32 %v6165, %v6863
      %v7016 = vadd.f32 %v6166, %v6868
      %v7017 = vadd.f32 %v6167, %v6873
      %v7018 = vadd.f32 %v6168, %v6878
      %v7019 = vadd.f32 %v6169, %v6883
      %v7020 = vadd.f32 %v6170, %v6888
      %v7021 = vadd.f32 %v6171, %v6893
      %v7022 = vadd.f32 %v6172, %v6898
      %v7023 = vadd.f32 %v6173, %v6903
      %v7024 = vadd.f32 %v6174, %v6908
      %v7025 = vadd.f32 %v6175, %v6913
      %v7026 = vadd.f32 %v6176, %v6918
      %v7027 = vadd.f32 %v6177, %v6923
      %v7028 = vadd.f32 %v6178, %v6928
      %v7029 = vadd.f32 %v6179, %v6933
      %v7030 = vadd.f32 %v6180, %v6938
      %v7031 = vadd.f32 %v6181, %v6943
      %v7032 = vadd.f32 %v6182, %v6948
      %v7033 = vadd.f32 %v6183, %v6953
      %v7034 = vld [vmem:[#allocation2 + $0x35] sm:$0xff]
      %v7035 = vld [vmem:[#allocation2 + $0x3d] sm:$0xff]
      %v7036 = vld [vmem:[#allocation2 + $0x45] sm:$0xff]
      %v7037 = vld [vmem:[#allocation2 + $0x4d] sm:$0xff]
      %v7038 = vld [vmem:[#allocation2 + $0x55] sm:$0xff]
      %v7039 = vld [vmem:[#allocation2 + $0x5d] sm:$0xff]
      %v7040 = vld [vmem:[#allocation2 + $0x65] sm:$0xff]
      %v7041 = vld [vmem:[#allocation2 + $0x6d] sm:$0xff]
      %v7042 = vld [vmem:[#allocation2 + $0x75] sm:$0xff]
      %v7043 = vld [vmem:[#allocation2 + $0x7d] sm:$0xff]
      %v7044 = vld [vmem:[#allocation2 + $0x85] sm:$0xff]
      %v7045 = vld [vmem:[#allocation2 + $0x8d] sm:$0xff]
      %v7046 = vld [vmem:[#allocation2 + $0x95] sm:$0xff]
      %v7047 = vld [vmem:[#allocation2 + $0x9d] sm:$0xff]
      %v7048 = vld [vmem:[#allocation2 + $0xa5] sm:$0xff]
      %v7049 = vld [vmem:[#allocation2 + $0xad] sm:$0xff]
      %v7050 = vld [vmem:[#allocation2 + $0xb5] sm:$0xff]
      %v7051 = vld [vmem:[#allocation2 + $0xbd] sm:$0xff]
      %v7052 = vld [vmem:[#allocation2 + $0xc5] sm:$0xff]
      %v7053 = vld [vmem:[#allocation2 + $0xcd] sm:$0xff]
      %v7054 = vld [vmem:[#allocation2 + $0xd5] sm:$0xff]
      %v7055 = vld [vmem:[#allocation2 + $0xdd] sm:$0xff]
      %v7056 = vld [vmem:[#allocation2 + $0xe5] sm:$0xff]
      %v7057 = vld [vmem:[#allocation2 + $0xed] sm:$0xff]
      %v7058 = vld [vmem:[#allocation2 + $0xf5] sm:$0xff]
      %v7059 = vld [vmem:[#allocation2 + $0xfd] sm:$0xff]
      %v7060 = vld [vmem:[#allocation2 + $0x105] sm:$0xff]
      %v7061 = vld [vmem:[#allocation2 + $0x10d] sm:$0xff]
      %v7062 = vld [vmem:[#allocation2 + $0x115] sm:$0xff]
      %v7063 = vld [vmem:[#allocation2 + $0x11d] sm:$0xff]
      %v7064 = vld [vmem:[#allocation2 + $0x125] sm:$0xff]
      %v7065 = vld [vmem:[#allocation2 + $0x12d] sm:$0xff]
      %v7066 = vld [vmem:[#allocation2 + $0x135] sm:$0xff]
      %v7067 = vld [vmem:[#allocation2 + $0x13d] sm:$0xff]
      %v7068 = vld [vmem:[#allocation2 + $0x145] sm:$0xff]
      %v7069 = vld [vmem:[#allocation2 + $0x14d] sm:$0xff]
      %v7070 = vld [vmem:[#allocation2 + $0x155] sm:$0xff]
      %v7071 = vld [vmem:[#allocation2 + $0x15d] sm:$0xff]
      %v7072 = vld [vmem:[#allocation2 + $0x165] sm:$0xff]
      %v7073 = vld [vmem:[#allocation2 + $0x16d] sm:$0xff]
      %v7074 = vld [vmem:[#allocation2 + $0x175] sm:$0xff]
      %v7075 = vld [vmem:[#allocation2 + $0x17d] sm:$0xff]
      %v7076 = vld [vmem:[#allocation2 + $0x185] sm:$0xff]
      %v7077 = vld [vmem:[#allocation2 + $0x18d] sm:$0xff]
      %v7078 = vld [vmem:[#allocation2 + $0x195] sm:$0xff]
      %v7079 = vld [vmem:[#allocation2 + $0x19d] sm:$0xff]
      %v7080 = vld [vmem:[#allocation2 + $0x1a5] sm:$0xff]
      %v7081 = vld [vmem:[#allocation2 + $0x1ad] sm:$0xff]
      %v7082 = vld [vmem:[#allocation2 + $0x1b5] sm:$0xff]
      %v7083 = vld [vmem:[#allocation2 + $0x1bd] sm:$0xff]
      %v7084 = vld [vmem:[#allocation2 + $0x1c5] sm:$0xff]
      %v7085 = vld [vmem:[#allocation2 + $0x1cd] sm:$0xff]
      %v7086 = vld [vmem:[#allocation2 + $0x1d5] sm:$0xff]
      %v7087 = vld [vmem:[#allocation2 + $0x1dd] sm:$0xff]
      %v7088 = vld [vmem:[#allocation2 + $0x1e5] sm:$0xff]
      %v7089 = vld [vmem:[#allocation2 + $0x1ed] sm:$0xff]
      %v7090 = vld [vmem:[#allocation2 + $0x1f5] sm:$0xff]
      %v7091 = vld [vmem:[#allocation2 + $0x1fd] sm:$0xff]
      %v7092 = vld [vmem:[#allocation2 + $0x205] sm:$0xff]
      %v7093 = vld [vmem:[#allocation2 + $0x20d] sm:$0xff]
      %v7094 = vld [vmem:[#allocation2 + $0x215] sm:$0xff]
      %v7095 = vld [vmem:[#allocation2 + $0x21d] sm:$0xff]
      %v7096 = vld [vmem:[#allocation2 + $0x225] sm:$0xff]
      %v7097 = vld [vmem:[#allocation2 + $0x22d] sm:$0xff]
      %v7098 = vld [vmem:[#allocation2 + $0x235] sm:$0xff]
      %v7099 = vld [vmem:[#allocation2 + $0x23d] sm:$0xff]
      %v7100 = vld [vmem:[#allocation2 + $0x245] sm:$0xff]
      %v7101 = vld [vmem:[#allocation2 + $0x24d] sm:$0xff]
      %v7102 = vld [vmem:[#allocation2 + $0x255] sm:$0xff]
      %v7103 = vld [vmem:[#allocation2 + $0x25d] sm:$0xff]
      %v7104 = vld [vmem:[#allocation2 + $0x265] sm:$0xff]
      %v7105 = vld [vmem:[#allocation2 + $0x26d] sm:$0xff]
      %v7106 = vld [vmem:[#allocation2 + $0x275] sm:$0xff]
      %v7107 = vld [vmem:[#allocation2 + $0x27d] sm:$0xff]
      %v7108 = vld [vmem:[#allocation2 + $0x285] sm:$0xff]
      %v7109 = vld [vmem:[#allocation2 + $0x28d] sm:$0xff]
      %v7110 = vld [vmem:[#allocation2 + $0x295] sm:$0xff]
      %v7111 = vld [vmem:[#allocation2 + $0x29d] sm:$0x3f]
      %s7112 = scalar_lea.vmem %s3, 224
      %v7113 = vld [vmem:[%s7112] sm:$0xff]
      %v7114 = vld [vmem:[%s7112 + $0x8] sm:$0xff]
      %v7115 = vld [vmem:[%s7112 + $0x10] sm:$0xff]
      %v7116 = vld [vmem:[%s7112 + $0x18] sm:$0xff]
      %v7118 = vsel %vm1154, %v7034, 0
      %v7121 = vsel %vm1154, %v7035, 0
      %v7124 = vsel %vm1154, %v7036, 0
      %v7127 = vsel %vm1154, %v7037, 0
      %v7130 = vsel %vm1154, %v7038, 0
      %v7133 = vsel %vm1154, %v7039, 0
      %v7136 = vsel %vm1154, %v7040, 0
      %v7139 = vsel %vm1154, %v7041, 0
      %v7142 = vsel %vm1154, %v7042, 0
      %v7145 = vsel %vm1154, %v7043, 0
      %v7148 = vsel %vm1154, %v7044, 0
      %v7151 = vsel %vm1154, %v7045, 0
      %v7154 = vsel %vm1154, %v7046, 0
      %v7157 = vsel %vm1154, %v7047, 0
      %v7160 = vsel %vm1154, %v7048, 0
      %v7163 = vsel %vm1154, %v7049, 0
      %v7166 = vsel %vm1154, %v7050, 0
      %v7169 = vsel %vm1154, %v7051, 0
      %v7172 = vsel %vm1154, %v7052, 0
      %v7175 = vsel %vm1154, %v7053, 0
      %v7178 = vsel %vm1154, %v7054, 0
      %v7181 = vsel %vm1154, %v7055, 0
      %v7184 = vsel %vm1154, %v7056, 0
      %v7187 = vsel %vm1154, %v7057, 0
      %v7190 = vsel %vm1154, %v7058, 0
      %v7193 = vsel %vm1154, %v7059, 0
      %v7196 = vsel %vm1154, %v7060, 0
      %v7199 = vsel %vm1154, %v7061, 0
      %v7202 = vsel %vm1154, %v7062, 0
      %v7205 = vsel %vm1154, %v7063, 0
      %v7208 = vsel %vm1154, %v7064, 0
      %v7211 = vsel %vm1154, %v7065, 0
      %v7214 = vsel %vm1154, %v7066, 0
      %v7217 = vsel %vm1154, %v7067, 0
      %v7220 = vsel %vm1154, %v7068, 0
      %v7223 = vsel %vm1154, %v7069, 0
      %v7226 = vsel %vm1154, %v7070, 0
      %v7229 = vsel %vm1154, %v7071, 0
      %v7232 = vsel %vm1154, %v7072, 0
      %v7235 = vsel %vm1154, %v7073, 0
      %v7238 = vsel %vm1154, %v7074, 0
      %v7241 = vsel %vm1154, %v7075, 0
      %v7244 = vsel %vm1154, %v7076, 0
      %v7247 = vsel %vm1154, %v7077, 0
      %v7250 = vsel %vm1154, %v7078, 0
      %v7253 = vsel %vm1154, %v7079, 0
      %v7256 = vsel %vm1154, %v7080, 0
      %v7259 = vsel %vm1154, %v7081, 0
      %v7262 = vsel %vm1154, %v7082, 0
      %v7265 = vsel %vm1154, %v7083, 0
      %v7268 = vsel %vm1154, %v7084, 0
      %v7271 = vsel %vm1154, %v7085, 0
      %v7274 = vsel %vm1154, %v7086, 0
      %v7277 = vsel %vm1154, %v7087, 0
      %v7280 = vsel %vm1154, %v7088, 0
      %v7283 = vsel %vm1154, %v7089, 0
      %v7286 = vsel %vm1154, %v7090, 0
      %v7289 = vsel %vm1154, %v7091, 0
      %v7292 = vsel %vm1154, %v7092, 0
      %v7295 = vsel %vm1154, %v7093, 0
      %v7298 = vsel %vm1154, %v7094, 0
      %v7301 = vsel %vm1154, %v7095, 0
      %v7304 = vsel %vm1154, %v7096, 0
      %v7307 = vsel %vm1154, %v7097, 0
      %v7310 = vsel %vm1154, %v7098, 0
      %v7313 = vsel %vm1154, %v7099, 0
      %v7316 = vsel %vm1154, %v7100, 0
      %v7319 = vsel %vm1154, %v7101, 0
      %v7322 = vsel %vm1154, %v7102, 0
      %v7325 = vsel %vm1154, %v7103, 0
      %v7328 = vsel %vm1154, %v7104, 0
      %v7331 = vsel %vm1154, %v7105, 0
      %v7334 = vsel %vm1154, %v7106, 0
      %v7337 = vsel %vm1154, %v7107, 0
      %v7340 = vsel %vm1154, %v7108, 0
      %v7343 = vsel %vm1154, %v7109, 0
      %v7346 = vsel %vm1154, %v7110, 0
      %v7349 = vsel %vm1154, %v7111, 0
      %7351 = vmatprep.subr.mxu0 0.0
      %7352 = vmatpush1.msra.mxu0 %v7113
      %7353 = vmatprep.subr.mxu0 0.0
      %7354 = vmatpush1.msra.mxu0 %v7114
      %7355 = vmatprep.subr.mxu0 0.0
      %7356 = vmatpush1.msra.mxu0 %v7115
      %7357 = vmatprep.subr.mxu0 0.0
      %7358 = vmatpush1.msra.mxu0 %v7116
      %7359 = vmatprep.subr.mxu0 0.0
      %7360 = vmatpush1.msra.mxu0 0.0
      %7361 = vmatprep.subr.mxu0 0.0
      %7362 = vmatpush1.msra.mxu0 0.0
      %7363 = vmatprep.subr.mxu0 0.0
      %7364 = vmatpush1.msra.mxu0 0.0
      %7365 = vmatprep.subr.mxu0 0.0
      %7366 = vmatpush1.msra.mxu0 0.0
      %7367 = vmatprep.subr.mxu0 0.0
      %7368 = vmatpush1.msra.mxu0 0.0
      %7369 = vmatprep.subr.mxu0 0.0
      %7370 = vmatpush1.msra.mxu0 0.0
      %7371 = vmatprep.subr.mxu0 0.0
      %7372 = vmatpush1.msra.mxu0 0.0
      %7373 = vmatprep.subr.mxu0 0.0
      %7374 = vmatpush1.msra.mxu0 0.0
      %7375 = vmatprep.subr.mxu0 0.0
      %7376 = vmatpush1.msra.mxu0 0.0
      %7377 = vmatprep.subr.mxu0 0.0
      %7378 = vmatpush1.msra.mxu0 0.0
      %7379 = vmatprep.subr.mxu0 0.0
      %7380 = vmatpush1.msra.mxu0 0.0
      %7381 = vmatprep.subr.mxu0 0.0
      %7382 = vmatpush1.msra.mxu0 0.0
      %7383 = vmatprep.subr.mxu0 0.0
      %7384 = vmatpush1.msra.mxu0 0.0
      %7385 = vmatprep.subr.mxu0 0.0
      %7386 = vmatpush1.msra.mxu0 0.0
      %7387 = vmatprep.subr.mxu0 0.0
      %7388 = vmatpush1.msra.mxu0 0.0
      %7389 = vmatprep.subr.mxu0 0.0
      %7390 = vmatpush1.msra.mxu0 0.0
      %7391 = vmatprep.subr.mxu0 0.0
      %7392 = vmatpush1.msra.mxu0 0.0
      %7393 = vmatprep.subr.mxu0 0.0
      %7394 = vmatpush1.msra.mxu0 0.0
      %7395 = vmatprep.subr.mxu0 0.0
      %7396 = vmatpush1.msra.mxu0 0.0
      %7397 = vmatprep.subr.mxu0 0.0
      %7398 = vmatpush1.msra.mxu0 0.0
      %7399 = vmatprep.subr.mxu0 0.0
      %7400 = vmatpush1.msra.mxu0 0.0
      %7401 = vmatprep.subr.mxu0 0.0
      %7402 = vmatpush1.msra.mxu0 0.0
      %7403 = vmatprep.subr.mxu0 0.0
      %7404 = vmatpush1.msra.mxu0 0.0
      %7405 = vmatprep.subr.mxu0 0.0
      %7406 = vmatpush1.msra.mxu0 0.0
      %7407 = vmatprep.subr.mxu0 0.0
      %7408 = vmatpush1.msra.mxu0 0.0
      %7409 = vmatprep.subr.mxu0 0.0
      %7410 = vmatpush1.msra.mxu0 0.0
      %7411 = vmatprep.subr.mxu0 0.0
      %7412 = vmatpush1.msra.mxu0 0.0
      %7413 = vmatprep.subr.mxu0 0.0
      %7414 = vmatpush1.msra.mxu0 0.0
      %7415 = vmatprep.mubr.f32.mxu0 0.0
      %7416 = vmatmul.mubr.f32.gmra.mrb[0].mxu0 %v7118
      %v7417 = vpop.f32.mrb[0].mxu0
      %v7418 = vadd.f32 0.0, %v7417
      %v7419 = vpop.f32.mrb[0].mxu0
      %7420 = vmatprep.mubr.f32.mxu0 0.0
      %7421 = vmatmul.mubr.f32.gmra.mrb[0].mxu0 %v7121
      %v7422 = vpop.f32.mrb[0].mxu0
      %v7423 = vadd.f32 0.0, %v7422
      %v7424 = vpop.f32.mrb[0].mxu0
      %7425 = vmatprep.mubr.f32.mxu0 0.0
      %7426 = vmatmul.mubr.f32.gmra.mrb[0].mxu0 %v7124
      %v7427 = vpop.f32.mrb[0].mxu0
      %v7428 = vadd.f32 0.0, %v7427
      %v7429 = vpop.f32.mrb[0].mxu0
      %7430 = vmatprep.mubr.f32.mxu0 0.0
      %7431 = vmatmul.mubr.f32.gmra.mrb[0].mxu0 %v7127
      %v7432 = vpop.f32.mrb[0].mxu0
      %v7433 = vadd.f32 0.0, %v7432
      %v7434 = vpop.f32.mrb[0].mxu0
      %7435 = vmatprep.mubr.f32.mxu0 0.0
      %7436 = vmatmul.mubr.f32.gmra.mrb[0].mxu0 %v7130
      %v7437 = vpop.f32.mrb[0].mxu0
      %v7438 = vadd.f32 0.0, %v7437
      %v7439 = vpop.f32.mrb[0].mxu0
      %7440 = vmatprep.mubr.f32.mxu0 0.0
      %7441 = vmatmul.mubr.f32.gmra.mrb[0].mxu0 %v7133
      %v7442 = vpop.f32.mrb[0].mxu0
      %v7443 = vadd.f32 0.0, %v7442
      %v7444 = vpop.f32.mrb[0].mxu0
      %7445 = vmatprep.mubr.f32.mxu0 0.0
      %7446 = vmatmul.mubr.f32.gmra.mrb[0].mxu0 %v7136
      %v7447 = vpop.f32.mrb[0].mxu0
      %v7448 = vadd.f32 0.0, %v7447
      %v7449 = vpop.f32.mrb[0].mxu0
      %7450 = vmatprep.mubr.f32.mxu0 0.0
      %7451 = vmatmul.mubr.f32.gmra.mrb[0].mxu0 %v7139
      %v7452 = vpop.f32.mrb[0].mxu0
      %v7453 = vadd.f32 0.0, %v7452
      %v7454 = vpop.f32.mrb[0].mxu0
      %7455 = vmatprep.mubr.f32.mxu0 0.0
      %7456 = vmatmul.mubr.f32.gmra.mrb[0].mxu0 %v7142
      %v7457 = vpop.f32.mrb[0].mxu0
      %v7458 = vadd.f32 0.0, %v7457
      %v7459 = vpop.f32.mrb[0].mxu0
      %7460 = vmatprep.mubr.f32.mxu0 0.0
      %7461 = vmatmul.mubr.f32.gmra.mrb[0].mxu0 %v7145
      %v7462 = vpop.f32.mrb[0].mxu0
      %v7463 = vadd.f32 0.0, %v7462
      %v7464 = vpop.f32.mrb[0].mxu0
      %7465 = vmatprep.mubr.f32.mxu0 0.0
      %7466 = vmatmul.mubr.f32.gmra.mrb[0].mxu0 %v7148
      %v7467 = vpop.f32.mrb[0].mxu0
      %v7468 = vadd.f32 0.0, %v7467
      %v7469 = vpop.f32.mrb[0].mxu0
      %7470 = vmatprep.mubr.f32.mxu0 0.0
      %7471 = vmatmul.mubr.f32.gmra.mrb[0].mxu0 %v7151
      %v7472 = vpop.f32.mrb[0].mxu0
      %v7473 = vadd.f32 0.0, %v7472
      %v7474 = vpop.f32.mrb[0].mxu0
      %7475 = vmatprep.mubr.f32.mxu0 0.0
      %7476 = vmatmul.mubr.f32.gmra.mrb[0].mxu0 %v7154
      %v7477 = vpop.f32.mrb[0].mxu0
      %v7478 = vadd.f32 0.0, %v7477
      %v7479 = vpop.f32.mrb[0].mxu0
      %7480 = vmatprep.mubr.f32.mxu0 0.0
      %7481 = vmatmul.mubr.f32.gmra.mrb[0].mxu0 %v7157
      %v7482 = vpop.f32.mrb[0].mxu0
      %v7483 = vadd.f32 0.0, %v7482
      %v7484 = vpop.f32.mrb[0].mxu0
      %7485 = vmatprep.mubr.f32.mxu0 0.0
      %7486 = vmatmul.mubr.f32.gmra.mrb[0].mxu0 %v7160
      %v7487 = vpop.f32.mrb[0].mxu0
      %v7488 = vadd.f32 0.0, %v7487
      %v7489 = vpop.f32.mrb[0].mxu0
      %7490 = vmatprep.mubr.f32.mxu0 0.0
      %7491 = vmatmul.mubr.f32.gmra.mrb[0].mxu0 %v7163
      %v7492 = vpop.f32.mrb[0].mxu0
      %v7493 = vadd.f32 0.0, %v7492
      %v7494 = vpop.f32.mrb[0].mxu0
      %7495 = vmatprep.mubr.f32.mxu0 0.0
      %7496 = vmatmul.mubr.f32.gmra.mrb[0].mxu0 %v7166
      %v7497 = vpop.f32.mrb[0].mxu0
      %v7498 = vadd.f32 0.0, %v7497
      %v7499 = vpop.f32.mrb[0].mxu0
      %7500 = vmatprep.mubr.f32.mxu0 0.0
      %7501 = vmatmul.mubr.f32.gmra.mrb[0].mxu0 %v7169
      %v7502 = vpop.f32.mrb[0].mxu0
      %v7503 = vadd.f32 0.0, %v7502
      %v7504 = vpop.f32.mrb[0].mxu0
      %7505 = vmatprep.mubr.f32.mxu0 0.0
      %7506 = vmatmul.mubr.f32.gmra.mrb[0].mxu0 %v7172
      %v7507 = vpop.f32.mrb[0].mxu0
      %v7508 = vadd.f32 0.0, %v7507
      %v7509 = vpop.f32.mrb[0].mxu0
      %7510 = vmatprep.mubr.f32.mxu0 0.0
      %7511 = vmatmul.mubr.f32.gmra.mrb[0].mxu0 %v7175
      %v7512 = vpop.f32.mrb[0].mxu0
      %v7513 = vadd.f32 0.0, %v7512
      %v7514 = vpop.f32.mrb[0].mxu0
      %7515 = vmatprep.mubr.f32.mxu0 0.0
      %7516 = vmatmul.mubr.f32.gmra.mrb[0].mxu0 %v7178
      %v7517 = vpop.f32.mrb[0].mxu0
      %v7518 = vadd.f32 0.0, %v7517
      %v7519 = vpop.f32.mrb[0].mxu0
      %7520 = vmatprep.mubr.f32.mxu0 0.0
      %7521 = vmatmul.mubr.f32.gmra.mrb[0].mxu0 %v7181
      %v7522 = vpop.f32.mrb[0].mxu0
      %v7523 = vadd.f32 0.0, %v7522
      %v7524 = vpop.f32.mrb[0].mxu0
      %7525 = vmatprep.mubr.f32.mxu0 0.0
      %7526 = vmatmul.mubr.f32.gmra.mrb[0].mxu0 %v7184
      %v7527 = vpop.f32.mrb[0].mxu0
      %v7528 = vadd.f32 0.0, %v7527
      %v7529 = vpop.f32.mrb[0].mxu0
      %7530 = vmatprep.mubr.f32.mxu0 0.0
      %7531 = vmatmul.mubr.f32.gmra.mrb[0].mxu0 %v7187
      %v7532 = vpop.f32.mrb[0].mxu0
      %v7533 = vadd.f32 0.0, %v7532
      %v7534 = vpop.f32.mrb[0].mxu0
      %7535 = vmatprep.mubr.f32.mxu0 0.0
      %7536 = vmatmul.mubr.f32.gmra.mrb[0].mxu0 %v7190
      %v7537 = vpop.f32.mrb[0].mxu0
      %v7538 = vadd.f32 0.0, %v7537
      %v7539 = vpop.f32.mrb[0].mxu0
      %7540 = vmatprep.mubr.f32.mxu0 0.0
      %7541 = vmatmul.mubr.f32.gmra.mrb[0].mxu0 %v7193
      %v7542 = vpop.f32.mrb[0].mxu0
      %v7543 = vadd.f32 0.0, %v7542
      %v7544 = vpop.f32.mrb[0].mxu0
      %7545 = vmatprep.mubr.f32.mxu0 0.0
      %7546 = vmatmul.mubr.f32.gmra.mrb[0].mxu0 %v7196
      %v7547 = vpop.f32.mrb[0].mxu0
      %v7548 = vadd.f32 0.0, %v7547
      %v7549 = vpop.f32.mrb[0].mxu0
      %7550 = vmatprep.mubr.f32.mxu0 0.0
      %7551 = vmatmul.mubr.f32.gmra.mrb[0].mxu0 %v7199
      %v7552 = vpop.f32.mrb[0].mxu0
      %v7553 = vadd.f32 0.0, %v7552
      %v7554 = vpop.f32.mrb[0].mxu0
      %7555 = vmatprep.mubr.f32.mxu0 0.0
      %7556 = vmatmul.mubr.f32.gmra.mrb[0].mxu0 %v7202
      %v7557 = vpop.f32.mrb[0].mxu0
      %v7558 = vadd.f32 0.0, %v7557
      %v7559 = vpop.f32.mrb[0].mxu0
      %7560 = vmatprep.mubr.f32.mxu0 0.0
      %7561 = vmatmul.mubr.f32.gmra.mrb[0].mxu0 %v7205
      %v7562 = vpop.f32.mrb[0].mxu0
      %v7563 = vadd.f32 0.0, %v7562
      %v7564 = vpop.f32.mrb[0].mxu0
      %7565 = vmatprep.mubr.f32.mxu0 0.0
      %7566 = vmatmul.mubr.f32.gmra.mrb[0].mxu0 %v7208
      %v7567 = vpop.f32.mrb[0].mxu0
      %v7568 = vadd.f32 0.0, %v7567
      %v7569 = vpop.f32.mrb[0].mxu0
      %7570 = vmatprep.mubr.f32.mxu0 0.0
      %7571 = vmatmul.mubr.f32.gmra.mrb[0].mxu0 %v7211
      %v7572 = vpop.f32.mrb[0].mxu0
      %v7573 = vadd.f32 0.0, %v7572
      %v7574 = vpop.f32.mrb[0].mxu0
      %7575 = vmatprep.mubr.f32.mxu0 0.0
      %7576 = vmatmul.mubr.f32.gmra.mrb[0].mxu0 %v7214
      %v7577 = vpop.f32.mrb[0].mxu0
      %v7578 = vadd.f32 0.0, %v7577
      %v7579 = vpop.f32.mrb[0].mxu0
      %7580 = vmatprep.mubr.f32.mxu0 0.0
      %7581 = vmatmul.mubr.f32.gmra.mrb[0].mxu0 %v7217
      %v7582 = vpop.f32.mrb[0].mxu0
      %v7583 = vadd.f32 0.0, %v7582
      %v7584 = vpop.f32.mrb[0].mxu0
      %7585 = vmatprep.mubr.f32.mxu0 0.0
      %7586 = vmatmul.mubr.f32.gmra.mrb[0].mxu0 %v7220
      %v7587 = vpop.f32.mrb[0].mxu0
      %v7588 = vadd.f32 0.0, %v7587
      %v7589 = vpop.f32.mrb[0].mxu0
      %7590 = vmatprep.mubr.f32.mxu0 0.0
      %7591 = vmatmul.mubr.f32.gmra.mrb[0].mxu0 %v7223
      %v7592 = vpop.f32.mrb[0].mxu0
      %v7593 = vadd.f32 0.0, %v7592
      %v7594 = vpop.f32.mrb[0].mxu0
      %7595 = vmatprep.mubr.f32.mxu0 0.0
      %7596 = vmatmul.mubr.f32.gmra.mrb[0].mxu0 %v7226
      %v7597 = vpop.f32.mrb[0].mxu0
      %v7598 = vadd.f32 0.0, %v7597
      %v7599 = vpop.f32.mrb[0].mxu0
      %7600 = vmatprep.mubr.f32.mxu0 0.0
      %7601 = vmatmul.mubr.f32.gmra.mrb[0].mxu0 %v7229
      %v7602 = vpop.f32.mrb[0].mxu0
      %v7603 = vadd.f32 0.0, %v7602
      %v7604 = vpop.f32.mrb[0].mxu0
      %7605 = vmatprep.mubr.f32.mxu0 0.0
      %7606 = vmatmul.mubr.f32.gmra.mrb[0].mxu0 %v7232
      %v7607 = vpop.f32.mrb[0].mxu0
      %v7608 = vadd.f32 0.0, %v7607
      %v7609 = vpop.f32.mrb[0].mxu0
      %7610 = vmatprep.mubr.f32.mxu0 0.0
      %7611 = vmatmul.mubr.f32.gmra.mrb[0].mxu0 %v7235
      %v7612 = vpop.f32.mrb[0].mxu0
      %v7613 = vadd.f32 0.0, %v7612
      %v7614 = vpop.f32.mrb[0].mxu0
      %7615 = vmatprep.mubr.f32.mxu0 0.0
      %7616 = vmatmul.mubr.f32.gmra.mrb[0].mxu0 %v7238
      %v7617 = vpop.f32.mrb[0].mxu0
      %v7618 = vadd.f32 0.0, %v7617
      %v7619 = vpop.f32.mrb[0].mxu0
      %7620 = vmatprep.mubr.f32.mxu0 0.0
      %7621 = vmatmul.mubr.f32.gmra.mrb[0].mxu0 %v7241
      %v7622 = vpop.f32.mrb[0].mxu0
      %v7623 = vadd.f32 0.0, %v7622
      %v7624 = vpop.f32.mrb[0].mxu0
      %7625 = vmatprep.mubr.f32.mxu0 0.0
      %7626 = vmatmul.mubr.f32.gmra.mrb[0].mxu0 %v7244
      %v7627 = vpop.f32.mrb[0].mxu0
      %v7628 = vadd.f32 0.0, %v7627
      %v7629 = vpop.f32.mrb[0].mxu0
      %7630 = vmatprep.mubr.f32.mxu0 0.0
      %7631 = vmatmul.mubr.f32.gmra.mrb[0].mxu0 %v7247
      %v7632 = vpop.f32.mrb[0].mxu0
      %v7633 = vadd.f32 0.0, %v7632
      %v7634 = vpop.f32.mrb[0].mxu0
      %7635 = vmatprep.mubr.f32.mxu0 0.0
      %7636 = vmatmul.mubr.f32.gmra.mrb[0].mxu0 %v7250
      %v7637 = vpop.f32.mrb[0].mxu0
      %v7638 = vadd.f32 0.0, %v7637
      %v7639 = vpop.f32.mrb[0].mxu0
      %7640 = vmatprep.mubr.f32.mxu0 0.0
      %7641 = vmatmul.mubr.f32.gmra.mrb[0].mxu0 %v7253
      %v7642 = vpop.f32.mrb[0].mxu0
      %v7643 = vadd.f32 0.0, %v7642
      %v7644 = vpop.f32.mrb[0].mxu0
      %7645 = vmatprep.mubr.f32.mxu0 0.0
      %7646 = vmatmul.mubr.f32.gmra.mrb[0].mxu0 %v7256
      %v7647 = vpop.f32.mrb[0].mxu0
      %v7648 = vadd.f32 0.0, %v7647
      %v7649 = vpop.f32.mrb[0].mxu0
      %7650 = vmatprep.mubr.f32.mxu0 0.0
      %7651 = vmatmul.mubr.f32.gmra.mrb[0].mxu0 %v7259
      %v7652 = vpop.f32.mrb[0].mxu0
      %v7653 = vadd.f32 0.0, %v7652
      %v7654 = vpop.f32.mrb[0].mxu0
      %7655 = vmatprep.mubr.f32.mxu0 0.0
      %7656 = vmatmul.mubr.f32.gmra.mrb[0].mxu0 %v7262
      %v7657 = vpop.f32.mrb[0].mxu0
      %v7658 = vadd.f32 0.0, %v7657
      %v7659 = vpop.f32.mrb[0].mxu0
      %7660 = vmatprep.mubr.f32.mxu0 0.0
      %7661 = vmatmul.mubr.f32.gmra.mrb[0].mxu0 %v7265
      %v7662 = vpop.f32.mrb[0].mxu0
      %v7663 = vadd.f32 0.0, %v7662
      %v7664 = vpop.f32.mrb[0].mxu0
      %7665 = vmatprep.mubr.f32.mxu0 0.0
      %7666 = vmatmul.mubr.f32.gmra.mrb[0].mxu0 %v7268
      %v7667 = vpop.f32.mrb[0].mxu0
      %v7668 = vadd.f32 0.0, %v7667
      %v7669 = vpop.f32.mrb[0].mxu0
      %7670 = vmatprep.mubr.f32.mxu0 0.0
      %7671 = vmatmul.mubr.f32.gmra.mrb[0].mxu0 %v7271
      %v7672 = vpop.f32.mrb[0].mxu0
      %v7673 = vadd.f32 0.0, %v7672
      %v7674 = vpop.f32.mrb[0].mxu0
      %7675 = vmatprep.mubr.f32.mxu0 0.0
      %7676 = vmatmul.mubr.f32.gmra.mrb[0].mxu0 %v7274
      %v7677 = vpop.f32.mrb[0].mxu0
      %v7678 = vadd.f32 0.0, %v7677
      %v7679 = vpop.f32.mrb[0].mxu0
      %7680 = vmatprep.mubr.f32.mxu0 0.0
      %7681 = vmatmul.mubr.f32.gmra.mrb[0].mxu0 %v7277
      %v7682 = vpop.f32.mrb[0].mxu0
      %v7683 = vadd.f32 0.0, %v7682
      %v7684 = vpop.f32.mrb[0].mxu0
      %7685 = vmatprep.mubr.f32.mxu0 0.0
      %7686 = vmatmul.mubr.f32.gmra.mrb[0].mxu0 %v7280
      %v7687 = vpop.f32.mrb[0].mxu0
      %v7688 = vadd.f32 0.0, %v7687
      %v7689 = vpop.f32.mrb[0].mxu0
      %7690 = vmatprep.mubr.f32.mxu0 0.0
      %7691 = vmatmul.mubr.f32.gmra.mrb[0].mxu0 %v7283
      %v7692 = vpop.f32.mrb[0].mxu0
      %v7693 = vadd.f32 0.0, %v7692
      %v7694 = vpop.f32.mrb[0].mxu0
      %7695 = vmatprep.mubr.f32.mxu0 0.0
      %7696 = vmatmul.mubr.f32.gmra.mrb[0].mxu0 %v7286
      %v7697 = vpop.f32.mrb[0].mxu0
      %v7698 = vadd.f32 0.0, %v7697
      %v7699 = vpop.f32.mrb[0].mxu0
      %7700 = vmatprep.mubr.f32.mxu0 0.0
      %7701 = vmatmul.mubr.f32.gmra.mrb[0].mxu0 %v7289
      %v7702 = vpop.f32.mrb[0].mxu0
      %v7703 = vadd.f32 0.0, %v7702
      %v7704 = vpop.f32.mrb[0].mxu0
      %7705 = vmatprep.mubr.f32.mxu0 0.0
      %7706 = vmatmul.mubr.f32.gmra.mrb[0].mxu0 %v7292
      %v7707 = vpop.f32.mrb[0].mxu0
      %v7708 = vadd.f32 0.0, %v7707
      %v7709 = vpop.f32.mrb[0].mxu0
      %7710 = vmatprep.mubr.f32.mxu0 0.0
      %7711 = vmatmul.mubr.f32.gmra.mrb[0].mxu0 %v7295
      %v7712 = vpop.f32.mrb[0].mxu0
      %v7713 = vadd.f32 0.0, %v7712
      %v7714 = vpop.f32.mrb[0].mxu0
      %7715 = vmatprep.mubr.f32.mxu0 0.0
      %7716 = vmatmul.mubr.f32.gmra.mrb[0].mxu0 %v7298
      %v7717 = vpop.f32.mrb[0].mxu0
      %v7718 = vadd.f32 0.0, %v7717
      %v7719 = vpop.f32.mrb[0].mxu0
      %7720 = vmatprep.mubr.f32.mxu0 0.0
      %7721 = vmatmul.mubr.f32.gmra.mrb[0].mxu0 %v7301
      %v7722 = vpop.f32.mrb[0].mxu0
      %v7723 = vadd.f32 0.0, %v7722
      %v7724 = vpop.f32.mrb[0].mxu0
      %7725 = vmatprep.mubr.f32.mxu0 0.0
      %7726 = vmatmul.mubr.f32.gmra.mrb[0].mxu0 %v7304
      %v7727 = vpop.f32.mrb[0].mxu0
      %v7728 = vadd.f32 0.0, %v7727
      %v7729 = vpop.f32.mrb[0].mxu0
      %7730 = vmatprep.mubr.f32.mxu0 0.0
      %7731 = vmatmul.mubr.f32.gmra.mrb[0].mxu0 %v7307
      %v7732 = vpop.f32.mrb[0].mxu0
      %v7733 = vadd.f32 0.0, %v7732
      %v7734 = vpop.f32.mrb[0].mxu0
      %7735 = vmatprep.mubr.f32.mxu0 0.0
      %7736 = vmatmul.mubr.f32.gmra.mrb[0].mxu0 %v7310
      %v7737 = vpop.f32.mrb[0].mxu0
      %v7738 = vadd.f32 0.0, %v7737
      %v7739 = vpop.f32.mrb[0].mxu0
      %7740 = vmatprep.mubr.f32.mxu0 0.0
      %7741 = vmatmul.mubr.f32.gmra.mrb[0].mxu0 %v7313
      %v7742 = vpop.f32.mrb[0].mxu0
      %v7743 = vadd.f32 0.0, %v7742
      %v7744 = vpop.f32.mrb[0].mxu0
      %7745 = vmatprep.mubr.f32.mxu0 0.0
      %7746 = vmatmul.mubr.f32.gmra.mrb[0].mxu0 %v7316
      %v7747 = vpop.f32.mrb[0].mxu0
      %v7748 = vadd.f32 0.0, %v7747
      %v7749 = vpop.f32.mrb[0].mxu0
      %7750 = vmatprep.mubr.f32.mxu0 0.0
      %7751 = vmatmul.mubr.f32.gmra.mrb[0].mxu0 %v7319
      %v7752 = vpop.f32.mrb[0].mxu0
      %v7753 = vadd.f32 0.0, %v7752
      %v7754 = vpop.f32.mrb[0].mxu0
      %7755 = vmatprep.mubr.f32.mxu0 0.0
      %7756 = vmatmul.mubr.f32.gmra.mrb[0].mxu0 %v7322
      %v7757 = vpop.f32.mrb[0].mxu0
      %v7758 = vadd.f32 0.0, %v7757
      %v7759 = vpop.f32.mrb[0].mxu0
      %7760 = vmatprep.mubr.f32.mxu0 0.0
      %7761 = vmatmul.mubr.f32.gmra.mrb[0].mxu0 %v7325
      %v7762 = vpop.f32.mrb[0].mxu0
      %v7763 = vadd.f32 0.0, %v7762
      %v7764 = vpop.f32.mrb[0].mxu0
      %7765 = vmatprep.mubr.f32.mxu0 0.0
      %7766 = vmatmul.mubr.f32.gmra.mrb[0].mxu0 %v7328
      %v7767 = vpop.f32.mrb[0].mxu0
      %v7768 = vadd.f32 0.0, %v7767
      %v7769 = vpop.f32.mrb[0].mxu0
      %7770 = vmatprep.mubr.f32.mxu0 0.0
      %7771 = vmatmul.mubr.f32.gmra.mrb[0].mxu0 %v7331
      %v7772 = vpop.f32.mrb[0].mxu0
      %v7773 = vadd.f32 0.0, %v7772
      %v7774 = vpop.f32.mrb[0].mxu0
      %7775 = vmatprep.mubr.f32.mxu0 0.0
      %7776 = vmatmul.mubr.f32.gmra.mrb[0].mxu0 %v7334
      %v7777 = vpop.f32.mrb[0].mxu0
      %v7778 = vadd.f32 0.0, %v7777
      %v7779 = vpop.f32.mrb[0].mxu0
      %7780 = vmatprep.mubr.f32.mxu0 0.0
      %7781 = vmatmul.mubr.f32.gmra.mrb[0].mxu0 %v7337
      %v7782 = vpop.f32.mrb[0].mxu0
      %v7783 = vadd.f32 0.0, %v7782
      %v7784 = vpop.f32.mrb[0].mxu0
      %7785 = vmatprep.mubr.f32.mxu0 0.0
      %7786 = vmatmul.mubr.f32.gmra.mrb[0].mxu0 %v7340
      %v7787 = vpop.f32.mrb[0].mxu0
      %v7788 = vadd.f32 0.0, %v7787
      %v7789 = vpop.f32.mrb[0].mxu0
      %7790 = vmatprep.mubr.f32.mxu0 0.0
      %7791 = vmatmul.mubr.f32.gmra.mrb[0].mxu0 %v7343
      %v7792 = vpop.f32.mrb[0].mxu0
      %v7793 = vadd.f32 0.0, %v7792
      %v7794 = vpop.f32.mrb[0].mxu0
      %7795 = vmatprep.mubr.f32.mxu0 0.0
      %7796 = vmatmul.mubr.f32.gmra.mrb[0].mxu0 %v7346
      %v7797 = vpop.f32.mrb[0].mxu0
      %v7798 = vadd.f32 0.0, %v7797
      %v7799 = vpop.f32.mrb[0].mxu0
      %7800 = vmatprep.mubr.f32.mxu0 0.0
      %7801 = vmatmul.mubr.f32.gmra.mrb[0].mxu0 %v7349
      %v7802 = vpop.f32.mrb[0].mxu0
      %v7803 = vadd.f32 0.0, %v7802
      %v7804 = vpop.f32.mrb[0].mxu0
      %7805 = vdwg.mxu0
      %v7806 = vadd.f32 %v6956, %v7418
      %v7807 = vadd.f32 %v6957, %v7423
      %v7808 = vadd.f32 %v6958, %v7428
      %v7809 = vadd.f32 %v6959, %v7433
      %v7810 = vadd.f32 %v6960, %v7438
      %v7811 = vadd.f32 %v6961, %v7443
      %v7812 = vadd.f32 %v6962, %v7448
      %v7813 = vadd.f32 %v6963, %v7453
      %v7814 = vadd.f32 %v6964, %v7458
      %v7815 = vadd.f32 %v6965, %v7463
      %v7816 = vadd.f32 %v6966, %v7468
      %v7817 = vadd.f32 %v6967, %v7473
      %v7818 = vadd.f32 %v6968, %v7478
      %v7819 = vadd.f32 %v6969, %v7483
      %v7820 = vadd.f32 %v6970, %v7488
      %v7821 = vadd.f32 %v6971, %v7493
      %v7822 = vadd.f32 %v6972, %v7498
      %v7823 = vadd.f32 %v6973, %v7503
      %v7824 = vadd.f32 %v6974, %v7508
      %v7825 = vadd.f32 %v6975, %v7513
      %v7826 = vadd.f32 %v6976, %v7518
      %v7827 = vadd.f32 %v6977, %v7523
      %v7828 = vadd.f32 %v6978, %v7528
      %v7829 = vadd.f32 %v6979, %v7533
      %v7830 = vadd.f32 %v6980, %v7538
      %v7831 = vadd.f32 %v6981, %v7543
      %v7832 = vadd.f32 %v6982, %v7548
      %v7833 = vadd.f32 %v6983, %v7553
      %v7834 = vadd.f32 %v6984, %v7558
      %v7835 = vadd.f32 %v6985, %v7563
      %v7836 = vadd.f32 %v6986, %v7568
      %v7837 = vadd.f32 %v6987, %v7573
      %v7838 = vadd.f32 %v6988, %v7578
      %v7839 = vadd.f32 %v6989, %v7583
      %v7840 = vadd.f32 %v6990, %v7588
      %v7841 = vadd.f32 %v6991, %v7593
      %v7842 = vadd.f32 %v6992, %v7598
      %v7843 = vadd.f32 %v6993, %v7603
      %v7844 = vadd.f32 %v6994, %v7608
      %v7845 = vadd.f32 %v6995, %v7613
      %v7846 = vadd.f32 %v6996, %v7618
      %v7847 = vadd.f32 %v6997, %v7623
      %v7848 = vadd.f32 %v6998, %v7628
      %v7849 = vadd.f32 %v6999, %v7633
      %v7850 = vadd.f32 %v7000, %v7638
      %v7851 = vadd.f32 %v7001, %v7643
      %v7852 = vadd.f32 %v7002, %v7648
      %v7853 = vadd.f32 %v7003, %v7653
      %v7854 = vadd.f32 %v7004, %v7658
      %v7855 = vadd.f32 %v7005, %v7663
      %v7856 = vadd.f32 %v7006, %v7668
      %v7857 = vadd.f32 %v7007, %v7673
      %v7858 = vadd.f32 %v7008, %v7678
      %v7859 = vadd.f32 %v7009, %v7683
      %v7860 = vadd.f32 %v7010, %v7688
      %v7861 = vadd.f32 %v7011, %v7693
      %v7862 = vadd.f32 %v7012, %v7698
      %v7863 = vadd.f32 %v7013, %v7703
      %v7864 = vadd.f32 %v7014, %v7708
      %v7865 = vadd.f32 %v7015, %v7713
      %v7866 = vadd.f32 %v7016, %v7718
      %v7867 = vadd.f32 %v7017, %v7723
      %v7868 = vadd.f32 %v7018, %v7728
      %v7869 = vadd.f32 %v7019, %v7733
      %v7870 = vadd.f32 %v7020, %v7738
      %v7871 = vadd.f32 %v7021, %v7743
      %v7872 = vadd.f32 %v7022, %v7748
      %v7873 = vadd.f32 %v7023, %v7753
      %v7874 = vadd.f32 %v7024, %v7758
      %v7875 = vadd.f32 %v7025, %v7763
      %v7876 = vadd.f32 %v7026, %v7768
      %v7877 = vadd.f32 %v7027, %v7773
      %v7878 = vadd.f32 %v7028, %v7778
      %v7879 = vadd.f32 %v7029, %v7783
      %v7880 = vadd.f32 %v7030, %v7788
      %v7881 = vadd.f32 %v7031, %v7793
      %v7882 = vadd.f32 %v7032, %v7798
      %v7883 = vadd.f32 %v7033, %v7803
      %v7884 = vld [vmem:[#allocation2 + $0x36] sm:$0xff]
      %v7885 = vld [vmem:[#allocation2 + $0x3e] sm:$0xff]
      %v7886 = vld [vmem:[#allocation2 + $0x46] sm:$0xff]
      %v7887 = vld [vmem:[#allocation2 + $0x4e] sm:$0xff]
      %v7888 = vld [vmem:[#allocation2 + $0x56] sm:$0xff]
      %v7889 = vld [vmem:[#allocation2 + $0x5e] sm:$0xff]
      %v7890 = vld [vmem:[#allocation2 + $0x66] sm:$0xff]
      %v7891 = vld [vmem:[#allocation2 + $0x6e] sm:$0xff]
      %v7892 = vld [vmem:[#allocation2 + $0x76] sm:$0xff]
      %v7893 = vld [vmem:[#allocation2 + $0x7e] sm:$0xff]
      %v7894 = vld [vmem:[#allocation2 + $0x86] sm:$0xff]
      %v7895 = vld [vmem:[#allocation2 + $0x8e] sm:$0xff]
      %v7896 = vld [vmem:[#allocation2 + $0x96] sm:$0xff]
      %v7897 = vld [vmem:[#allocation2 + $0x9e] sm:$0xff]
      %v7898 = vld [vmem:[#allocation2 + $0xa6] sm:$0xff]
      %v7899 = vld [vmem:[#allocation2 + $0xae] sm:$0xff]
      %v7900 = vld [vmem:[#allocation2 + $0xb6] sm:$0xff]
      %v7901 = vld [vmem:[#allocation2 + $0xbe] sm:$0xff]
      %v7902 = vld [vmem:[#allocation2 + $0xc6] sm:$0xff]
      %v7903 = vld [vmem:[#allocation2 + $0xce] sm:$0xff]
      %v7904 = vld [vmem:[#allocation2 + $0xd6] sm:$0xff]
      %v7905 = vld [vmem:[#allocation2 + $0xde] sm:$0xff]
      %v7906 = vld [vmem:[#allocation2 + $0xe6] sm:$0xff]
      %v7907 = vld [vmem:[#allocation2 + $0xee] sm:$0xff]
      %v7908 = vld [vmem:[#allocation2 + $0xf6] sm:$0xff]
      %v7909 = vld [vmem:[#allocation2 + $0xfe] sm:$0xff]
      %v7910 = vld [vmem:[#allocation2 + $0x106] sm:$0xff]
      %v7911 = vld [vmem:[#allocation2 + $0x10e] sm:$0xff]
      %v7912 = vld [vmem:[#allocation2 + $0x116] sm:$0xff]
      %v7913 = vld [vmem:[#allocation2 + $0x11e] sm:$0xff]
      %v7914 = vld [vmem:[#allocation2 + $0x126] sm:$0xff]
      %v7915 = vld [vmem:[#allocation2 + $0x12e] sm:$0xff]
      %v7916 = vld [vmem:[#allocation2 + $0x136] sm:$0xff]
      %v7917 = vld [vmem:[#allocation2 + $0x13e] sm:$0xff]
      %v7918 = vld [vmem:[#allocation2 + $0x146] sm:$0xff]
      %v7919 = vld [vmem:[#allocation2 + $0x14e] sm:$0xff]
      %v7920 = vld [vmem:[#allocation2 + $0x156] sm:$0xff]
      %v7921 = vld [vmem:[#allocation2 + $0x15e] sm:$0xff]
      %v7922 = vld [vmem:[#allocation2 + $0x166] sm:$0xff]
      %v7923 = vld [vmem:[#allocation2 + $0x16e] sm:$0xff]
      %v7924 = vld [vmem:[#allocation2 + $0x176] sm:$0xff]
      %v7925 = vld [vmem:[#allocation2 + $0x17e] sm:$0xff]
      %v7926 = vld [vmem:[#allocation2 + $0x186] sm:$0xff]
      %v7927 = vld [vmem:[#allocation2 + $0x18e] sm:$0xff]
      %v7928 = vld [vmem:[#allocation2 + $0x196] sm:$0xff]
      %v7929 = vld [vmem:[#allocation2 + $0x19e] sm:$0xff]
      %v7930 = vld [vmem:[#allocation2 + $0x1a6] sm:$0xff]
      %v7931 = vld [vmem:[#allocation2 + $0x1ae] sm:$0xff]
      %v7932 = vld [vmem:[#allocation2 + $0x1b6] sm:$0xff]
      %v7933 = vld [vmem:[#allocation2 + $0x1be] sm:$0xff]
      %v7934 = vld [vmem:[#allocation2 + $0x1c6] sm:$0xff]
      %v7935 = vld [vmem:[#allocation2 + $0x1ce] sm:$0xff]
      %v7936 = vld [vmem:[#allocation2 + $0x1d6] sm:$0xff]
      %v7937 = vld [vmem:[#allocation2 + $0x1de] sm:$0xff]
      %v7938 = vld [vmem:[#allocation2 + $0x1e6] sm:$0xff]
      %v7939 = vld [vmem:[#allocation2 + $0x1ee] sm:$0xff]
      %v7940 = vld [vmem:[#allocation2 + $0x1f6] sm:$0xff]
      %v7941 = vld [vmem:[#allocation2 + $0x1fe] sm:$0xff]
      %v7942 = vld [vmem:[#allocation2 + $0x206] sm:$0xff]
      %v7943 = vld [vmem:[#allocation2 + $0x20e] sm:$0xff]
      %v7944 = vld [vmem:[#allocation2 + $0x216] sm:$0xff]
      %v7945 = vld [vmem:[#allocation2 + $0x21e] sm:$0xff]
      %v7946 = vld [vmem:[#allocation2 + $0x226] sm:$0xff]
      %v7947 = vld [vmem:[#allocation2 + $0x22e] sm:$0xff]
      %v7948 = vld [vmem:[#allocation2 + $0x236] sm:$0xff]
      %v7949 = vld [vmem:[#allocation2 + $0x23e] sm:$0xff]
      %v7950 = vld [vmem:[#allocation2 + $0x246] sm:$0xff]
      %v7951 = vld [vmem:[#allocation2 + $0x24e] sm:$0xff]
      %v7952 = vld [vmem:[#allocation2 + $0x256] sm:$0xff]
      %v7953 = vld [vmem:[#allocation2 + $0x25e] sm:$0xff]
      %v7954 = vld [vmem:[#allocation2 + $0x266] sm:$0xff]
      %v7955 = vld [vmem:[#allocation2 + $0x26e] sm:$0xff]
      %v7956 = vld [vmem:[#allocation2 + $0x276] sm:$0xff]
      %v7957 = vld [vmem:[#allocation2 + $0x27e] sm:$0xff]
      %v7958 = vld [vmem:[#allocation2 + $0x286] sm:$0xff]
      %v7959 = vld [vmem:[#allocation2 + $0x28e] sm:$0xff]
      %v7960 = vld [vmem:[#allocation2 + $0x296] sm:$0xff]
      %v7961 = vld [vmem:[#allocation2 + $0x29e] sm:$0x3f]
      %s7962 = scalar_lea.vmem %s3, 256
      %v7963 = vld [vmem:[%s7962] sm:$0xff]
      %v7964 = vld [vmem:[%s7962 + $0x8] sm:$0xff]
      %v7965 = vld [vmem:[%s7962 + $0x10] sm:$0xff]
      %v7966 = vld [vmem:[%s7962 + $0x18] sm:$0xff]
      %v7968 = vsel %vm1154, %v7884, 0
      %v7971 = vsel %vm1154, %v7885, 0
      %v7974 = vsel %vm1154, %v7886, 0
      %v7977 = vsel %vm1154, %v7887, 0
      %v7980 = vsel %vm1154, %v7888, 0
      %v7983 = vsel %vm1154, %v7889, 0
      %v7986 = vsel %vm1154, %v7890, 0
      %v7989 = vsel %vm1154, %v7891, 0
      %v7992 = vsel %vm1154, %v7892, 0
      %v7995 = vsel %vm1154, %v7893, 0
      %v7998 = vsel %vm1154, %v7894, 0
      %v8001 = vsel %vm1154, %v7895, 0
      %v8004 = vsel %vm1154, %v7896, 0
      %v8007 = vsel %vm1154, %v7897, 0
      %v8010 = vsel %vm1154, %v7898, 0
      %v8013 = vsel %vm1154, %v7899, 0
      %v8016 = vsel %vm1154, %v7900, 0
      %v8019 = vsel %vm1154, %v7901, 0
      %v8022 = vsel %vm1154, %v7902, 0
      %v8025 = vsel %vm1154, %v7903, 0
      %v8028 = vsel %vm1154, %v7904, 0
      %v8031 = vsel %vm1154, %v7905, 0
      %v8034 = vsel %vm1154, %v7906, 0
      %v8037 = vsel %vm1154, %v7907, 0
      %v8040 = vsel %vm1154, %v7908, 0
      %v8043 = vsel %vm1154, %v7909, 0
      %v8046 = vsel %vm1154, %v7910, 0
      %v8049 = vsel %vm1154, %v7911, 0
      %v8052 = vsel %vm1154, %v7912, 0
      %v8055 = vsel %vm1154, %v7913, 0
      %v8058 = vsel %vm1154, %v7914, 0
      %v8061 = vsel %vm1154, %v7915, 0
      %v8064 = vsel %vm1154, %v7916, 0
      %v8067 = vsel %vm1154, %v7917, 0
      %v8070 = vsel %vm1154, %v7918, 0
      %v8073 = vsel %vm1154, %v7919, 0
      %v8076 = vsel %vm1154, %v7920, 0
      %v8079 = vsel %vm1154, %v7921, 0
      %v8082 = vsel %vm1154, %v7922, 0
      %v8085 = vsel %vm1154, %v7923, 0
      %v8088 = vsel %vm1154, %v7924, 0
      %v8091 = vsel %vm1154, %v7925, 0
      %v8094 = vsel %vm1154, %v7926, 0
      %v8097 = vsel %vm1154, %v7927, 0
      %v8100 = vsel %vm1154, %v7928, 0
      %v8103 = vsel %vm1154, %v7929, 0
      %v8106 = vsel %vm1154, %v7930, 0
      %v8109 = vsel %vm1154, %v7931, 0
      %v8112 = vsel %vm1154, %v7932, 0
      %v8115 = vsel %vm1154, %v7933, 0
      %v8118 = vsel %vm1154, %v7934, 0
      %v8121 = vsel %vm1154, %v7935, 0
      %v8124 = vsel %vm1154, %v7936, 0
      %v8127 = vsel %vm1154, %v7937, 0
      %v8130 = vsel %vm1154, %v7938, 0
      %v8133 = vsel %vm1154, %v7939, 0
      %v8136 = vsel %vm1154, %v7940, 0
      %v8139 = vsel %vm1154, %v7941, 0
      %v8142 = vsel %vm1154, %v7942, 0
      %v8145 = vsel %vm1154, %v7943, 0
      %v8148 = vsel %vm1154, %v7944, 0
      %v8151 = vsel %vm1154, %v7945, 0
      %v8154 = vsel %vm1154, %v7946, 0
      %v8157 = vsel %vm1154, %v7947, 0
      %v8160 = vsel %vm1154, %v7948, 0
      %v8163 = vsel %vm1154, %v7949, 0
      %v8166 = vsel %vm1154, %v7950, 0
      %v8169 = vsel %vm1154, %v7951, 0
      %v8172 = vsel %vm1154, %v7952, 0
      %v8175 = vsel %vm1154, %v7953, 0
      %v8178 = vsel %vm1154, %v7954, 0
      %v8181 = vsel %vm1154, %v7955, 0
      %v8184 = vsel %vm1154, %v7956, 0
      %v8187 = vsel %vm1154, %v7957, 0
      %v8190 = vsel %vm1154, %v7958, 0
      %v8193 = vsel %vm1154, %v7959, 0
      %v8196 = vsel %vm1154, %v7960, 0
      %v8199 = vsel %vm1154, %v7961, 0
      %8201 = vmatprep.subr.mxu0 0.0
      %8202 = vmatpush1.msra.mxu0 %v7963
      %8203 = vmatprep.subr.mxu0 0.0
      %8204 = vmatpush1.msra.mxu0 %v7964
      %8205 = vmatprep.subr.mxu0 0.0
      %8206 = vmatpush1.msra.mxu0 %v7965
      %8207 = vmatprep.subr.mxu0 0.0
      %8208 = vmatpush1.msra.mxu0 %v7966
      %8209 = vmatprep.subr.mxu0 0.0
      %8210 = vmatpush1.msra.mxu0 0.0
      %8211 = vmatprep.subr.mxu0 0.0
      %8212 = vmatpush1.msra.mxu0 0.0
      %8213 = vmatprep.subr.mxu0 0.0
      %8214 = vmatpush1.msra.mxu0 0.0
      %8215 = vmatprep.subr.mxu0 0.0
      %8216 = vmatpush1.msra.mxu0 0.0
      %8217 = vmatprep.subr.mxu0 0.0
      %8218 = vmatpush1.msra.mxu0 0.0
      %8219 = vmatprep.subr.mxu0 0.0
      %8220 = vmatpush1.msra.mxu0 0.0
      %8221 = vmatprep.subr.mxu0 0.0
      %8222 = vmatpush1.msra.mxu0 0.0
      %8223 = vmatprep.subr.mxu0 0.0
      %8224 = vmatpush1.msra.mxu0 0.0
      %8225 = vmatprep.subr.mxu0 0.0
      %8226 = vmatpush1.msra.mxu0 0.0
      %8227 = vmatprep.subr.mxu0 0.0
      %8228 = vmatpush1.msra.mxu0 0.0
      %8229 = vmatprep.subr.mxu0 0.0
      %8230 = vmatpush1.msra.mxu0 0.0
      %8231 = vmatprep.subr.mxu0 0.0
      %8232 = vmatpush1.msra.mxu0 0.0
      %8233 = vmatprep.subr.mxu0 0.0
      %8234 = vmatpush1.msra.mxu0 0.0
      %8235 = vmatprep.subr.mxu0 0.0
      %8236 = vmatpush1.msra.mxu0 0.0
      %8237 = vmatprep.subr.mxu0 0.0
      %8238 = vmatpush1.msra.mxu0 0.0
      %8239 = vmatprep.subr.mxu0 0.0
      %8240 = vmatpush1.msra.mxu0 0.0
      %8241 = vmatprep.subr.mxu0 0.0
      %8242 = vmatpush1.msra.mxu0 0.0
      %8243 = vmatprep.subr.mxu0 0.0
      %8244 = vmatpush1.msra.mxu0 0.0
      %8245 = vmatprep.subr.mxu0 0.0
      %8246 = vmatpush1.msra.mxu0 0.0
      %8247 = vmatprep.subr.mxu0 0.0
      %8248 = vmatpush1.msra.mxu0 0.0
      %8249 = vmatprep.subr.mxu0 0.0
      %8250 = vmatpush1.msra.mxu0 0.0
      %8251 = vmatprep.subr.mxu0 0.0
      %8252 = vmatpush1.msra.mxu0 0.0
      %8253 = vmatprep.subr.mxu0 0.0
      %8254 = vmatpush1.msra.mxu0 0.0
      %8255 = vmatprep.subr.mxu0 0.0
      %8256 = vmatpush1.msra.mxu0 0.0
      %8257 = vmatprep.subr.mxu0 0.0
      %8258 = vmatpush1.msra.mxu0 0.0
      %8259 = vmatprep.subr.mxu0 0.0
      %8260 = vmatpush1.msra.mxu0 0.0
      %8261 = vmatprep.subr.mxu0 0.0
      %8262 = vmatpush1.msra.mxu0 0.0
      %8263 = vmatprep.subr.mxu0 0.0
      %8264 = vmatpush1.msra.mxu0 0.0
      %8265 = vmatprep.mubr.f32.mxu0 0.0
      %8266 = vmatmul.mubr.f32.gmra.mrb[0].mxu0 %v7968
      %v8267 = vpop.f32.mrb[0].mxu0
      %v8268 = vadd.f32 0.0, %v8267
      %v8269 = vpop.f32.mrb[0].mxu0
      %8270 = vmatprep.mubr.f32.mxu0 0.0
      %8271 = vmatmul.mubr.f32.gmra.mrb[0].mxu0 %v7971
      %v8272 = vpop.f32.mrb[0].mxu0
      %v8273 = vadd.f32 0.0, %v8272
      %v8274 = vpop.f32.mrb[0].mxu0
      %8275 = vmatprep.mubr.f32.mxu0 0.0
      %8276 = vmatmul.mubr.f32.gmra.mrb[0].mxu0 %v7974
      %v8277 = vpop.f32.mrb[0].mxu0
      %v8278 = vadd.f32 0.0, %v8277
      %v8279 = vpop.f32.mrb[0].mxu0
      %8280 = vmatprep.mubr.f32.mxu0 0.0
      %8281 = vmatmul.mubr.f32.gmra.mrb[0].mxu0 %v7977
      %v8282 = vpop.f32.mrb[0].mxu0
      %v8283 = vadd.f32 0.0, %v8282
      %v8284 = vpop.f32.mrb[0].mxu0
      %8285 = vmatprep.mubr.f32.mxu0 0.0
      %8286 = vmatmul.mubr.f32.gmra.mrb[0].mxu0 %v7980
      %v8287 = vpop.f32.mrb[0].mxu0
      %v8288 = vadd.f32 0.0, %v8287
      %v8289 = vpop.f32.mrb[0].mxu0
      %8290 = vmatprep.mubr.f32.mxu0 0.0
      %8291 = vmatmul.mubr.f32.gmra.mrb[0].mxu0 %v7983
      %v8292 = vpop.f32.mrb[0].mxu0
      %v8293 = vadd.f32 0.0, %v8292
      %v8294 = vpop.f32.mrb[0].mxu0
      %8295 = vmatprep.mubr.f32.mxu0 0.0
      %8296 = vmatmul.mubr.f32.gmra.mrb[0].mxu0 %v7986
      %v8297 = vpop.f32.mrb[0].mxu0
      %v8298 = vadd.f32 0.0, %v8297
      %v8299 = vpop.f32.mrb[0].mxu0
      %8300 = vmatprep.mubr.f32.mxu0 0.0
      %8301 = vmatmul.mubr.f32.gmra.mrb[0].mxu0 %v7989
      %v8302 = vpop.f32.mrb[0].mxu0
      %v8303 = vadd.f32 0.0, %v8302
      %v8304 = vpop.f32.mrb[0].mxu0
      %8305 = vmatprep.mubr.f32.mxu0 0.0
      %8306 = vmatmul.mubr.f32.gmra.mrb[0].mxu0 %v7992
      %v8307 = vpop.f32.mrb[0].mxu0
      %v8308 = vadd.f32 0.0, %v8307
      %v8309 = vpop.f32.mrb[0].mxu0
      %8310 = vmatprep.mubr.f32.mxu0 0.0
      %8311 = vmatmul.mubr.f32.gmra.mrb[0].mxu0 %v7995
      %v8312 = vpop.f32.mrb[0].mxu0
      %v8313 = vadd.f32 0.0, %v8312
      %v8314 = vpop.f32.mrb[0].mxu0
      %8315 = vmatprep.mubr.f32.mxu0 0.0
      %8316 = vmatmul.mubr.f32.gmra.mrb[0].mxu0 %v7998
      %v8317 = vpop.f32.mrb[0].mxu0
      %v8318 = vadd.f32 0.0, %v8317
      %v8319 = vpop.f32.mrb[0].mxu0
      %8320 = vmatprep.mubr.f32.mxu0 0.0
      %8321 = vmatmul.mubr.f32.gmra.mrb[0].mxu0 %v8001
      %v8322 = vpop.f32.mrb[0].mxu0
      %v8323 = vadd.f32 0.0, %v8322
      %v8324 = vpop.f32.mrb[0].mxu0
      %8325 = vmatprep.mubr.f32.mxu0 0.0
      %8326 = vmatmul.mubr.f32.gmra.mrb[0].mxu0 %v8004
      %v8327 = vpop.f32.mrb[0].mxu0
      %v8328 = vadd.f32 0.0, %v8327
      %v8329 = vpop.f32.mrb[0].mxu0
      %8330 = vmatprep.mubr.f32.mxu0 0.0
      %8331 = vmatmul.mubr.f32.gmra.mrb[0].mxu0 %v8007
      %v8332 = vpop.f32.mrb[0].mxu0
      %v8333 = vadd.f32 0.0, %v8332
      %v8334 = vpop.f32.mrb[0].mxu0
      %8335 = vmatprep.mubr.f32.mxu0 0.0
      %8336 = vmatmul.mubr.f32.gmra.mrb[0].mxu0 %v8010
      %v8337 = vpop.f32.mrb[0].mxu0
      %v8338 = vadd.f32 0.0, %v8337
      %v8339 = vpop.f32.mrb[0].mxu0
      %8340 = vmatprep.mubr.f32.mxu0 0.0
      %8341 = vmatmul.mubr.f32.gmra.mrb[0].mxu0 %v8013
      %v8342 = vpop.f32.mrb[0].mxu0
      %v8343 = vadd.f32 0.0, %v8342
      %v8344 = vpop.f32.mrb[0].mxu0
      %8345 = vmatprep.mubr.f32.mxu0 0.0
      %8346 = vmatmul.mubr.f32.gmra.mrb[0].mxu0 %v8016
      %v8347 = vpop.f32.mrb[0].mxu0
      %v8348 = vadd.f32 0.0, %v8347
      %v8349 = vpop.f32.mrb[0].mxu0
      %8350 = vmatprep.mubr.f32.mxu0 0.0
      %8351 = vmatmul.mubr.f32.gmra.mrb[0].mxu0 %v8019
      %v8352 = vpop.f32.mrb[0].mxu0
      %v8353 = vadd.f32 0.0, %v8352
      %v8354 = vpop.f32.mrb[0].mxu0
      %8355 = vmatprep.mubr.f32.mxu0 0.0
      %8356 = vmatmul.mubr.f32.gmra.mrb[0].mxu0 %v8022
      %v8357 = vpop.f32.mrb[0].mxu0
      %v8358 = vadd.f32 0.0, %v8357
      %v8359 = vpop.f32.mrb[0].mxu0
      %8360 = vmatprep.mubr.f32.mxu0 0.0
      %8361 = vmatmul.mubr.f32.gmra.mrb[0].mxu0 %v8025
      %v8362 = vpop.f32.mrb[0].mxu0
      %v8363 = vadd.f32 0.0, %v8362
      %v8364 = vpop.f32.mrb[0].mxu0
      %8365 = vmatprep.mubr.f32.mxu0 0.0
      %8366 = vmatmul.mubr.f32.gmra.mrb[0].mxu0 %v8028
      %v8367 = vpop.f32.mrb[0].mxu0
      %v8368 = vadd.f32 0.0, %v8367
      %v8369 = vpop.f32.mrb[0].mxu0
      %8370 = vmatprep.mubr.f32.mxu0 0.0
      %8371 = vmatmul.mubr.f32.gmra.mrb[0].mxu0 %v8031
      %v8372 = vpop.f32.mrb[0].mxu0
      %v8373 = vadd.f32 0.0, %v8372
      %v8374 = vpop.f32.mrb[0].mxu0
      %8375 = vmatprep.mubr.f32.mxu0 0.0
      %8376 = vmatmul.mubr.f32.gmra.mrb[0].mxu0 %v8034
      %v8377 = vpop.f32.mrb[0].mxu0
      %v8378 = vadd.f32 0.0, %v8377
      %v8379 = vpop.f32.mrb[0].mxu0
      %8380 = vmatprep.mubr.f32.mxu0 0.0
      %8381 = vmatmul.mubr.f32.gmra.mrb[0].mxu0 %v8037
      %v8382 = vpop.f32.mrb[0].mxu0
      %v8383 = vadd.f32 0.0, %v8382
      %v8384 = vpop.f32.mrb[0].mxu0
      %8385 = vmatprep.mubr.f32.mxu0 0.0
      %8386 = vmatmul.mubr.f32.gmra.mrb[0].mxu0 %v8040
      %v8387 = vpop.f32.mrb[0].mxu0
      %v8388 = vadd.f32 0.0, %v8387
      %v8389 = vpop.f32.mrb[0].mxu0
      %8390 = vmatprep.mubr.f32.mxu0 0.0
      %8391 = vmatmul.mubr.f32.gmra.mrb[0].mxu0 %v8043
      %v8392 = vpop.f32.mrb[0].mxu0
      %v8393 = vadd.f32 0.0, %v8392
      %v8394 = vpop.f32.mrb[0].mxu0
      %8395 = vmatprep.mubr.f32.mxu0 0.0
      %8396 = vmatmul.mubr.f32.gmra.mrb[0].mxu0 %v8046
      %v8397 = vpop.f32.mrb[0].mxu0
      %v8398 = vadd.f32 0.0, %v8397
      %v8399 = vpop.f32.mrb[0].mxu0
      %8400 = vmatprep.mubr.f32.mxu0 0.0
      %8401 = vmatmul.mubr.f32.gmra.mrb[0].mxu0 %v8049
      %v8402 = vpop.f32.mrb[0].mxu0
      %v8403 = vadd.f32 0.0, %v8402
      %v8404 = vpop.f32.mrb[0].mxu0
      %8405 = vmatprep.mubr.f32.mxu0 0.0
      %8406 = vmatmul.mubr.f32.gmra.mrb[0].mxu0 %v8052
      %v8407 = vpop.f32.mrb[0].mxu0
      %v8408 = vadd.f32 0.0, %v8407
      %v8409 = vpop.f32.mrb[0].mxu0
      %8410 = vmatprep.mubr.f32.mxu0 0.0
      %8411 = vmatmul.mubr.f32.gmra.mrb[0].mxu0 %v8055
      %v8412 = vpop.f32.mrb[0].mxu0
      %v8413 = vadd.f32 0.0, %v8412
      %v8414 = vpop.f32.mrb[0].mxu0
      %8415 = vmatprep.mubr.f32.mxu0 0.0
      %8416 = vmatmul.mubr.f32.gmra.mrb[0].mxu0 %v8058
      %v8417 = vpop.f32.mrb[0].mxu0
      %v8418 = vadd.f32 0.0, %v8417
      %v8419 = vpop.f32.mrb[0].mxu0
      %8420 = vmatprep.mubr.f32.mxu0 0.0
      %8421 = vmatmul.mubr.f32.gmra.mrb[0].mxu0 %v8061
      %v8422 = vpop.f32.mrb[0].mxu0
      %v8423 = vadd.f32 0.0, %v8422
      %v8424 = vpop.f32.mrb[0].mxu0
      %8425 = vmatprep.mubr.f32.mxu0 0.0
      %8426 = vmatmul.mubr.f32.gmra.mrb[0].mxu0 %v8064
      %v8427 = vpop.f32.mrb[0].mxu0
      %v8428 = vadd.f32 0.0, %v8427
      %v8429 = vpop.f32.mrb[0].mxu0
      %8430 = vmatprep.mubr.f32.mxu0 0.0
      %8431 = vmatmul.mubr.f32.gmra.mrb[0].mxu0 %v8067
      %v8432 = vpop.f32.mrb[0].mxu0
      %v8433 = vadd.f32 0.0, %v8432
      %v8434 = vpop.f32.mrb[0].mxu0
      %8435 = vmatprep.mubr.f32.mxu0 0.0
      %8436 = vmatmul.mubr.f32.gmra.mrb[0].mxu0 %v8070
      %v8437 = vpop.f32.mrb[0].mxu0
      %v8438 = vadd.f32 0.0, %v8437
      %v8439 = vpop.f32.mrb[0].mxu0
      %8440 = vmatprep.mubr.f32.mxu0 0.0
      %8441 = vmatmul.mubr.f32.gmra.mrb[0].mxu0 %v8073
      %v8442 = vpop.f32.mrb[0].mxu0
      %v8443 = vadd.f32 0.0, %v8442
      %v8444 = vpop.f32.mrb[0].mxu0
      %8445 = vmatprep.mubr.f32.mxu0 0.0
      %8446 = vmatmul.mubr.f32.gmra.mrb[0].mxu0 %v8076
      %v8447 = vpop.f32.mrb[0].mxu0
      %v8448 = vadd.f32 0.0, %v8447
      %v8449 = vpop.f32.mrb[0].mxu0
      %8450 = vmatprep.mubr.f32.mxu0 0.0
      %8451 = vmatmul.mubr.f32.gmra.mrb[0].mxu0 %v8079
      %v8452 = vpop.f32.mrb[0].mxu0
      %v8453 = vadd.f32 0.0, %v8452
      %v8454 = vpop.f32.mrb[0].mxu0
      %8455 = vmatprep.mubr.f32.mxu0 0.0
      %8456 = vmatmul.mubr.f32.gmra.mrb[0].mxu0 %v8082
      %v8457 = vpop.f32.mrb[0].mxu0
      %v8458 = vadd.f32 0.0, %v8457
      %v8459 = vpop.f32.mrb[0].mxu0
      %8460 = vmatprep.mubr.f32.mxu0 0.0
      %8461 = vmatmul.mubr.f32.gmra.mrb[0].mxu0 %v8085
      %v8462 = vpop.f32.mrb[0].mxu0
      %v8463 = vadd.f32 0.0, %v8462
      %v8464 = vpop.f32.mrb[0].mxu0
      %8465 = vmatprep.mubr.f32.mxu0 0.0
      %8466 = vmatmul.mubr.f32.gmra.mrb[0].mxu0 %v8088
      %v8467 = vpop.f32.mrb[0].mxu0
      %v8468 = vadd.f32 0.0, %v8467
      %v8469 = vpop.f32.mrb[0].mxu0
      %8470 = vmatprep.mubr.f32.mxu0 0.0
      %8471 = vmatmul.mubr.f32.gmra.mrb[0].mxu0 %v8091
      %v8472 = vpop.f32.mrb[0].mxu0
      %v8473 = vadd.f32 0.0, %v8472
      %v8474 = vpop.f32.mrb[0].mxu0
      %8475 = vmatprep.mubr.f32.mxu0 0.0
      %8476 = vmatmul.mubr.f32.gmra.mrb[0].mxu0 %v8094
      %v8477 = vpop.f32.mrb[0].mxu0
      %v8478 = vadd.f32 0.0, %v8477
      %v8479 = vpop.f32.mrb[0].mxu0
      %8480 = vmatprep.mubr.f32.mxu0 0.0
      %8481 = vmatmul.mubr.f32.gmra.mrb[0].mxu0 %v8097
      %v8482 = vpop.f32.mrb[0].mxu0
      %v8483 = vadd.f32 0.0, %v8482
      %v8484 = vpop.f32.mrb[0].mxu0
      %8485 = vmatprep.mubr.f32.mxu0 0.0
      %8486 = vmatmul.mubr.f32.gmra.mrb[0].mxu0 %v8100
      %v8487 = vpop.f32.mrb[0].mxu0
      %v8488 = vadd.f32 0.0, %v8487
      %v8489 = vpop.f32.mrb[0].mxu0
      %8490 = vmatprep.mubr.f32.mxu0 0.0
      %8491 = vmatmul.mubr.f32.gmra.mrb[0].mxu0 %v8103
      %v8492 = vpop.f32.mrb[0].mxu0
      %v8493 = vadd.f32 0.0, %v8492
      %v8494 = vpop.f32.mrb[0].mxu0
      %8495 = vmatprep.mubr.f32.mxu0 0.0
      %8496 = vmatmul.mubr.f32.gmra.mrb[0].mxu0 %v8106
      %v8497 = vpop.f32.mrb[0].mxu0
      %v8498 = vadd.f32 0.0, %v8497
      %v8499 = vpop.f32.mrb[0].mxu0
      %8500 = vmatprep.mubr.f32.mxu0 0.0
      %8501 = vmatmul.mubr.f32.gmra.mrb[0].mxu0 %v8109
      %v8502 = vpop.f32.mrb[0].mxu0
      %v8503 = vadd.f32 0.0, %v8502
      %v8504 = vpop.f32.mrb[0].mxu0
      %8505 = vmatprep.mubr.f32.mxu0 0.0
      %8506 = vmatmul.mubr.f32.gmra.mrb[0].mxu0 %v8112
      %v8507 = vpop.f32.mrb[0].mxu0
      %v8508 = vadd.f32 0.0, %v8507
      %v8509 = vpop.f32.mrb[0].mxu0
      %8510 = vmatprep.mubr.f32.mxu0 0.0
      %8511 = vmatmul.mubr.f32.gmra.mrb[0].mxu0 %v8115
      %v8512 = vpop.f32.mrb[0].mxu0
      %v8513 = vadd.f32 0.0, %v8512
      %v8514 = vpop.f32.mrb[0].mxu0
      %8515 = vmatprep.mubr.f32.mxu0 0.0
      %8516 = vmatmul.mubr.f32.gmra.mrb[0].mxu0 %v8118
      %v8517 = vpop.f32.mrb[0].mxu0
      %v8518 = vadd.f32 0.0, %v8517
      %v8519 = vpop.f32.mrb[0].mxu0
      %8520 = vmatprep.mubr.f32.mxu0 0.0
      %8521 = vmatmul.mubr.f32.gmra.mrb[0].mxu0 %v8121
      %v8522 = vpop.f32.mrb[0].mxu0
      %v8523 = vadd.f32 0.0, %v8522
      %v8524 = vpop.f32.mrb[0].mxu0
      %8525 = vmatprep.mubr.f32.mxu0 0.0
      %8526 = vmatmul.mubr.f32.gmra.mrb[0].mxu0 %v8124
      %v8527 = vpop.f32.mrb[0].mxu0
      %v8528 = vadd.f32 0.0, %v8527
      %v8529 = vpop.f32.mrb[0].mxu0
      %8530 = vmatprep.mubr.f32.mxu0 0.0
      %8531 = vmatmul.mubr.f32.gmra.mrb[0].mxu0 %v8127
      %v8532 = vpop.f32.mrb[0].mxu0
      %v8533 = vadd.f32 0.0, %v8532
      %v8534 = vpop.f32.mrb[0].mxu0
      %8535 = vmatprep.mubr.f32.mxu0 0.0
      %8536 = vmatmul.mubr.f32.gmra.mrb[0].mxu0 %v8130
      %v8537 = vpop.f32.mrb[0].mxu0
      %v8538 = vadd.f32 0.0, %v8537
      %v8539 = vpop.f32.mrb[0].mxu0
      %8540 = vmatprep.mubr.f32.mxu0 0.0
      %8541 = vmatmul.mubr.f32.gmra.mrb[0].mxu0 %v8133
      %v8542 = vpop.f32.mrb[0].mxu0
      %v8543 = vadd.f32 0.0, %v8542
      %v8544 = vpop.f32.mrb[0].mxu0
      %8545 = vmatprep.mubr.f32.mxu0 0.0
      %8546 = vmatmul.mubr.f32.gmra.mrb[0].mxu0 %v8136
      %v8547 = vpop.f32.mrb[0].mxu0
      %v8548 = vadd.f32 0.0, %v8547
      %v8549 = vpop.f32.mrb[0].mxu0
      %8550 = vmatprep.mubr.f32.mxu0 0.0
      %8551 = vmatmul.mubr.f32.gmra.mrb[0].mxu0 %v8139
      %v8552 = vpop.f32.mrb[0].mxu0
      %v8553 = vadd.f32 0.0, %v8552
      %v8554 = vpop.f32.mrb[0].mxu0
      %8555 = vmatprep.mubr.f32.mxu0 0.0
      %8556 = vmatmul.mubr.f32.gmra.mrb[0].mxu0 %v8142
      %v8557 = vpop.f32.mrb[0].mxu0
      %v8558 = vadd.f32 0.0, %v8557
      %v8559 = vpop.f32.mrb[0].mxu0
      %8560 = vmatprep.mubr.f32.mxu0 0.0
      %8561 = vmatmul.mubr.f32.gmra.mrb[0].mxu0 %v8145
      %v8562 = vpop.f32.mrb[0].mxu0
      %v8563 = vadd.f32 0.0, %v8562
      %v8564 = vpop.f32.mrb[0].mxu0
      %8565 = vmatprep.mubr.f32.mxu0 0.0
      %8566 = vmatmul.mubr.f32.gmra.mrb[0].mxu0 %v8148
      %v8567 = vpop.f32.mrb[0].mxu0
      %v8568 = vadd.f32 0.0, %v8567
      %v8569 = vpop.f32.mrb[0].mxu0
      %8570 = vmatprep.mubr.f32.mxu0 0.0
      %8571 = vmatmul.mubr.f32.gmra.mrb[0].mxu0 %v8151
      %v8572 = vpop.f32.mrb[0].mxu0
      %v8573 = vadd.f32 0.0, %v8572
      %v8574 = vpop.f32.mrb[0].mxu0
      %8575 = vmatprep.mubr.f32.mxu0 0.0
      %8576 = vmatmul.mubr.f32.gmra.mrb[0].mxu0 %v8154
      %v8577 = vpop.f32.mrb[0].mxu0
      %v8578 = vadd.f32 0.0, %v8577
      %v8579 = vpop.f32.mrb[0].mxu0
      %8580 = vmatprep.mubr.f32.mxu0 0.0
      %8581 = vmatmul.mubr.f32.gmra.mrb[0].mxu0 %v8157
      %v8582 = vpop.f32.mrb[0].mxu0
      %v8583 = vadd.f32 0.0, %v8582
      %v8584 = vpop.f32.mrb[0].mxu0
      %8585 = vmatprep.mubr.f32.mxu0 0.0
      %8586 = vmatmul.mubr.f32.gmra.mrb[0].mxu0 %v8160
      %v8587 = vpop.f32.mrb[0].mxu0
      %v8588 = vadd.f32 0.0, %v8587
      %v8589 = vpop.f32.mrb[0].mxu0
      %8590 = vmatprep.mubr.f32.mxu0 0.0
      %8591 = vmatmul.mubr.f32.gmra.mrb[0].mxu0 %v8163
      %v8592 = vpop.f32.mrb[0].mxu0
      %v8593 = vadd.f32 0.0, %v8592
      %v8594 = vpop.f32.mrb[0].mxu0
      %8595 = vmatprep.mubr.f32.mxu0 0.0
      %8596 = vmatmul.mubr.f32.gmra.mrb[0].mxu0 %v8166
      %v8597 = vpop.f32.mrb[0].mxu0
      %v8598 = vadd.f32 0.0, %v8597
      %v8599 = vpop.f32.mrb[0].mxu0
      %8600 = vmatprep.mubr.f32.mxu0 0.0
      %8601 = vmatmul.mubr.f32.gmra.mrb[0].mxu0 %v8169
      %v8602 = vpop.f32.mrb[0].mxu0
      %v8603 = vadd.f32 0.0, %v8602
      %v8604 = vpop.f32.mrb[0].mxu0
      %8605 = vmatprep.mubr.f32.mxu0 0.0
      %8606 = vmatmul.mubr.f32.gmra.mrb[0].mxu0 %v8172
      %v8607 = vpop.f32.mrb[0].mxu0
      %v8608 = vadd.f32 0.0, %v8607
      %v8609 = vpop.f32.mrb[0].mxu0
      %8610 = vmatprep.mubr.f32.mxu0 0.0
      %8611 = vmatmul.mubr.f32.gmra.mrb[0].mxu0 %v8175
      %v8612 = vpop.f32.mrb[0].mxu0
      %v8613 = vadd.f32 0.0, %v8612
      %v8614 = vpop.f32.mrb[0].mxu0
      %8615 = vmatprep.mubr.f32.mxu0 0.0
      %8616 = vmatmul.mubr.f32.gmra.mrb[0].mxu0 %v8178
      %v8617 = vpop.f32.mrb[0].mxu0
      %v8618 = vadd.f32 0.0, %v8617
      %v8619 = vpop.f32.mrb[0].mxu0
      %8620 = vmatprep.mubr.f32.mxu0 0.0
      %8621 = vmatmul.mubr.f32.gmra.mrb[0].mxu0 %v8181
      %v8622 = vpop.f32.mrb[0].mxu0
      %v8623 = vadd.f32 0.0, %v8622
      %v8624 = vpop.f32.mrb[0].mxu0
      %8625 = vmatprep.mubr.f32.mxu0 0.0
      %8626 = vmatmul.mubr.f32.gmra.mrb[0].mxu0 %v8184
      %v8627 = vpop.f32.mrb[0].mxu0
      %v8628 = vadd.f32 0.0, %v8627
      %v8629 = vpop.f32.mrb[0].mxu0
      %8630 = vmatprep.mubr.f32.mxu0 0.0
      %8631 = vmatmul.mubr.f32.gmra.mrb[0].mxu0 %v8187
      %v8632 = vpop.f32.mrb[0].mxu0
      %v8633 = vadd.f32 0.0, %v8632
      %v8634 = vpop.f32.mrb[0].mxu0
      %8635 = vmatprep.mubr.f32.mxu0 0.0
      %8636 = vmatmul.mubr.f32.gmra.mrb[0].mxu0 %v8190
      %v8637 = vpop.f32.mrb[0].mxu0
      %v8638 = vadd.f32 0.0, %v8637
      %v8639 = vpop.f32.mrb[0].mxu0
      %8640 = vmatprep.mubr.f32.mxu0 0.0
      %8641 = vmatmul.mubr.f32.gmra.mrb[0].mxu0 %v8193
      %v8642 = vpop.f32.mrb[0].mxu0
      %v8643 = vadd.f32 0.0, %v8642
      %v8644 = vpop.f32.mrb[0].mxu0
      %8645 = vmatprep.mubr.f32.mxu0 0.0
      %8646 = vmatmul.mubr.f32.gmra.mrb[0].mxu0 %v8196
      %v8647 = vpop.f32.mrb[0].mxu0
      %v8648 = vadd.f32 0.0, %v8647
      %v8649 = vpop.f32.mrb[0].mxu0
      %8650 = vmatprep.mubr.f32.mxu0 0.0
      %8651 = vmatmul.mubr.f32.gmra.mrb[0].mxu0 %v8199
      %v8652 = vpop.f32.mrb[0].mxu0
      %v8653 = vadd.f32 0.0, %v8652
      %v8654 = vpop.f32.mrb[0].mxu0
      %8655 = vdwg.mxu0
      %v8656 = vadd.f32 %v7806, %v8268
      %v8657 = vadd.f32 %v7807, %v8273
      %v8658 = vadd.f32 %v7808, %v8278
      %v8659 = vadd.f32 %v7809, %v8283
      %v8660 = vadd.f32 %v7810, %v8288
      %v8661 = vadd.f32 %v7811, %v8293
      %v8662 = vadd.f32 %v7812, %v8298
      %v8663 = vadd.f32 %v7813, %v8303
      %v8664 = vadd.f32 %v7814, %v8308
      %v8665 = vadd.f32 %v7815, %v8313
      %v8666 = vadd.f32 %v7816, %v8318
      %v8667 = vadd.f32 %v7817, %v8323
      %v8668 = vadd.f32 %v7818, %v8328
      %v8669 = vadd.f32 %v7819, %v8333
      %v8670 = vadd.f32 %v7820, %v8338
      %v8671 = vadd.f32 %v7821, %v8343
      %v8672 = vadd.f32 %v7822, %v8348
      %v8673 = vadd.f32 %v7823, %v8353
      %v8674 = vadd.f32 %v7824, %v8358
      %v8675 = vadd.f32 %v7825, %v8363
      %v8676 = vadd.f32 %v7826, %v8368
      %v8677 = vadd.f32 %v7827, %v8373
      %v8678 = vadd.f32 %v7828, %v8378
      %v8679 = vadd.f32 %v7829, %v8383
      %v8680 = vadd.f32 %v7830, %v8388
      %v8681 = vadd.f32 %v7831, %v8393
      %v8682 = vadd.f32 %v7832, %v8398
      %v8683 = vadd.f32 %v7833, %v8403
      %v8684 = vadd.f32 %v7834, %v8408
      %v8685 = vadd.f32 %v7835, %v8413
      %v8686 = vadd.f32 %v7836, %v8418
      %v8687 = vadd.f32 %v7837, %v8423
      %v8688 = vadd.f32 %v7838, %v8428
      %v8689 = vadd.f32 %v7839, %v8433
      %v8690 = vadd.f32 %v7840, %v8438
      %v8691 = vadd.f32 %v7841, %v8443
      %v8692 = vadd.f32 %v7842, %v8448
      %v8693 = vadd.f32 %v7843, %v8453
      %v8694 = vadd.f32 %v7844, %v8458
      %v8695 = vadd.f32 %v7845, %v8463
      %v8696 = vadd.f32 %v7846, %v8468
      %v8697 = vadd.f32 %v7847, %v8473
      %v8698 = vadd.f32 %v7848, %v8478
      %v8699 = vadd.f32 %v7849, %v8483
      %v8700 = vadd.f32 %v7850, %v8488
      %v8701 = vadd.f32 %v7851, %v8493
      %v8702 = vadd.f32 %v7852, %v8498
      %v8703 = vadd.f32 %v7853, %v8503
      %v8704 = vadd.f32 %v7854, %v8508
      %v8705 = vadd.f32 %v7855, %v8513
      %v8706 = vadd.f32 %v7856, %v8518
      %v8707 = vadd.f32 %v7857, %v8523
      %v8708 = vadd.f32 %v7858, %v8528
      %v8709 = vadd.f32 %v7859, %v8533
      %v8710 = vadd.f32 %v7860, %v8538
      %v8711 = vadd.f32 %v7861, %v8543
      %v8712 = vadd.f32 %v7862, %v8548
      %v8713 = vadd.f32 %v7863, %v8553
      %v8714 = vadd.f32 %v7864, %v8558
      %v8715 = vadd.f32 %v7865, %v8563
      %v8716 = vadd.f32 %v7866, %v8568
      %v8717 = vadd.f32 %v7867, %v8573
      %v8718 = vadd.f32 %v7868, %v8578
      %v8719 = vadd.f32 %v7869, %v8583
      %v8720 = vadd.f32 %v7870, %v8588
      %v8721 = vadd.f32 %v7871, %v8593
      %v8722 = vadd.f32 %v7872, %v8598
      %v8723 = vadd.f32 %v7873, %v8603
      %v8724 = vadd.f32 %v7874, %v8608
      %v8725 = vadd.f32 %v7875, %v8613
      %v8726 = vadd.f32 %v7876, %v8618
      %v8727 = vadd.f32 %v7877, %v8623
      %v8728 = vadd.f32 %v7878, %v8628
      %v8729 = vadd.f32 %v7879, %v8633
      %v8730 = vadd.f32 %v7880, %v8638
      %v8731 = vadd.f32 %v7881, %v8643
      %v8732 = vadd.f32 %v7882, %v8648
      %v8733 = vadd.f32 %v7883, %v8653
      %v8734 = vld [vmem:[%s4] sm:$0x1]
      %v8736 = vlaneseq
      %v8737 = vshrl.u32 %v8736, 7
      %v8738 = vsub.s32 0, %v8737
      %v8739 = vrot.slane %v8734, %v8738
      %v8741 = vadd.f32 %v8656, %v8739
      %v8742 = vadd.f32 %v8657, %v8739
      %v8743 = vadd.f32 %v8658, %v8739
      %v8744 = vadd.f32 %v8659, %v8739
      %v8745 = vadd.f32 %v8660, %v8739
      %v8746 = vadd.f32 %v8661, %v8739
      %v8747 = vadd.f32 %v8662, %v8739
      %v8748 = vadd.f32 %v8663, %v8739
      %v8749 = vadd.f32 %v8664, %v8739
      %v8750 = vadd.f32 %v8665, %v8739
      %v8751 = vadd.f32 %v8666, %v8739
      %v8752 = vadd.f32 %v8667, %v8739
      %v8753 = vadd.f32 %v8668, %v8739
      %v8754 = vadd.f32 %v8669, %v8739
      %v8755 = vadd.f32 %v8670, %v8739
      %v8756 = vadd.f32 %v8671, %v8739
      %v8757 = vadd.f32 %v8672, %v8739
      %v8758 = vadd.f32 %v8673, %v8739
      %v8759 = vadd.f32 %v8674, %v8739
      %v8760 = vadd.f32 %v8675, %v8739
      %v8761 = vadd.f32 %v8676, %v8739
      %v8762 = vadd.f32 %v8677, %v8739
      %v8763 = vadd.f32 %v8678, %v8739
      %v8764 = vadd.f32 %v8679, %v8739
      %v8765 = vadd.f32 %v8680, %v8739
      %v8766 = vadd.f32 %v8681, %v8739
      %v8767 = vadd.f32 %v8682, %v8739
      %v8768 = vadd.f32 %v8683, %v8739
      %v8769 = vadd.f32 %v8684, %v8739
      %v8770 = vadd.f32 %v8685, %v8739
      %v8771 = vadd.f32 %v8686, %v8739
      %v8772 = vadd.f32 %v8687, %v8739
      %v8773 = vadd.f32 %v8688, %v8739
      %v8774 = vadd.f32 %v8689, %v8739
      %v8775 = vadd.f32 %v8690, %v8739
      %v8776 = vadd.f32 %v8691, %v8739
      %v8777 = vadd.f32 %v8692, %v8739
      %v8778 = vadd.f32 %v8693, %v8739
      %v8779 = vadd.f32 %v8694, %v8739
      %v8780 = vadd.f32 %v8695, %v8739
      %v8781 = vadd.f32 %v8696, %v8739
      %v8782 = vadd.f32 %v8697, %v8739
      %v8783 = vadd.f32 %v8698, %v8739
      %v8784 = vadd.f32 %v8699, %v8739
      %v8785 = vadd.f32 %v8700, %v8739
      %v8786 = vadd.f32 %v8701, %v8739
      %v8787 = vadd.f32 %v8702, %v8739
      %v8788 = vadd.f32 %v8703, %v8739
      %v8789 = vadd.f32 %v8704, %v8739
      %v8790 = vadd.f32 %v8705, %v8739
      %v8791 = vadd.f32 %v8706, %v8739
      %v8792 = vadd.f32 %v8707, %v8739
      %v8793 = vadd.f32 %v8708, %v8739
      %v8794 = vadd.f32 %v8709, %v8739
      %v8795 = vadd.f32 %v8710, %v8739
      %v8796 = vadd.f32 %v8711, %v8739
      %v8797 = vadd.f32 %v8712, %v8739
      %v8798 = vadd.f32 %v8713, %v8739
      %v8799 = vadd.f32 %v8714, %v8739
      %v8800 = vadd.f32 %v8715, %v8739
      %v8801 = vadd.f32 %v8716, %v8739
      %v8802 = vadd.f32 %v8717, %v8739
      %v8803 = vadd.f32 %v8718, %v8739
      %v8804 = vadd.f32 %v8719, %v8739
      %v8805 = vadd.f32 %v8720, %v8739
      %v8806 = vadd.f32 %v8721, %v8739
      %v8807 = vadd.f32 %v8722, %v8739
      %v8808 = vadd.f32 %v8723, %v8739
      %v8809 = vadd.f32 %v8724, %v8739
      %v8810 = vadd.f32 %v8725, %v8739
      %v8811 = vadd.f32 %v8726, %v8739
      %v8812 = vadd.f32 %v8727, %v8739
      %v8813 = vadd.f32 %v8728, %v8739
      %v8814 = vadd.f32 %v8729, %v8739
      %v8815 = vadd.f32 %v8730, %v8739
      %v8816 = vadd.f32 %v8731, %v8739
      %v8817 = vadd.f32 %v8732, %v8739
      %v8818 = vadd.f32 %v8733, %v8739
      %vm8819 = vcmask 523264
      %8820 = vst.msk [vmem:[#allocation3] sm:$0xff] %vm8819, %v8741
      %8821 = vst.msk [vmem:[#allocation3 + $0x8] sm:$0xff] %vm8819, %v8742
      %8822 = vst.msk [vmem:[#allocation3 + $0x10] sm:$0xff] %vm8819, %v8743
      %8823 = vst.msk [vmem:[#allocation3 + $0x18] sm:$0xff] %vm8819, %v8744
      %8824 = vst.msk [vmem:[#allocation3 + $0x20] sm:$0xff] %vm8819, %v8745
      %8825 = vst.msk [vmem:[#allocation3 + $0x28] sm:$0xff] %vm8819, %v8746
      %8826 = vst.msk [vmem:[#allocation3 + $0x30] sm:$0xff] %vm8819, %v8747
      %8827 = vst.msk [vmem:[#allocation3 + $0x38] sm:$0xff] %vm8819, %v8748
      %8828 = vst.msk [vmem:[#allocation3 + $0x40] sm:$0xff] %vm8819, %v8749
      %8829 = vst.msk [vmem:[#allocation3 + $0x48] sm:$0xff] %vm8819, %v8750
      %8830 = vst.msk [vmem:[#allocation3 + $0x50] sm:$0xff] %vm8819, %v8751
      %8831 = vst.msk [vmem:[#allocation3 + $0x58] sm:$0xff] %vm8819, %v8752
      %8832 = vst.msk [vmem:[#allocation3 + $0x60] sm:$0xff] %vm8819, %v8753
      %8833 = vst.msk [vmem:[#allocation3 + $0x68] sm:$0xff] %vm8819, %v8754
      %8834 = vst.msk [vmem:[#allocation3 + $0x70] sm:$0xff] %vm8819, %v8755
      %8835 = vst.msk [vmem:[#allocation3 + $0x78] sm:$0xff] %vm8819, %v8756
      %8836 = vst.msk [vmem:[#allocation3 + $0x80] sm:$0xff] %vm8819, %v8757
      %8837 = vst.msk [vmem:[#allocation3 + $0x88] sm:$0xff] %vm8819, %v8758
      %8838 = vst.msk [vmem:[#allocation3 + $0x90] sm:$0xff] %vm8819, %v8759
      %8839 = vst.msk [vmem:[#allocation3 + $0x98] sm:$0xff] %vm8819, %v8760
      %8840 = vst.msk [vmem:[#allocation3 + $0xa0] sm:$0xff] %vm8819, %v8761
      %8841 = vst.msk [vmem:[#allocation3 + $0xa8] sm:$0xff] %vm8819, %v8762
      %8842 = vst.msk [vmem:[#allocation3 + $0xb0] sm:$0xff] %vm8819, %v8763
      %8843 = vst.msk [vmem:[#allocation3 + $0xb8] sm:$0xff] %vm8819, %v8764
      %8844 = vst.msk [vmem:[#allocation3 + $0xc0] sm:$0xff] %vm8819, %v8765
      %8845 = vst.msk [vmem:[#allocation3 + $0xc8] sm:$0xff] %vm8819, %v8766
      %8846 = vst.msk [vmem:[#allocation3 + $0xd0] sm:$0xff] %vm8819, %v8767
      %8847 = vst.msk [vmem:[#allocation3 + $0xd8] sm:$0xff] %vm8819, %v8768
      %8848 = vst.msk [vmem:[#allocation3 + $0xe0] sm:$0xff] %vm8819, %v8769
      %8849 = vst.msk [vmem:[#allocation3 + $0xe8] sm:$0xff] %vm8819, %v8770
      %8850 = vst.msk [vmem:[#allocation3 + $0xf0] sm:$0xff] %vm8819, %v8771
      %8851 = vst.msk [vmem:[#allocation3 + $0xf8] sm:$0xff] %vm8819, %v8772
      %8852 = vst.msk [vmem:[#allocation3 + $0x100] sm:$0xff] %vm8819, %v8773
      %8853 = vst.msk [vmem:[#allocation3 + $0x108] sm:$0xff] %vm8819, %v8774
      %8854 = vst.msk [vmem:[#allocation3 + $0x110] sm:$0xff] %vm8819, %v8775
      %8855 = vst.msk [vmem:[#allocation3 + $0x118] sm:$0xff] %vm8819, %v8776
      %8856 = vst.msk [vmem:[#allocation3 + $0x120] sm:$0xff] %vm8819, %v8777
      %8857 = vst.msk [vmem:[#allocation3 + $0x128] sm:$0xff] %vm8819, %v8778
      %8858 = vst.msk [vmem:[#allocation3 + $0x130] sm:$0xff] %vm8819, %v8779
      %8859 = vst.msk [vmem:[#allocation3 + $0x138] sm:$0xff] %vm8819, %v8780
      %8860 = vst.msk [vmem:[#allocation3 + $0x140] sm:$0xff] %vm8819, %v8781
      %8861 = vst.msk [vmem:[#allocation3 + $0x148] sm:$0xff] %vm8819, %v8782
      %8862 = vst.msk [vmem:[#allocation3 + $0x150] sm:$0xff] %vm8819, %v8783
      %8863 = vst.msk [vmem:[#allocation3 + $0x158] sm:$0xff] %vm8819, %v8784
      %8864 = vst.msk [vmem:[#allocation3 + $0x160] sm:$0xff] %vm8819, %v8785
      %8865 = vst.msk [vmem:[#allocation3 + $0x168] sm:$0xff] %vm8819, %v8786
      %8866 = vst.msk [vmem:[#allocation3 + $0x170] sm:$0xff] %vm8819, %v8787
      %8867 = vst.msk [vmem:[#allocation3 + $0x178] sm:$0xff] %vm8819, %v8788
      %8868 = vst.msk [vmem:[#allocation3 + $0x180] sm:$0xff] %vm8819, %v8789
      %8869 = vst.msk [vmem:[#allocation3 + $0x188] sm:$0xff] %vm8819, %v8790
      %8870 = vst.msk [vmem:[#allocation3 + $0x190] sm:$0xff] %vm8819, %v8791
      %8871 = vst.msk [vmem:[#allocation3 + $0x198] sm:$0xff] %vm8819, %v8792
      %8872 = vst.msk [vmem:[#allocation3 + $0x1a0] sm:$0xff] %vm8819, %v8793
      %8873 = vst.msk [vmem:[#allocation3 + $0x1a8] sm:$0xff] %vm8819, %v8794
      %8874 = vst.msk [vmem:[#allocation3 + $0x1b0] sm:$0xff] %vm8819, %v8795
      %8875 = vst.msk [vmem:[#allocation3 + $0x1b8] sm:$0xff] %vm8819, %v8796
      %8876 = vst.msk [vmem:[#allocation3 + $0x1c0] sm:$0xff] %vm8819, %v8797
      %8877 = vst.msk [vmem:[#allocation3 + $0x1c8] sm:$0xff] %vm8819, %v8798
      %8878 = vst.msk [vmem:[#allocation3 + $0x1d0] sm:$0xff] %vm8819, %v8799
      %8879 = vst.msk [vmem:[#allocation3 + $0x1d8] sm:$0xff] %vm8819, %v8800
      %8880 = vst.msk [vmem:[#allocation3 + $0x1e0] sm:$0xff] %vm8819, %v8801
      %8881 = vst.msk [vmem:[#allocation3 + $0x1e8] sm:$0xff] %vm8819, %v8802
      %8882 = vst.msk [vmem:[#allocation3 + $0x1f0] sm:$0xff] %vm8819, %v8803
      %8883 = vst.msk [vmem:[#allocation3 + $0x1f8] sm:$0xff] %vm8819, %v8804
      %8884 = vst.msk [vmem:[#allocation3 + $0x200] sm:$0xff] %vm8819, %v8805
      %8885 = vst.msk [vmem:[#allocation3 + $0x208] sm:$0xff] %vm8819, %v8806
      %8886 = vst.msk [vmem:[#allocation3 + $0x210] sm:$0xff] %vm8819, %v8807
      %8887 = vst.msk [vmem:[#allocation3 + $0x218] sm:$0xff] %vm8819, %v8808
      %8888 = vst.msk [vmem:[#allocation3 + $0x220] sm:$0xff] %vm8819, %v8809
      %8889 = vst.msk [vmem:[#allocation3 + $0x228] sm:$0xff] %vm8819, %v8810
      %8890 = vst.msk [vmem:[#allocation3 + $0x230] sm:$0xff] %vm8819, %v8811
      %8891 = vst.msk [vmem:[#allocation3 + $0x238] sm:$0xff] %vm8819, %v8812
      %8892 = vst.msk [vmem:[#allocation3 + $0x240] sm:$0xff] %vm8819, %v8813
      %8893 = vst.msk [vmem:[#allocation3 + $0x248] sm:$0xff] %vm8819, %v8814
      %8894 = vst.msk [vmem:[#allocation3 + $0x250] sm:$0xff] %vm8819, %v8815
      %8895 = vst.msk [vmem:[#allocation3 + $0x258] sm:$0xff] %vm8819, %v8816
      %8896 = vst.msk [vmem:[#allocation3 + $0x260] sm:$0xff] %vm8819, %v8817
      %vm8897 = vcmask 521216
      %8898 = vst.msk [vmem:[#allocation3 + $0x268] sm:$0x3f] %vm8897, %v8818
      %v8899 = vld [vmem:[#allocation3] ss:$2 sm:$0xff]
      %s8900 = scalar_lea.vmem [#allocation3], 16
      %v8901 = vld [vmem:[%s8900] ss:$2 sm:$0xf]
      %s8902 = scalar_lea.vmem [#allocation3], 1
      %v8903 = vld [vmem:[%s8902] ss:$2 sm:$0xff]
      %s8904 = scalar_lea.vmem [#allocation3], 17
      %v8905 = vld [vmem:[%s8904] ss:$2 sm:$0xf]
      %s8906 = scalar_lea.vmem [#allocation3], 26
      %v8907 = vld [vmem:[%s8906] ss:$2 sm:$0xff]
      %s8908 = scalar_lea.vmem [#allocation3], 42
      %v8909 = vld [vmem:[%s8908] ss:$2 sm:$0xf]
      %s8910 = scalar_lea.vmem [#allocation3], 27
      %v8911 = vld [vmem:[%s8910] ss:$2 sm:$0xff]
      %s8912 = scalar_lea.vmem [#allocation3], 43
      %v8913 = vld [vmem:[%s8912] ss:$2 sm:$0xf]
      %v8914 = vmax.f32 %v8899, %v8903
      %v8915 = vmax.f32 %v8901, %v8905
      %v8916 = vmax.f32 %v8907, %v8911
      %v8917 = vmax.f32 %v8909, %v8913
      %v8918 = vmax.f32 %v8914, %v8916
      %v8919 = vmax.f32 %v8915, %v8917
      %v8920 = vmax.f32 %v8918, 0.0
      %v8921 = vmax.f32 %v8919, 0.0
      %v8922 = vpack.c.bf16 %v8921, %v8920
      %v8924 = vunpack.c.l.b16 %v8922
      %v8925 = vunpack.c.h.b16 %v8922
      %v8926 = vpack.c.b16 %v8924, %v8924
      %v8927 = vpack.c.b16 %v8925, %v8925
      %vm8930 = vcmask 519168
      %8931 = vst.msk [vmem:[%s224] sm:$0xf] %vm8930, %v8926
      %vm8932 = vcmask 517120
      %8933 = vst.msk [vmem:[%s224 + $0x4] sm:$0x3] %vm8932, %v8927
      %s8934 = scalar_lea.vmem [#allocation3], 52
      %v8935 = vld [vmem:[%s8934] ss:$2 sm:$0xff]
      %s8936 = scalar_lea.vmem [#allocation3], 68
      %v8937 = vld [vmem:[%s8936] ss:$2 sm:$0xf]
      %s8938 = scalar_lea.vmem [#allocation3], 53
      %v8939 = vld [vmem:[%s8938] ss:$2 sm:$0xff]
      %s8940 = scalar_lea.vmem [#allocation3], 69
      %v8941 = vld [vmem:[%s8940] ss:$2 sm:$0xf]
      %s8942 = scalar_lea.vmem [#allocation3], 78
      %v8943 = vld [vmem:[%s8942] ss:$2 sm:$0xff]
      %s8944 = scalar_lea.vmem [#allocation3], 94
      %v8945 = vld [vmem:[%s8944] ss:$2 sm:$0xf]
      %s8946 = scalar_lea.vmem [#allocation3], 79
      %v8947 = vld [vmem:[%s8946] ss:$2 sm:$0xff]
      %s8948 = scalar_lea.vmem [#allocation3], 95
      %v8949 = vld [vmem:[%s8948] ss:$2 sm:$0xf]
      %v8950 = vmax.f32 %v8935, %v8939
      %v8951 = vmax.f32 %v8937, %v8941
      %v8952 = vmax.f32 %v8943, %v8947
      %v8953 = vmax.f32 %v8945, %v8949
      %v8954 = vmax.f32 %v8950, %v8952
      %v8955 = vmax.f32 %v8951, %v8953
      %v8956 = vmax.f32 %v8954, 0.0
      %v8957 = vmax.f32 %v8955, 0.0
      %v8958 = vpack.c.bf16 %v8957, %v8956
      %v8960 = vunpack.c.l.b16 %v8958
      %v8961 = vunpack.c.h.b16 %v8958
      %v8962 = vpack.c.b16 %v8960, %v8960
      %v8963 = vpack.c.b16 %v8961, %v8961
      %s8966 = scalar_lea.vmem %s224, 8
      %8967 = vst.msk [vmem:[%s8966] sm:$0xf] %vm8930, %v8962
      %8968 = vst.msk [vmem:[%s8966 + $0x4] sm:$0x3] %vm8932, %v8963
      %s8969 = scalar_lea.vmem [#allocation3], 104
      %v8970 = vld [vmem:[%s8969] ss:$2 sm:$0xff]
      %s8971 = scalar_lea.vmem [#allocation3], 120
      %v8972 = vld [vmem:[%s8971] ss:$2 sm:$0xf]
      %s8973 = scalar_lea.vmem [#allocation3], 105
      %v8974 = vld [vmem:[%s8973] ss:$2 sm:$0xff]
      %s8975 = scalar_lea.vmem [#allocation3], 121
      %v8976 = vld [vmem:[%s8975] ss:$2 sm:$0xf]
      %s8977 = scalar_lea.vmem [#allocation3], 130
      %v8978 = vld [vmem:[%s8977] ss:$2 sm:$0xff]
      %s8979 = scalar_lea.vmem [#allocation3], 146
      %v8980 = vld [vmem:[%s8979] ss:$2 sm:$0xf]
      %s8981 = scalar_lea.vmem [#allocation3], 131
      %v8982 = vld [vmem:[%s8981] ss:$2 sm:$0xff]
      %s8983 = scalar_lea.vmem [#allocation3], 147
      %v8984 = vld [vmem:[%s8983] ss:$2 sm:$0xf]
      %v8985 = vmax.f32 %v8970, %v8974
      %v8986 = vmax.f32 %v8972, %v8976
      %v8987 = vmax.f32 %v8978, %v8982
      %v8988 = vmax.f32 %v8980, %v8984
      %v8989 = vmax.f32 %v8985, %v8987
      %v8990 = vmax.f32 %v8986, %v8988
      %v8991 = vmax.f32 %v8989, 0.0
      %v8992 = vmax.f32 %v8990, 0.0
      %v8993 = vpack.c.bf16 %v8992, %v8991
      %v8995 = vunpack.c.l.b16 %v8993
      %v8996 = vunpack.c.h.b16 %v8993
      %v8997 = vpack.c.b16 %v8995, %v8995
      %v8998 = vpack.c.b16 %v8996, %v8996
      %s9001 = scalar_lea.vmem %s224, 16
      %9002 = vst.msk [vmem:[%s9001] sm:$0xf] %vm8930, %v8997
      %9003 = vst.msk [vmem:[%s9001 + $0x4] sm:$0x3] %vm8932, %v8998
      %s9004 = scalar_lea.vmem [#allocation3], 156
      %v9005 = vld [vmem:[%s9004] ss:$2 sm:$0xff]
      %s9006 = scalar_lea.vmem [#allocation3], 172
      %v9007 = vld [vmem:[%s9006] ss:$2 sm:$0xf]
      %s9008 = scalar_lea.vmem [#allocation3], 157
      %v9009 = vld [vmem:[%s9008] ss:$2 sm:$0xff]
      %s9010 = scalar_lea.vmem [#allocation3], 173
      %v9011 = vld [vmem:[%s9010] ss:$2 sm:$0xf]
      %s9012 = scalar_lea.vmem [#allocation3], 182
      %v9013 = vld [vmem:[%s9012] ss:$2 sm:$0xff]
      %s9014 = scalar_lea.vmem [#allocation3], 198
      %v9015 = vld [vmem:[%s9014] ss:$2 sm:$0xf]
      %s9016 = scalar_lea.vmem [#allocation3], 183
      %v9017 = vld [vmem:[%s9016] ss:$2 sm:$0xff]
      %s9018 = scalar_lea.vmem [#allocation3], 199
      %v9019 = vld [vmem:[%s9018] ss:$2 sm:$0xf]
      %v9020 = vmax.f32 %v9005, %v9009
      %v9021 = vmax.f32 %v9007, %v9011
      %v9022 = vmax.f32 %v9013, %v9017
      %v9023 = vmax.f32 %v9015, %v9019
      %v9024 = vmax.f32 %v9020, %v9022
      %v9025 = vmax.f32 %v9021, %v9023
      %v9026 = vmax.f32 %v9024, 0.0
      %v9027 = vmax.f32 %v9025, 0.0
      %v9028 = vpack.c.bf16 %v9027, %v9026
      %v9030 = vunpack.c.l.b16 %v9028
      %v9031 = vunpack.c.h.b16 %v9028
      %v9032 = vpack.c.b16 %v9030, %v9030
      %v9033 = vpack.c.b16 %v9031, %v9031
      %s9036 = scalar_lea.vmem %s224, 24
      %9037 = vst.msk [vmem:[%s9036] sm:$0xf] %vm8930, %v9032
      %9038 = vst.msk [vmem:[%s9036 + $0x4] sm:$0x3] %vm8932, %v9033
      %s9039 = scalar_lea.vmem [#allocation3], 208
      %v9040 = vld [vmem:[%s9039] ss:$2 sm:$0xff]
      %s9041 = scalar_lea.vmem [#allocation3], 224
      %v9042 = vld [vmem:[%s9041] ss:$2 sm:$0xf]
      %s9043 = scalar_lea.vmem [#allocation3], 209
      %v9044 = vld [vmem:[%s9043] ss:$2 sm:$0xff]
      %s9045 = scalar_lea.vmem [#allocation3], 225
      %v9046 = vld [vmem:[%s9045] ss:$2 sm:$0xf]
      %s9047 = scalar_lea.vmem [#allocation3], 234
      %v9048 = vld [vmem:[%s9047] ss:$2 sm:$0xff]
      %s9049 = scalar_lea.vmem [#allocation3], 250
      %v9050 = vld [vmem:[%s9049] ss:$2 sm:$0xf]
      %s9051 = scalar_lea.vmem [#allocation3], 235
      %v9052 = vld [vmem:[%s9051] ss:$2 sm:$0xff]
      %s9053 = scalar_lea.vmem [#allocation3], 251
      %v9054 = vld [vmem:[%s9053] ss:$2 sm:$0xf]
      %v9055 = vmax.f32 %v9040, %v9044
      %v9056 = vmax.f32 %v9042, %v9046
      %v9057 = vmax.f32 %v9048, %v9052
      %v9058 = vmax.f32 %v9050, %v9054
      %v9059 = vmax.f32 %v9055, %v9057
      %v9060 = vmax.f32 %v9056, %v9058
      %v9061 = vmax.f32 %v9059, 0.0
      %v9062 = vmax.f32 %v9060, 0.0
      %v9063 = vpack.c.bf16 %v9062, %v9061
      %v9065 = vunpack.c.l.b16 %v9063
      %v9066 = vunpack.c.h.b16 %v9063
      %v9067 = vpack.c.b16 %v9065, %v9065
      %v9068 = vpack.c.b16 %v9066, %v9066
      %s9071 = scalar_lea.vmem %s224, 32
      %9072 = vst.msk [vmem:[%s9071] sm:$0xf] %vm8930, %v9067
      %9073 = vst.msk [vmem:[%s9071 + $0x4] sm:$0x3] %vm8932, %v9068
      %s9074 = scalar_lea.vmem [#allocation3], 260
      %v9075 = vld [vmem:[%s9074] ss:$2 sm:$0xff]
      %s9076 = scalar_lea.vmem [#allocation3], 276
      %v9077 = vld [vmem:[%s9076] ss:$2 sm:$0xf]
      %s9078 = scalar_lea.vmem [#allocation3], 261
      %v9079 = vld [vmem:[%s9078] ss:$2 sm:$0xff]
      %s9080 = scalar_lea.vmem [#allocation3], 277
      %v9081 = vld [vmem:[%s9080] ss:$2 sm:$0xf]
      %s9082 = scalar_lea.vmem [#allocation3], 286
      %v9083 = vld [vmem:[%s9082] ss:$2 sm:$0xff]
      %s9084 = scalar_lea.vmem [#allocation3], 302
      %v9085 = vld [vmem:[%s9084] ss:$2 sm:$0xf]
      %s9086 = scalar_lea.vmem [#allocation3], 287
      %v9087 = vld [vmem:[%s9086] ss:$2 sm:$0xff]
      %s9088 = scalar_lea.vmem [#allocation3], 303
      %v9089 = vld [vmem:[%s9088] ss:$2 sm:$0xf]
      %v9090 = vmax.f32 %v9075, %v9079
      %v9091 = vmax.f32 %v9077, %v9081
      %v9092 = vmax.f32 %v9083, %v9087
      %v9093 = vmax.f32 %v9085, %v9089
      %v9094 = vmax.f32 %v9090, %v9092
      %v9095 = vmax.f32 %v9091, %v9093
      %v9096 = vmax.f32 %v9094, 0.0
      %v9097 = vmax.f32 %v9095, 0.0
      %v9098 = vpack.c.bf16 %v9097, %v9096
      %v9100 = vunpack.c.l.b16 %v9098
      %v9101 = vunpack.c.h.b16 %v9098
      %v9102 = vpack.c.b16 %v9100, %v9100
      %v9103 = vpack.c.b16 %v9101, %v9101
      %s9106 = scalar_lea.vmem %s224, 40
      %9107 = vst.msk [vmem:[%s9106] sm:$0xf] %vm8930, %v9102
      %9108 = vst.msk [vmem:[%s9106 + $0x4] sm:$0x3] %vm8932, %v9103
      %s9109 = scalar_lea.vmem [#allocation3], 312
      %v9110 = vld [vmem:[%s9109] ss:$2 sm:$0xff]
      %s9111 = scalar_lea.vmem [#allocation3], 328
      %v9112 = vld [vmem:[%s9111] ss:$2 sm:$0xf]
      %s9113 = scalar_lea.vmem [#allocation3], 313
      %v9114 = vld [vmem:[%s9113] ss:$2 sm:$0xff]
      %s9115 = scalar_lea.vmem [#allocation3], 329
      %v9116 = vld [vmem:[%s9115] ss:$2 sm:$0xf]
      %s9117 = scalar_lea.vmem [#allocation3], 338
      %v9118 = vld [vmem:[%s9117] ss:$2 sm:$0xff]
      %s9119 = scalar_lea.vmem [#allocation3], 354
      %v9120 = vld [vmem:[%s9119] ss:$2 sm:$0xf]
      %s9121 = scalar_lea.vmem [#allocation3], 339
      %v9122 = vld [vmem:[%s9121] ss:$2 sm:$0xff]
      %s9123 = scalar_lea.vmem [#allocation3], 355
      %v9124 = vld [vmem:[%s9123] ss:$2 sm:$0xf]
      %v9125 = vmax.f32 %v9110, %v9114
      %v9126 = vmax.f32 %v9112, %v9116
      %v9127 = vmax.f32 %v9118, %v9122
      %v9128 = vmax.f32 %v9120, %v9124
      %v9129 = vmax.f32 %v9125, %v9127
      %v9130 = vmax.f32 %v9126, %v9128
      %v9131 = vmax.f32 %v9129, 0.0
      %v9132 = vmax.f32 %v9130, 0.0
      %v9133 = vpack.c.bf16 %v9132, %v9131
      %v9135 = vunpack.c.l.b16 %v9133
      %v9136 = vunpack.c.h.b16 %v9133
      %v9137 = vpack.c.b16 %v9135, %v9135
      %v9138 = vpack.c.b16 %v9136, %v9136
      %s9141 = scalar_lea.vmem %s224, 48
      %9142 = vst.msk [vmem:[%s9141] sm:$0xf] %vm8930, %v9137
      %9143 = vst.msk [vmem:[%s9141 + $0x4] sm:$0x3] %vm8932, %v9138
      %s9144 = scalar_lea.vmem [#allocation3], 364
      %v9145 = vld [vmem:[%s9144] ss:$2 sm:$0xff]
      %s9146 = scalar_lea.vmem [#allocation3], 380
      %v9147 = vld [vmem:[%s9146] ss:$2 sm:$0xf]
      %s9148 = scalar_lea.vmem [#allocation3], 365
      %v9149 = vld [vmem:[%s9148] ss:$2 sm:$0xff]
      %s9150 = scalar_lea.vmem [#allocation3], 381
      %v9151 = vld [vmem:[%s9150] ss:$2 sm:$0xf]
      %s9152 = scalar_lea.vmem [#allocation3], 390
      %v9153 = vld [vmem:[%s9152] ss:$2 sm:$0xff]
      %s9154 = scalar_lea.vmem [#allocation3], 406
      %v9155 = vld [vmem:[%s9154] ss:$2 sm:$0xf]
      %s9156 = scalar_lea.vmem [#allocation3], 391
      %v9157 = vld [vmem:[%s9156] ss:$2 sm:$0xff]
      %s9158 = scalar_lea.vmem [#allocation3], 407
      %v9159 = vld [vmem:[%s9158] ss:$2 sm:$0xf]
      %v9160 = vmax.f32 %v9145, %v9149
      %v9161 = vmax.f32 %v9147, %v9151
      %v9162 = vmax.f32 %v9153, %v9157
      %v9163 = vmax.f32 %v9155, %v9159
      %v9164 = vmax.f32 %v9160, %v9162
      %v9165 = vmax.f32 %v9161, %v9163
      %v9166 = vmax.f32 %v9164, 0.0
      %v9167 = vmax.f32 %v9165, 0.0
      %v9168 = vpack.c.bf16 %v9167, %v9166
      %v9170 = vunpack.c.l.b16 %v9168
      %v9171 = vunpack.c.h.b16 %v9168
      %v9172 = vpack.c.b16 %v9170, %v9170
      %v9173 = vpack.c.b16 %v9171, %v9171
      %s9176 = scalar_lea.vmem %s224, 56
      %9177 = vst.msk [vmem:[%s9176] sm:$0xf] %vm8930, %v9172
      %9178 = vst.msk [vmem:[%s9176 + $0x4] sm:$0x3] %vm8932, %v9173
      %s9179 = scalar_lea.vmem [#allocation3], 416
      %v9180 = vld [vmem:[%s9179] ss:$2 sm:$0xff]
      %s9181 = scalar_lea.vmem [#allocation3], 432
      %v9182 = vld [vmem:[%s9181] ss:$2 sm:$0xf]
      %s9183 = scalar_lea.vmem [#allocation3], 417
      %v9184 = vld [vmem:[%s9183] ss:$2 sm:$0xff]
      %s9185 = scalar_lea.vmem [#allocation3], 433
      %v9186 = vld [vmem:[%s9185] ss:$2 sm:$0xf]
      %s9187 = scalar_lea.vmem [#allocation3], 442
      %v9188 = vld [vmem:[%s9187] ss:$2 sm:$0xff]
      %s9189 = scalar_lea.vmem [#allocation3], 458
      %v9190 = vld [vmem:[%s9189] ss:$2 sm:$0xf]
      %s9191 = scalar_lea.vmem [#allocation3], 443
      %v9192 = vld [vmem:[%s9191] ss:$2 sm:$0xff]
      %s9193 = scalar_lea.vmem [#allocation3], 459
      %v9194 = vld [vmem:[%s9193] ss:$2 sm:$0xf]
      %v9195 = vmax.f32 %v9180, %v9184
      %v9196 = vmax.f32 %v9182, %v9186
      %v9197 = vmax.f32 %v9188, %v9192
      %v9198 = vmax.f32 %v9190, %v9194
      %v9199 = vmax.f32 %v9195, %v9197
      %v9200 = vmax.f32 %v9196, %v9198
      %v9201 = vmax.f32 %v9199, 0.0
      %v9202 = vmax.f32 %v9200, 0.0
      %v9203 = vpack.c.bf16 %v9202, %v9201
      %v9205 = vunpack.c.l.b16 %v9203
      %v9206 = vunpack.c.h.b16 %v9203
      %v9207 = vpack.c.b16 %v9205, %v9205
      %v9208 = vpack.c.b16 %v9206, %v9206
      %s9211 = scalar_lea.vmem %s224, 64
      %9212 = vst.msk [vmem:[%s9211] sm:$0xf] %vm8930, %v9207
      %9213 = vst.msk [vmem:[%s9211 + $0x4] sm:$0x3] %vm8932, %v9208
      %s9214 = scalar_lea.vmem [#allocation3], 468
      %v9215 = vld [vmem:[%s9214] ss:$2 sm:$0xff]
      %s9216 = scalar_lea.vmem [#allocation3], 484
      %v9217 = vld [vmem:[%s9216] ss:$2 sm:$0xf]
      %s9218 = scalar_lea.vmem [#allocation3], 469
      %v9219 = vld [vmem:[%s9218] ss:$2 sm:$0xff]
      %s9220 = scalar_lea.vmem [#allocation3], 485
      %v9221 = vld [vmem:[%s9220] ss:$2 sm:$0xf]
      %s9222 = scalar_lea.vmem [#allocation3], 494
      %v9223 = vld [vmem:[%s9222] ss:$2 sm:$0xff]
      %s9224 = scalar_lea.vmem [#allocation3], 510
      %v9225 = vld [vmem:[%s9224] ss:$2 sm:$0xf]
      %s9226 = scalar_lea.vmem [#allocation3], 495
      %v9227 = vld [vmem:[%s9226] ss:$2 sm:$0xff]
      %s9228 = scalar_lea.vmem [#allocation3], 511
      %v9229 = vld [vmem:[%s9228] ss:$2 sm:$0xf]
      %v9230 = vmax.f32 %v9215, %v9219
      %v9231 = vmax.f32 %v9217, %v9221
      %v9232 = vmax.f32 %v9223, %v9227
      %v9233 = vmax.f32 %v9225, %v9229
      %v9234 = vmax.f32 %v9230, %v9232
      %v9235 = vmax.f32 %v9231, %v9233
      %v9236 = vmax.f32 %v9234, 0.0
      %v9237 = vmax.f32 %v9235, 0.0
      %v9238 = vpack.c.bf16 %v9237, %v9236
      %v9240 = vunpack.c.l.b16 %v9238
      %v9241 = vunpack.c.h.b16 %v9238
      %v9242 = vpack.c.b16 %v9240, %v9240
      %v9243 = vpack.c.b16 %v9241, %v9241
      %s9246 = scalar_lea.vmem %s224, 72
      %9247 = vst.msk [vmem:[%s9246] sm:$0xf] %vm8930, %v9242
      %9248 = vst.msk [vmem:[%s9246 + $0x4] sm:$0x3] %vm8932, %v9243
      %s9249 = scalar_lea.vmem [#allocation3], 520
      %v9250 = vld [vmem:[%s9249] ss:$2 sm:$0xff]
      %s9251 = scalar_lea.vmem [#allocation3], 536
      %v9252 = vld [vmem:[%s9251] ss:$2 sm:$0xf]
      %s9253 = scalar_lea.vmem [#allocation3], 521
      %v9254 = vld [vmem:[%s9253] ss:$2 sm:$0xff]
      %s9255 = scalar_lea.vmem [#allocation3], 537
      %v9256 = vld [vmem:[%s9255] ss:$2 sm:$0xf]
      %s9257 = scalar_lea.vmem [#allocation3], 546
      %v9258 = vld [vmem:[%s9257] ss:$2 sm:$0xff]
      %s9259 = scalar_lea.vmem [#allocation3], 562
      %v9260 = vld [vmem:[%s9259] ss:$2 sm:$0xf]
      %s9261 = scalar_lea.vmem [#allocation3], 547
      %v9262 = vld [vmem:[%s9261] ss:$2 sm:$0xff]
      %s9263 = scalar_lea.vmem [#allocation3], 563
      %v9264 = vld [vmem:[%s9263] ss:$2 sm:$0xf]
      %v9265 = vmax.f32 %v9250, %v9254
      %v9266 = vmax.f32 %v9252, %v9256
      %v9267 = vmax.f32 %v9258, %v9262
      %v9268 = vmax.f32 %v9260, %v9264
      %v9269 = vmax.f32 %v9265, %v9267
      %v9270 = vmax.f32 %v9266, %v9268
      %v9271 = vmax.f32 %v9269, 0.0
      %v9272 = vmax.f32 %v9270, 0.0
      %v9273 = vpack.c.bf16 %v9272, %v9271
      %v9275 = vunpack.c.l.b16 %v9273
      %v9276 = vunpack.c.h.b16 %v9273
      %v9277 = vpack.c.b16 %v9275, %v9275
      %v9278 = vpack.c.b16 %v9276, %v9276
      %s9281 = scalar_lea.vmem %s224, 80
      %9282 = vst.msk [vmem:[%s9281] sm:$0xf] %vm8930, %v9277
      %9283 = vst.msk [vmem:[%s9281 + $0x4] sm:$0x3] %vm8932, %v9278
      %s9284 = scalar_lea.vmem [#allocation3], 572
      %v9285 = vld [vmem:[%s9284] ss:$2 sm:$0xff]
      %s9286 = scalar_lea.vmem [#allocation3], 588
      %v9287 = vld [vmem:[%s9286] ss:$2 sm:$0xf]
      %s9288 = scalar_lea.vmem [#allocation3], 573
      %v9289 = vld [vmem:[%s9288] ss:$2 sm:$0xff]
      %s9290 = scalar_lea.vmem [#allocation3], 589
      %v9291 = vld [vmem:[%s9290] ss:$2 sm:$0xf]
      %s9292 = scalar_lea.vmem [#allocation3], 598
      %v9293 = vld [vmem:[%s9292] ss:$2 sm:$0xff]
      %s9294 = scalar_lea.vmem [#allocation3], 614
      %v9295 = vld [vmem:[%s9294] ss:$2 sm:$0xf]
      %s9296 = scalar_lea.vmem [#allocation3], 599
      %v9297 = vld [vmem:[%s9296] ss:$2 sm:$0xff]
      %s9298 = scalar_lea.vmem [#allocation3], 615
      %v9299 = vld [vmem:[%s9298] ss:$2 sm:$0xf]
      %v9300 = vmax.f32 %v9285, %v9289
      %v9301 = vmax.f32 %v9287, %v9291
      %v9302 = vmax.f32 %v9293, %v9297
      %v9303 = vmax.f32 %v9295, %v9299
      %v9304 = vmax.f32 %v9300, %v9302
      %v9305 = vmax.f32 %v9301, %v9303
      %v9306 = vmax.f32 %v9304, 0.0
      %v9307 = vmax.f32 %v9305, 0.0
      %v9308 = vpack.c.bf16 %v9307, %v9306
      %v9310 = vunpack.c.l.b16 %v9308
      %v9311 = vunpack.c.h.b16 %v9308
      %v9312 = vpack.c.b16 %v9310, %v9310
      %v9313 = vpack.c.b16 %v9311, %v9311
      %s9316 = scalar_lea.vmem %s224, 88
      %9317 = vst.msk [vmem:[%s9316] sm:$0xf] %vm8930, %v9312
      %9318 = vst.msk [vmem:[%s9316 + $0x4] sm:$0x3] %vm8932, %v9313
      %p9319 = scmp.lt.s32.totalorder %s16, 1
      %s9320 = scalar_select %p9319, %s16, 1
      %s9321 = smul.addr %s9320, 24
      %s9322 = smul.addr %s9321, 4
      %s9323 = scalar_lea.vmem %s5, %s9322
      // Predicated region
      $region41: #{net_forward.2} parent=39 // pred_check
        %p9324 = pneg %p144
      $region42: #{net_forward.2} parent=39 // pred_check_branch
        %9326 = sbr.rel (%p9324) target = $region44
      $region43: #{net_forward.2} parent=39 // pred_region
        _
      $region44: #{net_forward.2} parent=39 // pred_fallthru
        _
    $region40: #{net_forward.2} parent=5 // pred_fallthru
      _
    %p9327 = scmp.le.s32.totalorder 2, %s11
    // Predicated region
    $region45: #{net_forward.2} parent=5 // pred_check
      %p9328 = pneg %p9327
    $region46: #{net_forward.2} parent=5 // pred_check_branch
      %9330 = sbr.rel (%p9328) target = $region48
    $region47: #{net_forward.2} parent=5 // pred_region
      %s9331 = ssub.s32 %s11, 2
      // Predicated region
      $region49: #{net_forward.2} parent=47 // pred_check
        %p9332 = pneg %p150
      $region50: #{net_forward.2} parent=47 // pred_check_branch
        %9334 = sbr.rel (%p9332) target = $region52
      $region51: #{net_forward.2} parent=47 // pred_region
        %p9335 = scmp.lt.s32.totalorder %s17, 1
        %s9336 = scalar_select %p9335, %s17, 1
        %s9337 = smul.addr %s9336, 24
        %s9338 = smul.addr %s9337, 4
        %s9339 = scalar_lea.vmem %s5, %s9338
      $region52: #{net_forward.2} parent=47 // pred_fallthru
        _
    $region48: #{net_forward.2} parent=5 // pred_fallthru
      _
  $region6: #{net_forward.2} parent=0 // loop_footer
    %s15 = sadd.s32 1, %s11
  $region7: #{net_forward.2} parent=0 // loop_footer_branch
    %10 = sbr.rel target = $region3
  $region8: #{net_forward.2} parent=0 // loop_exit
    _

</llo_original>
